<compile_context>
chip_gen: v7x
topology: tpu7x:2x2x1
jax: 0.10.0
libtpu: 0.0.40
codegen_flags: <defaults>
</compile_context>

<pallas_src>
import jax
import jax.numpy as jnp
from jax.experimental import pallas as pl
from jax.experimental.pallas import tpu as pltpu


def _decouple_kernel(x_ref, w0_ref, b0_ref, w1_ref, b1_ref, out_ref,
                     pad0_ref, pad1_ref, zpad_ref):
    """Fused Decouple head for one image: both branches, both conv layers.

    x_ref:    (1, H, W, Cp)     input image, channels zero-padded to Cp, bf16
    w0_ref:   (9, Cp, 2*Cp)     layer-0 weights, cls|reg stacked on N, bf16
    b0_ref:   (1, 2*Cp)         layer-0 folded BN bias, f32
    w1_ref:   (9, 2*Cp, 2*Cp)   layer-1 weights, block-diagonal, bf16
    b1_ref:   (1, 2*Cp)         layer-1 folded BN bias, f32
    out_ref:  (1, H, W, 2*Cp)   output (cls in lanes [:Cp], reg in [Cp:]), f32
    pad0_ref: (H+2, W, Cp)      bf16 scratch: row-padded layer-0 input
    pad1_ref: (H+2, W, 2*Cp)    bf16 scratch: row-padded layer-1 input
    zpad_ref: (H, W+16, 2*Cp)   f32 scratch: column-shift of dx partial sums
                                (interior at cols [8, 8+W), cols 7 / 8+W zero)
    """
    _, H, W, Cp = x_ref.shape
    C2 = 2 * Cp
    HW = H * W

    # --- refresh the zero borders only (tiny; interiors are rewritten) ------
    pad0_ref[0] = jnp.zeros((W, Cp), jnp.bfloat16)
    pad0_ref[H + 1] = jnp.zeros((W, Cp), jnp.bfloat16)
    pad1_ref[0] = jnp.zeros((W, C2), jnp.bfloat16)
    pad1_ref[H + 1] = jnp.zeros((W, C2), jnp.bfloat16)
    zpad_ref[:, 7:8, :] = jnp.zeros((H, 1, C2), jnp.float32)
    zpad_ref[:, 8 + W:9 + W, :] = jnp.zeros((H, 1, C2), jnp.float32)

    def conv3x3_bn_silu(pad_ref, w_ref, b_ref):
        """3x3 conv (folded BN) + SiLU.  Output channels == C2 == zpad lanes."""
        cin = pad_ref.shape[-1]
        cout = w_ref.shape[-1]
        # Three dy row-shifts: free major-axis slices, contiguous -> no copy.
        lhs = [pad_ref[dy:dy + H].reshape(HW, cin) for dy in range(3)]
        acc = jnp.zeros((HW, cout), jnp.float32)
        for dx in range(3):
            # Partial sum over dy for this dx tap column (bf16 x bf16 -> f32).
            z = jnp.zeros((HW, cout), jnp.float32)
            for dy in range(3):
                z = z + jnp.dot(lhs[dy], w_ref[dy * 3 + dx],
                                preferred_element_type=jnp.float32)
            if dx != 1:
                # Column shift by (dx - 1): aligned store of the interior, then
                # an offset load; cols 7 / 8+W supply the zero boundary.
                zpad_ref[:, 8:8 + W, :] = z.reshape(H, W, cout)
                z = zpad_ref[:, 7 + dx:7 + dx + W, :].reshape(HW, cout)
            acc = acc + z
        y = acc + b_ref[...]                 # folded BN bias, f32
        return y * jax.nn.sigmoid(y)         # SiLU, f32

    # ---- layer 0: both branches fused along the output-channel axis --------
    pad0_ref[1:H + 1] = x_ref[0]
    h0 = conv3x3_bn_silu(pad0_ref, w0_ref, b0_ref)            # (HW, 2*Cp) f32

    # ---- layer 1: block-diagonal weights keep the two branches independent -
    pad1_ref[1:H + 1] = h0.reshape(H, W, C2).astype(jnp.bfloat16)
    h1 = conv3x3_bn_silu(pad1_ref, w1_ref, b1_ref)            # (HW, 2*Cp) f32

    out_ref[0] = h1.reshape(H, W, C2).astype(out_ref.dtype)


def _decouple_pallas(x, w0, b0, w1, b1):
    """x: (N, H, W, Cp) bf16.  Returns (N, H, W, 2*Cp) f32."""
    N, H, W, Cp = x.shape
    C2 = 2 * Cp
    return pl.pallas_call(
        _decouple_kernel,
        out_shape=jax.ShapeDtypeStruct((N, H, W, C2), jnp.float32),
        grid_spec=pltpu.PrefetchScalarGridSpec(
            num_scalar_prefetch=0,
            grid=(N,),  # batch only; branches fused inside
            in_specs=[
                pl.BlockSpec((1, H, W, Cp), lambda n: (n, 0, 0, 0)),
                pl.BlockSpec((9, Cp, C2), lambda n: (0, 0, 0)),
                pl.BlockSpec((1, C2), lambda n: (0, 0)),
                pl.BlockSpec((9, C2, C2), lambda n: (0, 0, 0)),
                pl.BlockSpec((1, C2), lambda n: (0, 0)),
            ],
            out_specs=pl.BlockSpec((1, H, W, C2), lambda n: (n, 0, 0, 0)),
            scratch_shapes=[
                pltpu.VMEM((H + 2, W, Cp), jnp.bfloat16),    # pad0
                pltpu.VMEM((H + 2, W, C2), jnp.bfloat16),    # pad1
                pltpu.VMEM((H, W + 16, C2), jnp.float32),    # zpad (col shift)
            ],
        ),
        compiler_params=pltpu.CompilerParams(
            dimension_semantics=("parallel",),
            vmem_limit_bytes=32 * 1024 * 1024,
        ),
    )(x, w0, b0, w1, b1)


def _fold_bn(gamma, beta, mean, var, eps=1e-5):
    # TODO(synk): eval-mode BN only; training-mode batch statistics are not
    # implemented in the kernel (running stats are folded into the conv).
    scale = gamma / jnp.sqrt(var + eps)
    bias = beta - mean * scale
    return scale, bias


def _round_up(v, m):
    return (v + m - 1) // m * m


@jax.jit
def decouple_forward(x_nchw, params):
    """Decouple.forward: x (N, C, H, W) -> (cls_feats, reg_feats), both NCHW."""
    N, C, H, W = x_nchw.shape
    Cp = _round_up(max(C, 128), 128)   # lane-dense channel padding
    C2 = 2 * Cp

    (wc0, sc0, bc0), (wc1, sc1, bc1), (wr0, sr0, br0), (wr1, sr1, br1) = params

    # Layer 0: cls and reg stacked along output channels -> one N=2*Cp matmul.
    w0 = jnp.zeros((3, 3, Cp, C2), jnp.float32)
    w0 = w0.at[:, :, :C, :C].set(wc0 * sc0[None, None, None, :])
    w0 = w0.at[:, :, :C, Cp:Cp + C].set(wr0 * sr0[None, None, None, :])
    b0 = jnp.zeros((1, C2), jnp.float32)
    b0 = b0.at[0, :C].set(bc0).at[0, Cp:Cp + C].set(br0)

    # Layer 1: block-diagonal so the two branches stay independent while
    # sharing one dot chain (padding lanes stay exactly zero: SiLU(0) == 0).
    w1 = jnp.zeros((3, 3, C2, C2), jnp.float32)
    w1 = w1.at[:, :, :C, :C].set(wc1 * sc1[None, None, None, :])
    w1 = w1.at[:, :, Cp:Cp + C, Cp:Cp + C].set(wr1 * sr1[None, None, None, :])
    b1 = jnp.zeros((1, C2), jnp.float32)
    b1 = b1.at[0, :C].set(bc1).at[0, Cp:Cp + C].set(br1)

    w0 = w0.reshape(9, Cp, C2).astype(jnp.bfloat16)   # tap index j = 3*dy + dx
    w1 = w1.reshape(9, C2, C2).astype(jnp.bfloat16)

    x = jnp.transpose(x_nchw, (0, 2, 3, 1))                    # NCHW -> NHWC
    x = jnp.pad(x, ((0, 0), (0, 0), (0, 0), (0, Cp - C)))      # pad lanes
    x = x.astype(jnp.bfloat16)

    out = _decouple_pallas(x, w0, b0, w1, b1)                  # (N,H,W,2*Cp) f32
    cls_feats = jnp.transpose(out[..., :C], (0, 3, 1, 2))      # -> NCHW
    reg_feats = jnp.transpose(out[..., Cp:Cp + C], (0, 3, 1, 2))
    return cls_feats, reg_feats


def init_decouple_params(key, c):
    """Deterministic synthetic params for the 4 Conv(BN) blocks
    (order: cls.0, cls.1, reg.0, reg.1)."""
    params = []
    for i in range(4):
        k = jax.random.fold_in(key, i)
        kw, kg, kb, km, kv = jax.random.split(k, 5)
        w = jax.random.normal(kw, (3, 3, c, c), jnp.float32) * 0.1
        gamma = 1.0 + 0.1 * jax.random.normal(kg, (c,), jnp.float32)
        beta = 0.1 * jax.random.normal(kb, (c,), jnp.float32)
        mean = 0.1 * jax.random.normal(km, (c,), jnp.float32)
        var = jnp.abs(jax.random.normal(kv, (c,), jnp.float32)) + 0.5
        scale, bias = _fold_bn(gamma, beta, mean, var)
        params.append((w, scale, bias))
    return params


def _reference_layer(x_nhwc, w, scale, bias):
    y = jax.lax.conv_general_dilated(
        x_nhwc, w, window_strides=(1, 1), padding="SAME",
        dimension_numbers=("NHWC", "HWIO", "NHWC"),
    )
    y = y * scale + bias
    return y * jax.nn.sigmoid(y)


def _reference_forward(x_nchw, params):
    x = jnp.transpose(x_nchw, (0, 2, 3, 1))
    (w0, s0, b0), (w1, s1, b1), (w2, s2, b2), (w3, s3, b3) = params
    cls = _reference_layer(_reference_layer(x, w0, s0, b0), w1, s1, b1)
    reg = _reference_layer(_reference_layer(x, w2, s2, b2), w3, s3, b3)
    return (jnp.transpose(cls, (0, 3, 1, 2)),
            jnp.transpose(reg, (0, 3, 1, 2)))


if __name__ == "__main__":
    key = jax.random.PRNGKey(0)
    k_x, k_p = jax.random.split(key)

    N, C, H, W = 2, 4, 16, 16  # small NCHW input, matching the module contract
    x = jax.random.normal(k_x, (N, C, H, W), jnp.float32)
    params = init_decouple_params(k_p, C)

    cls_feats, reg_feats = decouple_forward(x, params)
    jax.block_until_ready((cls_feats, reg_feats))

    assert cls_feats.shape == (N, C, H, W)
    assert reg_feats.shape == (N, C, H, W)

    # Cross-check against a plain-JAX f32 reference (eval-mode BN semantics).
    # Tolerance widened vs. the f32 kernel because the matmuls now run in bf16.
    cls_ref, reg_ref = _reference_forward(x, params)
    assert jnp.allclose(cls_feats, cls_ref, atol=3e-2, rtol=3e-2)
    assert jnp.allclose(reg_feats, reg_ref, atol=3e-2, rtol=3e-2)

    print("KERNEL_OK")
</pallas_src>

<mosaic_0001>
module attributes {stable_mosaic.version = 11 : i64} {
  func.func @_decouple_kernel(%arg0: i32, %arg1: memref<1x16x16x128xbf16, #tpu.memory_space<vmem>>, %arg2: memref<9x128x256xbf16, #tpu.memory_space<vmem>>, %arg3: memref<1x256xf32, #tpu.memory_space<vmem>>, %arg4: memref<9x256x256xbf16, #tpu.memory_space<vmem>>, %arg5: memref<1x256xf32, #tpu.memory_space<vmem>>, %arg6: memref<1x16x16x256xf32, #tpu.memory_space<vmem>>, %arg7: memref<18x16x128xbf16, #tpu.memory_space<vmem>>, %arg8: memref<18x16x256xbf16, #tpu.memory_space<vmem>>, %arg9: memref<16x32x256xf32, #tpu.memory_space<vmem>>) attributes {dimension_semantics = [#tpu.dimension_semantics<parallel>], iteration_bounds = array<i64: 2>, scalar_prefetch = 0 : i64, scratch_operands = 3 : i64, tpu.core_type = #tpu.core_type<tc>, window_params = [{transform_indices = @transform_0, window_bounds = array<i64: 1, 16, 16, 128>}, {pipeline_mode = #tpu.pipeline_mode<synchronous>, transform_indices = @transform_1, window_bounds = array<i64: 9, 128, 256>}, {pipeline_mode = #tpu.pipeline_mode<synchronous>, transform_indices = @transform_2, window_bounds = array<i64: 1, 256>}, {pipeline_mode = #tpu.pipeline_mode<synchronous>, transform_indices = @transform_3, window_bounds = array<i64: 9, 256, 256>}, {pipeline_mode = #tpu.pipeline_mode<synchronous>, transform_indices = @transform_4, window_bounds = array<i64: 1, 256>}, {transform_indices = @transform_5, window_bounds = array<i64: 1, 16, 16, 256>}]} {
    %cst = arith.constant 0.000000e+00 : bf16
    %0 = vector.broadcast %cst : bf16 to vector<16x128xbf16>
    %c0 = arith.constant 0 : index
    %c0_0 = arith.constant 0 : index
    %c0_1 = arith.constant 0 : index
    %1 = vector.load %arg7[%c0, %c0_0, %c0_1] : memref<18x16x128xbf16, #tpu.memory_space<vmem>>, vector<1x16x128xbf16>
    %2 = vector.shape_cast %1 : vector<1x16x128xbf16> to vector<16x128xbf16>
    %3 = vector.shape_cast %0 : vector<16x128xbf16> to vector<1x16x128xbf16>
    tpu.vector_store %arg7[%c0, %c0_0, %c0_1], %3 {strides = array<i32>} : memref<18x16x128xbf16, #tpu.memory_space<vmem>>, vector<1x16x128xbf16>,
    %cst_2 = arith.constant 0.000000e+00 : bf16
    %4 = vector.broadcast %cst_2 : bf16 to vector<16x128xbf16>
    %c17 = arith.constant 17 : index
    %c0_3 = arith.constant 0 : index
    %c0_4 = arith.constant 0 : index
    %5 = vector.load %arg7[%c17, %c0_3, %c0_4] : memref<18x16x128xbf16, #tpu.memory_space<vmem>>, vector<1x16x128xbf16>
    %6 = vector.shape_cast %5 : vector<1x16x128xbf16> to vector<16x128xbf16>
    %7 = vector.shape_cast %4 : vector<16x128xbf16> to vector<1x16x128xbf16>
    tpu.vector_store %arg7[%c17, %c0_3, %c0_4], %7 {strides = array<i32>} : memref<18x16x128xbf16, #tpu.memory_space<vmem>>, vector<1x16x128xbf16>,
    %cst_5 = arith.constant 0.000000e+00 : bf16
    %8 = vector.broadcast %cst_5 : bf16 to vector<16x256xbf16>
    %c0_6 = arith.constant 0 : index
    %c0_7 = arith.constant 0 : index
    %c0_8 = arith.constant 0 : index
    %9 = vector.load %arg8[%c0_6, %c0_7, %c0_8] : memref<18x16x256xbf16, #tpu.memory_space<vmem>>, vector<1x16x256xbf16>
    %10 = vector.shape_cast %9 : vector<1x16x256xbf16> to vector<16x256xbf16>
    %11 = vector.shape_cast %8 : vector<16x256xbf16> to vector<1x16x256xbf16>
    tpu.vector_store %arg8[%c0_6, %c0_7, %c0_8], %11 {strides = array<i32>} : memref<18x16x256xbf16, #tpu.memory_space<vmem>>, vector<1x16x256xbf16>,
    %cst_9 = arith.constant 0.000000e+00 : bf16
    %12 = vector.broadcast %cst_9 : bf16 to vector<16x256xbf16>
    %c17_10 = arith.constant 17 : index
    %c0_11 = arith.constant 0 : index
    %c0_12 = arith.constant 0 : index
    %13 = vector.load %arg8[%c17_10, %c0_11, %c0_12] : memref<18x16x256xbf16, #tpu.memory_space<vmem>>, vector<1x16x256xbf16>
    %14 = vector.shape_cast %13 : vector<1x16x256xbf16> to vector<16x256xbf16>
    %15 = vector.shape_cast %12 : vector<16x256xbf16> to vector<1x16x256xbf16>
    tpu.vector_store %arg8[%c17_10, %c0_11, %c0_12], %15 {strides = array<i32>} : memref<18x16x256xbf16, #tpu.memory_space<vmem>>, vector<1x16x256xbf16>,
    %cst_13 = arith.constant 0.000000e+00 : f32
    %16 = vector.broadcast %cst_13 : f32 to vector<16x1x256xf32>
    %c0_14 = arith.constant 0 : index
    %c7 = arith.constant 7 : index
    %c0_15 = arith.constant 0 : index
    %17 = vector.load %arg9[%c0_14, %c7, %c0_15] : memref<16x32x256xf32, #tpu.memory_space<vmem>>, vector<16x1x256xf32>
    tpu.vector_store %arg9[%c0_14, %c7, %c0_15], %16 {strides = array<i32>} : memref<16x32x256xf32, #tpu.memory_space<vmem>>, vector<16x1x256xf32>,
    %cst_16 = arith.constant 0.000000e+00 : f32
    %18 = vector.broadcast %cst_16 : f32 to vector<16x1x256xf32>
    %c0_17 = arith.constant 0 : index
    %c24 = arith.constant 24 : index
    %c0_18 = arith.constant 0 : index
    %19 = vector.load %arg9[%c0_17, %c24, %c0_18] : memref<16x32x256xf32, #tpu.memory_space<vmem>>, vector<16x1x256xf32>
    tpu.vector_store %arg9[%c0_17, %c24, %c0_18], %18 {strides = array<i32>} : memref<16x32x256xf32, #tpu.memory_space<vmem>>, vector<16x1x256xf32>,
    %c0_19 = arith.constant 0 : index
    %c0_20 = arith.constant 0 : index
    %c0_21 = arith.constant 0 : index
    %c0_22 = arith.constant 0 : index
    %20 = vector.load %arg1[%c0_19, %c0_20, %c0_21, %c0_22] : memref<1x16x16x128xbf16, #tpu.memory_space<vmem>>, vector<1x16x16x128xbf16>
    %21 = vector.shape_cast %20 : vector<1x16x16x128xbf16> to vector<16x16x128xbf16>
    %c1 = arith.constant 1 : index
    %c0_23 = arith.constant 0 : index
    %c0_24 = arith.constant 0 : index
    %22 = vector.load %arg7[%c1, %c0_23, %c0_24] : memref<18x16x128xbf16, #tpu.memory_space<vmem>>, vector<16x16x128xbf16>
    tpu.vector_store %arg7[%c1, %c0_23, %c0_24], %21 {strides = array<i32>} : memref<18x16x128xbf16, #tpu.memory_space<vmem>>, vector<16x16x128xbf16>,
    %c0_25 = arith.constant 0 : index
    %c0_26 = arith.constant 0 : index
    %c0_27 = arith.constant 0 : index
    %23 = vector.load %arg7[%c0_25, %c0_26, %c0_27] : memref<18x16x128xbf16, #tpu.memory_space<vmem>>, vector<16x16x128xbf16>
    %24 = vector.shape_cast %23 : vector<16x16x128xbf16> to vector<256x128xbf16>
    %c1_28 = arith.constant 1 : index
    %c0_29 = arith.constant 0 : index
    %c0_30 = arith.constant 0 : index
    %25 = vector.load %arg7[%c1_28, %c0_29, %c0_30] : memref<18x16x128xbf16, #tpu.memory_space<vmem>>, vector<16x16x128xbf16>
    %26 = vector.shape_cast %25 : vector<16x16x128xbf16> to vector<256x128xbf16>
    %c2 = arith.constant 2 : index
    %c0_31 = arith.constant 0 : index
    %c0_32 = arith.constant 0 : index
    %27 = vector.load %arg7[%c2, %c0_31, %c0_32] : memref<18x16x128xbf16, #tpu.memory_space<vmem>>, vector<16x16x128xbf16>
    %28 = vector.shape_cast %27 : vector<16x16x128xbf16> to vector<256x128xbf16>
    %cst_33 = arith.constant 0.000000e+00 : f32
    %29 = vector.broadcast %cst_33 : f32 to vector<256x256xf32>
    %cst_34 = arith.constant 0.000000e+00 : f32
    %30 = vector.broadcast %cst_34 : f32 to vector<256x256xf32>
    %c0_35 = arith.constant 0 : index
    %c0_36 = arith.constant 0 : index
    %c0_37 = arith.constant 0 : index
    %31 = vector.load %arg2[%c0_35, %c0_36, %c0_37] : memref<9x128x256xbf16, #tpu.memory_space<vmem>>, vector<1x128x256xbf16>
    %32 = vector.shape_cast %31 : vector<1x128x256xbf16> to vector<128x256xbf16>
    %cst_38 = arith.constant dense<0.000000e+00> : vector<256x256xf32>
    %33 = tpu.matmul %24, %32, %cst_38 {dimension_numbers = #tpu.dot_dimension_numbers<[1], [0], [0], [1], [0, 0, 1, 1], [], []>} : vector<256x128xbf16>, vector<128x256xbf16>, vector<256x256xf32> -> vector<256x256xf32>
    %34 = arith.addf %30, %33 : vector<256x256xf32>
    %c3 = arith.constant 3 : index
    %c0_39 = arith.constant 0 : index
    %c0_40 = arith.constant 0 : index
    %35 = vector.load %arg2[%c3, %c0_39, %c0_40] : memref<9x128x256xbf16, #tpu.memory_space<vmem>>, vector<1x128x256xbf16>
    %36 = vector.shape_cast %35 : vector<1x128x256xbf16> to vector<128x256xbf16>
    %cst_41 = arith.constant dense<0.000000e+00> : vector<256x256xf32>
    %37 = tpu.matmul %26, %36, %cst_41 {dimension_numbers = #tpu.dot_dimension_numbers<[1], [0], [0], [1], [0, 0, 1, 1], [], []>} : vector<256x128xbf16>, vector<128x256xbf16>, vector<256x256xf32> -> vector<256x256xf32>
    %38 = arith.addf %34, %37 : vector<256x256xf32>
    %c6 = arith.constant 6 : index
    %c0_42 = arith.constant 0 : index
    %c0_43 = arith.constant 0 : index
    %39 = vector.load %arg2[%c6, %c0_42, %c0_43] : memref<9x128x256xbf16, #tpu.memory_space<vmem>>, vector<1x128x256xbf16>
    %40 = vector.shape_cast %39 : vector<1x128x256xbf16> to vector<128x256xbf16>
    %cst_44 = arith.constant dense<0.000000e+00> : vector<256x256xf32>
    %41 = tpu.matmul %28, %40, %cst_44 {dimension_numbers = #tpu.dot_dimension_numbers<[1], [0], [0], [1], [0, 0, 1, 1], [], []>} : vector<256x128xbf16>, vector<128x256xbf16>, vector<256x256xf32> -> vector<256x256xf32>
    %42 = arith.addf %38, %41 : vector<256x256xf32>
    %43 = vector.shape_cast %42 : vector<256x256xf32> to vector<16x16x256xf32>
    %c0_45 = arith.constant 0 : index
    %c8 = arith.constant 8 : index
    %c0_46 = arith.constant 0 : index
    %44 = vector.load %arg9[%c0_45, %c8, %c0_46] : memref<16x32x256xf32, #tpu.memory_space<vmem>>, vector<16x16x256xf32>
    tpu.vector_store %arg9[%c0_45, %c8, %c0_46], %43 {strides = array<i32>} : memref<16x32x256xf32, #tpu.memory_space<vmem>>, vector<16x16x256xf32>,
    %c0_47 = arith.constant 0 : index
    %c7_48 = arith.constant 7 : index
    %c0_49 = arith.constant 0 : index
    %45 = vector.load %arg9[%c0_47, %c7_48, %c0_49] : memref<16x32x256xf32, #tpu.memory_space<vmem>>, vector<16x16x256xf32>
    %46 = vector.shape_cast %45 : vector<16x16x256xf32> to vector<256x256xf32>
    %47 = arith.addf %29, %46 : vector<256x256xf32>
    %cst_50 = arith.constant 0.000000e+00 : f32
    %48 = vector.broadcast %cst_50 : f32 to vector<256x256xf32>
    %c1_51 = arith.constant 1 : index
    %c0_52 = arith.constant 0 : index
    %c0_53 = arith.constant 0 : index
    %49 = vector.load %arg2[%c1_51, %c0_52, %c0_53] : memref<9x128x256xbf16, #tpu.memory_space<vmem>>, vector<1x128x256xbf16>
    %50 = vector.shape_cast %49 : vector<1x128x256xbf16> to vector<128x256xbf16>
    %cst_54 = arith.constant dense<0.000000e+00> : vector<256x256xf32>
    %51 = tpu.matmul %24, %50, %cst_54 {dimension_numbers = #tpu.dot_dimension_numbers<[1], [0], [0], [1], [0, 0, 1, 1], [], []>} : vector<256x128xbf16>, vector<128x256xbf16>, vector<256x256xf32> -> vector<256x256xf32>
    %52 = arith.addf %48, %51 : vector<256x256xf32>
    %c4 = arith.constant 4 : index
    %c0_55 = arith.constant 0 : index
    %c0_56 = arith.constant 0 : index
    %53 = vector.load %arg2[%c4, %c0_55, %c0_56] : memref<9x128x256xbf16, #tpu.memory_space<vmem>>, vector<1x128x256xbf16>
    %54 = vector.shape_cast %53 : vector<1x128x256xbf16> to vector<128x256xbf16>
    %cst_57 = arith.constant dense<0.000000e+00> : vector<256x256xf32>
    %55 = tpu.matmul %26, %54, %cst_57 {dimension_numbers = #tpu.dot_dimension_numbers<[1], [0], [0], [1], [0, 0, 1, 1], [], []>} : vector<256x128xbf16>, vector<128x256xbf16>, vector<256x256xf32> -> vector<256x256xf32>
    %56 = arith.addf %52, %55 : vector<256x256xf32>
    %c7_58 = arith.constant 7 : index
    %c0_59 = arith.constant 0 : index
    %c0_60 = arith.constant 0 : index
    %57 = vector.load %arg2[%c7_58, %c0_59, %c0_60] : memref<9x128x256xbf16, #tpu.memory_space<vmem>>, vector<1x128x256xbf16>
    %58 = vector.shape_cast %57 : vector<1x128x256xbf16> to vector<128x256xbf16>
    %cst_61 = arith.constant dense<0.000000e+00> : vector<256x256xf32>
    %59 = tpu.matmul %28, %58, %cst_61 {dimension_numbers = #tpu.dot_dimension_numbers<[1], [0], [0], [1], [0, 0, 1, 1], [], []>} : vector<256x128xbf16>, vector<128x256xbf16>, vector<256x256xf32> -> vector<256x256xf32>
    %60 = arith.addf %56, %59 : vector<256x256xf32>
    %61 = arith.addf %47, %60 : vector<256x256xf32>
    %cst_62 = arith.constant 0.000000e+00 : f32
    %62 = vector.broadcast %cst_62 : f32 to vector<256x256xf32>
    %c2_63 = arith.constant 2 : index
    %c0_64 = arith.constant 0 : index
    %c0_65 = arith.constant 0 : index
    %63 = vector.load %arg2[%c2_63, %c0_64, %c0_65] : memref<9x128x256xbf16, #tpu.memory_space<vmem>>, vector<1x128x256xbf16>
    %64 = vector.shape_cast %63 : vector<1x128x256xbf16> to vector<128x256xbf16>
    %cst_66 = arith.constant dense<0.000000e+00> : vector<256x256xf32>
    %65 = tpu.matmul %24, %64, %cst_66 {dimension_numbers = #tpu.dot_dimension_numbers<[1], [0], [0], [1], [0, 0, 1, 1], [], []>} : vector<256x128xbf16>, vector<128x256xbf16>, vector<256x256xf32> -> vector<256x256xf32>
    %66 = arith.addf %62, %65 : vector<256x256xf32>
    %c5 = arith.constant 5 : index
    %c0_67 = arith.constant 0 : index
    %c0_68 = arith.constant 0 : index
    %67 = vector.load %arg2[%c5, %c0_67, %c0_68] : memref<9x128x256xbf16, #tpu.memory_space<vmem>>, vector<1x128x256xbf16>
    %68 = vector.shape_cast %67 : vector<1x128x256xbf16> to vector<128x256xbf16>
    %cst_69 = arith.constant dense<0.000000e+00> : vector<256x256xf32>
    %69 = tpu.matmul %26, %68, %cst_69 {dimension_numbers = #tpu.dot_dimension_numbers<[1], [0], [0], [1], [0, 0, 1, 1], [], []>} : vector<256x128xbf16>, vector<128x256xbf16>, vector<256x256xf32> -> vector<256x256xf32>
    %70 = arith.addf %66, %69 : vector<256x256xf32>
    %c8_70 = arith.constant 8 : index
    %c0_71 = arith.constant 0 : index
    %c0_72 = arith.constant 0 : index
    %71 = vector.load %arg2[%c8_70, %c0_71, %c0_72] : memref<9x128x256xbf16, #tpu.memory_space<vmem>>, vector<1x128x256xbf16>
    %72 = vector.shape_cast %71 : vector<1x128x256xbf16> to vector<128x256xbf16>
    %cst_73 = arith.constant dense<0.000000e+00> : vector<256x256xf32>
    %73 = tpu.matmul %28, %72, %cst_73 {dimension_numbers = #tpu.dot_dimension_numbers<[1], [0], [0], [1], [0, 0, 1, 1], [], []>} : vector<256x128xbf16>, vector<128x256xbf16>, vector<256x256xf32> -> vector<256x256xf32>
    %74 = arith.addf %70, %73 : vector<256x256xf32>
    %75 = vector.shape_cast %74 : vector<256x256xf32> to vector<16x16x256xf32>
    %c0_74 = arith.constant 0 : index
    %c8_75 = arith.constant 8 : index
    %c0_76 = arith.constant 0 : index
    %76 = vector.load %arg9[%c0_74, %c8_75, %c0_76] : memref<16x32x256xf32, #tpu.memory_space<vmem>>, vector<16x16x256xf32>
    tpu.vector_store %arg9[%c0_74, %c8_75, %c0_76], %75 {strides = array<i32>} : memref<16x32x256xf32, #tpu.memory_space<vmem>>, vector<16x16x256xf32>,
    %c0_77 = arith.constant 0 : index
    %c9 = arith.constant 9 : index
    %c0_78 = arith.constant 0 : index
    %77 = vector.load %arg9[%c0_77, %c9, %c0_78] : memref<16x32x256xf32, #tpu.memory_space<vmem>>, vector<16x16x256xf32>
    %78 = vector.shape_cast %77 : vector<16x16x256xf32> to vector<256x256xf32>
    %79 = arith.addf %61, %78 : vector<256x256xf32>
    %c0_79 = arith.constant 0 : index
    %c0_80 = arith.constant 0 : index
    %80 = vector.load %arg3[%c0_79, %c0_80] : memref<1x256xf32, #tpu.memory_space<vmem>>, vector<1x256xf32>
    %81 = vector.broadcast %80 : vector<1x256xf32> to vector<256x256xf32>
    %82 = arith.addf %79, %81 : vector<256x256xf32>
    %83 = arith.negf %82 : vector<256x256xf32>
    %84 = math.exp %83 : vector<256x256xf32>
    %cst_81 = arith.constant 1.000000e+00 : f32
    %85 = vector.broadcast %cst_81 : f32 to vector<256x256xf32>
    %86 = arith.addf %85, %84 : vector<256x256xf32>
    %87 = arith.divf %85, %86 : vector<256x256xf32>
    %88 = arith.mulf %82, %87 : vector<256x256xf32>
    %89 = vector.shape_cast %88 : vector<256x256xf32> to vector<16x16x256xf32>
    %90 = arith.truncf %89 : vector<16x16x256xf32> to vector<16x16x256xbf16>
    %c1_82 = arith.constant 1 : index
    %c0_83 = arith.constant 0 : index
    %c0_84 = arith.constant 0 : index
    %91 = vector.load %arg8[%c1_82, %c0_83, %c0_84] : memref<18x16x256xbf16, #tpu.memory_space<vmem>>, vector<16x16x256xbf16>
    tpu.vector_store %arg8[%c1_82, %c0_83, %c0_84], %90 {strides = array<i32>} : memref<18x16x256xbf16, #tpu.memory_space<vmem>>, vector<16x16x256xbf16>,
    %c0_85 = arith.constant 0 : index
    %c0_86 = arith.constant 0 : index
    %c0_87 = arith.constant 0 : index
    %92 = vector.load %arg8[%c0_85, %c0_86, %c0_87] : memref<18x16x256xbf16, #tpu.memory_space<vmem>>, vector<16x16x256xbf16>
    %93 = vector.shape_cast %92 : vector<16x16x256xbf16> to vector<256x256xbf16>
    %c1_88 = arith.constant 1 : index
    %c0_89 = arith.constant 0 : index
    %c0_90 = arith.constant 0 : index
    %94 = vector.load %arg8[%c1_88, %c0_89, %c0_90] : memref<18x16x256xbf16, #tpu.memory_space<vmem>>, vector<16x16x256xbf16>
    %95 = vector.shape_cast %94 : vector<16x16x256xbf16> to vector<256x256xbf16>
    %c2_91 = arith.constant 2 : index
    %c0_92 = arith.constant 0 : index
    %c0_93 = arith.constant 0 : index
    %96 = vector.load %arg8[%c2_91, %c0_92, %c0_93] : memref<18x16x256xbf16, #tpu.memory_space<vmem>>, vector<16x16x256xbf16>
    %97 = vector.shape_cast %96 : vector<16x16x256xbf16> to vector<256x256xbf16>
    %cst_94 = arith.constant 0.000000e+00 : f32
    %98 = vector.broadcast %cst_94 : f32 to vector<256x256xf32>
    %cst_95 = arith.constant 0.000000e+00 : f32
    %99 = vector.broadcast %cst_95 : f32 to vector<256x256xf32>
    %c0_96 = arith.constant 0 : index
    %c0_97 = arith.constant 0 : index
    %c0_98 = arith.constant 0 : index
    %100 = vector.load %arg4[%c0_96, %c0_97, %c0_98] : memref<9x256x256xbf16, #tpu.memory_space<vmem>>, vector<1x256x256xbf16>
    %101 = vector.shape_cast %100 : vector<1x256x256xbf16> to vector<256x256xbf16>
    %cst_99 = arith.constant dense<0.000000e+00> : vector<256x256xf32>
    %102 = tpu.matmul %93, %101, %cst_99 {dimension_numbers = #tpu.dot_dimension_numbers<[1], [0], [0], [1], [0, 0, 1, 1], [], []>} : vector<256x256xbf16>, vector<256x256xbf16>, vector<256x256xf32> -> vector<256x256xf32>
    %103 = arith.addf %99, %102 : vector<256x256xf32>
    %c3_100 = arith.constant 3 : index
    %c0_101 = arith.constant 0 : index
    %c0_102 = arith.constant 0 : index
    %104 = vector.load %arg4[%c3_100, %c0_101, %c0_102] : memref<9x256x256xbf16, #tpu.memory_space<vmem>>, vector<1x256x256xbf16>
    %105 = vector.shape_cast %104 : vector<1x256x256xbf16> to vector<256x256xbf16>
    %cst_103 = arith.constant dense<0.000000e+00> : vector<256x256xf32>
    %106 = tpu.matmul %95, %105, %cst_103 {dimension_numbers = #tpu.dot_dimension_numbers<[1], [0], [0], [1], [0, 0, 1, 1], [], []>} : vector<256x256xbf16>, vector<256x256xbf16>, vector<256x256xf32> -> vector<256x256xf32>
    %107 = arith.addf %103, %106 : vector<256x256xf32>
    %c6_104 = arith.constant 6 : index
    %c0_105 = arith.constant 0 : index
    %c0_106 = arith.constant 0 : index
    %108 = vector.load %arg4[%c6_104, %c0_105, %c0_106] : memref<9x256x256xbf16, #tpu.memory_space<vmem>>, vector<1x256x256xbf16>
    %109 = vector.shape_cast %108 : vector<1x256x256xbf16> to vector<256x256xbf16>
    %cst_107 = arith.constant dense<0.000000e+00> : vector<256x256xf32>
    %110 = tpu.matmul %97, %109, %cst_107 {dimension_numbers = #tpu.dot_dimension_numbers<[1], [0], [0], [1], [0, 0, 1, 1], [], []>} : vector<256x256xbf16>, vector<256x256xbf16>, vector<256x256xf32> -> vector<256x256xf32>
    %111 = arith.addf %107, %110 : vector<256x256xf32>
    %112 = vector.shape_cast %111 : vector<256x256xf32> to vector<16x16x256xf32>
    %c0_108 = arith.constant 0 : index
    %c8_109 = arith.constant 8 : index
    %c0_110 = arith.constant 0 : index
    %113 = vector.load %arg9[%c0_108, %c8_109, %c0_110] : memref<16x32x256xf32, #tpu.memory_space<vmem>>, vector<16x16x256xf32>
    tpu.vector_store %arg9[%c0_108, %c8_109, %c0_110], %112 {strides = array<i32>} : memref<16x32x256xf32, #tpu.memory_space<vmem>>, vector<16x16x256xf32>,
    %c0_111 = arith.constant 0 : index
    %c7_112 = arith.constant 7 : index
    %c0_113 = arith.constant 0 : index
    %114 = vector.load %arg9[%c0_111, %c7_112, %c0_113] : memref<16x32x256xf32, #tpu.memory_space<vmem>>, vector<16x16x256xf32>
    %115 = vector.shape_cast %114 : vector<16x16x256xf32> to vector<256x256xf32>
    %116 = arith.addf %98, %115 : vector<256x256xf32>
    %cst_114 = arith.constant 0.000000e+00 : f32
    %117 = vector.broadcast %cst_114 : f32 to vector<256x256xf32>
    %c1_115 = arith.constant 1 : index
    %c0_116 = arith.constant 0 : index
    %c0_117 = arith.constant 0 : index
    %118 = vector.load %arg4[%c1_115, %c0_116, %c0_117] : memref<9x256x256xbf16, #tpu.memory_space<vmem>>, vector<1x256x256xbf16>
    %119 = vector.shape_cast %118 : vector<1x256x256xbf16> to vector<256x256xbf16>
    %cst_118 = arith.constant dense<0.000000e+00> : vector<256x256xf32>
    %120 = tpu.matmul %93, %119, %cst_118 {dimension_numbers = #tpu.dot_dimension_numbers<[1], [0], [0], [1], [0, 0, 1, 1], [], []>} : vector<256x256xbf16>, vector<256x256xbf16>, vector<256x256xf32> -> vector<256x256xf32>
    %121 = arith.addf %117, %120 : vector<256x256xf32>
    %c4_119 = arith.constant 4 : index
    %c0_120 = arith.constant 0 : index
    %c0_121 = arith.constant 0 : index
    %122 = vector.load %arg4[%c4_119, %c0_120, %c0_121] : memref<9x256x256xbf16, #tpu.memory_space<vmem>>, vector<1x256x256xbf16>
    %123 = vector.shape_cast %122 : vector<1x256x256xbf16> to vector<256x256xbf16>
    %cst_122 = arith.constant dense<0.000000e+00> : vector<256x256xf32>
    %124 = tpu.matmul %95, %123, %cst_122 {dimension_numbers = #tpu.dot_dimension_numbers<[1], [0], [0], [1], [0, 0, 1, 1], [], []>} : vector<256x256xbf16>, vector<256x256xbf16>, vector<256x256xf32> -> vector<256x256xf32>
    %125 = arith.addf %121, %124 : vector<256x256xf32>
    %c7_123 = arith.constant 7 : index
    %c0_124 = arith.constant 0 : index
    %c0_125 = arith.constant 0 : index
    %126 = vector.load %arg4[%c7_123, %c0_124, %c0_125] : memref<9x256x256xbf16, #tpu.memory_space<vmem>>, vector<1x256x256xbf16>
    %127 = vector.shape_cast %126 : vector<1x256x256xbf16> to vector<256x256xbf16>
    %cst_126 = arith.constant dense<0.000000e+00> : vector<256x256xf32>
    %128 = tpu.matmul %97, %127, %cst_126 {dimension_numbers = #tpu.dot_dimension_numbers<[1], [0], [0], [1], [0, 0, 1, 1], [], []>} : vector<256x256xbf16>, vector<256x256xbf16>, vector<256x256xf32> -> vector<256x256xf32>
    %129 = arith.addf %125, %128 : vector<256x256xf32>
    %130 = arith.addf %116, %129 : vector<256x256xf32>
    %cst_127 = arith.constant 0.000000e+00 : f32
    %131 = vector.broadcast %cst_127 : f32 to vector<256x256xf32>
    %c2_128 = arith.constant 2 : index
    %c0_129 = arith.constant 0 : index
    %c0_130 = arith.constant 0 : index
    %132 = vector.load %arg4[%c2_128, %c0_129, %c0_130] : memref<9x256x256xbf16, #tpu.memory_space<vmem>>, vector<1x256x256xbf16>
    %133 = vector.shape_cast %132 : vector<1x256x256xbf16> to vector<256x256xbf16>
    %cst_131 = arith.constant dense<0.000000e+00> : vector<256x256xf32>
    %134 = tpu.matmul %93, %133, %cst_131 {dimension_numbers = #tpu.dot_dimension_numbers<[1], [0], [0], [1], [0, 0, 1, 1], [], []>} : vector<256x256xbf16>, vector<256x256xbf16>, vector<256x256xf32> -> vector<256x256xf32>
    %135 = arith.addf %131, %134 : vector<256x256xf32>
    %c5_132 = arith.constant 5 : index
    %c0_133 = arith.constant 0 : index
    %c0_134 = arith.constant 0 : index
    %136 = vector.load %arg4[%c5_132, %c0_133, %c0_134] : memref<9x256x256xbf16, #tpu.memory_space<vmem>>, vector<1x256x256xbf16>
    %137 = vector.shape_cast %136 : vector<1x256x256xbf16> to vector<256x256xbf16>
    %cst_135 = arith.constant dense<0.000000e+00> : vector<256x256xf32>
    %138 = tpu.matmul %95, %137, %cst_135 {dimension_numbers = #tpu.dot_dimension_numbers<[1], [0], [0], [1], [0, 0, 1, 1], [], []>} : vector<256x256xbf16>, vector<256x256xbf16>, vector<256x256xf32> -> vector<256x256xf32>
    %139 = arith.addf %135, %138 : vector<256x256xf32>
    %c8_136 = arith.constant 8 : index
    %c0_137 = arith.constant 0 : index
    %c0_138 = arith.constant 0 : index
    %140 = vector.load %arg4[%c8_136, %c0_137, %c0_138] : memref<9x256x256xbf16, #tpu.memory_space<vmem>>, vector<1x256x256xbf16>
    %141 = vector.shape_cast %140 : vector<1x256x256xbf16> to vector<256x256xbf16>
    %cst_139 = arith.constant dense<0.000000e+00> : vector<256x256xf32>
    %142 = tpu.matmul %97, %141, %cst_139 {dimension_numbers = #tpu.dot_dimension_numbers<[1], [0], [0], [1], [0, 0, 1, 1], [], []>} : vector<256x256xbf16>, vector<256x256xbf16>, vector<256x256xf32> -> vector<256x256xf32>
    %143 = arith.addf %139, %142 : vector<256x256xf32>
    %144 = vector.shape_cast %143 : vector<256x256xf32> to vector<16x16x256xf32>
    %c0_140 = arith.constant 0 : index
    %c8_141 = arith.constant 8 : index
    %c0_142 = arith.constant 0 : index
    %145 = vector.load %arg9[%c0_140, %c8_141, %c0_142] : memref<16x32x256xf32, #tpu.memory_space<vmem>>, vector<16x16x256xf32>
    tpu.vector_store %arg9[%c0_140, %c8_141, %c0_142], %144 {strides = array<i32>} : memref<16x32x256xf32, #tpu.memory_space<vmem>>, vector<16x16x256xf32>,
    %c0_143 = arith.constant 0 : index
    %c9_144 = arith.constant 9 : index
    %c0_145 = arith.constant 0 : index
    %146 = vector.load %arg9[%c0_143, %c9_144, %c0_145] : memref<16x32x256xf32, #tpu.memory_space<vmem>>, vector<16x16x256xf32>
    %147 = vector.shape_cast %146 : vector<16x16x256xf32> to vector<256x256xf32>
    %148 = arith.addf %130, %147 : vector<256x256xf32>
    %c0_146 = arith.constant 0 : index
    %c0_147 = arith.constant 0 : index
    %149 = vector.load %arg5[%c0_146, %c0_147] : memref<1x256xf32, #tpu.memory_space<vmem>>, vector<1x256xf32>
    %150 = vector.broadcast %149 : vector<1x256xf32> to vector<256x256xf32>
    %151 = arith.addf %148, %150 : vector<256x256xf32>
    %152 = arith.negf %151 : vector<256x256xf32>
    %153 = math.exp %152 : vector<256x256xf32>
    %cst_148 = arith.constant 1.000000e+00 : f32
    %154 = vector.broadcast %cst_148 : f32 to vector<256x256xf32>
    %155 = arith.addf %154, %153 : vector<256x256xf32>
    %156 = arith.divf %154, %155 : vector<256x256xf32>
    %157 = arith.mulf %151, %156 : vector<256x256xf32>
    %158 = vector.shape_cast %157 : vector<256x256xf32> to vector<16x16x256xf32>
    %c0_149 = arith.constant 0 : index
    %c0_150 = arith.constant 0 : index
    %c0_151 = arith.constant 0 : index
    %c0_152 = arith.constant 0 : index
    %159 = vector.load %arg6[%c0_149, %c0_150, %c0_151, %c0_152] : memref<1x16x16x256xf32, #tpu.memory_space<vmem>>, vector<1x16x16x256xf32>
    %160 = vector.shape_cast %159 : vector<1x16x16x256xf32> to vector<16x16x256xf32>
    %161 = vector.shape_cast %158 : vector<16x16x256xf32> to vector<1x16x16x256xf32>
    tpu.vector_store %arg6[%c0_149, %c0_150, %c0_151, %c0_152], %161 {strides = array<i32>} : memref<1x16x16x256xf32, #tpu.memory_space<vmem>>, vector<1x16x16x256xf32>,
    return
  }
  func.func @transform_0(%arg0: i32) -> (i32, i32, i32, i32) {
    %c0_i32 = arith.constant 0 : i32
    %c0_i32_0 = arith.constant 0 : i32
    %c0_i32_1 = arith.constant 0 : i32
    %c0_i32_2 = arith.constant 0 : i32
    return %arg0, %c0_i32, %c0_i32_0, %c0_i32_1 : i32, i32, i32, i32
  }
  func.func @transform_1(%arg0: i32) -> (i32, i32, i32) {
    %c0_i32 = arith.constant 0 : i32
    %c0_i32_0 = arith.constant 0 : i32
    %c0_i32_1 = arith.constant 0 : i32
    %c0_i32_2 = arith.constant 0 : i32
    return %c0_i32, %c0_i32_0, %c0_i32_1 : i32, i32, i32
  }
  func.func @transform_2(%arg0: i32) -> (i32, i32) {
    %c0_i32 = arith.constant 0 : i32
    %c0_i32_0 = arith.constant 0 : i32
    %c0_i32_1 = arith.constant 0 : i32
    return %c0_i32, %c0_i32_0 : i32, i32
  }
  func.func @transform_3(%arg0: i32) -> (i32, i32, i32) {
    %c0_i32 = arith.constant 0 : i32
    %c0_i32_0 = arith.constant 0 : i32
    %c0_i32_1 = arith.constant 0 : i32
    %c0_i32_2 = arith.constant 0 : i32
    return %c0_i32, %c0_i32_0, %c0_i32_1 : i32, i32, i32
  }
  func.func @transform_4(%arg0: i32) -> (i32, i32) {
    %c0_i32 = arith.constant 0 : i32
    %c0_i32_0 = arith.constant 0 : i32
    %c0_i32_1 = arith.constant 0 : i32
    return %c0_i32, %c0_i32_0 : i32, i32
  }
  func.func @transform_5(%arg0: i32) -> (i32, i32, i32, i32) {
    %c0_i32 = arith.constant 0 : i32
    %c0_i32_0 = arith.constant 0 : i32
    %c0_i32_1 = arith.constant 0 : i32
    %c0_i32_2 = arith.constant 0 : i32
    return %arg0, %c0_i32, %c0_i32_0, %c0_i32_1 : i32, i32, i32, i32
  }
}

</mosaic_0001>

<llo_original>
// kernel: decouple_forward.1
$region0: #{decouple_forward.1}
  #allocation0 [shape = 'u32[]', space=smem, size = 0x4, offset = 0x4, fixed_abs, tag = 'smem constant byte address 0x4 - core index']
  #allocation1 [shape = 'u32[144,128]{1,0:T(1,128)}', space=vmem, size = 0x12000, scoped, tag = 'internal scratch']
  #allocation2 [shape = 'bf16[18,16,128]{2,1,0:T(16,128)(2,1)}', space=vmem, size = 0x12000, scoped, tag = 'scratch operand']
  #allocation3 [shape = 'bf16[18,16,256]{2,1,0:T(16,128)(2,1)}', space=vmem, size = 0x24000, scoped, tag = 'scratch operand']
  #allocation4 [shape = 'f32[16,32,256]{2,1,0:T(8,128)}', space=vmem, size = 0x80000, scoped, tag = 'scratch operand']
  %s0 = inlined_call_operand.vmem [shape: bf16[2,16,16,128], index: 0, kind: input, shape index: {}]
  %s1 = inlined_call_operand.vmem [shape: bf16[9,128,256], index: 1, kind: input, shape index: {}]
  %s2 = inlined_call_operand.vmem [shape: f32[1,256], index: 2, kind: input, shape index: {}]
  %s3 = inlined_call_operand.vmem [shape: bf16[9,256,256], index: 3, kind: input, shape index: {}]
  %s4 = inlined_call_operand.vmem [shape: f32[1,256], index: 4, kind: input, shape index: {}]
  %s5 = inlined_call_operand.vmem [shape: f32[2,16,16,256], index: 5, kind: output, shape index: {}]
  %s6 = sld [smem:[#allocation0]]
  $region53: #{decouple_forward.1} parent=0
    _
  %s8 = ssub.s32 1, %s6
  %s9 = scalar_select 0, %s8, %s6
  loop: start=0, step=1, limit=4
  $region2: #{decouple_forward.1} parent=0 // loop_pre_header
    _
  $region3: #{decouple_forward.1} parent=0 // loop_header
    %s11 = sphi 0, %s15
    %p12 = scmp.ge.s32.totalorder %s11, 4
    %s21 = sphi 0, %s23
    %s24 = sphi 0, %s21
    %s25 = sphi 0, %s24
    %s41 = sphi 0, %s25
    %s45 = sphi 0, %s45
    %s47 = sphi 0, %s45
    %s48 = sphi 0, %s47
    %s62 = sphi 0, %s48
    %s66 = sphi 0, %s66
    %s68 = sphi 0, %s66
    %s69 = sphi 0, %s68
    %s83 = sphi 0, %s69
    %s87 = sphi 0, %s87
    %s89 = sphi 0, %s87
    %s90 = sphi 0, %s89
    %s104 = sphi 0, %s90
    %s108 = sphi 0, %s108
    %s110 = sphi 0, %s108
    %s111 = sphi 0, %s110
    %s125 = sphi 0, %s111
    %s131 = sphi 0, %s133
    %s134 = sphi 0, %s131
    %s135 = sphi 0, %s134
    %s151 = sphi 0, %s135
  $region4: #{decouple_forward.1} parent=0 // loop_header_branch
    %14 = sbr.rel (%p12) target = $region8
  $region5: #{decouple_forward.1} parent=0 // loop_body
    %s16 = ssub.s32 %s11, 1
    %s17 = ssub.s32 %s11, 2
    %s18 = sadd.s32 %s11, 1
    %s19 = ssub.s32 %s11, %s18
    %p20 = scmp.eq.s32.totalorder %s19, 0
    %s22 = sadd.s32 %s21, 1
    %s23 = scalar_select %p20, %s21, %s22
    %p26 = pneg %p20
    %p27 = scmp.eq.s32.totalorder %s11, 1
    %p28 = por %p26, %p27
    %p29 = scmp.ne.s32.totalorder %s21, %s24
    %p30 = scmp.eq.s32.totalorder %s11, 0
    %p31 = por %p29, %p30
    %p32 = scmp.ne.s32.totalorder %s21, %s24
    %p33 = scmp.eq.s32.totalorder %s16, 1
    %p34 = por %p32, %p33
    %p35 = scmp.ne.s32.totalorder %s24, %s25
    %p36 = scmp.eq.s32.totalorder %s16, 0
    %p37 = por %p35, %p36
    %p38 = scmp.ne.s32.totalorder %s24, %s25
    %p39 = scmp.eq.s32.totalorder %s17, 1
    %p40 = por %p38, %p39
    %p42 = scmp.ne.s32.totalorder %s25, %s41
    %p43 = scmp.eq.s32.totalorder %s17, 0
    %p44 = por %p42, %p43
    %s46 = sadd.s32 %s45, 1
    %p49 = scmp.eq.s32.totalorder %s11, 1
    %p50 = scmp.ne.s32.totalorder %s45, %s47
    %p51 = scmp.eq.s32.totalorder %s11, 0
    %p52 = por %p50, %p51
    %p53 = scmp.ne.s32.totalorder %s45, %s47
    %p54 = scmp.eq.s32.totalorder %s16, 1
    %p55 = por %p53, %p54
    %p56 = scmp.ne.s32.totalorder %s47, %s48
    %p57 = scmp.eq.s32.totalorder %s16, 0
    %p58 = por %p56, %p57
    %p59 = scmp.ne.s32.totalorder %s47, %s48
    %p60 = scmp.eq.s32.totalorder %s17, 1
    %p61 = por %p59, %p60
    %p63 = scmp.ne.s32.totalorder %s48, %s62
    %p64 = scmp.eq.s32.totalorder %s17, 0
    %p65 = por %p63, %p64
    %s67 = sadd.s32 %s66, 1
    %p70 = scmp.eq.s32.totalorder %s11, 1
    %p71 = scmp.ne.s32.totalorder %s66, %s68
    %p72 = scmp.eq.s32.totalorder %s11, 0
    %p73 = por %p71, %p72
    %p74 = scmp.ne.s32.totalorder %s66, %s68
    %p75 = scmp.eq.s32.totalorder %s16, 1
    %p76 = por %p74, %p75
    %p77 = scmp.ne.s32.totalorder %s68, %s69
    %p78 = scmp.eq.s32.totalorder %s16, 0
    %p79 = por %p77, %p78
    %p80 = scmp.ne.s32.totalorder %s68, %s69
    %p81 = scmp.eq.s32.totalorder %s17, 1
    %p82 = por %p80, %p81
    %p84 = scmp.ne.s32.totalorder %s69, %s83
    %p85 = scmp.eq.s32.totalorder %s17, 0
    %p86 = por %p84, %p85
    %s88 = sadd.s32 %s87, 1
    %p91 = scmp.eq.s32.totalorder %s11, 1
    %p92 = scmp.ne.s32.totalorder %s87, %s89
    %p93 = scmp.eq.s32.totalorder %s11, 0
    %p94 = por %p92, %p93
    %p95 = scmp.ne.s32.totalorder %s87, %s89
    %p96 = scmp.eq.s32.totalorder %s16, 1
    %p97 = por %p95, %p96
    %p98 = scmp.ne.s32.totalorder %s89, %s90
    %p99 = scmp.eq.s32.totalorder %s16, 0
    %p100 = por %p98, %p99
    %p101 = scmp.ne.s32.totalorder %s89, %s90
    %p102 = scmp.eq.s32.totalorder %s17, 1
    %p103 = por %p101, %p102
    %p105 = scmp.ne.s32.totalorder %s90, %s104
    %p106 = scmp.eq.s32.totalorder %s17, 0
    %p107 = por %p105, %p106
    %s109 = sadd.s32 %s108, 1
    %p112 = scmp.eq.s32.totalorder %s11, 1
    %p113 = scmp.ne.s32.totalorder %s108, %s110
    %p114 = scmp.eq.s32.totalorder %s11, 0
    %p115 = por %p113, %p114
    %p116 = scmp.ne.s32.totalorder %s108, %s110
    %p117 = scmp.eq.s32.totalorder %s16, 1
    %p118 = por %p116, %p117
    %p119 = scmp.ne.s32.totalorder %s110, %s111
    %p120 = scmp.eq.s32.totalorder %s16, 0
    %p121 = por %p119, %p120
    %p122 = scmp.ne.s32.totalorder %s110, %s111
    %p123 = scmp.eq.s32.totalorder %s17, 1
    %p124 = por %p122, %p123
    %p126 = scmp.ne.s32.totalorder %s111, %s125
    %p127 = scmp.eq.s32.totalorder %s17, 0
    %p128 = por %p126, %p127
    %s129 = ssub.s32 %s11, %s18
    %p130 = scmp.eq.s32.totalorder %s129, 0
    %s132 = sadd.s32 %s131, 1
    %s133 = scalar_select %p130, %s131, %s132
    %p136 = pneg %p130
    %p137 = scmp.eq.s32.totalorder %s11, 1
    %p138 = por %p136, %p137
    %p139 = scmp.ne.s32.totalorder %s131, %s134
    %p140 = scmp.eq.s32.totalorder %s11, 0
    %p141 = por %p139, %p140
    %p142 = scmp.ne.s32.totalorder %s131, %s134
    %p143 = scmp.eq.s32.totalorder %s16, 1
    %p144 = por %p142, %p143
    %p145 = scmp.ne.s32.totalorder %s134, %s135
    %p146 = scmp.eq.s32.totalorder %s16, 0
    %p147 = por %p145, %p146
    %p148 = scmp.ne.s32.totalorder %s134, %s135
    %p149 = scmp.eq.s32.totalorder %s17, 1
    %p150 = por %p148, %p149
    %p152 = scmp.ne.s32.totalorder %s135, %s151
    %p153 = scmp.eq.s32.totalorder %s17, 0
    %p154 = por %p152, %p153
    %p155 = scmp.le.s32.totalorder 1, %s11
    %p156 = scmp.lt.s32.totalorder %s11, 3
    %p157 = pnand %p155, %p156
    %p158 = pneg %p157
    // Predicated region
    $region9: #{decouple_forward.1} parent=5 // pred_check
      _
    $region10: #{decouple_forward.1} parent=5 // pred_check_branch
      %160 = sbr.rel (%p157) target = $region12
    $region11: #{decouple_forward.1} parent=5 // pred_region
      %s161 = ssub.s32 %s11, 1
      // Predicated region
      $region13: #{decouple_forward.1} parent=11 // pred_check
        %p162 = pneg %p58
      $region14: #{decouple_forward.1} parent=11 // pred_check_branch
        %164 = sbr.rel (%p162) target = $region16
      $region15: #{decouple_forward.1} parent=11 // pred_region
        _
      $region16: #{decouple_forward.1} parent=11 // pred_fallthru
        _
      // Predicated region
      $region17: #{decouple_forward.1} parent=11 // pred_check
        %p165 = pneg %p79
      $region18: #{decouple_forward.1} parent=11 // pred_check_branch
        %167 = sbr.rel (%p165) target = $region20
      $region19: #{decouple_forward.1} parent=11 // pred_region
        _
      $region20: #{decouple_forward.1} parent=11 // pred_fallthru
        _
      // Predicated region
      $region21: #{decouple_forward.1} parent=11 // pred_check
        %p168 = pneg %p100
      $region22: #{decouple_forward.1} parent=11 // pred_check_branch
        %170 = sbr.rel (%p168) target = $region24
      $region23: #{decouple_forward.1} parent=11 // pred_region
        _
      $region24: #{decouple_forward.1} parent=11 // pred_fallthru
        _
      // Predicated region
      $region25: #{decouple_forward.1} parent=11 // pred_check
        %p171 = pneg %p121
      $region26: #{decouple_forward.1} parent=11 // pred_check_branch
        %173 = sbr.rel (%p171) target = $region28
      $region27: #{decouple_forward.1} parent=11 // pred_region
        _
      $region28: #{decouple_forward.1} parent=11 // pred_fallthru
        _
    $region12: #{decouple_forward.1} parent=5 // pred_fallthru
      _
    %p174 = scmp.lt.s32.totalorder %s11, 2
    // Predicated region
    $region29: #{decouple_forward.1} parent=5 // pred_check
      %p175 = pneg %p174
    $region30: #{decouple_forward.1} parent=5 // pred_check_branch
      %177 = sbr.rel (%p175) target = $region32
    $region31: #{decouple_forward.1} parent=5 // pred_region
      // Predicated region
      $region33: #{decouple_forward.1} parent=31 // pred_check
        %p178 = pneg %p31
      $region34: #{decouple_forward.1} parent=31 // pred_check_branch
        %180 = sbr.rel (%p178) target = $region36
      $region35: #{decouple_forward.1} parent=31 // pred_region
        %p181 = scmp.lt.s32.totalorder %s11, 1
        %s182 = scalar_select %p181, %s11, 1
        %s183 = smul.addr %s182, 32
        %s184 = smul.addr %s183, 4
        %s185 = scalar_lea.vmem %s0, %s184
      $region36: #{decouple_forward.1} parent=31 // pred_fallthru
        _
    $region32: #{decouple_forward.1} parent=5 // pred_fallthru
      _
    %p186 = scmp.le.s32.totalorder 1, %s11
    %p187 = scmp.lt.s32.totalorder %s11, 3
    %p188 = pnand %p186, %p187
    %p189 = pneg %p188
    // Predicated region
    $region37: #{decouple_forward.1} parent=5 // pred_check
      _
    $region38: #{decouple_forward.1} parent=5 // pred_check_branch
      %191 = sbr.rel (%p188) target = $region40
    $region39: #{decouple_forward.1} parent=5 // pred_region
      %s192 = ssub.s32 %s11, 1
      %p193 = scmp.lt.s32.totalorder %s16, 1
      %s194 = scalar_select %p193, %s16, 1
      %s195 = smul.addr %s194, 32
      %s196 = smul.addr %s195, 4
      %s197 = scalar_lea.vmem %s0, %s196
      %p198 = pneg %p37
      %p199 = pneg %p34
      %p200 = pneg %p58
      %p201 = pneg %p55
      %p202 = pneg %p79
      %p203 = pneg %p76
      %p204 = pneg %p100
      %p205 = pneg %p97
      %p206 = pneg %p121
      %p207 = pneg %p118
      %p208 = pneg %p147
      %p209 = pneg %p144
      %p210 = scmp.lt.s32.totalorder %s16, 1
      %s211 = scalar_select %p210, %s16, 1
      %s212 = smul.addr %s211, 64
      %s213 = smul.addr %s212, 8
      %s214 = scalar_lea.vmem %s5, %s213
      %p215 = scmp.lt.s32.totalorder %s16, 1
      %s216 = scalar_select %p215, %s16, 1
      %s217 = smul.addr %s216, 32
      %s218 = smul.addr %s217, 4
      %s219 = scalar_lea.vmem %s0, %s218
      %p220 = scmp.lt.s32.totalorder %s16, 1
      %s221 = scalar_select %p220, %s16, 1
      %s222 = smul.addr %s221, 64
      %s223 = smul.addr %s222, 8
      %s224 = scalar_lea.vmem %s5, %s223
      %226 = vst [vmem:[#allocation2] sm:$0xff] 0
      %s227 = scalar_lea.vmem [#allocation2], 136
      %228 = vst [vmem:[%s227] sm:$0xff] 0
      %229 = vst [vmem:[#allocation3] sm:$0xff] 0
      %230 = vst [vmem:[#allocation3 + $0x8] sm:$0xff] 0
      %s231 = scalar_lea.vmem [#allocation3], 272
      %232 = vst [vmem:[%s231] sm:$0xff] 0
      %233 = vst [vmem:[%s231 + $0x8] sm:$0xff] 0
      %v234 = vlaneseq
      %vm235 = vcmp.ge.s32.totalorder %v234, 0
      %vm236 = vcmp.lt.s32.totalorder %v234, 256
      %vm237 = vmand %vm235, %vm236
      %s238 = scalar_lea.vmem [#allocation4], 7
      %239 = vst.msk [vmem:[%s238] ss:$8 sm:$0x3] %vm237, 0.0
      %240 = vst.msk [vmem:[%s238] ss:$8 sm:$0x0] %vm237, 0.0
      %s241 = scalar_lea.vmem [#allocation4], 71
      %242 = vst.msk [vmem:[%s241] ss:$8 sm:$0x3] %vm237, 0.0
      %243 = vst.msk [vmem:[%s241] ss:$8 sm:$0x0] %vm237, 0.0
      %s244 = scalar_lea.vmem [#allocation4], 135
      %245 = vst.msk [vmem:[%s244] ss:$8 sm:$0x3] %vm237, 0.0
      %246 = vst.msk [vmem:[%s244] ss:$8 sm:$0x0] %vm237, 0.0
      %s247 = scalar_lea.vmem [#allocation4], 199
      %248 = vst.msk [vmem:[%s247] ss:$8 sm:$0x3] %vm237, 0.0
      %249 = vst.msk [vmem:[%s247] ss:$8 sm:$0x0] %vm237, 0.0
      %s250 = scalar_lea.vmem [#allocation4], 263
      %251 = vst.msk [vmem:[%s250] ss:$8 sm:$0x3] %vm237, 0.0
      %252 = vst.msk [vmem:[%s250] ss:$8 sm:$0x0] %vm237, 0.0
      %s253 = scalar_lea.vmem [#allocation4], 327
      %254 = vst.msk [vmem:[%s253] ss:$8 sm:$0x3] %vm237, 0.0
      %255 = vst.msk [vmem:[%s253] ss:$8 sm:$0x0] %vm237, 0.0
      %s256 = scalar_lea.vmem [#allocation4], 391
      %257 = vst.msk [vmem:[%s256] ss:$8 sm:$0x3] %vm237, 0.0
      %258 = vst.msk [vmem:[%s256] ss:$8 sm:$0x0] %vm237, 0.0
      %s259 = scalar_lea.vmem [#allocation4], 455
      %260 = vst.msk [vmem:[%s259] ss:$8 sm:$0x3] %vm237, 0.0
      %261 = vst.msk [vmem:[%s259] ss:$8 sm:$0x0] %vm237, 0.0
      %s262 = scalar_lea.vmem [#allocation4], 519
      %263 = vst.msk [vmem:[%s262] ss:$8 sm:$0x3] %vm237, 0.0
      %264 = vst.msk [vmem:[%s262] ss:$8 sm:$0x0] %vm237, 0.0
      %s265 = scalar_lea.vmem [#allocation4], 583
      %266 = vst.msk [vmem:[%s265] ss:$8 sm:$0x3] %vm237, 0.0
      %267 = vst.msk [vmem:[%s265] ss:$8 sm:$0x0] %vm237, 0.0
      %s268 = scalar_lea.vmem [#allocation4], 647
      %269 = vst.msk [vmem:[%s268] ss:$8 sm:$0x3] %vm237, 0.0
      %270 = vst.msk [vmem:[%s268] ss:$8 sm:$0x0] %vm237, 0.0
      %s271 = scalar_lea.vmem [#allocation4], 711
      %272 = vst.msk [vmem:[%s271] ss:$8 sm:$0x3] %vm237, 0.0
      %273 = vst.msk [vmem:[%s271] ss:$8 sm:$0x0] %vm237, 0.0
      %s274 = scalar_lea.vmem [#allocation4], 775
      %275 = vst.msk [vmem:[%s274] ss:$8 sm:$0x3] %vm237, 0.0
      %276 = vst.msk [vmem:[%s274] ss:$8 sm:$0x0] %vm237, 0.0
      %s277 = scalar_lea.vmem [#allocation4], 839
      %278 = vst.msk [vmem:[%s277] ss:$8 sm:$0x3] %vm237, 0.0
      %279 = vst.msk [vmem:[%s277] ss:$8 sm:$0x0] %vm237, 0.0
      %s280 = scalar_lea.vmem [#allocation4], 903
      %281 = vst.msk [vmem:[%s280] ss:$8 sm:$0x3] %vm237, 0.0
      %282 = vst.msk [vmem:[%s280] ss:$8 sm:$0x0] %vm237, 0.0
      %s283 = scalar_lea.vmem [#allocation4], 967
      %284 = vst.msk [vmem:[%s283] ss:$8 sm:$0x3] %vm237, 0.0
      %285 = vst.msk [vmem:[%s283] ss:$8 sm:$0x0] %vm237, 0.0
      %s286 = scalar_lea.vmem [#allocation4], 48
      %287 = vst.msk [vmem:[%s286] ss:$8 sm:$0x3] %vm237, 0.0
      %288 = vst.msk [vmem:[%s286] ss:$8 sm:$0x0] %vm237, 0.0
      %s289 = scalar_lea.vmem [#allocation4], 112
      %290 = vst.msk [vmem:[%s289] ss:$8 sm:$0x3] %vm237, 0.0
      %291 = vst.msk [vmem:[%s289] ss:$8 sm:$0x0] %vm237, 0.0
      %s292 = scalar_lea.vmem [#allocation4], 176
      %293 = vst.msk [vmem:[%s292] ss:$8 sm:$0x3] %vm237, 0.0
      %294 = vst.msk [vmem:[%s292] ss:$8 sm:$0x0] %vm237, 0.0
      %s295 = scalar_lea.vmem [#allocation4], 240
      %296 = vst.msk [vmem:[%s295] ss:$8 sm:$0x3] %vm237, 0.0
      %297 = vst.msk [vmem:[%s295] ss:$8 sm:$0x0] %vm237, 0.0
      %s298 = scalar_lea.vmem [#allocation4], 304
      %299 = vst.msk [vmem:[%s298] ss:$8 sm:$0x3] %vm237, 0.0
      %300 = vst.msk [vmem:[%s298] ss:$8 sm:$0x0] %vm237, 0.0
      %s301 = scalar_lea.vmem [#allocation4], 368
      %302 = vst.msk [vmem:[%s301] ss:$8 sm:$0x3] %vm237, 0.0
      %303 = vst.msk [vmem:[%s301] ss:$8 sm:$0x0] %vm237, 0.0
      %s304 = scalar_lea.vmem [#allocation4], 432
      %305 = vst.msk [vmem:[%s304] ss:$8 sm:$0x3] %vm237, 0.0
      %306 = vst.msk [vmem:[%s304] ss:$8 sm:$0x0] %vm237, 0.0
      %s307 = scalar_lea.vmem [#allocation4], 496
      %308 = vst.msk [vmem:[%s307] ss:$8 sm:$0x3] %vm237, 0.0
      %309 = vst.msk [vmem:[%s307] ss:$8 sm:$0x0] %vm237, 0.0
      %s310 = scalar_lea.vmem [#allocation4], 560
      %311 = vst.msk [vmem:[%s310] ss:$8 sm:$0x3] %vm237, 0.0
      %312 = vst.msk [vmem:[%s310] ss:$8 sm:$0x0] %vm237, 0.0
      %s313 = scalar_lea.vmem [#allocation4], 624
      %314 = vst.msk [vmem:[%s313] ss:$8 sm:$0x3] %vm237, 0.0
      %315 = vst.msk [vmem:[%s313] ss:$8 sm:$0x0] %vm237, 0.0
      %s316 = scalar_lea.vmem [#allocation4], 688
      %317 = vst.msk [vmem:[%s316] ss:$8 sm:$0x3] %vm237, 0.0
      %318 = vst.msk [vmem:[%s316] ss:$8 sm:$0x0] %vm237, 0.0
      %s319 = scalar_lea.vmem [#allocation4], 752
      %320 = vst.msk [vmem:[%s319] ss:$8 sm:$0x3] %vm237, 0.0
      %321 = vst.msk [vmem:[%s319] ss:$8 sm:$0x0] %vm237, 0.0
      %s322 = scalar_lea.vmem [#allocation4], 816
      %323 = vst.msk [vmem:[%s322] ss:$8 sm:$0x3] %vm237, 0.0
      %324 = vst.msk [vmem:[%s322] ss:$8 sm:$0x0] %vm237, 0.0
      %s325 = scalar_lea.vmem [#allocation4], 880
      %326 = vst.msk [vmem:[%s325] ss:$8 sm:$0x3] %vm237, 0.0
      %327 = vst.msk [vmem:[%s325] ss:$8 sm:$0x0] %vm237, 0.0
      %s328 = scalar_lea.vmem [#allocation4], 944
      %329 = vst.msk [vmem:[%s328] ss:$8 sm:$0x3] %vm237, 0.0
      %330 = vst.msk [vmem:[%s328] ss:$8 sm:$0x0] %vm237, 0.0
      %s331 = scalar_lea.vmem [#allocation4], 1008
      %332 = vst.msk [vmem:[%s331] ss:$8 sm:$0x3] %vm237, 0.0
      %333 = vst.msk [vmem:[%s331] ss:$8 sm:$0x0] %vm237, 0.0
      %v334 = vld [vmem:[%s219] sm:$0xf]
      %v335 = vld [vmem:[%s219 + $0x4] sm:$0xf]
      %v336 = vld [vmem:[%s219 + $0x8] sm:$0xf]
      %v337 = vld [vmem:[%s219 + $0xc] sm:$0xf]
      %v338 = vld [vmem:[%s219 + $0x10] sm:$0xf]
      %v339 = vld [vmem:[%s219 + $0x14] sm:$0xf]
      %v340 = vld [vmem:[%s219 + $0x18] sm:$0xf]
      %v341 = vld [vmem:[%s219 + $0x1c] sm:$0xf]
      %v342 = vld [vmem:[%s219 + $0x20] sm:$0xf]
      %v343 = vld [vmem:[%s219 + $0x24] sm:$0xf]
      %v344 = vld [vmem:[%s219 + $0x28] sm:$0xf]
      %v345 = vld [vmem:[%s219 + $0x2c] sm:$0xf]
      %v346 = vld [vmem:[%s219 + $0x30] sm:$0xf]
      %v347 = vld [vmem:[%s219 + $0x34] sm:$0xf]
      %v348 = vld [vmem:[%s219 + $0x38] sm:$0xf]
      %v349 = vld [vmem:[%s219 + $0x3c] sm:$0xf]
      %v350 = vld [vmem:[%s219 + $0x40] sm:$0xf]
      %v351 = vld [vmem:[%s219 + $0x44] sm:$0xf]
      %v352 = vld [vmem:[%s219 + $0x48] sm:$0xf]
      %v353 = vld [vmem:[%s219 + $0x4c] sm:$0xf]
      %v354 = vld [vmem:[%s219 + $0x50] sm:$0xf]
      %v355 = vld [vmem:[%s219 + $0x54] sm:$0xf]
      %v356 = vld [vmem:[%s219 + $0x58] sm:$0xf]
      %v357 = vld [vmem:[%s219 + $0x5c] sm:$0xf]
      %v358 = vld [vmem:[%s219 + $0x60] sm:$0xf]
      %v359 = vld [vmem:[%s219 + $0x64] sm:$0xf]
      %v360 = vld [vmem:[%s219 + $0x68] sm:$0xf]
      %v361 = vld [vmem:[%s219 + $0x6c] sm:$0xf]
      %v362 = vld [vmem:[%s219 + $0x70] sm:$0xf]
      %v363 = vld [vmem:[%s219 + $0x74] sm:$0xf]
      %v364 = vld [vmem:[%s219 + $0x78] sm:$0xf]
      %v365 = vld [vmem:[%s219 + $0x7c] sm:$0xf]
      %v398 = vunpack.c.l.b16 %v334
      %v399 = vunpack.c.l.b16 %v335
      %v400 = vunpack.c.l.b16 %v336
      %v401 = vunpack.c.l.b16 %v337
      %v402 = vunpack.c.l.b16 %v338
      %v403 = vunpack.c.l.b16 %v339
      %v404 = vunpack.c.l.b16 %v340
      %v405 = vunpack.c.l.b16 %v341
      %v406 = vunpack.c.l.b16 %v342
      %v407 = vunpack.c.l.b16 %v343
      %v408 = vunpack.c.l.b16 %v344
      %v409 = vunpack.c.l.b16 %v345
      %v410 = vunpack.c.l.b16 %v346
      %v411 = vunpack.c.l.b16 %v347
      %v412 = vunpack.c.l.b16 %v348
      %v413 = vunpack.c.l.b16 %v349
      %v414 = vunpack.c.l.b16 %v350
      %v415 = vunpack.c.l.b16 %v351
      %v416 = vunpack.c.l.b16 %v352
      %v417 = vunpack.c.l.b16 %v353
      %v418 = vunpack.c.l.b16 %v354
      %v419 = vunpack.c.l.b16 %v355
      %v420 = vunpack.c.l.b16 %v356
      %v421 = vunpack.c.l.b16 %v357
      %v422 = vunpack.c.l.b16 %v358
      %v423 = vunpack.c.l.b16 %v359
      %v424 = vunpack.c.l.b16 %v360
      %v425 = vunpack.c.l.b16 %v361
      %v426 = vunpack.c.l.b16 %v362
      %v427 = vunpack.c.l.b16 %v363
      %v428 = vunpack.c.l.b16 %v364
      %v429 = vunpack.c.l.b16 %v365
      %v430 = vpack.c.b16 %v399, %v398
      %v431 = vpack.c.b16 %v401, %v400
      %v432 = vpack.c.b16 %v403, %v402
      %v433 = vpack.c.b16 %v405, %v404
      %v434 = vpack.c.b16 %v407, %v406
      %v435 = vpack.c.b16 %v409, %v408
      %v436 = vpack.c.b16 %v411, %v410
      %v437 = vpack.c.b16 %v413, %v412
      %v438 = vpack.c.b16 %v415, %v414
      %v439 = vpack.c.b16 %v417, %v416
      %v440 = vpack.c.b16 %v419, %v418
      %v441 = vpack.c.b16 %v421, %v420
      %v442 = vpack.c.b16 %v423, %v422
      %v443 = vpack.c.b16 %v425, %v424
      %v444 = vpack.c.b16 %v427, %v426
      %v445 = vpack.c.b16 %v429, %v428
      %s462 = scalar_lea.vmem [#allocation2], 8
      %463 = vst [vmem:[%s462] sm:$0xff] %v430
      %464 = vst [vmem:[%s462 + $0x8] sm:$0xff] %v431
      %465 = vst [vmem:[%s462 + $0x10] sm:$0xff] %v432
      %466 = vst [vmem:[%s462 + $0x18] sm:$0xff] %v433
      %467 = vst [vmem:[%s462 + $0x20] sm:$0xff] %v434
      %468 = vst [vmem:[%s462 + $0x28] sm:$0xff] %v435
      %469 = vst [vmem:[%s462 + $0x30] sm:$0xff] %v436
      %470 = vst [vmem:[%s462 + $0x38] sm:$0xff] %v437
      %471 = vst [vmem:[%s462 + $0x40] sm:$0xff] %v438
      %472 = vst [vmem:[%s462 + $0x48] sm:$0xff] %v439
      %473 = vst [vmem:[%s462 + $0x50] sm:$0xff] %v440
      %474 = vst [vmem:[%s462 + $0x58] sm:$0xff] %v441
      %475 = vst [vmem:[%s462 + $0x60] sm:$0xff] %v442
      %476 = vst [vmem:[%s462 + $0x68] sm:$0xff] %v443
      %477 = vst [vmem:[%s462 + $0x70] sm:$0xff] %v444
      %478 = vst [vmem:[%s462 + $0x78] sm:$0xff] %v445
      %v479 = vld [vmem:[#allocation2] sm:$0xff]
      %v480 = vld [vmem:[#allocation2 + $0x8] sm:$0xff]
      %v481 = vld [vmem:[#allocation2 + $0x10] sm:$0xff]
      %v482 = vld [vmem:[#allocation2 + $0x18] sm:$0xff]
      %v483 = vld [vmem:[#allocation2 + $0x20] sm:$0xff]
      %v484 = vld [vmem:[#allocation2 + $0x28] sm:$0xff]
      %v485 = vld [vmem:[#allocation2 + $0x30] sm:$0xff]
      %v486 = vld [vmem:[#allocation2 + $0x38] sm:$0xff]
      %v487 = vld [vmem:[#allocation2 + $0x40] sm:$0xff]
      %v488 = vld [vmem:[#allocation2 + $0x48] sm:$0xff]
      %v489 = vld [vmem:[#allocation2 + $0x50] sm:$0xff]
      %v490 = vld [vmem:[#allocation2 + $0x58] sm:$0xff]
      %v491 = vld [vmem:[#allocation2 + $0x60] sm:$0xff]
      %v492 = vld [vmem:[#allocation2 + $0x68] sm:$0xff]
      %v493 = vld [vmem:[#allocation2 + $0x70] sm:$0xff]
      %v494 = vld [vmem:[#allocation2 + $0x78] sm:$0xff]
      %v495 = vld [vmem:[%s462] sm:$0xff]
      %v496 = vld [vmem:[%s462 + $0x8] sm:$0xff]
      %v497 = vld [vmem:[%s462 + $0x10] sm:$0xff]
      %v498 = vld [vmem:[%s462 + $0x18] sm:$0xff]
      %v499 = vld [vmem:[%s462 + $0x20] sm:$0xff]
      %v500 = vld [vmem:[%s462 + $0x28] sm:$0xff]
      %v501 = vld [vmem:[%s462 + $0x30] sm:$0xff]
      %v502 = vld [vmem:[%s462 + $0x38] sm:$0xff]
      %v503 = vld [vmem:[%s462 + $0x40] sm:$0xff]
      %v504 = vld [vmem:[%s462 + $0x48] sm:$0xff]
      %v505 = vld [vmem:[%s462 + $0x50] sm:$0xff]
      %v506 = vld [vmem:[%s462 + $0x58] sm:$0xff]
      %v507 = vld [vmem:[%s462 + $0x60] sm:$0xff]
      %v508 = vld [vmem:[%s462 + $0x68] sm:$0xff]
      %v509 = vld [vmem:[%s462 + $0x70] sm:$0xff]
      %v510 = vld [vmem:[%s462 + $0x78] sm:$0xff]
      %s511 = scalar_lea.vmem [#allocation2], 16
      %v512 = vld [vmem:[%s511] sm:$0xff]
      %v513 = vld [vmem:[%s511 + $0x8] sm:$0xff]
      %v514 = vld [vmem:[%s511 + $0x10] sm:$0xff]
      %v515 = vld [vmem:[%s511 + $0x18] sm:$0xff]
      %v516 = vld [vmem:[%s511 + $0x20] sm:$0xff]
      %v517 = vld [vmem:[%s511 + $0x28] sm:$0xff]
      %v518 = vld [vmem:[%s511 + $0x30] sm:$0xff]
      %v519 = vld [vmem:[%s511 + $0x38] sm:$0xff]
      %v520 = vld [vmem:[%s511 + $0x40] sm:$0xff]
      %v521 = vld [vmem:[%s511 + $0x48] sm:$0xff]
      %v522 = vld [vmem:[%s511 + $0x50] sm:$0xff]
      %v523 = vld [vmem:[%s511 + $0x58] sm:$0xff]
      %v524 = vld [vmem:[%s511 + $0x60] sm:$0xff]
      %v525 = vld [vmem:[%s511 + $0x68] sm:$0xff]
      %v526 = vld [vmem:[%s511 + $0x70] sm:$0xff]
      %v527 = vld [vmem:[%s511 + $0x78] sm:$0xff]
      %v528 = vld [vmem:[%s1] sm:$0xff]
      %v529 = vld [vmem:[%s1 + $0x8] sm:$0xff]
      %v530 = vld [vmem:[%s1 + $0x10] sm:$0xff]
      %v531 = vld [vmem:[%s1 + $0x18] sm:$0xff]
      %v532 = vld [vmem:[%s1 + $0x20] sm:$0xff]
      %v533 = vld [vmem:[%s1 + $0x28] sm:$0xff]
      %v534 = vld [vmem:[%s1 + $0x30] sm:$0xff]
      %v535 = vld [vmem:[%s1 + $0x38] sm:$0xff]
      %v536 = vld [vmem:[%s1 + $0x40] sm:$0xff]
      %v537 = vld [vmem:[%s1 + $0x48] sm:$0xff]
      %v538 = vld [vmem:[%s1 + $0x50] sm:$0xff]
      %v539 = vld [vmem:[%s1 + $0x58] sm:$0xff]
      %v540 = vld [vmem:[%s1 + $0x60] sm:$0xff]
      %v541 = vld [vmem:[%s1 + $0x68] sm:$0xff]
      %v542 = vld [vmem:[%s1 + $0x70] sm:$0xff]
      %v543 = vld [vmem:[%s1 + $0x78] sm:$0xff]
      %s544 = scalar_lea.vmem %s1, 384
      %v545 = vld [vmem:[%s544] sm:$0xff]
      %v546 = vld [vmem:[%s544 + $0x8] sm:$0xff]
      %v547 = vld [vmem:[%s544 + $0x10] sm:$0xff]
      %v548 = vld [vmem:[%s544 + $0x18] sm:$0xff]
      %v549 = vld [vmem:[%s544 + $0x20] sm:$0xff]
      %v550 = vld [vmem:[%s544 + $0x28] sm:$0xff]
      %v551 = vld [vmem:[%s544 + $0x30] sm:$0xff]
      %v552 = vld [vmem:[%s544 + $0x38] sm:$0xff]
      %v553 = vld [vmem:[%s544 + $0x40] sm:$0xff]
      %v554 = vld [vmem:[%s544 + $0x48] sm:$0xff]
      %v555 = vld [vmem:[%s544 + $0x50] sm:$0xff]
      %v556 = vld [vmem:[%s544 + $0x58] sm:$0xff]
      %v557 = vld [vmem:[%s544 + $0x60] sm:$0xff]
      %v558 = vld [vmem:[%s544 + $0x68] sm:$0xff]
      %v559 = vld [vmem:[%s544 + $0x70] sm:$0xff]
      %v560 = vld [vmem:[%s544 + $0x78] sm:$0xff]
      %v577 = vunpack.c.l.b16 %v545
      %v578 = vunpack.c.h.b16 %v545
      %v579 = vunpack.c.l.b16 %v546
      %v580 = vunpack.c.h.b16 %v546
      %v581 = vunpack.c.l.b16 %v547
      %v582 = vunpack.c.h.b16 %v547
      %v583 = vunpack.c.l.b16 %v548
      %v584 = vunpack.c.h.b16 %v548
      %v585 = vunpack.c.l.b16 %v549
      %v586 = vunpack.c.h.b16 %v549
      %v587 = vunpack.c.l.b16 %v550
      %v588 = vunpack.c.h.b16 %v550
      %v589 = vunpack.c.l.b16 %v551
      %v590 = vunpack.c.h.b16 %v551
      %v591 = vunpack.c.l.b16 %v552
      %v592 = vunpack.c.h.b16 %v552
      %v593 = vunpack.c.l.b16 %v553
      %v594 = vunpack.c.h.b16 %v553
      %v595 = vunpack.c.l.b16 %v554
      %v596 = vunpack.c.h.b16 %v554
      %v597 = vunpack.c.l.b16 %v555
      %v598 = vunpack.c.h.b16 %v555
      %v599 = vunpack.c.l.b16 %v556
      %v600 = vunpack.c.h.b16 %v556
      %v601 = vunpack.c.l.b16 %v557
      %v602 = vunpack.c.h.b16 %v557
      %v603 = vunpack.c.l.b16 %v558
      %v604 = vunpack.c.h.b16 %v558
      %v605 = vunpack.c.l.b16 %v559
      %v606 = vunpack.c.h.b16 %v559
      %v607 = vunpack.c.l.b16 %v560
      %v608 = vunpack.c.h.b16 %v560
      %v609 = vpack.c.b16 %v579, %v577
      %v610 = vpack.c.b16 %v580, %v578
      %v611 = vpack.c.b16 %v583, %v581
      %v612 = vpack.c.b16 %v584, %v582
      %v613 = vpack.c.b16 %v587, %v585
      %v614 = vpack.c.b16 %v588, %v586
      %v615 = vpack.c.b16 %v591, %v589
      %v616 = vpack.c.b16 %v592, %v590
      %v617 = vpack.c.b16 %v595, %v593
      %v618 = vpack.c.b16 %v596, %v594
      %v619 = vpack.c.b16 %v599, %v597
      %v620 = vpack.c.b16 %v600, %v598
      %v621 = vpack.c.b16 %v603, %v601
      %v622 = vpack.c.b16 %v604, %v602
      %v623 = vpack.c.b16 %v607, %v605
      %v624 = vpack.c.b16 %v608, %v606
      %641 = vmatprep.subr.bf16.mxu0 %v610
      %642 = vmatpush1.bf16.msra.mxu0 %v609
      %643 = vmatprep.subr.bf16.mxu0 %v612
      %644 = vmatpush1.bf16.msra.mxu0 %v611
      %645 = vmatprep.subr.bf16.mxu0 %v614
      %646 = vmatpush1.bf16.msra.mxu0 %v613
      %647 = vmatprep.subr.bf16.mxu0 %v616
      %648 = vmatpush1.bf16.msra.mxu0 %v615
      %649 = vmatprep.subr.bf16.mxu0 %v618
      %650 = vmatpush1.bf16.msra.mxu0 %v617
      %651 = vmatprep.subr.bf16.mxu0 %v620
      %652 = vmatpush1.bf16.msra.mxu0 %v619
      %653 = vmatprep.subr.bf16.mxu0 %v622
      %654 = vmatpush1.bf16.msra.mxu0 %v621
      %655 = vmatprep.subr.bf16.mxu0 %v624
      %656 = vmatpush1.bf16.msra.mxu0 %v623
      %657 = vmatprep.subr.bf16.mxu0 0
      %658 = vmatpush1.bf16.msra.mxu0 0
      %659 = vmatprep.subr.bf16.mxu0 0
      %660 = vmatpush1.bf16.msra.mxu0 0
      %661 = vmatprep.subr.bf16.mxu0 0
      %662 = vmatpush1.bf16.msra.mxu0 0
      %663 = vmatprep.subr.bf16.mxu0 0
      %664 = vmatpush1.bf16.msra.mxu0 0
      %665 = vmatprep.subr.bf16.mxu0 0
      %666 = vmatpush1.bf16.msra.mxu0 0
      %667 = vmatprep.subr.bf16.mxu0 0
      %668 = vmatpush1.bf16.msra.mxu0 0
      %669 = vmatprep.subr.bf16.mxu0 0
      %670 = vmatpush1.bf16.msra.mxu0 0
      %671 = vmatprep.subr.bf16.mxu0 0
      %672 = vmatpush1.bf16.msra.mxu0 0
      %673 = vmatprep.mubr.bf16.mxu0 0
      %674 = vmatmul.mubr.bf16.gmra.mrb[0].mxu0 %v495
      %v675 = vpop.f32.mrb[0].mxu0
      %v676 = vadd.f32 0.0, %v675
      %v677 = vpop.f32.mrb[0].mxu0
      %v678 = vadd.f32 0.0, %v677
      %v679 = vpop.f32.mrb[0].mxu0
      %v680 = vadd.f32 0.0, %v679
      %v681 = vpop.f32.mrb[0].mxu0
      %v682 = vadd.f32 0.0, %v681
      %683 = vmatprep.mubr.bf16.mxu0 0
      %684 = vmatmul.mubr.bf16.gmra.mrb[0].mxu0 %v496
      %v685 = vpop.f32.mrb[0].mxu0
      %v686 = vadd.f32 0.0, %v685
      %v687 = vpop.f32.mrb[0].mxu0
      %v688 = vadd.f32 0.0, %v687
      %v689 = vpop.f32.mrb[0].mxu0
      %v690 = vadd.f32 0.0, %v689
      %v691 = vpop.f32.mrb[0].mxu0
      %v692 = vadd.f32 0.0, %v691
      %693 = vmatprep.mubr.bf16.mxu0 0
      %694 = vmatmul.mubr.bf16.gmra.mrb[0].mxu0 %v497
      %v695 = vpop.f32.mrb[0].mxu0
      %v696 = vadd.f32 0.0, %v695
      %v697 = vpop.f32.mrb[0].mxu0
      %v698 = vadd.f32 0.0, %v697
      %v699 = vpop.f32.mrb[0].mxu0
      %v700 = vadd.f32 0.0, %v699
      %v701 = vpop.f32.mrb[0].mxu0
      %v702 = vadd.f32 0.0, %v701
      %703 = vmatprep.mubr.bf16.mxu0 0
      %704 = vmatmul.mubr.bf16.gmra.mrb[0].mxu0 %v498
      %v705 = vpop.f32.mrb[0].mxu0
      %v706 = vadd.f32 0.0, %v705
      %v707 = vpop.f32.mrb[0].mxu0
      %v708 = vadd.f32 0.0, %v707
      %v709 = vpop.f32.mrb[0].mxu0
      %v710 = vadd.f32 0.0, %v709
      %v711 = vpop.f32.mrb[0].mxu0
      %v712 = vadd.f32 0.0, %v711
      %713 = vmatprep.mubr.bf16.mxu0 0
      %714 = vmatmul.mubr.bf16.gmra.mrb[0].mxu0 %v499
      %v715 = vpop.f32.mrb[0].mxu0
      %v716 = vadd.f32 0.0, %v715
      %v717 = vpop.f32.mrb[0].mxu0
      %v718 = vadd.f32 0.0, %v717
      %v719 = vpop.f32.mrb[0].mxu0
      %v720 = vadd.f32 0.0, %v719
      %v721 = vpop.f32.mrb[0].mxu0
      %v722 = vadd.f32 0.0, %v721
      %723 = vmatprep.mubr.bf16.mxu0 0
      %724 = vmatmul.mubr.bf16.gmra.mrb[0].mxu0 %v500
      %v725 = vpop.f32.mrb[0].mxu0
      %v726 = vadd.f32 0.0, %v725
      %v727 = vpop.f32.mrb[0].mxu0
      %v728 = vadd.f32 0.0, %v727
      %v729 = vpop.f32.mrb[0].mxu0
      %v730 = vadd.f32 0.0, %v729
      %v731 = vpop.f32.mrb[0].mxu0
      %v732 = vadd.f32 0.0, %v731
      %733 = vmatprep.mubr.bf16.mxu0 0
      %734 = vmatmul.mubr.bf16.gmra.mrb[0].mxu0 %v501
      %v735 = vpop.f32.mrb[0].mxu0
      %v736 = vadd.f32 0.0, %v735
      %v737 = vpop.f32.mrb[0].mxu0
      %v738 = vadd.f32 0.0, %v737
      %v739 = vpop.f32.mrb[0].mxu0
      %v740 = vadd.f32 0.0, %v739
      %v741 = vpop.f32.mrb[0].mxu0
      %v742 = vadd.f32 0.0, %v741
      %743 = vmatprep.mubr.bf16.mxu0 0
      %744 = vmatmul.mubr.bf16.gmra.mrb[0].mxu0 %v502
      %v745 = vpop.f32.mrb[0].mxu0
      %v746 = vadd.f32 0.0, %v745
      %v747 = vpop.f32.mrb[0].mxu0
      %v748 = vadd.f32 0.0, %v747
      %v749 = vpop.f32.mrb[0].mxu0
      %v750 = vadd.f32 0.0, %v749
      %v751 = vpop.f32.mrb[0].mxu0
      %v752 = vadd.f32 0.0, %v751
      %753 = vmatprep.mubr.bf16.mxu0 0
      %754 = vmatmul.mubr.bf16.gmra.mrb[0].mxu0 %v503
      %v755 = vpop.f32.mrb[0].mxu0
      %v756 = vadd.f32 0.0, %v755
      %v757 = vpop.f32.mrb[0].mxu0
      %v758 = vadd.f32 0.0, %v757
      %v759 = vpop.f32.mrb[0].mxu0
      %v760 = vadd.f32 0.0, %v759
      %v761 = vpop.f32.mrb[0].mxu0
      %v762 = vadd.f32 0.0, %v761
      %763 = vmatprep.mubr.bf16.mxu0 0
      %764 = vmatmul.mubr.bf16.gmra.mrb[0].mxu0 %v504
      %v765 = vpop.f32.mrb[0].mxu0
      %v766 = vadd.f32 0.0, %v765
      %v767 = vpop.f32.mrb[0].mxu0
      %v768 = vadd.f32 0.0, %v767
      %v769 = vpop.f32.mrb[0].mxu0
      %v770 = vadd.f32 0.0, %v769
      %v771 = vpop.f32.mrb[0].mxu0
      %v772 = vadd.f32 0.0, %v771
      %773 = vmatprep.mubr.bf16.mxu0 0
      %774 = vmatmul.mubr.bf16.gmra.mrb[0].mxu0 %v505
      %v775 = vpop.f32.mrb[0].mxu0
      %v776 = vadd.f32 0.0, %v775
      %v777 = vpop.f32.mrb[0].mxu0
      %v778 = vadd.f32 0.0, %v777
      %v779 = vpop.f32.mrb[0].mxu0
      %v780 = vadd.f32 0.0, %v779
      %v781 = vpop.f32.mrb[0].mxu0
      %v782 = vadd.f32 0.0, %v781
      %783 = vmatprep.mubr.bf16.mxu0 0
      %784 = vmatmul.mubr.bf16.gmra.mrb[0].mxu0 %v506
      %v785 = vpop.f32.mrb[0].mxu0
      %v786 = vadd.f32 0.0, %v785
      %v787 = vpop.f32.mrb[0].mxu0
      %v788 = vadd.f32 0.0, %v787
      %v789 = vpop.f32.mrb[0].mxu0
      %v790 = vadd.f32 0.0, %v789
      %v791 = vpop.f32.mrb[0].mxu0
      %v792 = vadd.f32 0.0, %v791
      %793 = vmatprep.mubr.bf16.mxu0 0
      %794 = vmatmul.mubr.bf16.gmra.mrb[0].mxu0 %v507
      %v795 = vpop.f32.mrb[0].mxu0
      %v796 = vadd.f32 0.0, %v795
      %v797 = vpop.f32.mrb[0].mxu0
      %v798 = vadd.f32 0.0, %v797
      %v799 = vpop.f32.mrb[0].mxu0
      %v800 = vadd.f32 0.0, %v799
      %v801 = vpop.f32.mrb[0].mxu0
      %v802 = vadd.f32 0.0, %v801
      %803 = vmatprep.mubr.bf16.mxu0 0
      %804 = vmatmul.mubr.bf16.gmra.mrb[0].mxu0 %v508
      %v805 = vpop.f32.mrb[0].mxu0
      %v806 = vadd.f32 0.0, %v805
      %v807 = vpop.f32.mrb[0].mxu0
      %v808 = vadd.f32 0.0, %v807
      %v809 = vpop.f32.mrb[0].mxu0
      %v810 = vadd.f32 0.0, %v809
      %v811 = vpop.f32.mrb[0].mxu0
      %v812 = vadd.f32 0.0, %v811
      %813 = vmatprep.mubr.bf16.mxu0 0
      %814 = vmatmul.mubr.bf16.gmra.mrb[0].mxu0 %v509
      %v815 = vpop.f32.mrb[0].mxu0
      %v816 = vadd.f32 0.0, %v815
      %v817 = vpop.f32.mrb[0].mxu0
      %v818 = vadd.f32 0.0, %v817
      %v819 = vpop.f32.mrb[0].mxu0
      %v820 = vadd.f32 0.0, %v819
      %v821 = vpop.f32.mrb[0].mxu0
      %v822 = vadd.f32 0.0, %v821
      %823 = vmatprep.mubr.bf16.mxu0 0
      %824 = vmatmul.mubr.bf16.gmra.mrb[0].mxu0 %v510
      %v825 = vpop.f32.mrb[0].mxu0
      %v826 = vadd.f32 0.0, %v825
      %v827 = vpop.f32.mrb[0].mxu0
      %v828 = vadd.f32 0.0, %v827
      %v829 = vpop.f32.mrb[0].mxu0
      %v830 = vadd.f32 0.0, %v829
      %v831 = vpop.f32.mrb[0].mxu0
      %v832 = vadd.f32 0.0, %v831
      %833 = vdwg.mxu0
      %v850 = vunpack.c.l.b16 %v528
      %v851 = vunpack.c.h.b16 %v528
      %v852 = vunpack.c.l.b16 %v529
      %v853 = vunpack.c.h.b16 %v529
      %v854 = vunpack.c.l.b16 %v530
      %v855 = vunpack.c.h.b16 %v530
      %v856 = vunpack.c.l.b16 %v531
      %v857 = vunpack.c.h.b16 %v531
      %v858 = vunpack.c.l.b16 %v532
      %v859 = vunpack.c.h.b16 %v532
      %v860 = vunpack.c.l.b16 %v533
      %v861 = vunpack.c.h.b16 %v533
      %v862 = vunpack.c.l.b16 %v534
      %v863 = vunpack.c.h.b16 %v534
      %v864 = vunpack.c.l.b16 %v535
      %v865 = vunpack.c.h.b16 %v535
      %v866 = vunpack.c.l.b16 %v536
      %v867 = vunpack.c.h.b16 %v536
      %v868 = vunpack.c.l.b16 %v537
      %v869 = vunpack.c.h.b16 %v537
      %v870 = vunpack.c.l.b16 %v538
      %v871 = vunpack.c.h.b16 %v538
      %v872 = vunpack.c.l.b16 %v539
      %v873 = vunpack.c.h.b16 %v539
      %v874 = vunpack.c.l.b16 %v540
      %v875 = vunpack.c.h.b16 %v540
      %v876 = vunpack.c.l.b16 %v541
      %v877 = vunpack.c.h.b16 %v541
      %v878 = vunpack.c.l.b16 %v542
      %v879 = vunpack.c.h.b16 %v542
      %v880 = vunpack.c.l.b16 %v543
      %v881 = vunpack.c.h.b16 %v543
      %v882 = vpack.c.b16 %v852, %v850
      %v883 = vpack.c.b16 %v853, %v851
      %v884 = vpack.c.b16 %v856, %v854
      %v885 = vpack.c.b16 %v857, %v855
      %v886 = vpack.c.b16 %v860, %v858
      %v887 = vpack.c.b16 %v861, %v859
      %v888 = vpack.c.b16 %v864, %v862
      %v889 = vpack.c.b16 %v865, %v863
      %v890 = vpack.c.b16 %v868, %v866
      %v891 = vpack.c.b16 %v869, %v867
      %v892 = vpack.c.b16 %v872, %v870
      %v893 = vpack.c.b16 %v873, %v871
      %v894 = vpack.c.b16 %v876, %v874
      %v895 = vpack.c.b16 %v877, %v875
      %v896 = vpack.c.b16 %v880, %v878
      %v897 = vpack.c.b16 %v881, %v879
      %914 = vmatprep.subr.bf16.mxu0 %v883
      %915 = vmatpush1.bf16.msra.mxu0 %v882
      %916 = vmatprep.subr.bf16.mxu0 %v885
      %917 = vmatpush1.bf16.msra.mxu0 %v884
      %918 = vmatprep.subr.bf16.mxu0 %v887
      %919 = vmatpush1.bf16.msra.mxu0 %v886
      %920 = vmatprep.subr.bf16.mxu0 %v889
      %921 = vmatpush1.bf16.msra.mxu0 %v888
      %922 = vmatprep.subr.bf16.mxu0 %v891
      %923 = vmatpush1.bf16.msra.mxu0 %v890
      %924 = vmatprep.subr.bf16.mxu0 %v893
      %925 = vmatpush1.bf16.msra.mxu0 %v892
      %926 = vmatprep.subr.bf16.mxu0 %v895
      %927 = vmatpush1.bf16.msra.mxu0 %v894
      %928 = vmatprep.subr.bf16.mxu0 %v897
      %929 = vmatpush1.bf16.msra.mxu0 %v896
      %930 = vmatprep.subr.bf16.mxu0 0
      %931 = vmatpush1.bf16.msra.mxu0 0
      %932 = vmatprep.subr.bf16.mxu0 0
      %933 = vmatpush1.bf16.msra.mxu0 0
      %934 = vmatprep.subr.bf16.mxu0 0
      %935 = vmatpush1.bf16.msra.mxu0 0
      %936 = vmatprep.subr.bf16.mxu0 0
      %937 = vmatpush1.bf16.msra.mxu0 0
      %938 = vmatprep.subr.bf16.mxu0 0
      %939 = vmatpush1.bf16.msra.mxu0 0
      %940 = vmatprep.subr.bf16.mxu0 0
      %941 = vmatpush1.bf16.msra.mxu0 0
      %942 = vmatprep.subr.bf16.mxu0 0
      %943 = vmatpush1.bf16.msra.mxu0 0
      %944 = vmatprep.subr.bf16.mxu0 0
      %945 = vmatpush1.bf16.msra.mxu0 0
      %946 = vmatprep.mubr.bf16.mxu0 0
      %947 = vmatmul.mubr.bf16.gmra.mrb[0].mxu0 %v479
      %v948 = vpop.f32.mrb[0].mxu0
      %v949 = vadd.f32 %v676, %v948
      %v950 = vpop.f32.mrb[0].mxu0
      %v951 = vadd.f32 %v678, %v950
      %v952 = vpop.f32.mrb[0].mxu0
      %v953 = vadd.f32 %v680, %v952
      %v954 = vpop.f32.mrb[0].mxu0
      %v955 = vadd.f32 %v682, %v954
      %956 = vmatprep.mubr.bf16.mxu0 0
      %957 = vmatmul.mubr.bf16.gmra.mrb[0].mxu0 %v480
      %v958 = vpop.f32.mrb[0].mxu0
      %v959 = vadd.f32 %v686, %v958
      %v960 = vpop.f32.mrb[0].mxu0
      %v961 = vadd.f32 %v688, %v960
      %v962 = vpop.f32.mrb[0].mxu0
      %v963 = vadd.f32 %v690, %v962
      %v964 = vpop.f32.mrb[0].mxu0
      %v965 = vadd.f32 %v692, %v964
      %966 = vmatprep.mubr.bf16.mxu0 0
      %967 = vmatmul.mubr.bf16.gmra.mrb[0].mxu0 %v481
      %v968 = vpop.f32.mrb[0].mxu0
      %v969 = vadd.f32 %v696, %v968
      %v970 = vpop.f32.mrb[0].mxu0
      %v971 = vadd.f32 %v698, %v970
      %v972 = vpop.f32.mrb[0].mxu0
      %v973 = vadd.f32 %v700, %v972
      %v974 = vpop.f32.mrb[0].mxu0
      %v975 = vadd.f32 %v702, %v974
      %976 = vmatprep.mubr.bf16.mxu0 0
      %977 = vmatmul.mubr.bf16.gmra.mrb[0].mxu0 %v482
      %v978 = vpop.f32.mrb[0].mxu0
      %v979 = vadd.f32 %v706, %v978
      %v980 = vpop.f32.mrb[0].mxu0
      %v981 = vadd.f32 %v708, %v980
      %v982 = vpop.f32.mrb[0].mxu0
      %v983 = vadd.f32 %v710, %v982
      %v984 = vpop.f32.mrb[0].mxu0
      %v985 = vadd.f32 %v712, %v984
      %986 = vmatprep.mubr.bf16.mxu0 0
      %987 = vmatmul.mubr.bf16.gmra.mrb[0].mxu0 %v483
      %v988 = vpop.f32.mrb[0].mxu0
      %v989 = vadd.f32 %v716, %v988
      %v990 = vpop.f32.mrb[0].mxu0
      %v991 = vadd.f32 %v718, %v990
      %v992 = vpop.f32.mrb[0].mxu0
      %v993 = vadd.f32 %v720, %v992
      %v994 = vpop.f32.mrb[0].mxu0
      %v995 = vadd.f32 %v722, %v994
      %996 = vmatprep.mubr.bf16.mxu0 0
      %997 = vmatmul.mubr.bf16.gmra.mrb[0].mxu0 %v484
      %v998 = vpop.f32.mrb[0].mxu0
      %v999 = vadd.f32 %v726, %v998
      %v1000 = vpop.f32.mrb[0].mxu0
      %v1001 = vadd.f32 %v728, %v1000
      %v1002 = vpop.f32.mrb[0].mxu0
      %v1003 = vadd.f32 %v730, %v1002
      %v1004 = vpop.f32.mrb[0].mxu0
      %v1005 = vadd.f32 %v732, %v1004
      %1006 = vmatprep.mubr.bf16.mxu0 0
      %1007 = vmatmul.mubr.bf16.gmra.mrb[0].mxu0 %v485
      %v1008 = vpop.f32.mrb[0].mxu0
      %v1009 = vadd.f32 %v736, %v1008
      %v1010 = vpop.f32.mrb[0].mxu0
      %v1011 = vadd.f32 %v738, %v1010
      %v1012 = vpop.f32.mrb[0].mxu0
      %v1013 = vadd.f32 %v740, %v1012
      %v1014 = vpop.f32.mrb[0].mxu0
      %v1015 = vadd.f32 %v742, %v1014
      %1016 = vmatprep.mubr.bf16.mxu0 0
      %1017 = vmatmul.mubr.bf16.gmra.mrb[0].mxu0 %v486
      %v1018 = vpop.f32.mrb[0].mxu0
      %v1019 = vadd.f32 %v746, %v1018
      %v1020 = vpop.f32.mrb[0].mxu0
      %v1021 = vadd.f32 %v748, %v1020
      %v1022 = vpop.f32.mrb[0].mxu0
      %v1023 = vadd.f32 %v750, %v1022
      %v1024 = vpop.f32.mrb[0].mxu0
      %v1025 = vadd.f32 %v752, %v1024
      %1026 = vmatprep.mubr.bf16.mxu0 0
      %1027 = vmatmul.mubr.bf16.gmra.mrb[0].mxu0 %v487
      %v1028 = vpop.f32.mrb[0].mxu0
      %v1029 = vadd.f32 %v756, %v1028
      %v1030 = vpop.f32.mrb[0].mxu0
      %v1031 = vadd.f32 %v758, %v1030
      %v1032 = vpop.f32.mrb[0].mxu0
      %v1033 = vadd.f32 %v760, %v1032
      %v1034 = vpop.f32.mrb[0].mxu0
      %v1035 = vadd.f32 %v762, %v1034
      %1036 = vmatprep.mubr.bf16.mxu0 0
      %1037 = vmatmul.mubr.bf16.gmra.mrb[0].mxu0 %v488
      %v1038 = vpop.f32.mrb[0].mxu0
      %v1039 = vadd.f32 %v766, %v1038
      %v1040 = vpop.f32.mrb[0].mxu0
      %v1041 = vadd.f32 %v768, %v1040
      %v1042 = vpop.f32.mrb[0].mxu0
      %v1043 = vadd.f32 %v770, %v1042
      %v1044 = vpop.f32.mrb[0].mxu0
      %v1045 = vadd.f32 %v772, %v1044
      %1046 = vmatprep.mubr.bf16.mxu0 0
      %1047 = vmatmul.mubr.bf16.gmra.mrb[0].mxu0 %v489
      %v1048 = vpop.f32.mrb[0].mxu0
      %v1049 = vadd.f32 %v776, %v1048
      %v1050 = vpop.f32.mrb[0].mxu0
      %v1051 = vadd.f32 %v778, %v1050
      %v1052 = vpop.f32.mrb[0].mxu0
      %v1053 = vadd.f32 %v780, %v1052
      %v1054 = vpop.f32.mrb[0].mxu0
      %v1055 = vadd.f32 %v782, %v1054
      %1056 = vmatprep.mubr.bf16.mxu0 0
      %1057 = vmatmul.mubr.bf16.gmra.mrb[0].mxu0 %v490
      %v1058 = vpop.f32.mrb[0].mxu0
      %v1059 = vadd.f32 %v786, %v1058
      %v1060 = vpop.f32.mrb[0].mxu0
      %v1061 = vadd.f32 %v788, %v1060
      %v1062 = vpop.f32.mrb[0].mxu0
      %v1063 = vadd.f32 %v790, %v1062
      %v1064 = vpop.f32.mrb[0].mxu0
      %v1065 = vadd.f32 %v792, %v1064
      %1066 = vmatprep.mubr.bf16.mxu0 0
      %1067 = vmatmul.mubr.bf16.gmra.mrb[0].mxu0 %v491
      %v1068 = vpop.f32.mrb[0].mxu0
      %v1069 = vadd.f32 %v796, %v1068
      %v1070 = vpop.f32.mrb[0].mxu0
      %v1071 = vadd.f32 %v798, %v1070
      %v1072 = vpop.f32.mrb[0].mxu0
      %v1073 = vadd.f32 %v800, %v1072
      %v1074 = vpop.f32.mrb[0].mxu0
      %v1075 = vadd.f32 %v802, %v1074
      %1076 = vmatprep.mubr.bf16.mxu0 0
      %1077 = vmatmul.mubr.bf16.gmra.mrb[0].mxu0 %v492
      %v1078 = vpop.f32.mrb[0].mxu0
      %v1079 = vadd.f32 %v806, %v1078
      %v1080 = vpop.f32.mrb[0].mxu0
      %v1081 = vadd.f32 %v808, %v1080
      %v1082 = vpop.f32.mrb[0].mxu0
      %v1083 = vadd.f32 %v810, %v1082
      %v1084 = vpop.f32.mrb[0].mxu0
      %v1085 = vadd.f32 %v812, %v1084
      %1086 = vmatprep.mubr.bf16.mxu0 0
      %1087 = vmatmul.mubr.bf16.gmra.mrb[0].mxu0 %v493
      %v1088 = vpop.f32.mrb[0].mxu0
      %v1089 = vadd.f32 %v816, %v1088
      %v1090 = vpop.f32.mrb[0].mxu0
      %v1091 = vadd.f32 %v818, %v1090
      %v1092 = vpop.f32.mrb[0].mxu0
      %v1093 = vadd.f32 %v820, %v1092
      %v1094 = vpop.f32.mrb[0].mxu0
      %v1095 = vadd.f32 %v822, %v1094
      %1096 = vmatprep.mubr.bf16.mxu0 0
      %1097 = vmatmul.mubr.bf16.gmra.mrb[0].mxu0 %v494
      %v1098 = vpop.f32.mrb[0].mxu0
      %v1099 = vadd.f32 %v826, %v1098
      %v1100 = vpop.f32.mrb[0].mxu0
      %v1101 = vadd.f32 %v828, %v1100
      %v1102 = vpop.f32.mrb[0].mxu0
      %v1103 = vadd.f32 %v830, %v1102
      %v1104 = vpop.f32.mrb[0].mxu0
      %v1105 = vadd.f32 %v832, %v1104
      %1106 = vdwg.mxu0
      %s1107 = scalar_lea.vmem %s1, 768
      %v1108 = vld [vmem:[%s1107] sm:$0xff]
      %v1109 = vld [vmem:[%s1107 + $0x8] sm:$0xff]
      %v1110 = vld [vmem:[%s1107 + $0x10] sm:$0xff]
      %v1111 = vld [vmem:[%s1107 + $0x18] sm:$0xff]
      %v1112 = vld [vmem:[%s1107 + $0x20] sm:$0xff]
      %v1113 = vld [vmem:[%s1107 + $0x28] sm:$0xff]
      %v1114 = vld [vmem:[%s1107 + $0x30] sm:$0xff]
      %v1115 = vld [vmem:[%s1107 + $0x38] sm:$0xff]
      %v1116 = vld [vmem:[%s1107 + $0x40] sm:$0xff]
      %v1117 = vld [vmem:[%s1107 + $0x48] sm:$0xff]
      %v1118 = vld [vmem:[%s1107 + $0x50] sm:$0xff]
      %v1119 = vld [vmem:[%s1107 + $0x58] sm:$0xff]
      %v1120 = vld [vmem:[%s1107 + $0x60] sm:$0xff]
      %v1121 = vld [vmem:[%s1107 + $0x68] sm:$0xff]
      %v1122 = vld [vmem:[%s1107 + $0x70] sm:$0xff]
      %v1123 = vld [vmem:[%s1107 + $0x78] sm:$0xff]
      %v1140 = vunpack.c.l.b16 %v1108
      %v1141 = vunpack.c.h.b16 %v1108
      %v1142 = vunpack.c.l.b16 %v1109
      %v1143 = vunpack.c.h.b16 %v1109
      %v1144 = vunpack.c.l.b16 %v1110
      %v1145 = vunpack.c.h.b16 %v1110
      %v1146 = vunpack.c.l.b16 %v1111
      %v1147 = vunpack.c.h.b16 %v1111
      %v1148 = vunpack.c.l.b16 %v1112
      %v1149 = vunpack.c.h.b16 %v1112
      %v1150 = vunpack.c.l.b16 %v1113
      %v1151 = vunpack.c.h.b16 %v1113
      %v1152 = vunpack.c.l.b16 %v1114
      %v1153 = vunpack.c.h.b16 %v1114
      %v1154 = vunpack.c.l.b16 %v1115
      %v1155 = vunpack.c.h.b16 %v1115
      %v1156 = vunpack.c.l.b16 %v1116
      %v1157 = vunpack.c.h.b16 %v1116
      %v1158 = vunpack.c.l.b16 %v1117
      %v1159 = vunpack.c.h.b16 %v1117
      %v1160 = vunpack.c.l.b16 %v1118
      %v1161 = vunpack.c.h.b16 %v1118
      %v1162 = vunpack.c.l.b16 %v1119
      %v1163 = vunpack.c.h.b16 %v1119
      %v1164 = vunpack.c.l.b16 %v1120
      %v1165 = vunpack.c.h.b16 %v1120
      %v1166 = vunpack.c.l.b16 %v1121
      %v1167 = vunpack.c.h.b16 %v1121
      %v1168 = vunpack.c.l.b16 %v1122
      %v1169 = vunpack.c.h.b16 %v1122
      %v1170 = vunpack.c.l.b16 %v1123
      %v1171 = vunpack.c.h.b16 %v1123
      %v1172 = vpack.c.b16 %v1142, %v1140
      %v1173 = vpack.c.b16 %v1143, %v1141
      %v1174 = vpack.c.b16 %v1146, %v1144
      %v1175 = vpack.c.b16 %v1147, %v1145
      %v1176 = vpack.c.b16 %v1150, %v1148
      %v1177 = vpack.c.b16 %v1151, %v1149
      %v1178 = vpack.c.b16 %v1154, %v1152
      %v1179 = vpack.c.b16 %v1155, %v1153
      %v1180 = vpack.c.b16 %v1158, %v1156
      %v1181 = vpack.c.b16 %v1159, %v1157
      %v1182 = vpack.c.b16 %v1162, %v1160
      %v1183 = vpack.c.b16 %v1163, %v1161
      %v1184 = vpack.c.b16 %v1166, %v1164
      %v1185 = vpack.c.b16 %v1167, %v1165
      %v1186 = vpack.c.b16 %v1170, %v1168
      %v1187 = vpack.c.b16 %v1171, %v1169
      %1204 = vmatprep.subr.bf16.mxu0 %v1173
      %1205 = vmatpush1.bf16.msra.mxu0 %v1172
      %1206 = vmatprep.subr.bf16.mxu0 %v1175
      %1207 = vmatpush1.bf16.msra.mxu0 %v1174
      %1208 = vmatprep.subr.bf16.mxu0 %v1177
      %1209 = vmatpush1.bf16.msra.mxu0 %v1176
      %1210 = vmatprep.subr.bf16.mxu0 %v1179
      %1211 = vmatpush1.bf16.msra.mxu0 %v1178
      %1212 = vmatprep.subr.bf16.mxu0 %v1181
      %1213 = vmatpush1.bf16.msra.mxu0 %v1180
      %1214 = vmatprep.subr.bf16.mxu0 %v1183
      %1215 = vmatpush1.bf16.msra.mxu0 %v1182
      %1216 = vmatprep.subr.bf16.mxu0 %v1185
      %1217 = vmatpush1.bf16.msra.mxu0 %v1184
      %1218 = vmatprep.subr.bf16.mxu0 %v1187
      %1219 = vmatpush1.bf16.msra.mxu0 %v1186
      %1220 = vmatprep.subr.bf16.mxu0 0
      %1221 = vmatpush1.bf16.msra.mxu0 0
      %1222 = vmatprep.subr.bf16.mxu0 0
      %1223 = vmatpush1.bf16.msra.mxu0 0
      %1224 = vmatprep.subr.bf16.mxu0 0
      %1225 = vmatpush1.bf16.msra.mxu0 0
      %1226 = vmatprep.subr.bf16.mxu0 0
      %1227 = vmatpush1.bf16.msra.mxu0 0
      %1228 = vmatprep.subr.bf16.mxu0 0
      %1229 = vmatpush1.bf16.msra.mxu0 0
      %1230 = vmatprep.subr.bf16.mxu0 0
      %1231 = vmatpush1.bf16.msra.mxu0 0
      %1232 = vmatprep.subr.bf16.mxu0 0
      %1233 = vmatpush1.bf16.msra.mxu0 0
      %1234 = vmatprep.subr.bf16.mxu0 0
      %1235 = vmatpush1.bf16.msra.mxu0 0
      %1236 = vmatprep.mubr.bf16.mxu0 0
      %1237 = vmatmul.mubr.bf16.gmra.mrb[0].mxu0 %v512
      %v1238 = vpop.f32.mrb[0].mxu0
      %v1239 = vadd.f32 0.0, %v1238
      %v1240 = vpop.f32.mrb[0].mxu0
      %v1241 = vadd.f32 0.0, %v1240
      %v1242 = vpop.f32.mrb[0].mxu0
      %v1243 = vadd.f32 0.0, %v1242
      %v1244 = vpop.f32.mrb[0].mxu0
      %v1245 = vadd.f32 0.0, %v1244
      %1246 = vmatprep.mubr.bf16.mxu0 0
      %1247 = vmatmul.mubr.bf16.gmra.mrb[0].mxu0 %v513
      %v1248 = vpop.f32.mrb[0].mxu0
      %v1249 = vadd.f32 0.0, %v1248
      %v1250 = vpop.f32.mrb[0].mxu0
      %v1251 = vadd.f32 0.0, %v1250
      %v1252 = vpop.f32.mrb[0].mxu0
      %v1253 = vadd.f32 0.0, %v1252
      %v1254 = vpop.f32.mrb[0].mxu0
      %v1255 = vadd.f32 0.0, %v1254
      %1256 = vmatprep.mubr.bf16.mxu0 0
      %1257 = vmatmul.mubr.bf16.gmra.mrb[0].mxu0 %v514
      %v1258 = vpop.f32.mrb[0].mxu0
      %v1259 = vadd.f32 0.0, %v1258
      %v1260 = vpop.f32.mrb[0].mxu0
      %v1261 = vadd.f32 0.0, %v1260
      %v1262 = vpop.f32.mrb[0].mxu0
      %v1263 = vadd.f32 0.0, %v1262
      %v1264 = vpop.f32.mrb[0].mxu0
      %v1265 = vadd.f32 0.0, %v1264
      %1266 = vmatprep.mubr.bf16.mxu0 0
      %1267 = vmatmul.mubr.bf16.gmra.mrb[0].mxu0 %v515
      %v1268 = vpop.f32.mrb[0].mxu0
      %v1269 = vadd.f32 0.0, %v1268
      %v1270 = vpop.f32.mrb[0].mxu0
      %v1271 = vadd.f32 0.0, %v1270
      %v1272 = vpop.f32.mrb[0].mxu0
      %v1273 = vadd.f32 0.0, %v1272
      %v1274 = vpop.f32.mrb[0].mxu0
      %v1275 = vadd.f32 0.0, %v1274
      %1276 = vmatprep.mubr.bf16.mxu0 0
      %1277 = vmatmul.mubr.bf16.gmra.mrb[0].mxu0 %v516
      %v1278 = vpop.f32.mrb[0].mxu0
      %v1279 = vadd.f32 0.0, %v1278
      %v1280 = vpop.f32.mrb[0].mxu0
      %v1281 = vadd.f32 0.0, %v1280
      %v1282 = vpop.f32.mrb[0].mxu0
      %v1283 = vadd.f32 0.0, %v1282
      %v1284 = vpop.f32.mrb[0].mxu0
      %v1285 = vadd.f32 0.0, %v1284
      %1286 = vmatprep.mubr.bf16.mxu0 0
      %1287 = vmatmul.mubr.bf16.gmra.mrb[0].mxu0 %v517
      %v1288 = vpop.f32.mrb[0].mxu0
      %v1289 = vadd.f32 0.0, %v1288
      %v1290 = vpop.f32.mrb[0].mxu0
      %v1291 = vadd.f32 0.0, %v1290
      %v1292 = vpop.f32.mrb[0].mxu0
      %v1293 = vadd.f32 0.0, %v1292
      %v1294 = vpop.f32.mrb[0].mxu0
      %v1295 = vadd.f32 0.0, %v1294
      %1296 = vmatprep.mubr.bf16.mxu0 0
      %1297 = vmatmul.mubr.bf16.gmra.mrb[0].mxu0 %v518
      %v1298 = vpop.f32.mrb[0].mxu0
      %v1299 = vadd.f32 0.0, %v1298
      %v1300 = vpop.f32.mrb[0].mxu0
      %v1301 = vadd.f32 0.0, %v1300
      %v1302 = vpop.f32.mrb[0].mxu0
      %v1303 = vadd.f32 0.0, %v1302
      %v1304 = vpop.f32.mrb[0].mxu0
      %v1305 = vadd.f32 0.0, %v1304
      %1306 = vmatprep.mubr.bf16.mxu0 0
      %1307 = vmatmul.mubr.bf16.gmra.mrb[0].mxu0 %v519
      %v1308 = vpop.f32.mrb[0].mxu0
      %v1309 = vadd.f32 0.0, %v1308
      %v1310 = vpop.f32.mrb[0].mxu0
      %v1311 = vadd.f32 0.0, %v1310
      %v1312 = vpop.f32.mrb[0].mxu0
      %v1313 = vadd.f32 0.0, %v1312
      %v1314 = vpop.f32.mrb[0].mxu0
      %v1315 = vadd.f32 0.0, %v1314
      %1316 = vmatprep.mubr.bf16.mxu0 0
      %1317 = vmatmul.mubr.bf16.gmra.mrb[0].mxu0 %v520
      %v1318 = vpop.f32.mrb[0].mxu0
      %v1319 = vadd.f32 0.0, %v1318
      %v1320 = vpop.f32.mrb[0].mxu0
      %v1321 = vadd.f32 0.0, %v1320
      %v1322 = vpop.f32.mrb[0].mxu0
      %v1323 = vadd.f32 0.0, %v1322
      %v1324 = vpop.f32.mrb[0].mxu0
      %v1325 = vadd.f32 0.0, %v1324
      %1326 = vmatprep.mubr.bf16.mxu0 0
      %1327 = vmatmul.mubr.bf16.gmra.mrb[0].mxu0 %v521
      %v1328 = vpop.f32.mrb[0].mxu0
      %v1329 = vadd.f32 0.0, %v1328
      %v1330 = vpop.f32.mrb[0].mxu0
      %v1331 = vadd.f32 0.0, %v1330
      %v1332 = vpop.f32.mrb[0].mxu0
      %v1333 = vadd.f32 0.0, %v1332
      %v1334 = vpop.f32.mrb[0].mxu0
      %v1335 = vadd.f32 0.0, %v1334
      %1336 = vmatprep.mubr.bf16.mxu0 0
      %1337 = vmatmul.mubr.bf16.gmra.mrb[0].mxu0 %v522
      %v1338 = vpop.f32.mrb[0].mxu0
      %v1339 = vadd.f32 0.0, %v1338
      %v1340 = vpop.f32.mrb[0].mxu0
      %v1341 = vadd.f32 0.0, %v1340
      %v1342 = vpop.f32.mrb[0].mxu0
      %v1343 = vadd.f32 0.0, %v1342
      %v1344 = vpop.f32.mrb[0].mxu0
      %v1345 = vadd.f32 0.0, %v1344
      %1346 = vmatprep.mubr.bf16.mxu0 0
      %1347 = vmatmul.mubr.bf16.gmra.mrb[0].mxu0 %v523
      %v1348 = vpop.f32.mrb[0].mxu0
      %v1349 = vadd.f32 0.0, %v1348
      %v1350 = vpop.f32.mrb[0].mxu0
      %v1351 = vadd.f32 0.0, %v1350
      %v1352 = vpop.f32.mrb[0].mxu0
      %v1353 = vadd.f32 0.0, %v1352
      %v1354 = vpop.f32.mrb[0].mxu0
      %v1355 = vadd.f32 0.0, %v1354
      %1356 = vmatprep.mubr.bf16.mxu0 0
      %1357 = vmatmul.mubr.bf16.gmra.mrb[0].mxu0 %v524
      %v1358 = vpop.f32.mrb[0].mxu0
      %v1359 = vadd.f32 0.0, %v1358
      %v1360 = vpop.f32.mrb[0].mxu0
      %v1361 = vadd.f32 0.0, %v1360
      %v1362 = vpop.f32.mrb[0].mxu0
      %v1363 = vadd.f32 0.0, %v1362
      %v1364 = vpop.f32.mrb[0].mxu0
      %v1365 = vadd.f32 0.0, %v1364
      %1366 = vmatprep.mubr.bf16.mxu0 0
      %1367 = vmatmul.mubr.bf16.gmra.mrb[0].mxu0 %v525
      %v1368 = vpop.f32.mrb[0].mxu0
      %v1369 = vadd.f32 0.0, %v1368
      %v1370 = vpop.f32.mrb[0].mxu0
      %v1371 = vadd.f32 0.0, %v1370
      %v1372 = vpop.f32.mrb[0].mxu0
      %v1373 = vadd.f32 0.0, %v1372
      %v1374 = vpop.f32.mrb[0].mxu0
      %v1375 = vadd.f32 0.0, %v1374
      %1376 = vmatprep.mubr.bf16.mxu0 0
      %1377 = vmatmul.mubr.bf16.gmra.mrb[0].mxu0 %v526
      %v1378 = vpop.f32.mrb[0].mxu0
      %v1379 = vadd.f32 0.0, %v1378
      %v1380 = vpop.f32.mrb[0].mxu0
      %v1381 = vadd.f32 0.0, %v1380
      %v1382 = vpop.f32.mrb[0].mxu0
      %v1383 = vadd.f32 0.0, %v1382
      %v1384 = vpop.f32.mrb[0].mxu0
      %v1385 = vadd.f32 0.0, %v1384
      %1386 = vmatprep.mubr.bf16.mxu0 0
      %1387 = vmatmul.mubr.bf16.gmra.mrb[0].mxu0 %v527
      %v1388 = vpop.f32.mrb[0].mxu0
      %v1389 = vadd.f32 0.0, %v1388
      %v1390 = vpop.f32.mrb[0].mxu0
      %v1391 = vadd.f32 0.0, %v1390
      %v1392 = vpop.f32.mrb[0].mxu0
      %v1393 = vadd.f32 0.0, %v1392
      %v1394 = vpop.f32.mrb[0].mxu0
      %v1395 = vadd.f32 0.0, %v1394
      %1396 = vdwg.mxu0
      %v1397 = vadd.f32 %v949, %v1239
      %v1398 = vadd.f32 %v951, %v1241
      %v1399 = vadd.f32 %v953, %v1243
      %v1400 = vadd.f32 %v955, %v1245
      %v1401 = vadd.f32 %v959, %v1249
      %v1402 = vadd.f32 %v961, %v1251
      %v1403 = vadd.f32 %v963, %v1253
      %v1404 = vadd.f32 %v965, %v1255
      %v1405 = vadd.f32 %v969, %v1259
      %v1406 = vadd.f32 %v971, %v1261
      %v1407 = vadd.f32 %v973, %v1263
      %v1408 = vadd.f32 %v975, %v1265
      %v1409 = vadd.f32 %v979, %v1269
      %v1410 = vadd.f32 %v981, %v1271
      %v1411 = vadd.f32 %v983, %v1273
      %v1412 = vadd.f32 %v985, %v1275
      %v1413 = vadd.f32 %v989, %v1279
      %v1414 = vadd.f32 %v991, %v1281
      %v1415 = vadd.f32 %v993, %v1283
      %v1416 = vadd.f32 %v995, %v1285
      %v1417 = vadd.f32 %v999, %v1289
      %v1418 = vadd.f32 %v1001, %v1291
      %v1419 = vadd.f32 %v1003, %v1293
      %v1420 = vadd.f32 %v1005, %v1295
      %v1421 = vadd.f32 %v1009, %v1299
      %v1422 = vadd.f32 %v1011, %v1301
      %v1423 = vadd.f32 %v1013, %v1303
      %v1424 = vadd.f32 %v1015, %v1305
      %v1425 = vadd.f32 %v1019, %v1309
      %v1426 = vadd.f32 %v1021, %v1311
      %v1427 = vadd.f32 %v1023, %v1313
      %v1428 = vadd.f32 %v1025, %v1315
      %v1429 = vadd.f32 %v1029, %v1319
      %v1430 = vadd.f32 %v1031, %v1321
      %v1431 = vadd.f32 %v1033, %v1323
      %v1432 = vadd.f32 %v1035, %v1325
      %v1433 = vadd.f32 %v1039, %v1329
      %v1434 = vadd.f32 %v1041, %v1331
      %v1435 = vadd.f32 %v1043, %v1333
      %v1436 = vadd.f32 %v1045, %v1335
      %v1437 = vadd.f32 %v1049, %v1339
      %v1438 = vadd.f32 %v1051, %v1341
      %v1439 = vadd.f32 %v1053, %v1343
      %v1440 = vadd.f32 %v1055, %v1345
      %v1441 = vadd.f32 %v1059, %v1349
      %v1442 = vadd.f32 %v1061, %v1351
      %v1443 = vadd.f32 %v1063, %v1353
      %v1444 = vadd.f32 %v1065, %v1355
      %v1445 = vadd.f32 %v1069, %v1359
      %v1446 = vadd.f32 %v1071, %v1361
      %v1447 = vadd.f32 %v1073, %v1363
      %v1448 = vadd.f32 %v1075, %v1365
      %v1449 = vadd.f32 %v1079, %v1369
      %v1450 = vadd.f32 %v1081, %v1371
      %v1451 = vadd.f32 %v1083, %v1373
      %v1452 = vadd.f32 %v1085, %v1375
      %v1453 = vadd.f32 %v1089, %v1379
      %v1454 = vadd.f32 %v1091, %v1381
      %v1455 = vadd.f32 %v1093, %v1383
      %v1456 = vadd.f32 %v1095, %v1385
      %v1457 = vadd.f32 %v1099, %v1389
      %v1458 = vadd.f32 %v1101, %v1391
      %v1459 = vadd.f32 %v1103, %v1393
      %v1460 = vadd.f32 %v1105, %v1395
      %1461 = vst [vmem:[#allocation4 + $0x10] sm:$0xff] %v1397
      %1462 = vst [vmem:[#allocation4 + $0x18] sm:$0xff] %v1398
      %1463 = vst [vmem:[#allocation4 + $0x20] sm:$0xff] %v1399
      %1464 = vst [vmem:[#allocation4 + $0x28] sm:$0xff] %v1400
      %1465 = vst [vmem:[#allocation4 + $0x50] sm:$0xff] %v1401
      %1466 = vst [vmem:[#allocation4 + $0x58] sm:$0xff] %v1402
      %1467 = vst [vmem:[#allocation4 + $0x60] sm:$0xff] %v1403
      %1468 = vst [vmem:[#allocation4 + $0x68] sm:$0xff] %v1404
      %1469 = vst [vmem:[#allocation4 + $0x90] sm:$0xff] %v1405
      %1470 = vst [vmem:[#allocation4 + $0x98] sm:$0xff] %v1406
      %1471 = vst [vmem:[#allocation4 + $0xa0] sm:$0xff] %v1407
      %1472 = vst [vmem:[#allocation4 + $0xa8] sm:$0xff] %v1408
      %1473 = vst [vmem:[#allocation4 + $0xd0] sm:$0xff] %v1409
      %1474 = vst [vmem:[#allocation4 + $0xd8] sm:$0xff] %v1410
      %1475 = vst [vmem:[#allocation4 + $0xe0] sm:$0xff] %v1411
      %1476 = vst [vmem:[#allocation4 + $0xe8] sm:$0xff] %v1412
      %1477 = vst [vmem:[#allocation4 + $0x110] sm:$0xff] %v1413
      %1478 = vst [vmem:[#allocation4 + $0x118] sm:$0xff] %v1414
      %1479 = vst [vmem:[#allocation4 + $0x120] sm:$0xff] %v1415
      %1480 = vst [vmem:[#allocation4 + $0x128] sm:$0xff] %v1416
      %1481 = vst [vmem:[#allocation4 + $0x150] sm:$0xff] %v1417
      %1482 = vst [vmem:[#allocation4 + $0x158] sm:$0xff] %v1418
      %1483 = vst [vmem:[#allocation4 + $0x160] sm:$0xff] %v1419
      %1484 = vst [vmem:[#allocation4 + $0x168] sm:$0xff] %v1420
      %1485 = vst [vmem:[#allocation4 + $0x190] sm:$0xff] %v1421
      %1486 = vst [vmem:[#allocation4 + $0x198] sm:$0xff] %v1422
      %1487 = vst [vmem:[#allocation4 + $0x1a0] sm:$0xff] %v1423
      %1488 = vst [vmem:[#allocation4 + $0x1a8] sm:$0xff] %v1424
      %1489 = vst [vmem:[#allocation4 + $0x1d0] sm:$0xff] %v1425
      %1490 = vst [vmem:[#allocation4 + $0x1d8] sm:$0xff] %v1426
      %1491 = vst [vmem:[#allocation4 + $0x1e0] sm:$0xff] %v1427
      %1492 = vst [vmem:[#allocation4 + $0x1e8] sm:$0xff] %v1428
      %1493 = vst [vmem:[#allocation4 + $0x210] sm:$0xff] %v1429
      %1494 = vst [vmem:[#allocation4 + $0x218] sm:$0xff] %v1430
      %1495 = vst [vmem:[#allocation4 + $0x220] sm:$0xff] %v1431
      %1496 = vst [vmem:[#allocation4 + $0x228] sm:$0xff] %v1432
      %1497 = vst [vmem:[#allocation4 + $0x250] sm:$0xff] %v1433
      %1498 = vst [vmem:[#allocation4 + $0x258] sm:$0xff] %v1434
      %1499 = vst [vmem:[#allocation4 + $0x260] sm:$0xff] %v1435
      %1500 = vst [vmem:[#allocation4 + $0x268] sm:$0xff] %v1436
      %1501 = vst [vmem:[#allocation4 + $0x290] sm:$0xff] %v1437
      %1502 = vst [vmem:[#allocation4 + $0x298] sm:$0xff] %v1438
      %1503 = vst [vmem:[#allocation4 + $0x2a0] sm:$0xff] %v1439
      %1504 = vst [vmem:[#allocation4 + $0x2a8] sm:$0xff] %v1440
      %1505 = vst [vmem:[#allocation4 + $0x2d0] sm:$0xff] %v1441
      %1506 = vst [vmem:[#allocation4 + $0x2d8] sm:$0xff] %v1442
      %1507 = vst [vmem:[#allocation4 + $0x2e0] sm:$0xff] %v1443
      %1508 = vst [vmem:[#allocation4 + $0x2e8] sm:$0xff] %v1444
      %1509 = vst [vmem:[#allocation4 + $0x310] sm:$0xff] %v1445
      %1510 = vst [vmem:[#allocation4 + $0x318] sm:$0xff] %v1446
      %1511 = vst [vmem:[#allocation4 + $0x320] sm:$0xff] %v1447
      %1512 = vst [vmem:[#allocation4 + $0x328] sm:$0xff] %v1448
      %1513 = vst [vmem:[#allocation4 + $0x350] sm:$0xff] %v1449
      %1514 = vst [vmem:[#allocation4 + $0x358] sm:$0xff] %v1450
      %1515 = vst [vmem:[#allocation4 + $0x360] sm:$0xff] %v1451
      %1516 = vst [vmem:[#allocation4 + $0x368] sm:$0xff] %v1452
      %1517 = vst [vmem:[#allocation4 + $0x390] sm:$0xff] %v1453
      %1518 = vst [vmem:[#allocation4 + $0x398] sm:$0xff] %v1454
      %1519 = vst [vmem:[#allocation4 + $0x3a0] sm:$0xff] %v1455
      %1520 = vst [vmem:[#allocation4 + $0x3a8] sm:$0xff] %v1456
      %1521 = vst [vmem:[#allocation4 + $0x3d0] sm:$0xff] %v1457
      %1522 = vst [vmem:[#allocation4 + $0x3d8] sm:$0xff] %v1458
      %1523 = vst [vmem:[#allocation4 + $0x3e0] sm:$0xff] %v1459
      %1524 = vst [vmem:[#allocation4 + $0x3e8] sm:$0xff] %v1460
      %v1525 = vld [vmem:[#allocation4] sm:$0x80]
      %v1526 = vld [vmem:[#allocation4 + $0x8] sm:$0x80]
      %v1527 = vld [vmem:[#allocation4 + $0x10] sm:$0xff]
      %v1528 = vld [vmem:[#allocation4 + $0x18] sm:$0xff]
      %v1529 = vld [vmem:[#allocation4 + $0x20] sm:$0x7f]
      %v1530 = vld [vmem:[#allocation4 + $0x28] sm:$0x7f]
      %v1531 = vld [vmem:[#allocation4 + $0x40] sm:$0x80]
      %v1532 = vld [vmem:[#allocation4 + $0x48] sm:$0x80]
      %v1533 = vld [vmem:[#allocation4 + $0x50] sm:$0xff]
      %v1534 = vld [vmem:[#allocation4 + $0x58] sm:$0xff]
      %v1535 = vld [vmem:[#allocation4 + $0x60] sm:$0x7f]
      %v1536 = vld [vmem:[#allocation4 + $0x68] sm:$0x7f]
      %v1537 = vld [vmem:[#allocation4 + $0x80] sm:$0x80]
      %v1538 = vld [vmem:[#allocation4 + $0x88] sm:$0x80]
      %v1539 = vld [vmem:[#allocation4 + $0x90] sm:$0xff]
      %v1540 = vld [vmem:[#allocation4 + $0x98] sm:$0xff]
      %v1541 = vld [vmem:[#allocation4 + $0xa0] sm:$0x7f]
      %v1542 = vld [vmem:[#allocation4 + $0xa8] sm:$0x7f]
      %v1543 = vld [vmem:[#allocation4 + $0xc0] sm:$0x80]
      %v1544 = vld [vmem:[#allocation4 + $0xc8] sm:$0x80]
      %v1545 = vld [vmem:[#allocation4 + $0xd0] sm:$0xff]
      %v1546 = vld [vmem:[#allocation4 + $0xd8] sm:$0xff]
      %v1547 = vld [vmem:[#allocation4 + $0xe0] sm:$0x7f]
      %v1548 = vld [vmem:[#allocation4 + $0xe8] sm:$0x7f]
      %v1549 = vld [vmem:[#allocation4 + $0x100] sm:$0x80]
      %v1550 = vld [vmem:[#allocation4 + $0x108] sm:$0x80]
      %v1551 = vld [vmem:[#allocation4 + $0x110] sm:$0xff]
      %v1552 = vld [vmem:[#allocation4 + $0x118] sm:$0xff]
      %v1553 = vld [vmem:[#allocation4 + $0x120] sm:$0x7f]
      %v1554 = vld [vmem:[#allocation4 + $0x128] sm:$0x7f]
      %v1555 = vld [vmem:[#allocation4 + $0x140] sm:$0x80]
      %v1556 = vld [vmem:[#allocation4 + $0x148] sm:$0x80]
      %v1557 = vld [vmem:[#allocation4 + $0x150] sm:$0xff]
      %v1558 = vld [vmem:[#allocation4 + $0x158] sm:$0xff]
      %v1559 = vld [vmem:[#allocation4 + $0x160] sm:$0x7f]
      %v1560 = vld [vmem:[#allocation4 + $0x168] sm:$0x7f]
      %v1561 = vld [vmem:[#allocation4 + $0x180] sm:$0x80]
      %v1562 = vld [vmem:[#allocation4 + $0x188] sm:$0x80]
      %v1563 = vld [vmem:[#allocation4 + $0x190] sm:$0xff]
      %v1564 = vld [vmem:[#allocation4 + $0x198] sm:$0xff]
      %v1565 = vld [vmem:[#allocation4 + $0x1a0] sm:$0x7f]
      %v1566 = vld [vmem:[#allocation4 + $0x1a8] sm:$0x7f]
      %v1567 = vld [vmem:[#allocation4 + $0x1c0] sm:$0x80]
      %v1568 = vld [vmem:[#allocation4 + $0x1c8] sm:$0x80]
      %v1569 = vld [vmem:[#allocation4 + $0x1d0] sm:$0xff]
      %v1570 = vld [vmem:[#allocation4 + $0x1d8] sm:$0xff]
      %v1571 = vld [vmem:[#allocation4 + $0x1e0] sm:$0x7f]
      %v1572 = vld [vmem:[#allocation4 + $0x1e8] sm:$0x7f]
      %v1573 = vld [vmem:[#allocation4 + $0x200] sm:$0x80]
      %v1574 = vld [vmem:[#allocation4 + $0x208] sm:$0x80]
      %v1575 = vld [vmem:[#allocation4 + $0x210] sm:$0xff]
      %v1576 = vld [vmem:[#allocation4 + $0x218] sm:$0xff]
      %v1577 = vld [vmem:[#allocation4 + $0x220] sm:$0x7f]
      %v1578 = vld [vmem:[#allocation4 + $0x228] sm:$0x7f]
      %v1579 = vld [vmem:[#allocation4 + $0x240] sm:$0x80]
      %v1580 = vld [vmem:[#allocation4 + $0x248] sm:$0x80]
      %v1581 = vld [vmem:[#allocation4 + $0x250] sm:$0xff]
      %v1582 = vld [vmem:[#allocation4 + $0x258] sm:$0xff]
      %v1583 = vld [vmem:[#allocation4 + $0x260] sm:$0x7f]
      %v1584 = vld [vmem:[#allocation4 + $0x268] sm:$0x7f]
      %v1585 = vld [vmem:[#allocation4 + $0x280] sm:$0x80]
      %v1586 = vld [vmem:[#allocation4 + $0x288] sm:$0x80]
      %v1587 = vld [vmem:[#allocation4 + $0x290] sm:$0xff]
      %v1588 = vld [vmem:[#allocation4 + $0x298] sm:$0xff]
      %v1589 = vld [vmem:[#allocation4 + $0x2a0] sm:$0x7f]
      %v1590 = vld [vmem:[#allocation4 + $0x2a8] sm:$0x7f]
      %v1591 = vld [vmem:[#allocation4 + $0x2c0] sm:$0x80]
      %v1592 = vld [vmem:[#allocation4 + $0x2c8] sm:$0x80]
      %v1593 = vld [vmem:[#allocation4 + $0x2d0] sm:$0xff]
      %v1594 = vld [vmem:[#allocation4 + $0x2d8] sm:$0xff]
      %v1595 = vld [vmem:[#allocation4 + $0x2e0] sm:$0x7f]
      %v1596 = vld [vmem:[#allocation4 + $0x2e8] sm:$0x7f]
      %v1597 = vld [vmem:[#allocation4 + $0x300] sm:$0x80]
      %v1598 = vld [vmem:[#allocation4 + $0x308] sm:$0x80]
      %v1599 = vld [vmem:[#allocation4 + $0x310] sm:$0xff]
      %v1600 = vld [vmem:[#allocation4 + $0x318] sm:$0xff]
      %v1601 = vld [vmem:[#allocation4 + $0x320] sm:$0x7f]
      %v1602 = vld [vmem:[#allocation4 + $0x328] sm:$0x7f]
      %v1603 = vld [vmem:[#allocation4 + $0x340] sm:$0x80]
      %v1604 = vld [vmem:[#allocation4 + $0x348] sm:$0x80]
      %v1605 = vld [vmem:[#allocation4 + $0x350] sm:$0xff]
      %v1606 = vld [vmem:[#allocation4 + $0x358] sm:$0xff]
      %v1607 = vld [vmem:[#allocation4 + $0x360] sm:$0x7f]
      %v1608 = vld [vmem:[#allocation4 + $0x368] sm:$0x7f]
      %v1609 = vld [vmem:[#allocation4 + $0x380] sm:$0x80]
      %v1610 = vld [vmem:[#allocation4 + $0x388] sm:$0x80]
      %v1611 = vld [vmem:[#allocation4 + $0x390] sm:$0xff]
      %v1612 = vld [vmem:[#allocation4 + $0x398] sm:$0xff]
      %v1613 = vld [vmem:[#allocation4 + $0x3a0] sm:$0x7f]
      %v1614 = vld [vmem:[#allocation4 + $0x3a8] sm:$0x7f]
      %v1615 = vld [vmem:[#allocation4 + $0x3c0] sm:$0x80]
      %v1616 = vld [vmem:[#allocation4 + $0x3c8] sm:$0x80]
      %v1617 = vld [vmem:[#allocation4 + $0x3d0] sm:$0xff]
      %v1618 = vld [vmem:[#allocation4 + $0x3d8] sm:$0xff]
      %v1619 = vld [vmem:[#allocation4 + $0x3e0] sm:$0x7f]
      %v1620 = vld [vmem:[#allocation4 + $0x3e8] sm:$0x7f]
      %vm1717 = vcmask 1040384
      %v1718 = vrot.slane %v1525, 7
      %v1719 = vrot.slane %v1527, 7
      %v1720 = vsel %vm1717, %v1718, %v1719
      %v1721 = vrot.slane %v1526, 7
      %v1722 = vrot.slane %v1528, 7
      %v1723 = vsel %vm1717, %v1721, %v1722
      %v1724 = vrot.slane %v1529, 7
      %v1725 = vsel %vm1717, %v1719, %v1724
      %v1726 = vrot.slane %v1530, 7
      %v1727 = vsel %vm1717, %v1722, %v1726
      %v1728 = vrot.slane %v1531, 7
      %v1729 = vrot.slane %v1533, 7
      %v1730 = vsel %vm1717, %v1728, %v1729
      %v1731 = vrot.slane %v1532, 7
      %v1732 = vrot.slane %v1534, 7
      %v1733 = vsel %vm1717, %v1731, %v1732
      %v1734 = vrot.slane %v1535, 7
      %v1735 = vsel %vm1717, %v1729, %v1734
      %v1736 = vrot.slane %v1536, 7
      %v1737 = vsel %vm1717, %v1732, %v1736
      %v1738 = vrot.slane %v1537, 7
      %v1739 = vrot.slane %v1539, 7
      %v1740 = vsel %vm1717, %v1738, %v1739
      %v1741 = vrot.slane %v1538, 7
      %v1742 = vrot.slane %v1540, 7
      %v1743 = vsel %vm1717, %v1741, %v1742
      %v1744 = vrot.slane %v1541, 7
      %v1745 = vsel %vm1717, %v1739, %v1744
      %v1746 = vrot.slane %v1542, 7
      %v1747 = vsel %vm1717, %v1742, %v1746
      %v1748 = vrot.slane %v1543, 7
      %v1749 = vrot.slane %v1545, 7
      %v1750 = vsel %vm1717, %v1748, %v1749
      %v1751 = vrot.slane %v1544, 7
      %v1752 = vrot.slane %v1546, 7
      %v1753 = vsel %vm1717, %v1751, %v1752
      %v1754 = vrot.slane %v1547, 7
      %v1755 = vsel %vm1717, %v1749, %v1754
      %v1756 = vrot.slane %v1548, 7
      %v1757 = vsel %vm1717, %v1752, %v1756
      %v1758 = vrot.slane %v1549, 7
      %v1759 = vrot.slane %v1551, 7
      %v1760 = vsel %vm1717, %v1758, %v1759
      %v1761 = vrot.slane %v1550, 7
      %v1762 = vrot.slane %v1552, 7
      %v1763 = vsel %vm1717, %v1761, %v1762
      %v1764 = vrot.slane %v1553, 7
      %v1765 = vsel %vm1717, %v1759, %v1764
      %v1766 = vrot.slane %v1554, 7
      %v1767 = vsel %vm1717, %v1762, %v1766
      %v1768 = vrot.slane %v1555, 7
      %v1769 = vrot.slane %v1557, 7
      %v1770 = vsel %vm1717, %v1768, %v1769
      %v1771 = vrot.slane %v1556, 7
      %v1772 = vrot.slane %v1558, 7
      %v1773 = vsel %vm1717, %v1771, %v1772
      %v1774 = vrot.slane %v1559, 7
      %v1775 = vsel %vm1717, %v1769, %v1774
      %v1776 = vrot.slane %v1560, 7
      %v1777 = vsel %vm1717, %v1772, %v1776
      %v1778 = vrot.slane %v1561, 7
      %v1779 = vrot.slane %v1563, 7
      %v1780 = vsel %vm1717, %v1778, %v1779
      %v1781 = vrot.slane %v1562, 7
      %v1782 = vrot.slane %v1564, 7
      %v1783 = vsel %vm1717, %v1781, %v1782
      %v1784 = vrot.slane %v1565, 7
      %v1785 = vsel %vm1717, %v1779, %v1784
      %v1786 = vrot.slane %v1566, 7
      %v1787 = vsel %vm1717, %v1782, %v1786
      %v1788 = vrot.slane %v1567, 7
      %v1789 = vrot.slane %v1569, 7
      %v1790 = vsel %vm1717, %v1788, %v1789
      %v1791 = vrot.slane %v1568, 7
      %v1792 = vrot.slane %v1570, 7
      %v1793 = vsel %vm1717, %v1791, %v1792
      %v1794 = vrot.slane %v1571, 7
      %v1795 = vsel %vm1717, %v1789, %v1794
      %v1796 = vrot.slane %v1572, 7
      %v1797 = vsel %vm1717, %v1792, %v1796
      %v1798 = vrot.slane %v1573, 7
      %v1799 = vrot.slane %v1575, 7
      %v1800 = vsel %vm1717, %v1798, %v1799
      %v1801 = vrot.slane %v1574, 7
      %v1802 = vrot.slane %v1576, 7
      %v1803 = vsel %vm1717, %v1801, %v1802
      %v1804 = vrot.slane %v1577, 7
      %v1805 = vsel %vm1717, %v1799, %v1804
      %v1806 = vrot.slane %v1578, 7
      %v1807 = vsel %vm1717, %v1802, %v1806
      %v1808 = vrot.slane %v1579, 7
      %v1809 = vrot.slane %v1581, 7
      %v1810 = vsel %vm1717, %v1808, %v1809
      %v1811 = vrot.slane %v1580, 7
      %v1812 = vrot.slane %v1582, 7
      %v1813 = vsel %vm1717, %v1811, %v1812
      %v1814 = vrot.slane %v1583, 7
      %v1815 = vsel %vm1717, %v1809, %v1814
      %v1816 = vrot.slane %v1584, 7
      %v1817 = vsel %vm1717, %v1812, %v1816
      %v1818 = vrot.slane %v1585, 7
      %v1819 = vrot.slane %v1587, 7
      %v1820 = vsel %vm1717, %v1818, %v1819
      %v1821 = vrot.slane %v1586, 7
      %v1822 = vrot.slane %v1588, 7
      %v1823 = vsel %vm1717, %v1821, %v1822
      %v1824 = vrot.slane %v1589, 7
      %v1825 = vsel %vm1717, %v1819, %v1824
      %v1826 = vrot.slane %v1590, 7
      %v1827 = vsel %vm1717, %v1822, %v1826
      %v1828 = vrot.slane %v1591, 7
      %v1829 = vrot.slane %v1593, 7
      %v1830 = vsel %vm1717, %v1828, %v1829
      %v1831 = vrot.slane %v1592, 7
      %v1832 = vrot.slane %v1594, 7
      %v1833 = vsel %vm1717, %v1831, %v1832
      %v1834 = vrot.slane %v1595, 7
      %v1835 = vsel %vm1717, %v1829, %v1834
      %v1836 = vrot.slane %v1596, 7
      %v1837 = vsel %vm1717, %v1832, %v1836
      %v1838 = vrot.slane %v1597, 7
      %v1839 = vrot.slane %v1599, 7
      %v1840 = vsel %vm1717, %v1838, %v1839
      %v1841 = vrot.slane %v1598, 7
      %v1842 = vrot.slane %v1600, 7
      %v1843 = vsel %vm1717, %v1841, %v1842
      %v1844 = vrot.slane %v1601, 7
      %v1845 = vsel %vm1717, %v1839, %v1844
      %v1846 = vrot.slane %v1602, 7
      %v1847 = vsel %vm1717, %v1842, %v1846
      %v1848 = vrot.slane %v1603, 7
      %v1849 = vrot.slane %v1605, 7
      %v1850 = vsel %vm1717, %v1848, %v1849
      %v1851 = vrot.slane %v1604, 7
      %v1852 = vrot.slane %v1606, 7
      %v1853 = vsel %vm1717, %v1851, %v1852
      %v1854 = vrot.slane %v1607, 7
      %v1855 = vsel %vm1717, %v1849, %v1854
      %v1856 = vrot.slane %v1608, 7
      %v1857 = vsel %vm1717, %v1852, %v1856
      %v1858 = vrot.slane %v1609, 7
      %v1859 = vrot.slane %v1611, 7
      %v1860 = vsel %vm1717, %v1858, %v1859
      %v1861 = vrot.slane %v1610, 7
      %v1862 = vrot.slane %v1612, 7
      %v1863 = vsel %vm1717, %v1861, %v1862
      %v1864 = vrot.slane %v1613, 7
      %v1865 = vsel %vm1717, %v1859, %v1864
      %v1866 = vrot.slane %v1614, 7
      %v1867 = vsel %vm1717, %v1862, %v1866
      %v1868 = vrot.slane %v1615, 7
      %v1869 = vrot.slane %v1617, 7
      %v1870 = vsel %vm1717, %v1868, %v1869
      %v1871 = vrot.slane %v1616, 7
      %v1872 = vrot.slane %v1618, 7
      %v1873 = vsel %vm1717, %v1871, %v1872
      %v1874 = vrot.slane %v1619, 7
      %v1875 = vsel %vm1717, %v1869, %v1874
      %v1876 = vrot.slane %v1620, 7
      %v1877 = vsel %vm1717, %v1872, %v1876
      %v1942 = vadd.f32 %v1720, 0.0
      %v1943 = vadd.f32 %v1723, 0.0
      %v1944 = vadd.f32 %v1725, 0.0
      %v1945 = vadd.f32 %v1727, 0.0
      %v1946 = vadd.f32 %v1730, 0.0
      %v1947 = vadd.f32 %v1733, 0.0
      %v1948 = vadd.f32 %v1735, 0.0
      %v1949 = vadd.f32 %v1737, 0.0
      %v1950 = vadd.f32 %v1740, 0.0
      %v1951 = vadd.f32 %v1743, 0.0
      %v1952 = vadd.f32 %v1745, 0.0
      %v1953 = vadd.f32 %v1747, 0.0
      %v1954 = vadd.f32 %v1750, 0.0
      %v1955 = vadd.f32 %v1753, 0.0
      %v1956 = vadd.f32 %v1755, 0.0
      %v1957 = vadd.f32 %v1757, 0.0
      %v1958 = vadd.f32 %v1760, 0.0
      %v1959 = vadd.f32 %v1763, 0.0
      %v1960 = vadd.f32 %v1765, 0.0
      %v1961 = vadd.f32 %v1767, 0.0
      %v1962 = vadd.f32 %v1770, 0.0
      %v1963 = vadd.f32 %v1773, 0.0
      %v1964 = vadd.f32 %v1775, 0.0
      %v1965 = vadd.f32 %v1777, 0.0
      %v1966 = vadd.f32 %v1780, 0.0
      %v1967 = vadd.f32 %v1783, 0.0
      %v1968 = vadd.f32 %v1785, 0.0
      %v1969 = vadd.f32 %v1787, 0.0
      %v1970 = vadd.f32 %v1790, 0.0
      %v1971 = vadd.f32 %v1793, 0.0
      %v1972 = vadd.f32 %v1795, 0.0
      %v1973 = vadd.f32 %v1797, 0.0
      %v1974 = vadd.f32 %v1800, 0.0
      %v1975 = vadd.f32 %v1803, 0.0
      %v1976 = vadd.f32 %v1805, 0.0
      %v1977 = vadd.f32 %v1807, 0.0
      %v1978 = vadd.f32 %v1810, 0.0
      %v1979 = vadd.f32 %v1813, 0.0
      %v1980 = vadd.f32 %v1815, 0.0
      %v1981 = vadd.f32 %v1817, 0.0
      %v1982 = vadd.f32 %v1820, 0.0
      %v1983 = vadd.f32 %v1823, 0.0
      %v1984 = vadd.f32 %v1825, 0.0
      %v1985 = vadd.f32 %v1827, 0.0
      %v1986 = vadd.f32 %v1830, 0.0
      %v1987 = vadd.f32 %v1833, 0.0
      %v1988 = vadd.f32 %v1835, 0.0
      %v1989 = vadd.f32 %v1837, 0.0
      %v1990 = vadd.f32 %v1840, 0.0
      %v1991 = vadd.f32 %v1843, 0.0
      %v1992 = vadd.f32 %v1845, 0.0
      %v1993 = vadd.f32 %v1847, 0.0
      %v1994 = vadd.f32 %v1850, 0.0
      %v1995 = vadd.f32 %v1853, 0.0
      %v1996 = vadd.f32 %v1855, 0.0
      %v1997 = vadd.f32 %v1857, 0.0
      %v1998 = vadd.f32 %v1860, 0.0
      %v1999 = vadd.f32 %v1863, 0.0
      %v2000 = vadd.f32 %v1865, 0.0
      %v2001 = vadd.f32 %v1867, 0.0
      %v2002 = vadd.f32 %v1870, 0.0
      %v2003 = vadd.f32 %v1873, 0.0
      %v2004 = vadd.f32 %v1875, 0.0
      %v2005 = vadd.f32 %v1877, 0.0
      %s2006 = scalar_lea.vmem %s1, 128
      %v2007 = vld [vmem:[%s2006] sm:$0xff]
      %v2008 = vld [vmem:[%s2006 + $0x8] sm:$0xff]
      %v2009 = vld [vmem:[%s2006 + $0x10] sm:$0xff]
      %v2010 = vld [vmem:[%s2006 + $0x18] sm:$0xff]
      %v2011 = vld [vmem:[%s2006 + $0x20] sm:$0xff]
      %v2012 = vld [vmem:[%s2006 + $0x28] sm:$0xff]
      %v2013 = vld [vmem:[%s2006 + $0x30] sm:$0xff]
      %v2014 = vld [vmem:[%s2006 + $0x38] sm:$0xff]
      %v2015 = vld [vmem:[%s2006 + $0x40] sm:$0xff]
      %v2016 = vld [vmem:[%s2006 + $0x48] sm:$0xff]
      %v2017 = vld [vmem:[%s2006 + $0x50] sm:$0xff]
      %v2018 = vld [vmem:[%s2006 + $0x58] sm:$0xff]
      %v2019 = vld [vmem:[%s2006 + $0x60] sm:$0xff]
      %v2020 = vld [vmem:[%s2006 + $0x68] sm:$0xff]
      %v2021 = vld [vmem:[%s2006 + $0x70] sm:$0xff]
      %v2022 = vld [vmem:[%s2006 + $0x78] sm:$0xff]
      %s2023 = scalar_lea.vmem %s1, 512
      %v2024 = vld [vmem:[%s2023] sm:$0xff]
      %v2025 = vld [vmem:[%s2023 + $0x8] sm:$0xff]
      %v2026 = vld [vmem:[%s2023 + $0x10] sm:$0xff]
      %v2027 = vld [vmem:[%s2023 + $0x18] sm:$0xff]
      %v2028 = vld [vmem:[%s2023 + $0x20] sm:$0xff]
      %v2029 = vld [vmem:[%s2023 + $0x28] sm:$0xff]
      %v2030 = vld [vmem:[%s2023 + $0x30] sm:$0xff]
      %v2031 = vld [vmem:[%s2023 + $0x38] sm:$0xff]
      %v2032 = vld [vmem:[%s2023 + $0x40] sm:$0xff]
      %v2033 = vld [vmem:[%s2023 + $0x48] sm:$0xff]
      %v2034 = vld [vmem:[%s2023 + $0x50] sm:$0xff]
      %v2035 = vld [vmem:[%s2023 + $0x58] sm:$0xff]
      %v2036 = vld [vmem:[%s2023 + $0x60] sm:$0xff]
      %v2037 = vld [vmem:[%s2023 + $0x68] sm:$0xff]
      %v2038 = vld [vmem:[%s2023 + $0x70] sm:$0xff]
      %v2039 = vld [vmem:[%s2023 + $0x78] sm:$0xff]
      %v2056 = vunpack.c.l.b16 %v2024
      %v2057 = vunpack.c.h.b16 %v2024
      %v2058 = vunpack.c.l.b16 %v2025
      %v2059 = vunpack.c.h.b16 %v2025
      %v2060 = vunpack.c.l.b16 %v2026
      %v2061 = vunpack.c.h.b16 %v2026
      %v2062 = vunpack.c.l.b16 %v2027
      %v2063 = vunpack.c.h.b16 %v2027
      %v2064 = vunpack.c.l.b16 %v2028
      %v2065 = vunpack.c.h.b16 %v2028
      %v2066 = vunpack.c.l.b16 %v2029
      %v2067 = vunpack.c.h.b16 %v2029
      %v2068 = vunpack.c.l.b16 %v2030
      %v2069 = vunpack.c.h.b16 %v2030
      %v2070 = vunpack.c.l.b16 %v2031
      %v2071 = vunpack.c.h.b16 %v2031
      %v2072 = vunpack.c.l.b16 %v2032
      %v2073 = vunpack.c.h.b16 %v2032
      %v2074 = vunpack.c.l.b16 %v2033
      %v2075 = vunpack.c.h.b16 %v2033
      %v2076 = vunpack.c.l.b16 %v2034
      %v2077 = vunpack.c.h.b16 %v2034
      %v2078 = vunpack.c.l.b16 %v2035
      %v2079 = vunpack.c.h.b16 %v2035
      %v2080 = vunpack.c.l.b16 %v2036
      %v2081 = vunpack.c.h.b16 %v2036
      %v2082 = vunpack.c.l.b16 %v2037
      %v2083 = vunpack.c.h.b16 %v2037
      %v2084 = vunpack.c.l.b16 %v2038
      %v2085 = vunpack.c.h.b16 %v2038
      %v2086 = vunpack.c.l.b16 %v2039
      %v2087 = vunpack.c.h.b16 %v2039
      %v2088 = vpack.c.b16 %v2058, %v2056
      %v2089 = vpack.c.b16 %v2059, %v2057
      %v2090 = vpack.c.b16 %v2062, %v2060
      %v2091 = vpack.c.b16 %v2063, %v2061
      %v2092 = vpack.c.b16 %v2066, %v2064
      %v2093 = vpack.c.b16 %v2067, %v2065
      %v2094 = vpack.c.b16 %v2070, %v2068
      %v2095 = vpack.c.b16 %v2071, %v2069
      %v2096 = vpack.c.b16 %v2074, %v2072
      %v2097 = vpack.c.b16 %v2075, %v2073
      %v2098 = vpack.c.b16 %v2078, %v2076
      %v2099 = vpack.c.b16 %v2079, %v2077
      %v2100 = vpack.c.b16 %v2082, %v2080
      %v2101 = vpack.c.b16 %v2083, %v2081
      %v2102 = vpack.c.b16 %v2086, %v2084
      %v2103 = vpack.c.b16 %v2087, %v2085
      %2120 = vmatprep.subr.bf16.mxu0 %v2089
      %2121 = vmatpush1.bf16.msra.mxu0 %v2088
      %2122 = vmatprep.subr.bf16.mxu0 %v2091
      %2123 = vmatpush1.bf16.msra.mxu0 %v2090
      %2124 = vmatprep.subr.bf16.mxu0 %v2093
      %2125 = vmatpush1.bf16.msra.mxu0 %v2092
      %2126 = vmatprep.subr.bf16.mxu0 %v2095
      %2127 = vmatpush1.bf16.msra.mxu0 %v2094
      %2128 = vmatprep.subr.bf16.mxu0 %v2097
      %2129 = vmatpush1.bf16.msra.mxu0 %v2096
      %2130 = vmatprep.subr.bf16.mxu0 %v2099
      %2131 = vmatpush1.bf16.msra.mxu0 %v2098
      %2132 = vmatprep.subr.bf16.mxu0 %v2101
      %2133 = vmatpush1.bf16.msra.mxu0 %v2100
      %2134 = vmatprep.subr.bf16.mxu0 %v2103
      %2135 = vmatpush1.bf16.msra.mxu0 %v2102
      %2136 = vmatprep.subr.bf16.mxu0 0
      %2137 = vmatpush1.bf16.msra.mxu0 0
      %2138 = vmatprep.subr.bf16.mxu0 0
      %2139 = vmatpush1.bf16.msra.mxu0 0
      %2140 = vmatprep.subr.bf16.mxu0 0
      %2141 = vmatpush1.bf16.msra.mxu0 0
      %2142 = vmatprep.subr.bf16.mxu0 0
      %2143 = vmatpush1.bf16.msra.mxu0 0
      %2144 = vmatprep.subr.bf16.mxu0 0
      %2145 = vmatpush1.bf16.msra.mxu0 0
      %2146 = vmatprep.subr.bf16.mxu0 0
      %2147 = vmatpush1.bf16.msra.mxu0 0
      %2148 = vmatprep.subr.bf16.mxu0 0
      %2149 = vmatpush1.bf16.msra.mxu0 0
      %2150 = vmatprep.subr.bf16.mxu0 0
      %2151 = vmatpush1.bf16.msra.mxu0 0
      %2152 = vmatprep.mubr.bf16.mxu0 0
      %2153 = vmatmul.mubr.bf16.gmra.mrb[0].mxu0 %v495
      %v2154 = vpop.f32.mrb[0].mxu0
      %v2155 = vadd.f32 0.0, %v2154
      %v2156 = vpop.f32.mrb[0].mxu0
      %v2157 = vadd.f32 0.0, %v2156
      %v2158 = vpop.f32.mrb[0].mxu0
      %v2159 = vadd.f32 0.0, %v2158
      %v2160 = vpop.f32.mrb[0].mxu0
      %v2161 = vadd.f32 0.0, %v2160
      %2162 = vmatprep.mubr.bf16.mxu0 0
      %2163 = vmatmul.mubr.bf16.gmra.mrb[0].mxu0 %v496
      %v2164 = vpop.f32.mrb[0].mxu0
      %v2165 = vadd.f32 0.0, %v2164
      %v2166 = vpop.f32.mrb[0].mxu0
      %v2167 = vadd.f32 0.0, %v2166
      %v2168 = vpop.f32.mrb[0].mxu0
      %v2169 = vadd.f32 0.0, %v2168
      %v2170 = vpop.f32.mrb[0].mxu0
      %v2171 = vadd.f32 0.0, %v2170
      %2172 = vmatprep.mubr.bf16.mxu0 0
      %2173 = vmatmul.mubr.bf16.gmra.mrb[0].mxu0 %v497
      %v2174 = vpop.f32.mrb[0].mxu0
      %v2175 = vadd.f32 0.0, %v2174
      %v2176 = vpop.f32.mrb[0].mxu0
      %v2177 = vadd.f32 0.0, %v2176
      %v2178 = vpop.f32.mrb[0].mxu0
      %v2179 = vadd.f32 0.0, %v2178
      %v2180 = vpop.f32.mrb[0].mxu0
      %v2181 = vadd.f32 0.0, %v2180
      %2182 = vmatprep.mubr.bf16.mxu0 0
      %2183 = vmatmul.mubr.bf16.gmra.mrb[0].mxu0 %v498
      %v2184 = vpop.f32.mrb[0].mxu0
      %v2185 = vadd.f32 0.0, %v2184
      %v2186 = vpop.f32.mrb[0].mxu0
      %v2187 = vadd.f32 0.0, %v2186
      %v2188 = vpop.f32.mrb[0].mxu0
      %v2189 = vadd.f32 0.0, %v2188
      %v2190 = vpop.f32.mrb[0].mxu0
      %v2191 = vadd.f32 0.0, %v2190
      %2192 = vmatprep.mubr.bf16.mxu0 0
      %2193 = vmatmul.mubr.bf16.gmra.mrb[0].mxu0 %v499
      %v2194 = vpop.f32.mrb[0].mxu0
      %v2195 = vadd.f32 0.0, %v2194
      %v2196 = vpop.f32.mrb[0].mxu0
      %v2197 = vadd.f32 0.0, %v2196
      %v2198 = vpop.f32.mrb[0].mxu0
      %v2199 = vadd.f32 0.0, %v2198
      %v2200 = vpop.f32.mrb[0].mxu0
      %v2201 = vadd.f32 0.0, %v2200
      %2202 = vmatprep.mubr.bf16.mxu0 0
      %2203 = vmatmul.mubr.bf16.gmra.mrb[0].mxu0 %v500
      %v2204 = vpop.f32.mrb[0].mxu0
      %v2205 = vadd.f32 0.0, %v2204
      %v2206 = vpop.f32.mrb[0].mxu0
      %v2207 = vadd.f32 0.0, %v2206
      %v2208 = vpop.f32.mrb[0].mxu0
      %v2209 = vadd.f32 0.0, %v2208
      %v2210 = vpop.f32.mrb[0].mxu0
      %v2211 = vadd.f32 0.0, %v2210
      %2212 = vmatprep.mubr.bf16.mxu0 0
      %2213 = vmatmul.mubr.bf16.gmra.mrb[0].mxu0 %v501
      %v2214 = vpop.f32.mrb[0].mxu0
      %v2215 = vadd.f32 0.0, %v2214
      %v2216 = vpop.f32.mrb[0].mxu0
      %v2217 = vadd.f32 0.0, %v2216
      %v2218 = vpop.f32.mrb[0].mxu0
      %v2219 = vadd.f32 0.0, %v2218
      %v2220 = vpop.f32.mrb[0].mxu0
      %v2221 = vadd.f32 0.0, %v2220
      %2222 = vmatprep.mubr.bf16.mxu0 0
      %2223 = vmatmul.mubr.bf16.gmra.mrb[0].mxu0 %v502
      %v2224 = vpop.f32.mrb[0].mxu0
      %v2225 = vadd.f32 0.0, %v2224
      %v2226 = vpop.f32.mrb[0].mxu0
      %v2227 = vadd.f32 0.0, %v2226
      %v2228 = vpop.f32.mrb[0].mxu0
      %v2229 = vadd.f32 0.0, %v2228
      %v2230 = vpop.f32.mrb[0].mxu0
      %v2231 = vadd.f32 0.0, %v2230
      %2232 = vmatprep.mubr.bf16.mxu0 0
      %2233 = vmatmul.mubr.bf16.gmra.mrb[0].mxu0 %v503
      %v2234 = vpop.f32.mrb[0].mxu0
      %v2235 = vadd.f32 0.0, %v2234
      %v2236 = vpop.f32.mrb[0].mxu0
      %v2237 = vadd.f32 0.0, %v2236
      %v2238 = vpop.f32.mrb[0].mxu0
      %v2239 = vadd.f32 0.0, %v2238
      %v2240 = vpop.f32.mrb[0].mxu0
      %v2241 = vadd.f32 0.0, %v2240
      %2242 = vmatprep.mubr.bf16.mxu0 0
      %2243 = vmatmul.mubr.bf16.gmra.mrb[0].mxu0 %v504
      %v2244 = vpop.f32.mrb[0].mxu0
      %v2245 = vadd.f32 0.0, %v2244
      %v2246 = vpop.f32.mrb[0].mxu0
      %v2247 = vadd.f32 0.0, %v2246
      %v2248 = vpop.f32.mrb[0].mxu0
      %v2249 = vadd.f32 0.0, %v2248
      %v2250 = vpop.f32.mrb[0].mxu0
      %v2251 = vadd.f32 0.0, %v2250
      %2252 = vmatprep.mubr.bf16.mxu0 0
      %2253 = vmatmul.mubr.bf16.gmra.mrb[0].mxu0 %v505
      %v2254 = vpop.f32.mrb[0].mxu0
      %v2255 = vadd.f32 0.0, %v2254
      %v2256 = vpop.f32.mrb[0].mxu0
      %v2257 = vadd.f32 0.0, %v2256
      %v2258 = vpop.f32.mrb[0].mxu0
      %v2259 = vadd.f32 0.0, %v2258
      %v2260 = vpop.f32.mrb[0].mxu0
      %v2261 = vadd.f32 0.0, %v2260
      %2262 = vmatprep.mubr.bf16.mxu0 0
      %2263 = vmatmul.mubr.bf16.gmra.mrb[0].mxu0 %v506
      %v2264 = vpop.f32.mrb[0].mxu0
      %v2265 = vadd.f32 0.0, %v2264
      %v2266 = vpop.f32.mrb[0].mxu0
      %v2267 = vadd.f32 0.0, %v2266
      %v2268 = vpop.f32.mrb[0].mxu0
      %v2269 = vadd.f32 0.0, %v2268
      %v2270 = vpop.f32.mrb[0].mxu0
      %v2271 = vadd.f32 0.0, %v2270
      %2272 = vmatprep.mubr.bf16.mxu0 0
      %2273 = vmatmul.mubr.bf16.gmra.mrb[0].mxu0 %v507
      %v2274 = vpop.f32.mrb[0].mxu0
      %v2275 = vadd.f32 0.0, %v2274
      %v2276 = vpop.f32.mrb[0].mxu0
      %v2277 = vadd.f32 0.0, %v2276
      %v2278 = vpop.f32.mrb[0].mxu0
      %v2279 = vadd.f32 0.0, %v2278
      %v2280 = vpop.f32.mrb[0].mxu0
      %v2281 = vadd.f32 0.0, %v2280
      %2282 = vmatprep.mubr.bf16.mxu0 0
      %2283 = vmatmul.mubr.bf16.gmra.mrb[0].mxu0 %v508
      %v2284 = vpop.f32.mrb[0].mxu0
      %v2285 = vadd.f32 0.0, %v2284
      %v2286 = vpop.f32.mrb[0].mxu0
      %v2287 = vadd.f32 0.0, %v2286
      %v2288 = vpop.f32.mrb[0].mxu0
      %v2289 = vadd.f32 0.0, %v2288
      %v2290 = vpop.f32.mrb[0].mxu0
      %v2291 = vadd.f32 0.0, %v2290
      %2292 = vmatprep.mubr.bf16.mxu0 0
      %2293 = vmatmul.mubr.bf16.gmra.mrb[0].mxu0 %v509
      %v2294 = vpop.f32.mrb[0].mxu0
      %v2295 = vadd.f32 0.0, %v2294
      %v2296 = vpop.f32.mrb[0].mxu0
      %v2297 = vadd.f32 0.0, %v2296
      %v2298 = vpop.f32.mrb[0].mxu0
      %v2299 = vadd.f32 0.0, %v2298
      %v2300 = vpop.f32.mrb[0].mxu0
      %v2301 = vadd.f32 0.0, %v2300
      %2302 = vmatprep.mubr.bf16.mxu0 0
      %2303 = vmatmul.mubr.bf16.gmra.mrb[0].mxu0 %v510
      %v2304 = vpop.f32.mrb[0].mxu0
      %v2305 = vadd.f32 0.0, %v2304
      %v2306 = vpop.f32.mrb[0].mxu0
      %v2307 = vadd.f32 0.0, %v2306
      %v2308 = vpop.f32.mrb[0].mxu0
      %v2309 = vadd.f32 0.0, %v2308
      %v2310 = vpop.f32.mrb[0].mxu0
      %v2311 = vadd.f32 0.0, %v2310
      %2312 = vdwg.mxu0
      %v2329 = vunpack.c.l.b16 %v2007
      %v2330 = vunpack.c.h.b16 %v2007
      %v2331 = vunpack.c.l.b16 %v2008
      %v2332 = vunpack.c.h.b16 %v2008
      %v2333 = vunpack.c.l.b16 %v2009
      %v2334 = vunpack.c.h.b16 %v2009
      %v2335 = vunpack.c.l.b16 %v2010
      %v2336 = vunpack.c.h.b16 %v2010
      %v2337 = vunpack.c.l.b16 %v2011
      %v2338 = vunpack.c.h.b16 %v2011
      %v2339 = vunpack.c.l.b16 %v2012
      %v2340 = vunpack.c.h.b16 %v2012
      %v2341 = vunpack.c.l.b16 %v2013
      %v2342 = vunpack.c.h.b16 %v2013
      %v2343 = vunpack.c.l.b16 %v2014
      %v2344 = vunpack.c.h.b16 %v2014
      %v2345 = vunpack.c.l.b16 %v2015
      %v2346 = vunpack.c.h.b16 %v2015
      %v2347 = vunpack.c.l.b16 %v2016
      %v2348 = vunpack.c.h.b16 %v2016
      %v2349 = vunpack.c.l.b16 %v2017
      %v2350 = vunpack.c.h.b16 %v2017
      %v2351 = vunpack.c.l.b16 %v2018
      %v2352 = vunpack.c.h.b16 %v2018
      %v2353 = vunpack.c.l.b16 %v2019
      %v2354 = vunpack.c.h.b16 %v2019
      %v2355 = vunpack.c.l.b16 %v2020
      %v2356 = vunpack.c.h.b16 %v2020
      %v2357 = vunpack.c.l.b16 %v2021
      %v2358 = vunpack.c.h.b16 %v2021
      %v2359 = vunpack.c.l.b16 %v2022
      %v2360 = vunpack.c.h.b16 %v2022
      %v2361 = vpack.c.b16 %v2331, %v2329
      %v2362 = vpack.c.b16 %v2332, %v2330
      %v2363 = vpack.c.b16 %v2335, %v2333
      %v2364 = vpack.c.b16 %v2336, %v2334
      %v2365 = vpack.c.b16 %v2339, %v2337
      %v2366 = vpack.c.b16 %v2340, %v2338
      %v2367 = vpack.c.b16 %v2343, %v2341
      %v2368 = vpack.c.b16 %v2344, %v2342
      %v2369 = vpack.c.b16 %v2347, %v2345
      %v2370 = vpack.c.b16 %v2348, %v2346
      %v2371 = vpack.c.b16 %v2351, %v2349
      %v2372 = vpack.c.b16 %v2352, %v2350
      %v2373 = vpack.c.b16 %v2355, %v2353
      %v2374 = vpack.c.b16 %v2356, %v2354
      %v2375 = vpack.c.b16 %v2359, %v2357
      %v2376 = vpack.c.b16 %v2360, %v2358
      %2393 = vmatprep.subr.bf16.mxu0 %v2362
      %2394 = vmatpush1.bf16.msra.mxu0 %v2361
      %2395 = vmatprep.subr.bf16.mxu0 %v2364
      %2396 = vmatpush1.bf16.msra.mxu0 %v2363
      %2397 = vmatprep.subr.bf16.mxu0 %v2366
      %2398 = vmatpush1.bf16.msra.mxu0 %v2365
      %2399 = vmatprep.subr.bf16.mxu0 %v2368
      %2400 = vmatpush1.bf16.msra.mxu0 %v2367
      %2401 = vmatprep.subr.bf16.mxu0 %v2370
      %2402 = vmatpush1.bf16.msra.mxu0 %v2369
      %2403 = vmatprep.subr.bf16.mxu0 %v2372
      %2404 = vmatpush1.bf16.msra.mxu0 %v2371
      %2405 = vmatprep.subr.bf16.mxu0 %v2374
      %2406 = vmatpush1.bf16.msra.mxu0 %v2373
      %2407 = vmatprep.subr.bf16.mxu0 %v2376
      %2408 = vmatpush1.bf16.msra.mxu0 %v2375
      %2409 = vmatprep.subr.bf16.mxu0 0
      %2410 = vmatpush1.bf16.msra.mxu0 0
      %2411 = vmatprep.subr.bf16.mxu0 0
      %2412 = vmatpush1.bf16.msra.mxu0 0
      %2413 = vmatprep.subr.bf16.mxu0 0
      %2414 = vmatpush1.bf16.msra.mxu0 0
      %2415 = vmatprep.subr.bf16.mxu0 0
      %2416 = vmatpush1.bf16.msra.mxu0 0
      %2417 = vmatprep.subr.bf16.mxu0 0
      %2418 = vmatpush1.bf16.msra.mxu0 0
      %2419 = vmatprep.subr.bf16.mxu0 0
      %2420 = vmatpush1.bf16.msra.mxu0 0
      %2421 = vmatprep.subr.bf16.mxu0 0
      %2422 = vmatpush1.bf16.msra.mxu0 0
      %2423 = vmatprep.subr.bf16.mxu0 0
      %2424 = vmatpush1.bf16.msra.mxu0 0
      %2425 = vmatprep.mubr.bf16.mxu0 0
      %2426 = vmatmul.mubr.bf16.gmra.mrb[0].mxu0 %v479
      %v2427 = vpop.f32.mrb[0].mxu0
      %v2428 = vadd.f32 %v2155, %v2427
      %v2429 = vpop.f32.mrb[0].mxu0
      %v2430 = vadd.f32 %v2157, %v2429
      %v2431 = vpop.f32.mrb[0].mxu0
      %v2432 = vadd.f32 %v2159, %v2431
      %v2433 = vpop.f32.mrb[0].mxu0
      %v2434 = vadd.f32 %v2161, %v2433
      %2435 = vmatprep.mubr.bf16.mxu0 0
      %2436 = vmatmul.mubr.bf16.gmra.mrb[0].mxu0 %v480
      %v2437 = vpop.f32.mrb[0].mxu0
      %v2438 = vadd.f32 %v2165, %v2437
      %v2439 = vpop.f32.mrb[0].mxu0
      %v2440 = vadd.f32 %v2167, %v2439
      %v2441 = vpop.f32.mrb[0].mxu0
      %v2442 = vadd.f32 %v2169, %v2441
      %v2443 = vpop.f32.mrb[0].mxu0
      %v2444 = vadd.f32 %v2171, %v2443
      %2445 = vmatprep.mubr.bf16.mxu0 0
      %2446 = vmatmul.mubr.bf16.gmra.mrb[0].mxu0 %v481
      %v2447 = vpop.f32.mrb[0].mxu0
      %v2448 = vadd.f32 %v2175, %v2447
      %v2449 = vpop.f32.mrb[0].mxu0
      %v2450 = vadd.f32 %v2177, %v2449
      %v2451 = vpop.f32.mrb[0].mxu0
      %v2452 = vadd.f32 %v2179, %v2451
      %v2453 = vpop.f32.mrb[0].mxu0
      %v2454 = vadd.f32 %v2181, %v2453
      %2455 = vmatprep.mubr.bf16.mxu0 0
      %2456 = vmatmul.mubr.bf16.gmra.mrb[0].mxu0 %v482
      %v2457 = vpop.f32.mrb[0].mxu0
      %v2458 = vadd.f32 %v2185, %v2457
      %v2459 = vpop.f32.mrb[0].mxu0
      %v2460 = vadd.f32 %v2187, %v2459
      %v2461 = vpop.f32.mrb[0].mxu0
      %v2462 = vadd.f32 %v2189, %v2461
      %v2463 = vpop.f32.mrb[0].mxu0
      %v2464 = vadd.f32 %v2191, %v2463
      %2465 = vmatprep.mubr.bf16.mxu0 0
      %2466 = vmatmul.mubr.bf16.gmra.mrb[0].mxu0 %v483
      %v2467 = vpop.f32.mrb[0].mxu0
      %v2468 = vadd.f32 %v2195, %v2467
      %v2469 = vpop.f32.mrb[0].mxu0
      %v2470 = vadd.f32 %v2197, %v2469
      %v2471 = vpop.f32.mrb[0].mxu0
      %v2472 = vadd.f32 %v2199, %v2471
      %v2473 = vpop.f32.mrb[0].mxu0
      %v2474 = vadd.f32 %v2201, %v2473
      %2475 = vmatprep.mubr.bf16.mxu0 0
      %2476 = vmatmul.mubr.bf16.gmra.mrb[0].mxu0 %v484
      %v2477 = vpop.f32.mrb[0].mxu0
      %v2478 = vadd.f32 %v2205, %v2477
      %v2479 = vpop.f32.mrb[0].mxu0
      %v2480 = vadd.f32 %v2207, %v2479
      %v2481 = vpop.f32.mrb[0].mxu0
      %v2482 = vadd.f32 %v2209, %v2481
      %v2483 = vpop.f32.mrb[0].mxu0
      %v2484 = vadd.f32 %v2211, %v2483
      %2485 = vmatprep.mubr.bf16.mxu0 0
      %2486 = vmatmul.mubr.bf16.gmra.mrb[0].mxu0 %v485
      %v2487 = vpop.f32.mrb[0].mxu0
      %v2488 = vadd.f32 %v2215, %v2487
      %v2489 = vpop.f32.mrb[0].mxu0
      %v2490 = vadd.f32 %v2217, %v2489
      %v2491 = vpop.f32.mrb[0].mxu0
      %v2492 = vadd.f32 %v2219, %v2491
      %v2493 = vpop.f32.mrb[0].mxu0
      %v2494 = vadd.f32 %v2221, %v2493
      %2495 = vmatprep.mubr.bf16.mxu0 0
      %2496 = vmatmul.mubr.bf16.gmra.mrb[0].mxu0 %v486
      %v2497 = vpop.f32.mrb[0].mxu0
      %v2498 = vadd.f32 %v2225, %v2497
      %v2499 = vpop.f32.mrb[0].mxu0
      %v2500 = vadd.f32 %v2227, %v2499
      %v2501 = vpop.f32.mrb[0].mxu0
      %v2502 = vadd.f32 %v2229, %v2501
      %v2503 = vpop.f32.mrb[0].mxu0
      %v2504 = vadd.f32 %v2231, %v2503
      %2505 = vmatprep.mubr.bf16.mxu0 0
      %2506 = vmatmul.mubr.bf16.gmra.mrb[0].mxu0 %v487
      %v2507 = vpop.f32.mrb[0].mxu0
      %v2508 = vadd.f32 %v2235, %v2507
      %v2509 = vpop.f32.mrb[0].mxu0
      %v2510 = vadd.f32 %v2237, %v2509
      %v2511 = vpop.f32.mrb[0].mxu0
      %v2512 = vadd.f32 %v2239, %v2511
      %v2513 = vpop.f32.mrb[0].mxu0
      %v2514 = vadd.f32 %v2241, %v2513
      %2515 = vmatprep.mubr.bf16.mxu0 0
      %2516 = vmatmul.mubr.bf16.gmra.mrb[0].mxu0 %v488
      %v2517 = vpop.f32.mrb[0].mxu0
      %v2518 = vadd.f32 %v2245, %v2517
      %v2519 = vpop.f32.mrb[0].mxu0
      %v2520 = vadd.f32 %v2247, %v2519
      %v2521 = vpop.f32.mrb[0].mxu0
      %v2522 = vadd.f32 %v2249, %v2521
      %v2523 = vpop.f32.mrb[0].mxu0
      %v2524 = vadd.f32 %v2251, %v2523
      %2525 = vmatprep.mubr.bf16.mxu0 0
      %2526 = vmatmul.mubr.bf16.gmra.mrb[0].mxu0 %v489
      %v2527 = vpop.f32.mrb[0].mxu0
      %v2528 = vadd.f32 %v2255, %v2527
      %v2529 = vpop.f32.mrb[0].mxu0
      %v2530 = vadd.f32 %v2257, %v2529
      %v2531 = vpop.f32.mrb[0].mxu0
      %v2532 = vadd.f32 %v2259, %v2531
      %v2533 = vpop.f32.mrb[0].mxu0
      %v2534 = vadd.f32 %v2261, %v2533
      %2535 = vmatprep.mubr.bf16.mxu0 0
      %2536 = vmatmul.mubr.bf16.gmra.mrb[0].mxu0 %v490
      %v2537 = vpop.f32.mrb[0].mxu0
      %v2538 = vadd.f32 %v2265, %v2537
      %v2539 = vpop.f32.mrb[0].mxu0
      %v2540 = vadd.f32 %v2267, %v2539
      %v2541 = vpop.f32.mrb[0].mxu0
      %v2542 = vadd.f32 %v2269, %v2541
      %v2543 = vpop.f32.mrb[0].mxu0
      %v2544 = vadd.f32 %v2271, %v2543
      %2545 = vmatprep.mubr.bf16.mxu0 0
      %2546 = vmatmul.mubr.bf16.gmra.mrb[0].mxu0 %v491
      %v2547 = vpop.f32.mrb[0].mxu0
      %v2548 = vadd.f32 %v2275, %v2547
      %v2549 = vpop.f32.mrb[0].mxu0
      %v2550 = vadd.f32 %v2277, %v2549
      %v2551 = vpop.f32.mrb[0].mxu0
      %v2552 = vadd.f32 %v2279, %v2551
      %v2553 = vpop.f32.mrb[0].mxu0
      %v2554 = vadd.f32 %v2281, %v2553
      %2555 = vmatprep.mubr.bf16.mxu0 0
      %2556 = vmatmul.mubr.bf16.gmra.mrb[0].mxu0 %v492
      %v2557 = vpop.f32.mrb[0].mxu0
      %v2558 = vadd.f32 %v2285, %v2557
      %v2559 = vpop.f32.mrb[0].mxu0
      %v2560 = vadd.f32 %v2287, %v2559
      %v2561 = vpop.f32.mrb[0].mxu0
      %v2562 = vadd.f32 %v2289, %v2561
      %v2563 = vpop.f32.mrb[0].mxu0
      %v2564 = vadd.f32 %v2291, %v2563
      %2565 = vmatprep.mubr.bf16.mxu0 0
      %2566 = vmatmul.mubr.bf16.gmra.mrb[0].mxu0 %v493
      %v2567 = vpop.f32.mrb[0].mxu0
      %v2568 = vadd.f32 %v2295, %v2567
      %v2569 = vpop.f32.mrb[0].mxu0
      %v2570 = vadd.f32 %v2297, %v2569
      %v2571 = vpop.f32.mrb[0].mxu0
      %v2572 = vadd.f32 %v2299, %v2571
      %v2573 = vpop.f32.mrb[0].mxu0
      %v2574 = vadd.f32 %v2301, %v2573
      %2575 = vmatprep.mubr.bf16.mxu0 0
      %2576 = vmatmul.mubr.bf16.gmra.mrb[0].mxu0 %v494
      %v2577 = vpop.f32.mrb[0].mxu0
      %v2578 = vadd.f32 %v2305, %v2577
      %v2579 = vpop.f32.mrb[0].mxu0
      %v2580 = vadd.f32 %v2307, %v2579
      %v2581 = vpop.f32.mrb[0].mxu0
      %v2582 = vadd.f32 %v2309, %v2581
      %v2583 = vpop.f32.mrb[0].mxu0
      %v2584 = vadd.f32 %v2311, %v2583
      %2585 = vdwg.mxu0
      %s2586 = scalar_lea.vmem %s1, 896
      %v2587 = vld [vmem:[%s2586] sm:$0xff]
      %v2588 = vld [vmem:[%s2586 + $0x8] sm:$0xff]
      %v2589 = vld [vmem:[%s2586 + $0x10] sm:$0xff]
      %v2590 = vld [vmem:[%s2586 + $0x18] sm:$0xff]
      %v2591 = vld [vmem:[%s2586 + $0x20] sm:$0xff]
      %v2592 = vld [vmem:[%s2586 + $0x28] sm:$0xff]
      %v2593 = vld [vmem:[%s2586 + $0x30] sm:$0xff]
      %v2594 = vld [vmem:[%s2586 + $0x38] sm:$0xff]
      %v2595 = vld [vmem:[%s2586 + $0x40] sm:$0xff]
      %v2596 = vld [vmem:[%s2586 + $0x48] sm:$0xff]
      %v2597 = vld [vmem:[%s2586 + $0x50] sm:$0xff]
      %v2598 = vld [vmem:[%s2586 + $0x58] sm:$0xff]
      %v2599 = vld [vmem:[%s2586 + $0x60] sm:$0xff]
      %v2600 = vld [vmem:[%s2586 + $0x68] sm:$0xff]
      %v2601 = vld [vmem:[%s2586 + $0x70] sm:$0xff]
      %v2602 = vld [vmem:[%s2586 + $0x78] sm:$0xff]
      %v2619 = vunpack.c.l.b16 %v2587
      %v2620 = vunpack.c.h.b16 %v2587
      %v2621 = vunpack.c.l.b16 %v2588
      %v2622 = vunpack.c.h.b16 %v2588
      %v2623 = vunpack.c.l.b16 %v2589
      %v2624 = vunpack.c.h.b16 %v2589
      %v2625 = vunpack.c.l.b16 %v2590
      %v2626 = vunpack.c.h.b16 %v2590
      %v2627 = vunpack.c.l.b16 %v2591
      %v2628 = vunpack.c.h.b16 %v2591
      %v2629 = vunpack.c.l.b16 %v2592
      %v2630 = vunpack.c.h.b16 %v2592
      %v2631 = vunpack.c.l.b16 %v2593
      %v2632 = vunpack.c.h.b16 %v2593
      %v2633 = vunpack.c.l.b16 %v2594
      %v2634 = vunpack.c.h.b16 %v2594
      %v2635 = vunpack.c.l.b16 %v2595
      %v2636 = vunpack.c.h.b16 %v2595
      %v2637 = vunpack.c.l.b16 %v2596
      %v2638 = vunpack.c.h.b16 %v2596
      %v2639 = vunpack.c.l.b16 %v2597
      %v2640 = vunpack.c.h.b16 %v2597
      %v2641 = vunpack.c.l.b16 %v2598
      %v2642 = vunpack.c.h.b16 %v2598
      %v2643 = vunpack.c.l.b16 %v2599
      %v2644 = vunpack.c.h.b16 %v2599
      %v2645 = vunpack.c.l.b16 %v2600
      %v2646 = vunpack.c.h.b16 %v2600
      %v2647 = vunpack.c.l.b16 %v2601
      %v2648 = vunpack.c.h.b16 %v2601
      %v2649 = vunpack.c.l.b16 %v2602
      %v2650 = vunpack.c.h.b16 %v2602
      %v2651 = vpack.c.b16 %v2621, %v2619
      %v2652 = vpack.c.b16 %v2622, %v2620
      %v2653 = vpack.c.b16 %v2625, %v2623
      %v2654 = vpack.c.b16 %v2626, %v2624
      %v2655 = vpack.c.b16 %v2629, %v2627
      %v2656 = vpack.c.b16 %v2630, %v2628
      %v2657 = vpack.c.b16 %v2633, %v2631
      %v2658 = vpack.c.b16 %v2634, %v2632
      %v2659 = vpack.c.b16 %v2637, %v2635
      %v2660 = vpack.c.b16 %v2638, %v2636
      %v2661 = vpack.c.b16 %v2641, %v2639
      %v2662 = vpack.c.b16 %v2642, %v2640
      %v2663 = vpack.c.b16 %v2645, %v2643
      %v2664 = vpack.c.b16 %v2646, %v2644
      %v2665 = vpack.c.b16 %v2649, %v2647
      %v2666 = vpack.c.b16 %v2650, %v2648
      %2683 = vmatprep.subr.bf16.mxu0 %v2652
      %2684 = vmatpush1.bf16.msra.mxu0 %v2651
      %2685 = vmatprep.subr.bf16.mxu0 %v2654
      %2686 = vmatpush1.bf16.msra.mxu0 %v2653
      %2687 = vmatprep.subr.bf16.mxu0 %v2656
      %2688 = vmatpush1.bf16.msra.mxu0 %v2655
      %2689 = vmatprep.subr.bf16.mxu0 %v2658
      %2690 = vmatpush1.bf16.msra.mxu0 %v2657
      %2691 = vmatprep.subr.bf16.mxu0 %v2660
      %2692 = vmatpush1.bf16.msra.mxu0 %v2659
      %2693 = vmatprep.subr.bf16.mxu0 %v2662
      %2694 = vmatpush1.bf16.msra.mxu0 %v2661
      %2695 = vmatprep.subr.bf16.mxu0 %v2664
      %2696 = vmatpush1.bf16.msra.mxu0 %v2663
      %2697 = vmatprep.subr.bf16.mxu0 %v2666
      %2698 = vmatpush1.bf16.msra.mxu0 %v2665
      %2699 = vmatprep.subr.bf16.mxu0 0
      %2700 = vmatpush1.bf16.msra.mxu0 0
      %2701 = vmatprep.subr.bf16.mxu0 0
      %2702 = vmatpush1.bf16.msra.mxu0 0
      %2703 = vmatprep.subr.bf16.mxu0 0
      %2704 = vmatpush1.bf16.msra.mxu0 0
      %2705 = vmatprep.subr.bf16.mxu0 0
      %2706 = vmatpush1.bf16.msra.mxu0 0
      %2707 = vmatprep.subr.bf16.mxu0 0
      %2708 = vmatpush1.bf16.msra.mxu0 0
      %2709 = vmatprep.subr.bf16.mxu0 0
      %2710 = vmatpush1.bf16.msra.mxu0 0
      %2711 = vmatprep.subr.bf16.mxu0 0
      %2712 = vmatpush1.bf16.msra.mxu0 0
      %2713 = vmatprep.subr.bf16.mxu0 0
      %2714 = vmatpush1.bf16.msra.mxu0 0
      %2715 = vmatprep.mubr.bf16.mxu0 0
      %2716 = vmatmul.mubr.bf16.gmra.mrb[0].mxu0 %v512
      %v2717 = vpop.f32.mrb[0].mxu0
      %v2718 = vadd.f32 0.0, %v2717
      %v2719 = vpop.f32.mrb[0].mxu0
      %v2720 = vadd.f32 0.0, %v2719
      %v2721 = vpop.f32.mrb[0].mxu0
      %v2722 = vadd.f32 0.0, %v2721
      %v2723 = vpop.f32.mrb[0].mxu0
      %v2724 = vadd.f32 0.0, %v2723
      %2725 = vmatprep.mubr.bf16.mxu0 0
      %2726 = vmatmul.mubr.bf16.gmra.mrb[0].mxu0 %v513
      %v2727 = vpop.f32.mrb[0].mxu0
      %v2728 = vadd.f32 0.0, %v2727
      %v2729 = vpop.f32.mrb[0].mxu0
      %v2730 = vadd.f32 0.0, %v2729
      %v2731 = vpop.f32.mrb[0].mxu0
      %v2732 = vadd.f32 0.0, %v2731
      %v2733 = vpop.f32.mrb[0].mxu0
      %v2734 = vadd.f32 0.0, %v2733
      %2735 = vmatprep.mubr.bf16.mxu0 0
      %2736 = vmatmul.mubr.bf16.gmra.mrb[0].mxu0 %v514
      %v2737 = vpop.f32.mrb[0].mxu0
      %v2738 = vadd.f32 0.0, %v2737
      %v2739 = vpop.f32.mrb[0].mxu0
      %v2740 = vadd.f32 0.0, %v2739
      %v2741 = vpop.f32.mrb[0].mxu0
      %v2742 = vadd.f32 0.0, %v2741
      %v2743 = vpop.f32.mrb[0].mxu0
      %v2744 = vadd.f32 0.0, %v2743
      %2745 = vmatprep.mubr.bf16.mxu0 0
      %2746 = vmatmul.mubr.bf16.gmra.mrb[0].mxu0 %v515
      %v2747 = vpop.f32.mrb[0].mxu0
      %v2748 = vadd.f32 0.0, %v2747
      %v2749 = vpop.f32.mrb[0].mxu0
      %v2750 = vadd.f32 0.0, %v2749
      %v2751 = vpop.f32.mrb[0].mxu0
      %v2752 = vadd.f32 0.0, %v2751
      %v2753 = vpop.f32.mrb[0].mxu0
      %v2754 = vadd.f32 0.0, %v2753
      %2755 = vmatprep.mubr.bf16.mxu0 0
      %2756 = vmatmul.mubr.bf16.gmra.mrb[0].mxu0 %v516
      %v2757 = vpop.f32.mrb[0].mxu0
      %v2758 = vadd.f32 0.0, %v2757
      %v2759 = vpop.f32.mrb[0].mxu0
      %v2760 = vadd.f32 0.0, %v2759
      %v2761 = vpop.f32.mrb[0].mxu0
      %v2762 = vadd.f32 0.0, %v2761
      %v2763 = vpop.f32.mrb[0].mxu0
      %v2764 = vadd.f32 0.0, %v2763
      %2765 = vmatprep.mubr.bf16.mxu0 0
      %2766 = vmatmul.mubr.bf16.gmra.mrb[0].mxu0 %v517
      %v2767 = vpop.f32.mrb[0].mxu0
      %v2768 = vadd.f32 0.0, %v2767
      %v2769 = vpop.f32.mrb[0].mxu0
      %v2770 = vadd.f32 0.0, %v2769
      %v2771 = vpop.f32.mrb[0].mxu0
      %v2772 = vadd.f32 0.0, %v2771
      %v2773 = vpop.f32.mrb[0].mxu0
      %v2774 = vadd.f32 0.0, %v2773
      %2775 = vmatprep.mubr.bf16.mxu0 0
      %2776 = vmatmul.mubr.bf16.gmra.mrb[0].mxu0 %v518
      %v2777 = vpop.f32.mrb[0].mxu0
      %v2778 = vadd.f32 0.0, %v2777
      %v2779 = vpop.f32.mrb[0].mxu0
      %v2780 = vadd.f32 0.0, %v2779
      %v2781 = vpop.f32.mrb[0].mxu0
      %v2782 = vadd.f32 0.0, %v2781
      %v2783 = vpop.f32.mrb[0].mxu0
      %v2784 = vadd.f32 0.0, %v2783
      %2785 = vmatprep.mubr.bf16.mxu0 0
      %2786 = vmatmul.mubr.bf16.gmra.mrb[0].mxu0 %v519
      %v2787 = vpop.f32.mrb[0].mxu0
      %v2788 = vadd.f32 0.0, %v2787
      %v2789 = vpop.f32.mrb[0].mxu0
      %v2790 = vadd.f32 0.0, %v2789
      %v2791 = vpop.f32.mrb[0].mxu0
      %v2792 = vadd.f32 0.0, %v2791
      %v2793 = vpop.f32.mrb[0].mxu0
      %v2794 = vadd.f32 0.0, %v2793
      %2795 = vmatprep.mubr.bf16.mxu0 0
      %2796 = vmatmul.mubr.bf16.gmra.mrb[0].mxu0 %v520
      %v2797 = vpop.f32.mrb[0].mxu0
      %v2798 = vadd.f32 0.0, %v2797
      %v2799 = vpop.f32.mrb[0].mxu0
      %v2800 = vadd.f32 0.0, %v2799
      %v2801 = vpop.f32.mrb[0].mxu0
      %v2802 = vadd.f32 0.0, %v2801
      %v2803 = vpop.f32.mrb[0].mxu0
      %v2804 = vadd.f32 0.0, %v2803
      %2805 = vmatprep.mubr.bf16.mxu0 0
      %2806 = vmatmul.mubr.bf16.gmra.mrb[0].mxu0 %v521
      %v2807 = vpop.f32.mrb[0].mxu0
      %v2808 = vadd.f32 0.0, %v2807
      %v2809 = vpop.f32.mrb[0].mxu0
      %v2810 = vadd.f32 0.0, %v2809
      %v2811 = vpop.f32.mrb[0].mxu0
      %v2812 = vadd.f32 0.0, %v2811
      %v2813 = vpop.f32.mrb[0].mxu0
      %v2814 = vadd.f32 0.0, %v2813
      %2815 = vmatprep.mubr.bf16.mxu0 0
      %2816 = vmatmul.mubr.bf16.gmra.mrb[0].mxu0 %v522
      %v2817 = vpop.f32.mrb[0].mxu0
      %v2818 = vadd.f32 0.0, %v2817
      %v2819 = vpop.f32.mrb[0].mxu0
      %v2820 = vadd.f32 0.0, %v2819
      %v2821 = vpop.f32.mrb[0].mxu0
      %v2822 = vadd.f32 0.0, %v2821
      %v2823 = vpop.f32.mrb[0].mxu0
      %v2824 = vadd.f32 0.0, %v2823
      %2825 = vmatprep.mubr.bf16.mxu0 0
      %2826 = vmatmul.mubr.bf16.gmra.mrb[0].mxu0 %v523
      %v2827 = vpop.f32.mrb[0].mxu0
      %v2828 = vadd.f32 0.0, %v2827
      %v2829 = vpop.f32.mrb[0].mxu0
      %v2830 = vadd.f32 0.0, %v2829
      %v2831 = vpop.f32.mrb[0].mxu0
      %v2832 = vadd.f32 0.0, %v2831
      %v2833 = vpop.f32.mrb[0].mxu0
      %v2834 = vadd.f32 0.0, %v2833
      %2835 = vmatprep.mubr.bf16.mxu0 0
      %2836 = vmatmul.mubr.bf16.gmra.mrb[0].mxu0 %v524
      %v2837 = vpop.f32.mrb[0].mxu0
      %v2838 = vadd.f32 0.0, %v2837
      %v2839 = vpop.f32.mrb[0].mxu0
      %v2840 = vadd.f32 0.0, %v2839
      %v2841 = vpop.f32.mrb[0].mxu0
      %v2842 = vadd.f32 0.0, %v2841
      %v2843 = vpop.f32.mrb[0].mxu0
      %v2844 = vadd.f32 0.0, %v2843
      %2845 = vmatprep.mubr.bf16.mxu0 0
      %2846 = vmatmul.mubr.bf16.gmra.mrb[0].mxu0 %v525
      %v2847 = vpop.f32.mrb[0].mxu0
      %v2848 = vadd.f32 0.0, %v2847
      %v2849 = vpop.f32.mrb[0].mxu0
      %v2850 = vadd.f32 0.0, %v2849
      %v2851 = vpop.f32.mrb[0].mxu0
      %v2852 = vadd.f32 0.0, %v2851
      %v2853 = vpop.f32.mrb[0].mxu0
      %v2854 = vadd.f32 0.0, %v2853
      %2855 = vmatprep.mubr.bf16.mxu0 0
      %2856 = vmatmul.mubr.bf16.gmra.mrb[0].mxu0 %v526
      %v2857 = vpop.f32.mrb[0].mxu0
      %v2858 = vadd.f32 0.0, %v2857
      %v2859 = vpop.f32.mrb[0].mxu0
      %v2860 = vadd.f32 0.0, %v2859
      %v2861 = vpop.f32.mrb[0].mxu0
      %v2862 = vadd.f32 0.0, %v2861
      %v2863 = vpop.f32.mrb[0].mxu0
      %v2864 = vadd.f32 0.0, %v2863
      %2865 = vmatprep.mubr.bf16.mxu0 0
      %2866 = vmatmul.mubr.bf16.gmra.mrb[0].mxu0 %v527
      %v2867 = vpop.f32.mrb[0].mxu0
      %v2868 = vadd.f32 0.0, %v2867
      %v2869 = vpop.f32.mrb[0].mxu0
      %v2870 = vadd.f32 0.0, %v2869
      %v2871 = vpop.f32.mrb[0].mxu0
      %v2872 = vadd.f32 0.0, %v2871
      %v2873 = vpop.f32.mrb[0].mxu0
      %v2874 = vadd.f32 0.0, %v2873
      %2875 = vdwg.mxu0
      %v2876 = vadd.f32 %v2428, %v2718
      %v2877 = vadd.f32 %v2430, %v2720
      %v2878 = vadd.f32 %v2432, %v2722
      %v2879 = vadd.f32 %v2434, %v2724
      %v2880 = vadd.f32 %v2438, %v2728
      %v2881 = vadd.f32 %v2440, %v2730
      %v2882 = vadd.f32 %v2442, %v2732
      %v2883 = vadd.f32 %v2444, %v2734
      %v2884 = vadd.f32 %v2448, %v2738
      %v2885 = vadd.f32 %v2450, %v2740
      %v2886 = vadd.f32 %v2452, %v2742
      %v2887 = vadd.f32 %v2454, %v2744
      %v2888 = vadd.f32 %v2458, %v2748
      %v2889 = vadd.f32 %v2460, %v2750
      %v2890 = vadd.f32 %v2462, %v2752
      %v2891 = vadd.f32 %v2464, %v2754
      %v2892 = vadd.f32 %v2468, %v2758
      %v2893 = vadd.f32 %v2470, %v2760
      %v2894 = vadd.f32 %v2472, %v2762
      %v2895 = vadd.f32 %v2474, %v2764
      %v2896 = vadd.f32 %v2478, %v2768
      %v2897 = vadd.f32 %v2480, %v2770
      %v2898 = vadd.f32 %v2482, %v2772
      %v2899 = vadd.f32 %v2484, %v2774
      %v2900 = vadd.f32 %v2488, %v2778
      %v2901 = vadd.f32 %v2490, %v2780
      %v2902 = vadd.f32 %v2492, %v2782
      %v2903 = vadd.f32 %v2494, %v2784
      %v2904 = vadd.f32 %v2498, %v2788
      %v2905 = vadd.f32 %v2500, %v2790
      %v2906 = vadd.f32 %v2502, %v2792
      %v2907 = vadd.f32 %v2504, %v2794
      %v2908 = vadd.f32 %v2508, %v2798
      %v2909 = vadd.f32 %v2510, %v2800
      %v2910 = vadd.f32 %v2512, %v2802
      %v2911 = vadd.f32 %v2514, %v2804
      %v2912 = vadd.f32 %v2518, %v2808
      %v2913 = vadd.f32 %v2520, %v2810
      %v2914 = vadd.f32 %v2522, %v2812
      %v2915 = vadd.f32 %v2524, %v2814
      %v2916 = vadd.f32 %v2528, %v2818
      %v2917 = vadd.f32 %v2530, %v2820
      %v2918 = vadd.f32 %v2532, %v2822
      %v2919 = vadd.f32 %v2534, %v2824
      %v2920 = vadd.f32 %v2538, %v2828
      %v2921 = vadd.f32 %v2540, %v2830
      %v2922 = vadd.f32 %v2542, %v2832
      %v2923 = vadd.f32 %v2544, %v2834
      %v2924 = vadd.f32 %v2548, %v2838
      %v2925 = vadd.f32 %v2550, %v2840
      %v2926 = vadd.f32 %v2552, %v2842
      %v2927 = vadd.f32 %v2554, %v2844
      %v2928 = vadd.f32 %v2558, %v2848
      %v2929 = vadd.f32 %v2560, %v2850
      %v2930 = vadd.f32 %v2562, %v2852
      %v2931 = vadd.f32 %v2564, %v2854
      %v2932 = vadd.f32 %v2568, %v2858
      %v2933 = vadd.f32 %v2570, %v2860
      %v2934 = vadd.f32 %v2572, %v2862
      %v2935 = vadd.f32 %v2574, %v2864
      %v2936 = vadd.f32 %v2578, %v2868
      %v2937 = vadd.f32 %v2580, %v2870
      %v2938 = vadd.f32 %v2582, %v2872
      %v2939 = vadd.f32 %v2584, %v2874
      %v2940 = vadd.f32 %v1942, %v2876
      %v2941 = vadd.f32 %v1943, %v2877
      %v2942 = vadd.f32 %v1944, %v2878
      %v2943 = vadd.f32 %v1945, %v2879
      %v2944 = vadd.f32 %v1946, %v2880
      %v2945 = vadd.f32 %v1947, %v2881
      %v2946 = vadd.f32 %v1948, %v2882
      %v2947 = vadd.f32 %v1949, %v2883
      %v2948 = vadd.f32 %v1950, %v2884
      %v2949 = vadd.f32 %v1951, %v2885
      %v2950 = vadd.f32 %v1952, %v2886
      %v2951 = vadd.f32 %v1953, %v2887
      %v2952 = vadd.f32 %v1954, %v2888
      %v2953 = vadd.f32 %v1955, %v2889
      %v2954 = vadd.f32 %v1956, %v2890
      %v2955 = vadd.f32 %v1957, %v2891
      %v2956 = vadd.f32 %v1958, %v2892
      %v2957 = vadd.f32 %v1959, %v2893
      %v2958 = vadd.f32 %v1960, %v2894
      %v2959 = vadd.f32 %v1961, %v2895
      %v2960 = vadd.f32 %v1962, %v2896
      %v2961 = vadd.f32 %v1963, %v2897
      %v2962 = vadd.f32 %v1964, %v2898
      %v2963 = vadd.f32 %v1965, %v2899
      %v2964 = vadd.f32 %v1966, %v2900
      %v2965 = vadd.f32 %v1967, %v2901
      %v2966 = vadd.f32 %v1968, %v2902
      %v2967 = vadd.f32 %v1969, %v2903
      %v2968 = vadd.f32 %v1970, %v2904
      %v2969 = vadd.f32 %v1971, %v2905
      %v2970 = vadd.f32 %v1972, %v2906
      %v2971 = vadd.f32 %v1973, %v2907
      %v2972 = vadd.f32 %v1974, %v2908
      %v2973 = vadd.f32 %v1975, %v2909
      %v2974 = vadd.f32 %v1976, %v2910
      %v2975 = vadd.f32 %v1977, %v2911
      %v2976 = vadd.f32 %v1978, %v2912
      %v2977 = vadd.f32 %v1979, %v2913
      %v2978 = vadd.f32 %v1980, %v2914
      %v2979 = vadd.f32 %v1981, %v2915
      %v2980 = vadd.f32 %v1982, %v2916
      %v2981 = vadd.f32 %v1983, %v2917
      %v2982 = vadd.f32 %v1984, %v2918
      %v2983 = vadd.f32 %v1985, %v2919
      %v2984 = vadd.f32 %v1986, %v2920
      %v2985 = vadd.f32 %v1987, %v2921
      %v2986 = vadd.f32 %v1988, %v2922
      %v2987 = vadd.f32 %v1989, %v2923
      %v2988 = vadd.f32 %v1990, %v2924
      %v2989 = vadd.f32 %v1991, %v2925
      %v2990 = vadd.f32 %v1992, %v2926
      %v2991 = vadd.f32 %v1993, %v2927
      %v2992 = vadd.f32 %v1994, %v2928
      %v2993 = vadd.f32 %v1995, %v2929
      %v2994 = vadd.f32 %v1996, %v2930
      %v2995 = vadd.f32 %v1997, %v2931
      %v2996 = vadd.f32 %v1998, %v2932
      %v2997 = vadd.f32 %v1999, %v2933
      %v2998 = vadd.f32 %v2000, %v2934
      %v2999 = vadd.f32 %v2001, %v2935
      %v3000 = vadd.f32 %v2002, %v2936
      %v3001 = vadd.f32 %v2003, %v2937
      %v3002 = vadd.f32 %v2004, %v2938
      %v3003 = vadd.f32 %v2005, %v2939
      %s3004 = scalar_lea.vmem %s1, 256
      %v3005 = vld [vmem:[%s3004] sm:$0xff]
      %v3006 = vld [vmem:[%s3004 + $0x8] sm:$0xff]
      %v3007 = vld [vmem:[%s3004 + $0x10] sm:$0xff]
      %v3008 = vld [vmem:[%s3004 + $0x18] sm:$0xff]
      %v3009 = vld [vmem:[%s3004 + $0x20] sm:$0xff]
      %v3010 = vld [vmem:[%s3004 + $0x28] sm:$0xff]
      %v3011 = vld [vmem:[%s3004 + $0x30] sm:$0xff]
      %v3012 = vld [vmem:[%s3004 + $0x38] sm:$0xff]
      %v3013 = vld [vmem:[%s3004 + $0x40] sm:$0xff]
      %v3014 = vld [vmem:[%s3004 + $0x48] sm:$0xff]
      %v3015 = vld [vmem:[%s3004 + $0x50] sm:$0xff]
      %v3016 = vld [vmem:[%s3004 + $0x58] sm:$0xff]
      %v3017 = vld [vmem:[%s3004 + $0x60] sm:$0xff]
      %v3018 = vld [vmem:[%s3004 + $0x68] sm:$0xff]
      %v3019 = vld [vmem:[%s3004 + $0x70] sm:$0xff]
      %v3020 = vld [vmem:[%s3004 + $0x78] sm:$0xff]
      %s3021 = scalar_lea.vmem %s1, 640
      %v3022 = vld [vmem:[%s3021] sm:$0xff]
      %v3023 = vld [vmem:[%s3021 + $0x8] sm:$0xff]
      %v3024 = vld [vmem:[%s3021 + $0x10] sm:$0xff]
      %v3025 = vld [vmem:[%s3021 + $0x18] sm:$0xff]
      %v3026 = vld [vmem:[%s3021 + $0x20] sm:$0xff]
      %v3027 = vld [vmem:[%s3021 + $0x28] sm:$0xff]
      %v3028 = vld [vmem:[%s3021 + $0x30] sm:$0xff]
      %v3029 = vld [vmem:[%s3021 + $0x38] sm:$0xff]
      %v3030 = vld [vmem:[%s3021 + $0x40] sm:$0xff]
      %v3031 = vld [vmem:[%s3021 + $0x48] sm:$0xff]
      %v3032 = vld [vmem:[%s3021 + $0x50] sm:$0xff]
      %v3033 = vld [vmem:[%s3021 + $0x58] sm:$0xff]
      %v3034 = vld [vmem:[%s3021 + $0x60] sm:$0xff]
      %v3035 = vld [vmem:[%s3021 + $0x68] sm:$0xff]
      %v3036 = vld [vmem:[%s3021 + $0x70] sm:$0xff]
      %v3037 = vld [vmem:[%s3021 + $0x78] sm:$0xff]
      %v3054 = vunpack.c.l.b16 %v3022
      %v3055 = vunpack.c.h.b16 %v3022
      %v3056 = vunpack.c.l.b16 %v3023
      %v3057 = vunpack.c.h.b16 %v3023
      %v3058 = vunpack.c.l.b16 %v3024
      %v3059 = vunpack.c.h.b16 %v3024
      %v3060 = vunpack.c.l.b16 %v3025
      %v3061 = vunpack.c.h.b16 %v3025
      %v3062 = vunpack.c.l.b16 %v3026
      %v3063 = vunpack.c.h.b16 %v3026
      %v3064 = vunpack.c.l.b16 %v3027
      %v3065 = vunpack.c.h.b16 %v3027
      %v3066 = vunpack.c.l.b16 %v3028
      %v3067 = vunpack.c.h.b16 %v3028
      %v3068 = vunpack.c.l.b16 %v3029
      %v3069 = vunpack.c.h.b16 %v3029
      %v3070 = vunpack.c.l.b16 %v3030
      %v3071 = vunpack.c.h.b16 %v3030
      %v3072 = vunpack.c.l.b16 %v3031
      %v3073 = vunpack.c.h.b16 %v3031
      %v3074 = vunpack.c.l.b16 %v3032
      %v3075 = vunpack.c.h.b16 %v3032
      %v3076 = vunpack.c.l.b16 %v3033
      %v3077 = vunpack.c.h.b16 %v3033
      %v3078 = vunpack.c.l.b16 %v3034
      %v3079 = vunpack.c.h.b16 %v3034
      %v3080 = vunpack.c.l.b16 %v3035
      %v3081 = vunpack.c.h.b16 %v3035
      %v3082 = vunpack.c.l.b16 %v3036
      %v3083 = vunpack.c.h.b16 %v3036
      %v3084 = vunpack.c.l.b16 %v3037
      %v3085 = vunpack.c.h.b16 %v3037
      %v3086 = vpack.c.b16 %v3056, %v3054
      %v3087 = vpack.c.b16 %v3057, %v3055
      %v3088 = vpack.c.b16 %v3060, %v3058
      %v3089 = vpack.c.b16 %v3061, %v3059
      %v3090 = vpack.c.b16 %v3064, %v3062
      %v3091 = vpack.c.b16 %v3065, %v3063
      %v3092 = vpack.c.b16 %v3068, %v3066
      %v3093 = vpack.c.b16 %v3069, %v3067
      %v3094 = vpack.c.b16 %v3072, %v3070
      %v3095 = vpack.c.b16 %v3073, %v3071
      %v3096 = vpack.c.b16 %v3076, %v3074
      %v3097 = vpack.c.b16 %v3077, %v3075
      %v3098 = vpack.c.b16 %v3080, %v3078
      %v3099 = vpack.c.b16 %v3081, %v3079
      %v3100 = vpack.c.b16 %v3084, %v3082
      %v3101 = vpack.c.b16 %v3085, %v3083
      %3118 = vmatprep.subr.bf16.mxu0 %v3087
      %3119 = vmatpush1.bf16.msra.mxu0 %v3086
      %3120 = vmatprep.subr.bf16.mxu0 %v3089
      %3121 = vmatpush1.bf16.msra.mxu0 %v3088
      %3122 = vmatprep.subr.bf16.mxu0 %v3091
      %3123 = vmatpush1.bf16.msra.mxu0 %v3090
      %3124 = vmatprep.subr.bf16.mxu0 %v3093
      %3125 = vmatpush1.bf16.msra.mxu0 %v3092
      %3126 = vmatprep.subr.bf16.mxu0 %v3095
      %3127 = vmatpush1.bf16.msra.mxu0 %v3094
      %3128 = vmatprep.subr.bf16.mxu0 %v3097
      %3129 = vmatpush1.bf16.msra.mxu0 %v3096
      %3130 = vmatprep.subr.bf16.mxu0 %v3099
      %3131 = vmatpush1.bf16.msra.mxu0 %v3098
      %3132 = vmatprep.subr.bf16.mxu0 %v3101
      %3133 = vmatpush1.bf16.msra.mxu0 %v3100
      %3134 = vmatprep.subr.bf16.mxu0 0
      %3135 = vmatpush1.bf16.msra.mxu0 0
      %3136 = vmatprep.subr.bf16.mxu0 0
      %3137 = vmatpush1.bf16.msra.mxu0 0
      %3138 = vmatprep.subr.bf16.mxu0 0
      %3139 = vmatpush1.bf16.msra.mxu0 0
      %3140 = vmatprep.subr.bf16.mxu0 0
      %3141 = vmatpush1.bf16.msra.mxu0 0
      %3142 = vmatprep.subr.bf16.mxu0 0
      %3143 = vmatpush1.bf16.msra.mxu0 0
      %3144 = vmatprep.subr.bf16.mxu0 0
      %3145 = vmatpush1.bf16.msra.mxu0 0
      %3146 = vmatprep.subr.bf16.mxu0 0
      %3147 = vmatpush1.bf16.msra.mxu0 0
      %3148 = vmatprep.subr.bf16.mxu0 0
      %3149 = vmatpush1.bf16.msra.mxu0 0
      %3150 = vmatprep.mubr.bf16.mxu0 0
      %3151 = vmatmul.mubr.bf16.gmra.mrb[0].mxu0 %v495
      %v3152 = vpop.f32.mrb[0].mxu0
      %v3153 = vadd.f32 0.0, %v3152
      %v3154 = vpop.f32.mrb[0].mxu0
      %v3155 = vadd.f32 0.0, %v3154
      %v3156 = vpop.f32.mrb[0].mxu0
      %v3157 = vadd.f32 0.0, %v3156
      %v3158 = vpop.f32.mrb[0].mxu0
      %v3159 = vadd.f32 0.0, %v3158
      %3160 = vmatprep.mubr.bf16.mxu0 0
      %3161 = vmatmul.mubr.bf16.gmra.mrb[0].mxu0 %v496
      %v3162 = vpop.f32.mrb[0].mxu0
      %v3163 = vadd.f32 0.0, %v3162
      %v3164 = vpop.f32.mrb[0].mxu0
      %v3165 = vadd.f32 0.0, %v3164
      %v3166 = vpop.f32.mrb[0].mxu0
      %v3167 = vadd.f32 0.0, %v3166
      %v3168 = vpop.f32.mrb[0].mxu0
      %v3169 = vadd.f32 0.0, %v3168
      %3170 = vmatprep.mubr.bf16.mxu0 0
      %3171 = vmatmul.mubr.bf16.gmra.mrb[0].mxu0 %v497
      %v3172 = vpop.f32.mrb[0].mxu0
      %v3173 = vadd.f32 0.0, %v3172
      %v3174 = vpop.f32.mrb[0].mxu0
      %v3175 = vadd.f32 0.0, %v3174
      %v3176 = vpop.f32.mrb[0].mxu0
      %v3177 = vadd.f32 0.0, %v3176
      %v3178 = vpop.f32.mrb[0].mxu0
      %v3179 = vadd.f32 0.0, %v3178
      %3180 = vmatprep.mubr.bf16.mxu0 0
      %3181 = vmatmul.mubr.bf16.gmra.mrb[0].mxu0 %v498
      %v3182 = vpop.f32.mrb[0].mxu0
      %v3183 = vadd.f32 0.0, %v3182
      %v3184 = vpop.f32.mrb[0].mxu0
      %v3185 = vadd.f32 0.0, %v3184
      %v3186 = vpop.f32.mrb[0].mxu0
      %v3187 = vadd.f32 0.0, %v3186
      %v3188 = vpop.f32.mrb[0].mxu0
      %v3189 = vadd.f32 0.0, %v3188
      %3190 = vmatprep.mubr.bf16.mxu0 0
      %3191 = vmatmul.mubr.bf16.gmra.mrb[0].mxu0 %v499
      %v3192 = vpop.f32.mrb[0].mxu0
      %v3193 = vadd.f32 0.0, %v3192
      %v3194 = vpop.f32.mrb[0].mxu0
      %v3195 = vadd.f32 0.0, %v3194
      %v3196 = vpop.f32.mrb[0].mxu0
      %v3197 = vadd.f32 0.0, %v3196
      %v3198 = vpop.f32.mrb[0].mxu0
      %v3199 = vadd.f32 0.0, %v3198
      %3200 = vmatprep.mubr.bf16.mxu0 0
      %3201 = vmatmul.mubr.bf16.gmra.mrb[0].mxu0 %v500
      %v3202 = vpop.f32.mrb[0].mxu0
      %v3203 = vadd.f32 0.0, %v3202
      %v3204 = vpop.f32.mrb[0].mxu0
      %v3205 = vadd.f32 0.0, %v3204
      %v3206 = vpop.f32.mrb[0].mxu0
      %v3207 = vadd.f32 0.0, %v3206
      %v3208 = vpop.f32.mrb[0].mxu0
      %v3209 = vadd.f32 0.0, %v3208
      %3210 = vmatprep.mubr.bf16.mxu0 0
      %3211 = vmatmul.mubr.bf16.gmra.mrb[0].mxu0 %v501
      %v3212 = vpop.f32.mrb[0].mxu0
      %v3213 = vadd.f32 0.0, %v3212
      %v3214 = vpop.f32.mrb[0].mxu0
      %v3215 = vadd.f32 0.0, %v3214
      %v3216 = vpop.f32.mrb[0].mxu0
      %v3217 = vadd.f32 0.0, %v3216
      %v3218 = vpop.f32.mrb[0].mxu0
      %v3219 = vadd.f32 0.0, %v3218
      %3220 = vmatprep.mubr.bf16.mxu0 0
      %3221 = vmatmul.mubr.bf16.gmra.mrb[0].mxu0 %v502
      %v3222 = vpop.f32.mrb[0].mxu0
      %v3223 = vadd.f32 0.0, %v3222
      %v3224 = vpop.f32.mrb[0].mxu0
      %v3225 = vadd.f32 0.0, %v3224
      %v3226 = vpop.f32.mrb[0].mxu0
      %v3227 = vadd.f32 0.0, %v3226
      %v3228 = vpop.f32.mrb[0].mxu0
      %v3229 = vadd.f32 0.0, %v3228
      %3230 = vmatprep.mubr.bf16.mxu0 0
      %3231 = vmatmul.mubr.bf16.gmra.mrb[0].mxu0 %v503
      %v3232 = vpop.f32.mrb[0].mxu0
      %v3233 = vadd.f32 0.0, %v3232
      %v3234 = vpop.f32.mrb[0].mxu0
      %v3235 = vadd.f32 0.0, %v3234
      %v3236 = vpop.f32.mrb[0].mxu0
      %v3237 = vadd.f32 0.0, %v3236
      %v3238 = vpop.f32.mrb[0].mxu0
      %v3239 = vadd.f32 0.0, %v3238
      %3240 = vmatprep.mubr.bf16.mxu0 0
      %3241 = vmatmul.mubr.bf16.gmra.mrb[0].mxu0 %v504
      %v3242 = vpop.f32.mrb[0].mxu0
      %v3243 = vadd.f32 0.0, %v3242
      %v3244 = vpop.f32.mrb[0].mxu0
      %v3245 = vadd.f32 0.0, %v3244
      %v3246 = vpop.f32.mrb[0].mxu0
      %v3247 = vadd.f32 0.0, %v3246
      %v3248 = vpop.f32.mrb[0].mxu0
      %v3249 = vadd.f32 0.0, %v3248
      %3250 = vmatprep.mubr.bf16.mxu0 0
      %3251 = vmatmul.mubr.bf16.gmra.mrb[0].mxu0 %v505
      %v3252 = vpop.f32.mrb[0].mxu0
      %v3253 = vadd.f32 0.0, %v3252
      %v3254 = vpop.f32.mrb[0].mxu0
      %v3255 = vadd.f32 0.0, %v3254
      %v3256 = vpop.f32.mrb[0].mxu0
      %v3257 = vadd.f32 0.0, %v3256
      %v3258 = vpop.f32.mrb[0].mxu0
      %v3259 = vadd.f32 0.0, %v3258
      %3260 = vmatprep.mubr.bf16.mxu0 0
      %3261 = vmatmul.mubr.bf16.gmra.mrb[0].mxu0 %v506
      %v3262 = vpop.f32.mrb[0].mxu0
      %v3263 = vadd.f32 0.0, %v3262
      %v3264 = vpop.f32.mrb[0].mxu0
      %v3265 = vadd.f32 0.0, %v3264
      %v3266 = vpop.f32.mrb[0].mxu0
      %v3267 = vadd.f32 0.0, %v3266
      %v3268 = vpop.f32.mrb[0].mxu0
      %v3269 = vadd.f32 0.0, %v3268
      %3270 = vmatprep.mubr.bf16.mxu0 0
      %3271 = vmatmul.mubr.bf16.gmra.mrb[0].mxu0 %v507
      %v3272 = vpop.f32.mrb[0].mxu0
      %v3273 = vadd.f32 0.0, %v3272
      %v3274 = vpop.f32.mrb[0].mxu0
      %v3275 = vadd.f32 0.0, %v3274
      %v3276 = vpop.f32.mrb[0].mxu0
      %v3277 = vadd.f32 0.0, %v3276
      %v3278 = vpop.f32.mrb[0].mxu0
      %v3279 = vadd.f32 0.0, %v3278
      %3280 = vmatprep.mubr.bf16.mxu0 0
      %3281 = vmatmul.mubr.bf16.gmra.mrb[0].mxu0 %v508
      %v3282 = vpop.f32.mrb[0].mxu0
      %v3283 = vadd.f32 0.0, %v3282
      %v3284 = vpop.f32.mrb[0].mxu0
      %v3285 = vadd.f32 0.0, %v3284
      %v3286 = vpop.f32.mrb[0].mxu0
      %v3287 = vadd.f32 0.0, %v3286
      %v3288 = vpop.f32.mrb[0].mxu0
      %v3289 = vadd.f32 0.0, %v3288
      %3290 = vmatprep.mubr.bf16.mxu0 0
      %3291 = vmatmul.mubr.bf16.gmra.mrb[0].mxu0 %v509
      %v3292 = vpop.f32.mrb[0].mxu0
      %v3293 = vadd.f32 0.0, %v3292
      %v3294 = vpop.f32.mrb[0].mxu0
      %v3295 = vadd.f32 0.0, %v3294
      %v3296 = vpop.f32.mrb[0].mxu0
      %v3297 = vadd.f32 0.0, %v3296
      %v3298 = vpop.f32.mrb[0].mxu0
      %v3299 = vadd.f32 0.0, %v3298
      %3300 = vmatprep.mubr.bf16.mxu0 0
      %3301 = vmatmul.mubr.bf16.gmra.mrb[0].mxu0 %v510
      %v3302 = vpop.f32.mrb[0].mxu0
      %v3303 = vadd.f32 0.0, %v3302
      %v3304 = vpop.f32.mrb[0].mxu0
      %v3305 = vadd.f32 0.0, %v3304
      %v3306 = vpop.f32.mrb[0].mxu0
      %v3307 = vadd.f32 0.0, %v3306
      %v3308 = vpop.f32.mrb[0].mxu0
      %v3309 = vadd.f32 0.0, %v3308
      %3310 = vdwg.mxu0
      %v3327 = vunpack.c.l.b16 %v3005
      %v3328 = vunpack.c.h.b16 %v3005
      %v3329 = vunpack.c.l.b16 %v3006
      %v3330 = vunpack.c.h.b16 %v3006
      %v3331 = vunpack.c.l.b16 %v3007
      %v3332 = vunpack.c.h.b16 %v3007
      %v3333 = vunpack.c.l.b16 %v3008
      %v3334 = vunpack.c.h.b16 %v3008
      %v3335 = vunpack.c.l.b16 %v3009
      %v3336 = vunpack.c.h.b16 %v3009
      %v3337 = vunpack.c.l.b16 %v3010
      %v3338 = vunpack.c.h.b16 %v3010
      %v3339 = vunpack.c.l.b16 %v3011
      %v3340 = vunpack.c.h.b16 %v3011
      %v3341 = vunpack.c.l.b16 %v3012
      %v3342 = vunpack.c.h.b16 %v3012
      %v3343 = vunpack.c.l.b16 %v3013
      %v3344 = vunpack.c.h.b16 %v3013
      %v3345 = vunpack.c.l.b16 %v3014
      %v3346 = vunpack.c.h.b16 %v3014
      %v3347 = vunpack.c.l.b16 %v3015
      %v3348 = vunpack.c.h.b16 %v3015
      %v3349 = vunpack.c.l.b16 %v3016
      %v3350 = vunpack.c.h.b16 %v3016
      %v3351 = vunpack.c.l.b16 %v3017
      %v3352 = vunpack.c.h.b16 %v3017
      %v3353 = vunpack.c.l.b16 %v3018
      %v3354 = vunpack.c.h.b16 %v3018
      %v3355 = vunpack.c.l.b16 %v3019
      %v3356 = vunpack.c.h.b16 %v3019
      %v3357 = vunpack.c.l.b16 %v3020
      %v3358 = vunpack.c.h.b16 %v3020
      %v3359 = vpack.c.b16 %v3329, %v3327
      %v3360 = vpack.c.b16 %v3330, %v3328
      %v3361 = vpack.c.b16 %v3333, %v3331
      %v3362 = vpack.c.b16 %v3334, %v3332
      %v3363 = vpack.c.b16 %v3337, %v3335
      %v3364 = vpack.c.b16 %v3338, %v3336
      %v3365 = vpack.c.b16 %v3341, %v3339
      %v3366 = vpack.c.b16 %v3342, %v3340
      %v3367 = vpack.c.b16 %v3345, %v3343
      %v3368 = vpack.c.b16 %v3346, %v3344
      %v3369 = vpack.c.b16 %v3349, %v3347
      %v3370 = vpack.c.b16 %v3350, %v3348
      %v3371 = vpack.c.b16 %v3353, %v3351
      %v3372 = vpack.c.b16 %v3354, %v3352
      %v3373 = vpack.c.b16 %v3357, %v3355
      %v3374 = vpack.c.b16 %v3358, %v3356
      %3391 = vmatprep.subr.bf16.mxu0 %v3360
      %3392 = vmatpush1.bf16.msra.mxu0 %v3359
      %3393 = vmatprep.subr.bf16.mxu0 %v3362
      %3394 = vmatpush1.bf16.msra.mxu0 %v3361
      %3395 = vmatprep.subr.bf16.mxu0 %v3364
      %3396 = vmatpush1.bf16.msra.mxu0 %v3363
      %3397 = vmatprep.subr.bf16.mxu0 %v3366
      %3398 = vmatpush1.bf16.msra.mxu0 %v3365
      %3399 = vmatprep.subr.bf16.mxu0 %v3368
      %3400 = vmatpush1.bf16.msra.mxu0 %v3367
      %3401 = vmatprep.subr.bf16.mxu0 %v3370
      %3402 = vmatpush1.bf16.msra.mxu0 %v3369
      %3403 = vmatprep.subr.bf16.mxu0 %v3372
      %3404 = vmatpush1.bf16.msra.mxu0 %v3371
      %3405 = vmatprep.subr.bf16.mxu0 %v3374
      %3406 = vmatpush1.bf16.msra.mxu0 %v3373
      %3407 = vmatprep.subr.bf16.mxu0 0
      %3408 = vmatpush1.bf16.msra.mxu0 0
      %3409 = vmatprep.subr.bf16.mxu0 0
      %3410 = vmatpush1.bf16.msra.mxu0 0
      %3411 = vmatprep.subr.bf16.mxu0 0
      %3412 = vmatpush1.bf16.msra.mxu0 0
      %3413 = vmatprep.subr.bf16.mxu0 0
      %3414 = vmatpush1.bf16.msra.mxu0 0
      %3415 = vmatprep.subr.bf16.mxu0 0
      %3416 = vmatpush1.bf16.msra.mxu0 0
      %3417 = vmatprep.subr.bf16.mxu0 0
      %3418 = vmatpush1.bf16.msra.mxu0 0
      %3419 = vmatprep.subr.bf16.mxu0 0
      %3420 = vmatpush1.bf16.msra.mxu0 0
      %3421 = vmatprep.subr.bf16.mxu0 0
      %3422 = vmatpush1.bf16.msra.mxu0 0
      %3423 = vmatprep.mubr.bf16.mxu0 0
      %3424 = vmatmul.mubr.bf16.gmra.mrb[0].mxu0 %v479
      %v3425 = vpop.f32.mrb[0].mxu0
      %v3426 = vadd.f32 %v3153, %v3425
      %v3427 = vpop.f32.mrb[0].mxu0
      %v3428 = vadd.f32 %v3155, %v3427
      %v3429 = vpop.f32.mrb[0].mxu0
      %v3430 = vadd.f32 %v3157, %v3429
      %v3431 = vpop.f32.mrb[0].mxu0
      %v3432 = vadd.f32 %v3159, %v3431
      %3433 = vmatprep.mubr.bf16.mxu0 0
      %3434 = vmatmul.mubr.bf16.gmra.mrb[0].mxu0 %v480
      %v3435 = vpop.f32.mrb[0].mxu0
      %v3436 = vadd.f32 %v3163, %v3435
      %v3437 = vpop.f32.mrb[0].mxu0
      %v3438 = vadd.f32 %v3165, %v3437
      %v3439 = vpop.f32.mrb[0].mxu0
      %v3440 = vadd.f32 %v3167, %v3439
      %v3441 = vpop.f32.mrb[0].mxu0
      %v3442 = vadd.f32 %v3169, %v3441
      %3443 = vmatprep.mubr.bf16.mxu0 0
      %3444 = vmatmul.mubr.bf16.gmra.mrb[0].mxu0 %v481
      %v3445 = vpop.f32.mrb[0].mxu0
      %v3446 = vadd.f32 %v3173, %v3445
      %v3447 = vpop.f32.mrb[0].mxu0
      %v3448 = vadd.f32 %v3175, %v3447
      %v3449 = vpop.f32.mrb[0].mxu0
      %v3450 = vadd.f32 %v3177, %v3449
      %v3451 = vpop.f32.mrb[0].mxu0
      %v3452 = vadd.f32 %v3179, %v3451
      %3453 = vmatprep.mubr.bf16.mxu0 0
      %3454 = vmatmul.mubr.bf16.gmra.mrb[0].mxu0 %v482
      %v3455 = vpop.f32.mrb[0].mxu0
      %v3456 = vadd.f32 %v3183, %v3455
      %v3457 = vpop.f32.mrb[0].mxu0
      %v3458 = vadd.f32 %v3185, %v3457
      %v3459 = vpop.f32.mrb[0].mxu0
      %v3460 = vadd.f32 %v3187, %v3459
      %v3461 = vpop.f32.mrb[0].mxu0
      %v3462 = vadd.f32 %v3189, %v3461
      %3463 = vmatprep.mubr.bf16.mxu0 0
      %3464 = vmatmul.mubr.bf16.gmra.mrb[0].mxu0 %v483
      %v3465 = vpop.f32.mrb[0].mxu0
      %v3466 = vadd.f32 %v3193, %v3465
      %v3467 = vpop.f32.mrb[0].mxu0
      %v3468 = vadd.f32 %v3195, %v3467
      %v3469 = vpop.f32.mrb[0].mxu0
      %v3470 = vadd.f32 %v3197, %v3469
      %v3471 = vpop.f32.mrb[0].mxu0
      %v3472 = vadd.f32 %v3199, %v3471
      %3473 = vmatprep.mubr.bf16.mxu0 0
      %3474 = vmatmul.mubr.bf16.gmra.mrb[0].mxu0 %v484
      %v3475 = vpop.f32.mrb[0].mxu0
      %v3476 = vadd.f32 %v3203, %v3475
      %v3477 = vpop.f32.mrb[0].mxu0
      %v3478 = vadd.f32 %v3205, %v3477
      %v3479 = vpop.f32.mrb[0].mxu0
      %v3480 = vadd.f32 %v3207, %v3479
      %v3481 = vpop.f32.mrb[0].mxu0
      %v3482 = vadd.f32 %v3209, %v3481
      %3483 = vmatprep.mubr.bf16.mxu0 0
      %3484 = vmatmul.mubr.bf16.gmra.mrb[0].mxu0 %v485
      %v3485 = vpop.f32.mrb[0].mxu0
      %v3486 = vadd.f32 %v3213, %v3485
      %v3487 = vpop.f32.mrb[0].mxu0
      %v3488 = vadd.f32 %v3215, %v3487
      %v3489 = vpop.f32.mrb[0].mxu0
      %v3490 = vadd.f32 %v3217, %v3489
      %v3491 = vpop.f32.mrb[0].mxu0
      %v3492 = vadd.f32 %v3219, %v3491
      %3493 = vmatprep.mubr.bf16.mxu0 0
      %3494 = vmatmul.mubr.bf16.gmra.mrb[0].mxu0 %v486
      %v3495 = vpop.f32.mrb[0].mxu0
      %v3496 = vadd.f32 %v3223, %v3495
      %v3497 = vpop.f32.mrb[0].mxu0
      %v3498 = vadd.f32 %v3225, %v3497
      %v3499 = vpop.f32.mrb[0].mxu0
      %v3500 = vadd.f32 %v3227, %v3499
      %v3501 = vpop.f32.mrb[0].mxu0
      %v3502 = vadd.f32 %v3229, %v3501
      %3503 = vmatprep.mubr.bf16.mxu0 0
      %3504 = vmatmul.mubr.bf16.gmra.mrb[0].mxu0 %v487
      %v3505 = vpop.f32.mrb[0].mxu0
      %v3506 = vadd.f32 %v3233, %v3505
      %v3507 = vpop.f32.mrb[0].mxu0
      %v3508 = vadd.f32 %v3235, %v3507
      %v3509 = vpop.f32.mrb[0].mxu0
      %v3510 = vadd.f32 %v3237, %v3509
      %v3511 = vpop.f32.mrb[0].mxu0
      %v3512 = vadd.f32 %v3239, %v3511
      %3513 = vmatprep.mubr.bf16.mxu0 0
      %3514 = vmatmul.mubr.bf16.gmra.mrb[0].mxu0 %v488
      %v3515 = vpop.f32.mrb[0].mxu0
      %v3516 = vadd.f32 %v3243, %v3515
      %v3517 = vpop.f32.mrb[0].mxu0
      %v3518 = vadd.f32 %v3245, %v3517
      %v3519 = vpop.f32.mrb[0].mxu0
      %v3520 = vadd.f32 %v3247, %v3519
      %v3521 = vpop.f32.mrb[0].mxu0
      %v3522 = vadd.f32 %v3249, %v3521
      %3523 = vmatprep.mubr.bf16.mxu0 0
      %3524 = vmatmul.mubr.bf16.gmra.mrb[0].mxu0 %v489
      %v3525 = vpop.f32.mrb[0].mxu0
      %v3526 = vadd.f32 %v3253, %v3525
      %v3527 = vpop.f32.mrb[0].mxu0
      %v3528 = vadd.f32 %v3255, %v3527
      %v3529 = vpop.f32.mrb[0].mxu0
      %v3530 = vadd.f32 %v3257, %v3529
      %v3531 = vpop.f32.mrb[0].mxu0
      %v3532 = vadd.f32 %v3259, %v3531
      %3533 = vmatprep.mubr.bf16.mxu0 0
      %3534 = vmatmul.mubr.bf16.gmra.mrb[0].mxu0 %v490
      %v3535 = vpop.f32.mrb[0].mxu0
      %v3536 = vadd.f32 %v3263, %v3535
      %v3537 = vpop.f32.mrb[0].mxu0
      %v3538 = vadd.f32 %v3265, %v3537
      %v3539 = vpop.f32.mrb[0].mxu0
      %v3540 = vadd.f32 %v3267, %v3539
      %v3541 = vpop.f32.mrb[0].mxu0
      %v3542 = vadd.f32 %v3269, %v3541
      %3543 = vmatprep.mubr.bf16.mxu0 0
      %3544 = vmatmul.mubr.bf16.gmra.mrb[0].mxu0 %v491
      %v3545 = vpop.f32.mrb[0].mxu0
      %v3546 = vadd.f32 %v3273, %v3545
      %v3547 = vpop.f32.mrb[0].mxu0
      %v3548 = vadd.f32 %v3275, %v3547
      %v3549 = vpop.f32.mrb[0].mxu0
      %v3550 = vadd.f32 %v3277, %v3549
      %v3551 = vpop.f32.mrb[0].mxu0
      %v3552 = vadd.f32 %v3279, %v3551
      %3553 = vmatprep.mubr.bf16.mxu0 0
      %3554 = vmatmul.mubr.bf16.gmra.mrb[0].mxu0 %v492
      %v3555 = vpop.f32.mrb[0].mxu0
      %v3556 = vadd.f32 %v3283, %v3555
      %v3557 = vpop.f32.mrb[0].mxu0
      %v3558 = vadd.f32 %v3285, %v3557
      %v3559 = vpop.f32.mrb[0].mxu0
      %v3560 = vadd.f32 %v3287, %v3559
      %v3561 = vpop.f32.mrb[0].mxu0
      %v3562 = vadd.f32 %v3289, %v3561
      %3563 = vmatprep.mubr.bf16.mxu0 0
      %3564 = vmatmul.mubr.bf16.gmra.mrb[0].mxu0 %v493
      %v3565 = vpop.f32.mrb[0].mxu0
      %v3566 = vadd.f32 %v3293, %v3565
      %v3567 = vpop.f32.mrb[0].mxu0
      %v3568 = vadd.f32 %v3295, %v3567
      %v3569 = vpop.f32.mrb[0].mxu0
      %v3570 = vadd.f32 %v3297, %v3569
      %v3571 = vpop.f32.mrb[0].mxu0
      %v3572 = vadd.f32 %v3299, %v3571
      %3573 = vmatprep.mubr.bf16.mxu0 0
      %3574 = vmatmul.mubr.bf16.gmra.mrb[0].mxu0 %v494
      %v3575 = vpop.f32.mrb[0].mxu0
      %v3576 = vadd.f32 %v3303, %v3575
      %v3577 = vpop.f32.mrb[0].mxu0
      %v3578 = vadd.f32 %v3305, %v3577
      %v3579 = vpop.f32.mrb[0].mxu0
      %v3580 = vadd.f32 %v3307, %v3579
      %v3581 = vpop.f32.mrb[0].mxu0
      %v3582 = vadd.f32 %v3309, %v3581
      %3583 = vdwg.mxu0
      %s3584 = scalar_lea.vmem %s1, 1024
      %v3585 = vld [vmem:[%s3584] sm:$0xff]
      %v3586 = vld [vmem:[%s3584 + $0x8] sm:$0xff]
      %v3587 = vld [vmem:[%s3584 + $0x10] sm:$0xff]
      %v3588 = vld [vmem:[%s3584 + $0x18] sm:$0xff]
      %v3589 = vld [vmem:[%s3584 + $0x20] sm:$0xff]
      %v3590 = vld [vmem:[%s3584 + $0x28] sm:$0xff]
      %v3591 = vld [vmem:[%s3584 + $0x30] sm:$0xff]
      %v3592 = vld [vmem:[%s3584 + $0x38] sm:$0xff]
      %v3593 = vld [vmem:[%s3584 + $0x40] sm:$0xff]
      %v3594 = vld [vmem:[%s3584 + $0x48] sm:$0xff]
      %v3595 = vld [vmem:[%s3584 + $0x50] sm:$0xff]
      %v3596 = vld [vmem:[%s3584 + $0x58] sm:$0xff]
      %v3597 = vld [vmem:[%s3584 + $0x60] sm:$0xff]
      %v3598 = vld [vmem:[%s3584 + $0x68] sm:$0xff]
      %v3599 = vld [vmem:[%s3584 + $0x70] sm:$0xff]
      %v3600 = vld [vmem:[%s3584 + $0x78] sm:$0xff]
      %v3617 = vunpack.c.l.b16 %v3585
      %v3618 = vunpack.c.h.b16 %v3585
      %v3619 = vunpack.c.l.b16 %v3586
      %v3620 = vunpack.c.h.b16 %v3586
      %v3621 = vunpack.c.l.b16 %v3587
      %v3622 = vunpack.c.h.b16 %v3587
      %v3623 = vunpack.c.l.b16 %v3588
      %v3624 = vunpack.c.h.b16 %v3588
      %v3625 = vunpack.c.l.b16 %v3589
      %v3626 = vunpack.c.h.b16 %v3589
      %v3627 = vunpack.c.l.b16 %v3590
      %v3628 = vunpack.c.h.b16 %v3590
      %v3629 = vunpack.c.l.b16 %v3591
      %v3630 = vunpack.c.h.b16 %v3591
      %v3631 = vunpack.c.l.b16 %v3592
      %v3632 = vunpack.c.h.b16 %v3592
      %v3633 = vunpack.c.l.b16 %v3593
      %v3634 = vunpack.c.h.b16 %v3593
      %v3635 = vunpack.c.l.b16 %v3594
      %v3636 = vunpack.c.h.b16 %v3594
      %v3637 = vunpack.c.l.b16 %v3595
      %v3638 = vunpack.c.h.b16 %v3595
      %v3639 = vunpack.c.l.b16 %v3596
      %v3640 = vunpack.c.h.b16 %v3596
      %v3641 = vunpack.c.l.b16 %v3597
      %v3642 = vunpack.c.h.b16 %v3597
      %v3643 = vunpack.c.l.b16 %v3598
      %v3644 = vunpack.c.h.b16 %v3598
      %v3645 = vunpack.c.l.b16 %v3599
      %v3646 = vunpack.c.h.b16 %v3599
      %v3647 = vunpack.c.l.b16 %v3600
      %v3648 = vunpack.c.h.b16 %v3600
      %v3649 = vpack.c.b16 %v3619, %v3617
      %v3650 = vpack.c.b16 %v3620, %v3618
      %v3651 = vpack.c.b16 %v3623, %v3621
      %v3652 = vpack.c.b16 %v3624, %v3622
      %v3653 = vpack.c.b16 %v3627, %v3625
      %v3654 = vpack.c.b16 %v3628, %v3626
      %v3655 = vpack.c.b16 %v3631, %v3629
      %v3656 = vpack.c.b16 %v3632, %v3630
      %v3657 = vpack.c.b16 %v3635, %v3633
      %v3658 = vpack.c.b16 %v3636, %v3634
      %v3659 = vpack.c.b16 %v3639, %v3637
      %v3660 = vpack.c.b16 %v3640, %v3638
      %v3661 = vpack.c.b16 %v3643, %v3641
      %v3662 = vpack.c.b16 %v3644, %v3642
      %v3663 = vpack.c.b16 %v3647, %v3645
      %v3664 = vpack.c.b16 %v3648, %v3646
      %3681 = vmatprep.subr.bf16.mxu0 %v3650
      %3682 = vmatpush1.bf16.msra.mxu0 %v3649
      %3683 = vmatprep.subr.bf16.mxu0 %v3652
      %3684 = vmatpush1.bf16.msra.mxu0 %v3651
      %3685 = vmatprep.subr.bf16.mxu0 %v3654
      %3686 = vmatpush1.bf16.msra.mxu0 %v3653
      %3687 = vmatprep.subr.bf16.mxu0 %v3656
      %3688 = vmatpush1.bf16.msra.mxu0 %v3655
      %3689 = vmatprep.subr.bf16.mxu0 %v3658
      %3690 = vmatpush1.bf16.msra.mxu0 %v3657
      %3691 = vmatprep.subr.bf16.mxu0 %v3660
      %3692 = vmatpush1.bf16.msra.mxu0 %v3659
      %3693 = vmatprep.subr.bf16.mxu0 %v3662
      %3694 = vmatpush1.bf16.msra.mxu0 %v3661
      %3695 = vmatprep.subr.bf16.mxu0 %v3664
      %3696 = vmatpush1.bf16.msra.mxu0 %v3663
      %3697 = vmatprep.subr.bf16.mxu0 0
      %3698 = vmatpush1.bf16.msra.mxu0 0
      %3699 = vmatprep.subr.bf16.mxu0 0
      %3700 = vmatpush1.bf16.msra.mxu0 0
      %3701 = vmatprep.subr.bf16.mxu0 0
      %3702 = vmatpush1.bf16.msra.mxu0 0
      %3703 = vmatprep.subr.bf16.mxu0 0
      %3704 = vmatpush1.bf16.msra.mxu0 0
      %3705 = vmatprep.subr.bf16.mxu0 0
      %3706 = vmatpush1.bf16.msra.mxu0 0
      %3707 = vmatprep.subr.bf16.mxu0 0
      %3708 = vmatpush1.bf16.msra.mxu0 0
      %3709 = vmatprep.subr.bf16.mxu0 0
      %3710 = vmatpush1.bf16.msra.mxu0 0
      %3711 = vmatprep.subr.bf16.mxu0 0
      %3712 = vmatpush1.bf16.msra.mxu0 0
      %3713 = vmatprep.mubr.bf16.mxu0 0
      %3714 = vmatmul.mubr.bf16.gmra.mrb[0].mxu0 %v512
      %v3715 = vpop.f32.mrb[0].mxu0
      %v3716 = vadd.f32 0.0, %v3715
      %v3717 = vpop.f32.mrb[0].mxu0
      %v3718 = vadd.f32 0.0, %v3717
      %v3719 = vpop.f32.mrb[0].mxu0
      %v3720 = vadd.f32 0.0, %v3719
      %v3721 = vpop.f32.mrb[0].mxu0
      %v3722 = vadd.f32 0.0, %v3721
      %3723 = vmatprep.mubr.bf16.mxu0 0
      %3724 = vmatmul.mubr.bf16.gmra.mrb[0].mxu0 %v513
      %v3725 = vpop.f32.mrb[0].mxu0
      %v3726 = vadd.f32 0.0, %v3725
      %v3727 = vpop.f32.mrb[0].mxu0
      %v3728 = vadd.f32 0.0, %v3727
      %v3729 = vpop.f32.mrb[0].mxu0
      %v3730 = vadd.f32 0.0, %v3729
      %v3731 = vpop.f32.mrb[0].mxu0
      %v3732 = vadd.f32 0.0, %v3731
      %3733 = vmatprep.mubr.bf16.mxu0 0
      %3734 = vmatmul.mubr.bf16.gmra.mrb[0].mxu0 %v514
      %v3735 = vpop.f32.mrb[0].mxu0
      %v3736 = vadd.f32 0.0, %v3735
      %v3737 = vpop.f32.mrb[0].mxu0
      %v3738 = vadd.f32 0.0, %v3737
      %v3739 = vpop.f32.mrb[0].mxu0
      %v3740 = vadd.f32 0.0, %v3739
      %v3741 = vpop.f32.mrb[0].mxu0
      %v3742 = vadd.f32 0.0, %v3741
      %3743 = vmatprep.mubr.bf16.mxu0 0
      %3744 = vmatmul.mubr.bf16.gmra.mrb[0].mxu0 %v515
      %v3745 = vpop.f32.mrb[0].mxu0
      %v3746 = vadd.f32 0.0, %v3745
      %v3747 = vpop.f32.mrb[0].mxu0
      %v3748 = vadd.f32 0.0, %v3747
      %v3749 = vpop.f32.mrb[0].mxu0
      %v3750 = vadd.f32 0.0, %v3749
      %v3751 = vpop.f32.mrb[0].mxu0
      %v3752 = vadd.f32 0.0, %v3751
      %3753 = vmatprep.mubr.bf16.mxu0 0
      %3754 = vmatmul.mubr.bf16.gmra.mrb[0].mxu0 %v516
      %v3755 = vpop.f32.mrb[0].mxu0
      %v3756 = vadd.f32 0.0, %v3755
      %v3757 = vpop.f32.mrb[0].mxu0
      %v3758 = vadd.f32 0.0, %v3757
      %v3759 = vpop.f32.mrb[0].mxu0
      %v3760 = vadd.f32 0.0, %v3759
      %v3761 = vpop.f32.mrb[0].mxu0
      %v3762 = vadd.f32 0.0, %v3761
      %3763 = vmatprep.mubr.bf16.mxu0 0
      %3764 = vmatmul.mubr.bf16.gmra.mrb[0].mxu0 %v517
      %v3765 = vpop.f32.mrb[0].mxu0
      %v3766 = vadd.f32 0.0, %v3765
      %v3767 = vpop.f32.mrb[0].mxu0
      %v3768 = vadd.f32 0.0, %v3767
      %v3769 = vpop.f32.mrb[0].mxu0
      %v3770 = vadd.f32 0.0, %v3769
      %v3771 = vpop.f32.mrb[0].mxu0
      %v3772 = vadd.f32 0.0, %v3771
      %3773 = vmatprep.mubr.bf16.mxu0 0
      %3774 = vmatmul.mubr.bf16.gmra.mrb[0].mxu0 %v518
      %v3775 = vpop.f32.mrb[0].mxu0
      %v3776 = vadd.f32 0.0, %v3775
      %v3777 = vpop.f32.mrb[0].mxu0
      %v3778 = vadd.f32 0.0, %v3777
      %v3779 = vpop.f32.mrb[0].mxu0
      %v3780 = vadd.f32 0.0, %v3779
      %v3781 = vpop.f32.mrb[0].mxu0
      %v3782 = vadd.f32 0.0, %v3781
      %3783 = vmatprep.mubr.bf16.mxu0 0
      %3784 = vmatmul.mubr.bf16.gmra.mrb[0].mxu0 %v519
      %v3785 = vpop.f32.mrb[0].mxu0
      %v3786 = vadd.f32 0.0, %v3785
      %v3787 = vpop.f32.mrb[0].mxu0
      %v3788 = vadd.f32 0.0, %v3787
      %v3789 = vpop.f32.mrb[0].mxu0
      %v3790 = vadd.f32 0.0, %v3789
      %v3791 = vpop.f32.mrb[0].mxu0
      %v3792 = vadd.f32 0.0, %v3791
      %3793 = vmatprep.mubr.bf16.mxu0 0
      %3794 = vmatmul.mubr.bf16.gmra.mrb[0].mxu0 %v520
      %v3795 = vpop.f32.mrb[0].mxu0
      %v3796 = vadd.f32 0.0, %v3795
      %v3797 = vpop.f32.mrb[0].mxu0
      %v3798 = vadd.f32 0.0, %v3797
      %v3799 = vpop.f32.mrb[0].mxu0
      %v3800 = vadd.f32 0.0, %v3799
      %v3801 = vpop.f32.mrb[0].mxu0
      %v3802 = vadd.f32 0.0, %v3801
      %3803 = vmatprep.mubr.bf16.mxu0 0
      %3804 = vmatmul.mubr.bf16.gmra.mrb[0].mxu0 %v521
      %v3805 = vpop.f32.mrb[0].mxu0
      %v3806 = vadd.f32 0.0, %v3805
      %v3807 = vpop.f32.mrb[0].mxu0
      %v3808 = vadd.f32 0.0, %v3807
      %v3809 = vpop.f32.mrb[0].mxu0
      %v3810 = vadd.f32 0.0, %v3809
      %v3811 = vpop.f32.mrb[0].mxu0
      %v3812 = vadd.f32 0.0, %v3811
      %3813 = vmatprep.mubr.bf16.mxu0 0
      %3814 = vmatmul.mubr.bf16.gmra.mrb[0].mxu0 %v522
      %v3815 = vpop.f32.mrb[0].mxu0
      %v3816 = vadd.f32 0.0, %v3815
      %v3817 = vpop.f32.mrb[0].mxu0
      %v3818 = vadd.f32 0.0, %v3817
      %v3819 = vpop.f32.mrb[0].mxu0
      %v3820 = vadd.f32 0.0, %v3819
      %v3821 = vpop.f32.mrb[0].mxu0
      %v3822 = vadd.f32 0.0, %v3821
      %3823 = vmatprep.mubr.bf16.mxu0 0
      %3824 = vmatmul.mubr.bf16.gmra.mrb[0].mxu0 %v523
      %v3825 = vpop.f32.mrb[0].mxu0
      %v3826 = vadd.f32 0.0, %v3825
      %v3827 = vpop.f32.mrb[0].mxu0
      %v3828 = vadd.f32 0.0, %v3827
      %v3829 = vpop.f32.mrb[0].mxu0
      %v3830 = vadd.f32 0.0, %v3829
      %v3831 = vpop.f32.mrb[0].mxu0
      %v3832 = vadd.f32 0.0, %v3831
      %3833 = vmatprep.mubr.bf16.mxu0 0
      %3834 = vmatmul.mubr.bf16.gmra.mrb[0].mxu0 %v524
      %v3835 = vpop.f32.mrb[0].mxu0
      %v3836 = vadd.f32 0.0, %v3835
      %v3837 = vpop.f32.mrb[0].mxu0
      %v3838 = vadd.f32 0.0, %v3837
      %v3839 = vpop.f32.mrb[0].mxu0
      %v3840 = vadd.f32 0.0, %v3839
      %v3841 = vpop.f32.mrb[0].mxu0
      %v3842 = vadd.f32 0.0, %v3841
      %3843 = vmatprep.mubr.bf16.mxu0 0
      %3844 = vmatmul.mubr.bf16.gmra.mrb[0].mxu0 %v525
      %v3845 = vpop.f32.mrb[0].mxu0
      %v3846 = vadd.f32 0.0, %v3845
      %v3847 = vpop.f32.mrb[0].mxu0
      %v3848 = vadd.f32 0.0, %v3847
      %v3849 = vpop.f32.mrb[0].mxu0
      %v3850 = vadd.f32 0.0, %v3849
      %v3851 = vpop.f32.mrb[0].mxu0
      %v3852 = vadd.f32 0.0, %v3851
      %3853 = vmatprep.mubr.bf16.mxu0 0
      %3854 = vmatmul.mubr.bf16.gmra.mrb[0].mxu0 %v526
      %v3855 = vpop.f32.mrb[0].mxu0
      %v3856 = vadd.f32 0.0, %v3855
      %v3857 = vpop.f32.mrb[0].mxu0
      %v3858 = vadd.f32 0.0, %v3857
      %v3859 = vpop.f32.mrb[0].mxu0
      %v3860 = vadd.f32 0.0, %v3859
      %v3861 = vpop.f32.mrb[0].mxu0
      %v3862 = vadd.f32 0.0, %v3861
      %3863 = vmatprep.mubr.bf16.mxu0 0
      %3864 = vmatmul.mubr.bf16.gmra.mrb[0].mxu0 %v527
      %v3865 = vpop.f32.mrb[0].mxu0
      %v3866 = vadd.f32 0.0, %v3865
      %v3867 = vpop.f32.mrb[0].mxu0
      %v3868 = vadd.f32 0.0, %v3867
      %v3869 = vpop.f32.mrb[0].mxu0
      %v3870 = vadd.f32 0.0, %v3869
      %v3871 = vpop.f32.mrb[0].mxu0
      %v3872 = vadd.f32 0.0, %v3871
      %3873 = vdwg.mxu0
      %v3874 = vadd.f32 %v3426, %v3716
      %v3875 = vadd.f32 %v3428, %v3718
      %v3876 = vadd.f32 %v3430, %v3720
      %v3877 = vadd.f32 %v3432, %v3722
      %v3878 = vadd.f32 %v3436, %v3726
      %v3879 = vadd.f32 %v3438, %v3728
      %v3880 = vadd.f32 %v3440, %v3730
      %v3881 = vadd.f32 %v3442, %v3732
      %v3882 = vadd.f32 %v3446, %v3736
      %v3883 = vadd.f32 %v3448, %v3738
      %v3884 = vadd.f32 %v3450, %v3740
      %v3885 = vadd.f32 %v3452, %v3742
      %v3886 = vadd.f32 %v3456, %v3746
      %v3887 = vadd.f32 %v3458, %v3748
      %v3888 = vadd.f32 %v3460, %v3750
      %v3889 = vadd.f32 %v3462, %v3752
      %v3890 = vadd.f32 %v3466, %v3756
      %v3891 = vadd.f32 %v3468, %v3758
      %v3892 = vadd.f32 %v3470, %v3760
      %v3893 = vadd.f32 %v3472, %v3762
      %v3894 = vadd.f32 %v3476, %v3766
      %v3895 = vadd.f32 %v3478, %v3768
      %v3896 = vadd.f32 %v3480, %v3770
      %v3897 = vadd.f32 %v3482, %v3772
      %v3898 = vadd.f32 %v3486, %v3776
      %v3899 = vadd.f32 %v3488, %v3778
      %v3900 = vadd.f32 %v3490, %v3780
      %v3901 = vadd.f32 %v3492, %v3782
      %v3902 = vadd.f32 %v3496, %v3786
      %v3903 = vadd.f32 %v3498, %v3788
      %v3904 = vadd.f32 %v3500, %v3790
      %v3905 = vadd.f32 %v3502, %v3792
      %v3906 = vadd.f32 %v3506, %v3796
      %v3907 = vadd.f32 %v3508, %v3798
      %v3908 = vadd.f32 %v3510, %v3800
      %v3909 = vadd.f32 %v3512, %v3802
      %v3910 = vadd.f32 %v3516, %v3806
      %v3911 = vadd.f32 %v3518, %v3808
      %v3912 = vadd.f32 %v3520, %v3810
      %v3913 = vadd.f32 %v3522, %v3812
      %v3914 = vadd.f32 %v3526, %v3816
      %v3915 = vadd.f32 %v3528, %v3818
      %v3916 = vadd.f32 %v3530, %v3820
      %v3917 = vadd.f32 %v3532, %v3822
      %v3918 = vadd.f32 %v3536, %v3826
      %v3919 = vadd.f32 %v3538, %v3828
      %v3920 = vadd.f32 %v3540, %v3830
      %v3921 = vadd.f32 %v3542, %v3832
      %v3922 = vadd.f32 %v3546, %v3836
      %v3923 = vadd.f32 %v3548, %v3838
      %v3924 = vadd.f32 %v3550, %v3840
      %v3925 = vadd.f32 %v3552, %v3842
      %v3926 = vadd.f32 %v3556, %v3846
      %v3927 = vadd.f32 %v3558, %v3848
      %v3928 = vadd.f32 %v3560, %v3850
      %v3929 = vadd.f32 %v3562, %v3852
      %v3930 = vadd.f32 %v3566, %v3856
      %v3931 = vadd.f32 %v3568, %v3858
      %v3932 = vadd.f32 %v3570, %v3860
      %v3933 = vadd.f32 %v3572, %v3862
      %v3934 = vadd.f32 %v3576, %v3866
      %v3935 = vadd.f32 %v3578, %v3868
      %v3936 = vadd.f32 %v3580, %v3870
      %v3937 = vadd.f32 %v3582, %v3872
      %3938 = vst [vmem:[#allocation4 + $0x10] sm:$0xff] %v3874
      %3939 = vst [vmem:[#allocation4 + $0x18] sm:$0xff] %v3875
      %3940 = vst [vmem:[#allocation4 + $0x20] sm:$0xff] %v3876
      %3941 = vst [vmem:[#allocation4 + $0x28] sm:$0xff] %v3877
      %3942 = vst [vmem:[#allocation4 + $0x50] sm:$0xff] %v3878
      %3943 = vst [vmem:[#allocation4 + $0x58] sm:$0xff] %v3879
      %3944 = vst [vmem:[#allocation4 + $0x60] sm:$0xff] %v3880
      %3945 = vst [vmem:[#allocation4 + $0x68] sm:$0xff] %v3881
      %3946 = vst [vmem:[#allocation4 + $0x90] sm:$0xff] %v3882
      %3947 = vst [vmem:[#allocation4 + $0x98] sm:$0xff] %v3883
      %3948 = vst [vmem:[#allocation4 + $0xa0] sm:$0xff] %v3884
      %3949 = vst [vmem:[#allocation4 + $0xa8] sm:$0xff] %v3885
      %3950 = vst [vmem:[#allocation4 + $0xd0] sm:$0xff] %v3886
      %3951 = vst [vmem:[#allocation4 + $0xd8] sm:$0xff] %v3887
      %3952 = vst [vmem:[#allocation4 + $0xe0] sm:$0xff] %v3888
      %3953 = vst [vmem:[#allocation4 + $0xe8] sm:$0xff] %v3889
      %3954 = vst [vmem:[#allocation4 + $0x110] sm:$0xff] %v3890
      %3955 = vst [vmem:[#allocation4 + $0x118] sm:$0xff] %v3891
      %3956 = vst [vmem:[#allocation4 + $0x120] sm:$0xff] %v3892
      %3957 = vst [vmem:[#allocation4 + $0x128] sm:$0xff] %v3893
      %3958 = vst [vmem:[#allocation4 + $0x150] sm:$0xff] %v3894
      %3959 = vst [vmem:[#allocation4 + $0x158] sm:$0xff] %v3895
      %3960 = vst [vmem:[#allocation4 + $0x160] sm:$0xff] %v3896
      %3961 = vst [vmem:[#allocation4 + $0x168] sm:$0xff] %v3897
      %3962 = vst [vmem:[#allocation4 + $0x190] sm:$0xff] %v3898
      %3963 = vst [vmem:[#allocation4 + $0x198] sm:$0xff] %v3899
      %3964 = vst [vmem:[#allocation4 + $0x1a0] sm:$0xff] %v3900
      %3965 = vst [vmem:[#allocation4 + $0x1a8] sm:$0xff] %v3901
      %3966 = vst [vmem:[#allocation4 + $0x1d0] sm:$0xff] %v3902
      %3967 = vst [vmem:[#allocation4 + $0x1d8] sm:$0xff] %v3903
      %3968 = vst [vmem:[#allocation4 + $0x1e0] sm:$0xff] %v3904
      %3969 = vst [vmem:[#allocation4 + $0x1e8] sm:$0xff] %v3905
      %3970 = vst [vmem:[#allocation4 + $0x210] sm:$0xff] %v3906
      %3971 = vst [vmem:[#allocation4 + $0x218] sm:$0xff] %v3907
      %3972 = vst [vmem:[#allocation4 + $0x220] sm:$0xff] %v3908
      %3973 = vst [vmem:[#allocation4 + $0x228] sm:$0xff] %v3909
      %3974 = vst [vmem:[#allocation4 + $0x250] sm:$0xff] %v3910
      %3975 = vst [vmem:[#allocation4 + $0x258] sm:$0xff] %v3911
      %3976 = vst [vmem:[#allocation4 + $0x260] sm:$0xff] %v3912
      %3977 = vst [vmem:[#allocation4 + $0x268] sm:$0xff] %v3913
      %3978 = vst [vmem:[#allocation4 + $0x290] sm:$0xff] %v3914
      %3979 = vst [vmem:[#allocation4 + $0x298] sm:$0xff] %v3915
      %3980 = vst [vmem:[#allocation4 + $0x2a0] sm:$0xff] %v3916
      %3981 = vst [vmem:[#allocation4 + $0x2a8] sm:$0xff] %v3917
      %3982 = vst [vmem:[#allocation4 + $0x2d0] sm:$0xff] %v3918
      %3983 = vst [vmem:[#allocation4 + $0x2d8] sm:$0xff] %v3919
      %3984 = vst [vmem:[#allocation4 + $0x2e0] sm:$0xff] %v3920
      %3985 = vst [vmem:[#allocation4 + $0x2e8] sm:$0xff] %v3921
      %3986 = vst [vmem:[#allocation4 + $0x310] sm:$0xff] %v3922
      %3987 = vst [vmem:[#allocation4 + $0x318] sm:$0xff] %v3923
      %3988 = vst [vmem:[#allocation4 + $0x320] sm:$0xff] %v3924
      %3989 = vst [vmem:[#allocation4 + $0x328] sm:$0xff] %v3925
      %3990 = vst [vmem:[#allocation4 + $0x350] sm:$0xff] %v3926
      %3991 = vst [vmem:[#allocation4 + $0x358] sm:$0xff] %v3927
      %3992 = vst [vmem:[#allocation4 + $0x360] sm:$0xff] %v3928
      %3993 = vst [vmem:[#allocation4 + $0x368] sm:$0xff] %v3929
      %3994 = vst [vmem:[#allocation4 + $0x390] sm:$0xff] %v3930
      %3995 = vst [vmem:[#allocation4 + $0x398] sm:$0xff] %v3931
      %3996 = vst [vmem:[#allocation4 + $0x3a0] sm:$0xff] %v3932
      %3997 = vst [vmem:[#allocation4 + $0x3a8] sm:$0xff] %v3933
      %3998 = vst [vmem:[#allocation4 + $0x3d0] sm:$0xff] %v3934
      %3999 = vst [vmem:[#allocation4 + $0x3d8] sm:$0xff] %v3935
      %4000 = vst [vmem:[#allocation4 + $0x3e0] sm:$0xff] %v3936
      %4001 = vst [vmem:[#allocation4 + $0x3e8] sm:$0xff] %v3937
      %v4002 = vld [vmem:[#allocation4 + $0x10] sm:$0xfe]
      %v4003 = vld [vmem:[#allocation4 + $0x18] sm:$0xfe]
      %v4004 = vld [vmem:[#allocation4 + $0x20] sm:$0xff]
      %v4005 = vld [vmem:[#allocation4 + $0x28] sm:$0xff]
      %v4006 = vld [vmem:[#allocation4 + $0x30] sm:$0x1]
      %v4007 = vld [vmem:[#allocation4 + $0x38] sm:$0x1]
      %v4008 = vld [vmem:[#allocation4 + $0x50] sm:$0xfe]
      %v4009 = vld [vmem:[#allocation4 + $0x58] sm:$0xfe]
      %v4010 = vld [vmem:[#allocation4 + $0x60] sm:$0xff]
      %v4011 = vld [vmem:[#allocation4 + $0x68] sm:$0xff]
      %v4012 = vld [vmem:[#allocation4 + $0x70] sm:$0x1]
      %v4013 = vld [vmem:[#allocation4 + $0x78] sm:$0x1]
      %v4014 = vld [vmem:[#allocation4 + $0x90] sm:$0xfe]
      %v4015 = vld [vmem:[#allocation4 + $0x98] sm:$0xfe]
      %v4016 = vld [vmem:[#allocation4 + $0xa0] sm:$0xff]
      %v4017 = vld [vmem:[#allocation4 + $0xa8] sm:$0xff]
      %v4018 = vld [vmem:[#allocation4 + $0xb0] sm:$0x1]
      %v4019 = vld [vmem:[#allocation4 + $0xb8] sm:$0x1]
      %v4020 = vld [vmem:[#allocation4 + $0xd0] sm:$0xfe]
      %v4021 = vld [vmem:[#allocation4 + $0xd8] sm:$0xfe]
      %v4022 = vld [vmem:[#allocation4 + $0xe0] sm:$0xff]
      %v4023 = vld [vmem:[#allocation4 + $0xe8] sm:$0xff]
      %v4024 = vld [vmem:[#allocation4 + $0xf0] sm:$0x1]
      %v4025 = vld [vmem:[#allocation4 + $0xf8] sm:$0x1]
      %v4026 = vld [vmem:[#allocation4 + $0x110] sm:$0xfe]
      %v4027 = vld [vmem:[#allocation4 + $0x118] sm:$0xfe]
      %v4028 = vld [vmem:[#allocation4 + $0x120] sm:$0xff]
      %v4029 = vld [vmem:[#allocation4 + $0x128] sm:$0xff]
      %v4030 = vld [vmem:[#allocation4 + $0x130] sm:$0x1]
      %v4031 = vld [vmem:[#allocation4 + $0x138] sm:$0x1]
      %v4032 = vld [vmem:[#allocation4 + $0x150] sm:$0xfe]
      %v4033 = vld [vmem:[#allocation4 + $0x158] sm:$0xfe]
      %v4034 = vld [vmem:[#allocation4 + $0x160] sm:$0xff]
      %v4035 = vld [vmem:[#allocation4 + $0x168] sm:$0xff]
      %v4036 = vld [vmem:[#allocation4 + $0x170] sm:$0x1]
      %v4037 = vld [vmem:[#allocation4 + $0x178] sm:$0x1]
      %v4038 = vld [vmem:[#allocation4 + $0x190] sm:$0xfe]
      %v4039 = vld [vmem:[#allocation4 + $0x198] sm:$0xfe]
      %v4040 = vld [vmem:[#allocation4 + $0x1a0] sm:$0xff]
      %v4041 = vld [vmem:[#allocation4 + $0x1a8] sm:$0xff]
      %v4042 = vld [vmem:[#allocation4 + $0x1b0] sm:$0x1]
      %v4043 = vld [vmem:[#allocation4 + $0x1b8] sm:$0x1]
      %v4044 = vld [vmem:[#allocation4 + $0x1d0] sm:$0xfe]
      %v4045 = vld [vmem:[#allocation4 + $0x1d8] sm:$0xfe]
      %v4046 = vld [vmem:[#allocation4 + $0x1e0] sm:$0xff]
      %v4047 = vld [vmem:[#allocation4 + $0x1e8] sm:$0xff]
      %v4048 = vld [vmem:[#allocation4 + $0x1f0] sm:$0x1]
      %v4049 = vld [vmem:[#allocation4 + $0x1f8] sm:$0x1]
      %v4050 = vld [vmem:[#allocation4 + $0x210] sm:$0xfe]
      %v4051 = vld [vmem:[#allocation4 + $0x218] sm:$0xfe]
      %v4052 = vld [vmem:[#allocation4 + $0x220] sm:$0xff]
      %v4053 = vld [vmem:[#allocation4 + $0x228] sm:$0xff]
      %v4054 = vld [vmem:[#allocation4 + $0x230] sm:$0x1]
      %v4055 = vld [vmem:[#allocation4 + $0x238] sm:$0x1]
      %v4056 = vld [vmem:[#allocation4 + $0x250] sm:$0xfe]
      %v4057 = vld [vmem:[#allocation4 + $0x258] sm:$0xfe]
      %v4058 = vld [vmem:[#allocation4 + $0x260] sm:$0xff]
      %v4059 = vld [vmem:[#allocation4 + $0x268] sm:$0xff]
      %v4060 = vld [vmem:[#allocation4 + $0x270] sm:$0x1]
      %v4061 = vld [vmem:[#allocation4 + $0x278] sm:$0x1]
      %v4062 = vld [vmem:[#allocation4 + $0x290] sm:$0xfe]
      %v4063 = vld [vmem:[#allocation4 + $0x298] sm:$0xfe]
      %v4064 = vld [vmem:[#allocation4 + $0x2a0] sm:$0xff]
      %v4065 = vld [vmem:[#allocation4 + $0x2a8] sm:$0xff]
      %v4066 = vld [vmem:[#allocation4 + $0x2b0] sm:$0x1]
      %v4067 = vld [vmem:[#allocation4 + $0x2b8] sm:$0x1]
      %v4068 = vld [vmem:[#allocation4 + $0x2d0] sm:$0xfe]
      %v4069 = vld [vmem:[#allocation4 + $0x2d8] sm:$0xfe]
      %v4070 = vld [vmem:[#allocation4 + $0x2e0] sm:$0xff]
      %v4071 = vld [vmem:[#allocation4 + $0x2e8] sm:$0xff]
      %v4072 = vld [vmem:[#allocation4 + $0x2f0] sm:$0x1]
      %v4073 = vld [vmem:[#allocation4 + $0x2f8] sm:$0x1]
      %v4074 = vld [vmem:[#allocation4 + $0x310] sm:$0xfe]
      %v4075 = vld [vmem:[#allocation4 + $0x318] sm:$0xfe]
      %v4076 = vld [vmem:[#allocation4 + $0x320] sm:$0xff]
      %v4077 = vld [vmem:[#allocation4 + $0x328] sm:$0xff]
      %v4078 = vld [vmem:[#allocation4 + $0x330] sm:$0x1]
      %v4079 = vld [vmem:[#allocation4 + $0x338] sm:$0x1]
      %v4080 = vld [vmem:[#allocation4 + $0x350] sm:$0xfe]
      %v4081 = vld [vmem:[#allocation4 + $0x358] sm:$0xfe]
      %v4082 = vld [vmem:[#allocation4 + $0x360] sm:$0xff]
      %v4083 = vld [vmem:[#allocation4 + $0x368] sm:$0xff]
      %v4084 = vld [vmem:[#allocation4 + $0x370] sm:$0x1]
      %v4085 = vld [vmem:[#allocation4 + $0x378] sm:$0x1]
      %v4086 = vld [vmem:[#allocation4 + $0x390] sm:$0xfe]
      %v4087 = vld [vmem:[#allocation4 + $0x398] sm:$0xfe]
      %v4088 = vld [vmem:[#allocation4 + $0x3a0] sm:$0xff]
      %v4089 = vld [vmem:[#allocation4 + $0x3a8] sm:$0xff]
      %v4090 = vld [vmem:[#allocation4 + $0x3b0] sm:$0x1]
      %v4091 = vld [vmem:[#allocation4 + $0x3b8] sm:$0x1]
      %v4092 = vld [vmem:[#allocation4 + $0x3d0] sm:$0xfe]
      %v4093 = vld [vmem:[#allocation4 + $0x3d8] sm:$0xfe]
      %v4094 = vld [vmem:[#allocation4 + $0x3e0] sm:$0xff]
      %v4095 = vld [vmem:[#allocation4 + $0x3e8] sm:$0xff]
      %v4096 = vld [vmem:[#allocation4 + $0x3f0] sm:$0x1]
      %v4097 = vld [vmem:[#allocation4 + $0x3f8] sm:$0x1]
      %vm4194 = vcmask 1046528
      %v4195 = vrot.slane %v4002, 1
      %v4196 = vrot.slane %v4004, 1
      %v4197 = vsel %vm4194, %v4195, %v4196
      %v4198 = vrot.slane %v4003, 1
      %v4199 = vrot.slane %v4005, 1
      %v4200 = vsel %vm4194, %v4198, %v4199
      %v4201 = vrot.slane %v4006, 1
      %v4202 = vsel %vm4194, %v4196, %v4201
      %v4203 = vrot.slane %v4007, 1
      %v4204 = vsel %vm4194, %v4199, %v4203
      %v4205 = vrot.slane %v4008, 1
      %v4206 = vrot.slane %v4010, 1
      %v4207 = vsel %vm4194, %v4205, %v4206
      %v4208 = vrot.slane %v4009, 1
      %v4209 = vrot.slane %v4011, 1
      %v4210 = vsel %vm4194, %v4208, %v4209
      %v4211 = vrot.slane %v4012, 1
      %v4212 = vsel %vm4194, %v4206, %v4211
      %v4213 = vrot.slane %v4013, 1
      %v4214 = vsel %vm4194, %v4209, %v4213
      %v4215 = vrot.slane %v4014, 1
      %v4216 = vrot.slane %v4016, 1
      %v4217 = vsel %vm4194, %v4215, %v4216
      %v4218 = vrot.slane %v4015, 1
      %v4219 = vrot.slane %v4017, 1
      %v4220 = vsel %vm4194, %v4218, %v4219
      %v4221 = vrot.slane %v4018, 1
      %v4222 = vsel %vm4194, %v4216, %v4221
      %v4223 = vrot.slane %v4019, 1
      %v4224 = vsel %vm4194, %v4219, %v4223
      %v4225 = vrot.slane %v4020, 1
      %v4226 = vrot.slane %v4022, 1
      %v4227 = vsel %vm4194, %v4225, %v4226
      %v4228 = vrot.slane %v4021, 1
      %v4229 = vrot.slane %v4023, 1
      %v4230 = vsel %vm4194, %v4228, %v4229
      %v4231 = vrot.slane %v4024, 1
      %v4232 = vsel %vm4194, %v4226, %v4231
      %v4233 = vrot.slane %v4025, 1
      %v4234 = vsel %vm4194, %v4229, %v4233
      %v4235 = vrot.slane %v4026, 1
      %v4236 = vrot.slane %v4028, 1
      %v4237 = vsel %vm4194, %v4235, %v4236
      %v4238 = vrot.slane %v4027, 1
      %v4239 = vrot.slane %v4029, 1
      %v4240 = vsel %vm4194, %v4238, %v4239
      %v4241 = vrot.slane %v4030, 1
      %v4242 = vsel %vm4194, %v4236, %v4241
      %v4243 = vrot.slane %v4031, 1
      %v4244 = vsel %vm4194, %v4239, %v4243
      %v4245 = vrot.slane %v4032, 1
      %v4246 = vrot.slane %v4034, 1
      %v4247 = vsel %vm4194, %v4245, %v4246
      %v4248 = vrot.slane %v4033, 1
      %v4249 = vrot.slane %v4035, 1
      %v4250 = vsel %vm4194, %v4248, %v4249
      %v4251 = vrot.slane %v4036, 1
      %v4252 = vsel %vm4194, %v4246, %v4251
      %v4253 = vrot.slane %v4037, 1
      %v4254 = vsel %vm4194, %v4249, %v4253
      %v4255 = vrot.slane %v4038, 1
      %v4256 = vrot.slane %v4040, 1
      %v4257 = vsel %vm4194, %v4255, %v4256
      %v4258 = vrot.slane %v4039, 1
      %v4259 = vrot.slane %v4041, 1
      %v4260 = vsel %vm4194, %v4258, %v4259
      %v4261 = vrot.slane %v4042, 1
      %v4262 = vsel %vm4194, %v4256, %v4261
      %v4263 = vrot.slane %v4043, 1
      %v4264 = vsel %vm4194, %v4259, %v4263
      %v4265 = vrot.slane %v4044, 1
      %v4266 = vrot.slane %v4046, 1
      %v4267 = vsel %vm4194, %v4265, %v4266
      %v4268 = vrot.slane %v4045, 1
      %v4269 = vrot.slane %v4047, 1
      %v4270 = vsel %vm4194, %v4268, %v4269
      %v4271 = vrot.slane %v4048, 1
      %v4272 = vsel %vm4194, %v4266, %v4271
      %v4273 = vrot.slane %v4049, 1
      %v4274 = vsel %vm4194, %v4269, %v4273
      %v4275 = vrot.slane %v4050, 1
      %v4276 = vrot.slane %v4052, 1
      %v4277 = vsel %vm4194, %v4275, %v4276
      %v4278 = vrot.slane %v4051, 1
      %v4279 = vrot.slane %v4053, 1
      %v4280 = vsel %vm4194, %v4278, %v4279
      %v4281 = vrot.slane %v4054, 1
      %v4282 = vsel %vm4194, %v4276, %v4281
      %v4283 = vrot.slane %v4055, 1
      %v4284 = vsel %vm4194, %v4279, %v4283
      %v4285 = vrot.slane %v4056, 1
      %v4286 = vrot.slane %v4058, 1
      %v4287 = vsel %vm4194, %v4285, %v4286
      %v4288 = vrot.slane %v4057, 1
      %v4289 = vrot.slane %v4059, 1
      %v4290 = vsel %vm4194, %v4288, %v4289
      %v4291 = vrot.slane %v4060, 1
      %v4292 = vsel %vm4194, %v4286, %v4291
      %v4293 = vrot.slane %v4061, 1
      %v4294 = vsel %vm4194, %v4289, %v4293
      %v4295 = vrot.slane %v4062, 1
      %v4296 = vrot.slane %v4064, 1
      %v4297 = vsel %vm4194, %v4295, %v4296
      %v4298 = vrot.slane %v4063, 1
      %v4299 = vrot.slane %v4065, 1
      %v4300 = vsel %vm4194, %v4298, %v4299
      %v4301 = vrot.slane %v4066, 1
      %v4302 = vsel %vm4194, %v4296, %v4301
      %v4303 = vrot.slane %v4067, 1
      %v4304 = vsel %vm4194, %v4299, %v4303
      %v4305 = vrot.slane %v4068, 1
      %v4306 = vrot.slane %v4070, 1
      %v4307 = vsel %vm4194, %v4305, %v4306
      %v4308 = vrot.slane %v4069, 1
      %v4309 = vrot.slane %v4071, 1
      %v4310 = vsel %vm4194, %v4308, %v4309
      %v4311 = vrot.slane %v4072, 1
      %v4312 = vsel %vm4194, %v4306, %v4311
      %v4313 = vrot.slane %v4073, 1
      %v4314 = vsel %vm4194, %v4309, %v4313
      %v4315 = vrot.slane %v4074, 1
      %v4316 = vrot.slane %v4076, 1
      %v4317 = vsel %vm4194, %v4315, %v4316
      %v4318 = vrot.slane %v4075, 1
      %v4319 = vrot.slane %v4077, 1
      %v4320 = vsel %vm4194, %v4318, %v4319
      %v4321 = vrot.slane %v4078, 1
      %v4322 = vsel %vm4194, %v4316, %v4321
      %v4323 = vrot.slane %v4079, 1
      %v4324 = vsel %vm4194, %v4319, %v4323
      %v4325 = vrot.slane %v4080, 1
      %v4326 = vrot.slane %v4082, 1
      %v4327 = vsel %vm4194, %v4325, %v4326
      %v4328 = vrot.slane %v4081, 1
      %v4329 = vrot.slane %v4083, 1
      %v4330 = vsel %vm4194, %v4328, %v4329
      %v4331 = vrot.slane %v4084, 1
      %v4332 = vsel %vm4194, %v4326, %v4331
      %v4333 = vrot.slane %v4085, 1
      %v4334 = vsel %vm4194, %v4329, %v4333
      %v4335 = vrot.slane %v4086, 1
      %v4336 = vrot.slane %v4088, 1
      %v4337 = vsel %vm4194, %v4335, %v4336
      %v4338 = vrot.slane %v4087, 1
      %v4339 = vrot.slane %v4089, 1
      %v4340 = vsel %vm4194, %v4338, %v4339
      %v4341 = vrot.slane %v4090, 1
      %v4342 = vsel %vm4194, %v4336, %v4341
      %v4343 = vrot.slane %v4091, 1
      %v4344 = vsel %vm4194, %v4339, %v4343
      %v4345 = vrot.slane %v4092, 1
      %v4346 = vrot.slane %v4094, 1
      %v4347 = vsel %vm4194, %v4345, %v4346
      %v4348 = vrot.slane %v4093, 1
      %v4349 = vrot.slane %v4095, 1
      %v4350 = vsel %vm4194, %v4348, %v4349
      %v4351 = vrot.slane %v4096, 1
      %v4352 = vsel %vm4194, %v4346, %v4351
      %v4353 = vrot.slane %v4097, 1
      %v4354 = vsel %vm4194, %v4349, %v4353
      %v4419 = vadd.f32 %v2940, %v4197
      %v4420 = vadd.f32 %v2941, %v4200
      %v4421 = vadd.f32 %v2942, %v4202
      %v4422 = vadd.f32 %v2943, %v4204
      %v4423 = vadd.f32 %v2944, %v4207
      %v4424 = vadd.f32 %v2945, %v4210
      %v4425 = vadd.f32 %v2946, %v4212
      %v4426 = vadd.f32 %v2947, %v4214
      %v4427 = vadd.f32 %v2948, %v4217
      %v4428 = vadd.f32 %v2949, %v4220
      %v4429 = vadd.f32 %v2950, %v4222
      %v4430 = vadd.f32 %v2951, %v4224
      %v4431 = vadd.f32 %v2952, %v4227
      %v4432 = vadd.f32 %v2953, %v4230
      %v4433 = vadd.f32 %v2954, %v4232
      %v4434 = vadd.f32 %v2955, %v4234
      %v4435 = vadd.f32 %v2956, %v4237
      %v4436 = vadd.f32 %v2957, %v4240
      %v4437 = vadd.f32 %v2958, %v4242
      %v4438 = vadd.f32 %v2959, %v4244
      %v4439 = vadd.f32 %v2960, %v4247
      %v4440 = vadd.f32 %v2961, %v4250
      %v4441 = vadd.f32 %v2962, %v4252
      %v4442 = vadd.f32 %v2963, %v4254
      %v4443 = vadd.f32 %v2964, %v4257
      %v4444 = vadd.f32 %v2965, %v4260
      %v4445 = vadd.f32 %v2966, %v4262
      %v4446 = vadd.f32 %v2967, %v4264
      %v4447 = vadd.f32 %v2968, %v4267
      %v4448 = vadd.f32 %v2969, %v4270
      %v4449 = vadd.f32 %v2970, %v4272
      %v4450 = vadd.f32 %v2971, %v4274
      %v4451 = vadd.f32 %v2972, %v4277
      %v4452 = vadd.f32 %v2973, %v4280
      %v4453 = vadd.f32 %v2974, %v4282
      %v4454 = vadd.f32 %v2975, %v4284
      %v4455 = vadd.f32 %v2976, %v4287
      %v4456 = vadd.f32 %v2977, %v4290
      %v4457 = vadd.f32 %v2978, %v4292
      %v4458 = vadd.f32 %v2979, %v4294
      %v4459 = vadd.f32 %v2980, %v4297
      %v4460 = vadd.f32 %v2981, %v4300
      %v4461 = vadd.f32 %v2982, %v4302
      %v4462 = vadd.f32 %v2983, %v4304
      %v4463 = vadd.f32 %v2984, %v4307
      %v4464 = vadd.f32 %v2985, %v4310
      %v4465 = vadd.f32 %v2986, %v4312
      %v4466 = vadd.f32 %v2987, %v4314
      %v4467 = vadd.f32 %v2988, %v4317
      %v4468 = vadd.f32 %v2989, %v4320
      %v4469 = vadd.f32 %v2990, %v4322
      %v4470 = vadd.f32 %v2991, %v4324
      %v4471 = vadd.f32 %v2992, %v4327
      %v4472 = vadd.f32 %v2993, %v4330
      %v4473 = vadd.f32 %v2994, %v4332
      %v4474 = vadd.f32 %v2995, %v4334
      %v4475 = vadd.f32 %v2996, %v4337
      %v4476 = vadd.f32 %v2997, %v4340
      %v4477 = vadd.f32 %v2998, %v4342
      %v4478 = vadd.f32 %v2999, %v4344
      %v4479 = vadd.f32 %v3000, %v4347
      %v4480 = vadd.f32 %v3001, %v4350
      %v4481 = vadd.f32 %v3002, %v4352
      %v4482 = vadd.f32 %v3003, %v4354
      %v4483 = vld [vmem:[%s2] sm:$0x3]
      %v4485 = vlaneseq
      %v4486 = vshrl.u32 %v4485, 7
      %v4487 = vsub.s32 0, %v4486
      %v4488 = vrot.slane %v4483, %v4487
      %v4489 = vlaneseq
      %v4490 = vshrl.u32 %v4489, 7
      %v4491 = vsub.s32 1, %v4490
      %v4492 = vrot.slane %v4483, %v4491
      %v4495 = vadd.f32 %v4419, %v4488
      %v4496 = vadd.f32 %v4420, %v4492
      %v4497 = vadd.f32 %v4421, %v4488
      %v4498 = vadd.f32 %v4422, %v4492
      %v4499 = vadd.f32 %v4423, %v4488
      %v4500 = vadd.f32 %v4424, %v4492
      %v4501 = vadd.f32 %v4425, %v4488
      %v4502 = vadd.f32 %v4426, %v4492
      %v4503 = vadd.f32 %v4427, %v4488
      %v4504 = vadd.f32 %v4428, %v4492
      %v4505 = vadd.f32 %v4429, %v4488
      %v4506 = vadd.f32 %v4430, %v4492
      %v4507 = vadd.f32 %v4431, %v4488
      %v4508 = vadd.f32 %v4432, %v4492
      %v4509 = vadd.f32 %v4433, %v4488
      %v4510 = vadd.f32 %v4434, %v4492
      %v4511 = vadd.f32 %v4435, %v4488
      %v4512 = vadd.f32 %v4436, %v4492
      %v4513 = vadd.f32 %v4437, %v4488
      %v4514 = vadd.f32 %v4438, %v4492
      %v4515 = vadd.f32 %v4439, %v4488
      %v4516 = vadd.f32 %v4440, %v4492
      %v4517 = vadd.f32 %v4441, %v4488
      %v4518 = vadd.f32 %v4442, %v4492
      %v4519 = vadd.f32 %v4443, %v4488
      %v4520 = vadd.f32 %v4444, %v4492
      %v4521 = vadd.f32 %v4445, %v4488
      %v4522 = vadd.f32 %v4446, %v4492
      %v4523 = vadd.f32 %v4447, %v4488
      %v4524 = vadd.f32 %v4448, %v4492
      %v4525 = vadd.f32 %v4449, %v4488
      %v4526 = vadd.f32 %v4450, %v4492
      %v4527 = vadd.f32 %v4451, %v4488
      %v4528 = vadd.f32 %v4452, %v4492
      %v4529 = vadd.f32 %v4453, %v4488
      %v4530 = vadd.f32 %v4454, %v4492
      %v4531 = vadd.f32 %v4455, %v4488
      %v4532 = vadd.f32 %v4456, %v4492
      %v4533 = vadd.f32 %v4457, %v4488
      %v4534 = vadd.f32 %v4458, %v4492
      %v4535 = vadd.f32 %v4459, %v4488
      %v4536 = vadd.f32 %v4460, %v4492
      %v4537 = vadd.f32 %v4461, %v4488
      %v4538 = vadd.f32 %v4462, %v4492
      %v4539 = vadd.f32 %v4463, %v4488
      %v4540 = vadd.f32 %v4464, %v4492
      %v4541 = vadd.f32 %v4465, %v4488
      %v4542 = vadd.f32 %v4466, %v4492
      %v4543 = vadd.f32 %v4467, %v4488
      %v4544 = vadd.f32 %v4468, %v4492
      %v4545 = vadd.f32 %v4469, %v4488
      %v4546 = vadd.f32 %v4470, %v4492
      %v4547 = vadd.f32 %v4471, %v4488
      %v4548 = vadd.f32 %v4472, %v4492
      %v4549 = vadd.f32 %v4473, %v4488
      %v4550 = vadd.f32 %v4474, %v4492
      %v4551 = vadd.f32 %v4475, %v4488
      %v4552 = vadd.f32 %v4476, %v4492
      %v4553 = vadd.f32 %v4477, %v4488
      %v4554 = vadd.f32 %v4478, %v4492
      %v4555 = vadd.f32 %v4479, %v4488
      %v4556 = vadd.f32 %v4480, %v4492
      %v4557 = vadd.f32 %v4481, %v4488
      %v4558 = vadd.f32 %v4482, %v4492
      %v4559 = vxor.u32 %v4495, 2147483648
      %v4560 = vxor.u32 %v4496, 2147483648
      %v4561 = vxor.u32 %v4497, 2147483648
      %v4562 = vxor.u32 %v4498, 2147483648
      %v4563 = vxor.u32 %v4499, 2147483648
      %v4564 = vxor.u32 %v4500, 2147483648
      %v4565 = vxor.u32 %v4501, 2147483648
      %v4566 = vxor.u32 %v4502, 2147483648
      %v4567 = vxor.u32 %v4503, 2147483648
      %v4568 = vxor.u32 %v4504, 2147483648
      %v4569 = vxor.u32 %v4505, 2147483648
      %v4570 = vxor.u32 %v4506, 2147483648
      %v4571 = vxor.u32 %v4507, 2147483648
      %v4572 = vxor.u32 %v4508, 2147483648
      %v4573 = vxor.u32 %v4509, 2147483648
      %v4574 = vxor.u32 %v4510, 2147483648
      %v4575 = vxor.u32 %v4511, 2147483648
      %v4576 = vxor.u32 %v4512, 2147483648
      %v4577 = vxor.u32 %v4513, 2147483648
      %v4578 = vxor.u32 %v4514, 2147483648
      %v4579 = vxor.u32 %v4515, 2147483648
      %v4580 = vxor.u32 %v4516, 2147483648
      %v4581 = vxor.u32 %v4517, 2147483648
      %v4582 = vxor.u32 %v4518, 2147483648
      %v4583 = vxor.u32 %v4519, 2147483648
      %v4584 = vxor.u32 %v4520, 2147483648
      %v4585 = vxor.u32 %v4521, 2147483648
      %v4586 = vxor.u32 %v4522, 2147483648
      %v4587 = vxor.u32 %v4523, 2147483648
      %v4588 = vxor.u32 %v4524, 2147483648
      %v4589 = vxor.u32 %v4525, 2147483648
      %v4590 = vxor.u32 %v4526, 2147483648
      %v4591 = vxor.u32 %v4527, 2147483648
      %v4592 = vxor.u32 %v4528, 2147483648
      %v4593 = vxor.u32 %v4529, 2147483648
      %v4594 = vxor.u32 %v4530, 2147483648
      %v4595 = vxor.u32 %v4531, 2147483648
      %v4596 = vxor.u32 %v4532, 2147483648
      %v4597 = vxor.u32 %v4533, 2147483648
      %v4598 = vxor.u32 %v4534, 2147483648
      %v4599 = vxor.u32 %v4535, 2147483648
      %v4600 = vxor.u32 %v4536, 2147483648
      %v4601 = vxor.u32 %v4537, 2147483648
      %v4602 = vxor.u32 %v4538, 2147483648
      %v4603 = vxor.u32 %v4539, 2147483648
      %v4604 = vxor.u32 %v4540, 2147483648
      %v4605 = vxor.u32 %v4541, 2147483648
      %v4606 = vxor.u32 %v4542, 2147483648
      %v4607 = vxor.u32 %v4543, 2147483648
      %v4608 = vxor.u32 %v4544, 2147483648
      %v4609 = vxor.u32 %v4545, 2147483648
      %v4610 = vxor.u32 %v4546, 2147483648
      %v4611 = vxor.u32 %v4547, 2147483648
      %v4612 = vxor.u32 %v4548, 2147483648
      %v4613 = vxor.u32 %v4549, 2147483648
      %v4614 = vxor.u32 %v4550, 2147483648
      %v4615 = vxor.u32 %v4551, 2147483648
      %v4616 = vxor.u32 %v4552, 2147483648
      %v4617 = vxor.u32 %v4553, 2147483648
      %v4618 = vxor.u32 %v4554, 2147483648
      %v4619 = vxor.u32 %v4555, 2147483648
      %v4620 = vxor.u32 %v4556, 2147483648
      %v4621 = vxor.u32 %v4557, 2147483648
      %v4622 = vxor.u32 %v4558, 2147483648
      %v4623 = vmul.f32 %v4559, 1.442695
      %v4624 = vpow.pop %v4623
      %v4625 = vmul.f32 %v4560, 1.442695
      %v4626 = vpow.pop %v4625
      %v4627 = vmul.f32 %v4561, 1.442695
      %v4628 = vpow.pop %v4627
      %v4629 = vmul.f32 %v4562, 1.442695
      %v4630 = vpow.pop %v4629
      %v4631 = vmul.f32 %v4563, 1.442695
      %v4632 = vpow.pop %v4631
      %v4633 = vmul.f32 %v4564, 1.442695
      %v4634 = vpow.pop %v4633
      %v4635 = vmul.f32 %v4565, 1.442695
      %v4636 = vpow.pop %v4635
      %v4637 = vmul.f32 %v4566, 1.442695
      %v4638 = vpow.pop %v4637
      %v4639 = vmul.f32 %v4567, 1.442695
      %v4640 = vpow.pop %v4639
      %v4641 = vmul.f32 %v4568, 1.442695
      %v4642 = vpow.pop %v4641
      %v4643 = vmul.f32 %v4569, 1.442695
      %v4644 = vpow.pop %v4643
      %v4645 = vmul.f32 %v4570, 1.442695
      %v4646 = vpow.pop %v4645
      %v4647 = vmul.f32 %v4571, 1.442695
      %v4648 = vpow.pop %v4647
      %v4649 = vmul.f32 %v4572, 1.442695
      %v4650 = vpow.pop %v4649
      %v4651 = vmul.f32 %v4573, 1.442695
      %v4652 = vpow.pop %v4651
      %v4653 = vmul.f32 %v4574, 1.442695
      %v4654 = vpow.pop %v4653
      %v4655 = vmul.f32 %v4575, 1.442695
      %v4656 = vpow.pop %v4655
      %v4657 = vmul.f32 %v4576, 1.442695
      %v4658 = vpow.pop %v4657
      %v4659 = vmul.f32 %v4577, 1.442695
      %v4660 = vpow.pop %v4659
      %v4661 = vmul.f32 %v4578, 1.442695
      %v4662 = vpow.pop %v4661
      %v4663 = vmul.f32 %v4579, 1.442695
      %v4664 = vpow.pop %v4663
      %v4665 = vmul.f32 %v4580, 1.442695
      %v4666 = vpow.pop %v4665
      %v4667 = vmul.f32 %v4581, 1.442695
      %v4668 = vpow.pop %v4667
      %v4669 = vmul.f32 %v4582, 1.442695
      %v4670 = vpow.pop %v4669
      %v4671 = vmul.f32 %v4583, 1.442695
      %v4672 = vpow.pop %v4671
      %v4673 = vmul.f32 %v4584, 1.442695
      %v4674 = vpow.pop %v4673
      %v4675 = vmul.f32 %v4585, 1.442695
      %v4676 = vpow.pop %v4675
      %v4677 = vmul.f32 %v4586, 1.442695
      %v4678 = vpow.pop %v4677
      %v4679 = vmul.f32 %v4587, 1.442695
      %v4680 = vpow.pop %v4679
      %v4681 = vmul.f32 %v4588, 1.442695
      %v4682 = vpow.pop %v4681
      %v4683 = vmul.f32 %v4589, 1.442695
      %v4684 = vpow.pop %v4683
      %v4685 = vmul.f32 %v4590, 1.442695
      %v4686 = vpow.pop %v4685
      %v4687 = vmul.f32 %v4591, 1.442695
      %v4688 = vpow.pop %v4687
      %v4689 = vmul.f32 %v4592, 1.442695
      %v4690 = vpow.pop %v4689
      %v4691 = vmul.f32 %v4593, 1.442695
      %v4692 = vpow.pop %v4691
      %v4693 = vmul.f32 %v4594, 1.442695
      %v4694 = vpow.pop %v4693
      %v4695 = vmul.f32 %v4595, 1.442695
      %v4696 = vpow.pop %v4695
      %v4697 = vmul.f32 %v4596, 1.442695
      %v4698 = vpow.pop %v4697
      %v4699 = vmul.f32 %v4597, 1.442695
      %v4700 = vpow.pop %v4699
      %v4701 = vmul.f32 %v4598, 1.442695
      %v4702 = vpow.pop %v4701
      %v4703 = vmul.f32 %v4599, 1.442695
      %v4704 = vpow.pop %v4703
      %v4705 = vmul.f32 %v4600, 1.442695
      %v4706 = vpow.pop %v4705
      %v4707 = vmul.f32 %v4601, 1.442695
      %v4708 = vpow.pop %v4707
      %v4709 = vmul.f32 %v4602, 1.442695
      %v4710 = vpow.pop %v4709
      %v4711 = vmul.f32 %v4603, 1.442695
      %v4712 = vpow.pop %v4711
      %v4713 = vmul.f32 %v4604, 1.442695
      %v4714 = vpow.pop %v4713
      %v4715 = vmul.f32 %v4605, 1.442695
      %v4716 = vpow.pop %v4715
      %v4717 = vmul.f32 %v4606, 1.442695
      %v4718 = vpow.pop %v4717
      %v4719 = vmul.f32 %v4607, 1.442695
      %v4720 = vpow.pop %v4719
      %v4721 = vmul.f32 %v4608, 1.442695
      %v4722 = vpow.pop %v4721
      %v4723 = vmul.f32 %v4609, 1.442695
      %v4724 = vpow.pop %v4723
      %v4725 = vmul.f32 %v4610, 1.442695
      %v4726 = vpow.pop %v4725
      %v4727 = vmul.f32 %v4611, 1.442695
      %v4728 = vpow.pop %v4727
      %v4729 = vmul.f32 %v4612, 1.442695
      %v4730 = vpow.pop %v4729
      %v4731 = vmul.f32 %v4613, 1.442695
      %v4732 = vpow.pop %v4731
      %v4733 = vmul.f32 %v4614, 1.442695
      %v4734 = vpow.pop %v4733
      %v4735 = vmul.f32 %v4615, 1.442695
      %v4736 = vpow.pop %v4735
      %v4737 = vmul.f32 %v4616, 1.442695
      %v4738 = vpow.pop %v4737
      %v4739 = vmul.f32 %v4617, 1.442695
      %v4740 = vpow.pop %v4739
      %v4741 = vmul.f32 %v4618, 1.442695
      %v4742 = vpow.pop %v4741
      %v4743 = vmul.f32 %v4619, 1.442695
      %v4744 = vpow.pop %v4743
      %v4745 = vmul.f32 %v4620, 1.442695
      %v4746 = vpow.pop %v4745
      %v4747 = vmul.f32 %v4621, 1.442695
      %v4748 = vpow.pop %v4747
      %v4749 = vmul.f32 %v4622, 1.442695
      %v4750 = vpow.pop %v4749
      %v4751 = vadd.f32 %v4624, 1.0
      %v4752 = vadd.f32 %v4626, 1.0
      %v4753 = vadd.f32 %v4628, 1.0
      %v4754 = vadd.f32 %v4630, 1.0
      %v4755 = vadd.f32 %v4632, 1.0
      %v4756 = vadd.f32 %v4634, 1.0
      %v4757 = vadd.f32 %v4636, 1.0
      %v4758 = vadd.f32 %v4638, 1.0
      %v4759 = vadd.f32 %v4640, 1.0
      %v4760 = vadd.f32 %v4642, 1.0
      %v4761 = vadd.f32 %v4644, 1.0
      %v4762 = vadd.f32 %v4646, 1.0
      %v4763 = vadd.f32 %v4648, 1.0
      %v4764 = vadd.f32 %v4650, 1.0
      %v4765 = vadd.f32 %v4652, 1.0
      %v4766 = vadd.f32 %v4654, 1.0
      %v4767 = vadd.f32 %v4656, 1.0
      %v4768 = vadd.f32 %v4658, 1.0
      %v4769 = vadd.f32 %v4660, 1.0
      %v4770 = vadd.f32 %v4662, 1.0
      %v4771 = vadd.f32 %v4664, 1.0
      %v4772 = vadd.f32 %v4666, 1.0
      %v4773 = vadd.f32 %v4668, 1.0
      %v4774 = vadd.f32 %v4670, 1.0
      %v4775 = vadd.f32 %v4672, 1.0
      %v4776 = vadd.f32 %v4674, 1.0
      %v4777 = vadd.f32 %v4676, 1.0
      %v4778 = vadd.f32 %v4678, 1.0
      %v4779 = vadd.f32 %v4680, 1.0
      %v4780 = vadd.f32 %v4682, 1.0
      %v4781 = vadd.f32 %v4684, 1.0
      %v4782 = vadd.f32 %v4686, 1.0
      %v4783 = vadd.f32 %v4688, 1.0
      %v4784 = vadd.f32 %v4690, 1.0
      %v4785 = vadd.f32 %v4692, 1.0
      %v4786 = vadd.f32 %v4694, 1.0
      %v4787 = vadd.f32 %v4696, 1.0
      %v4788 = vadd.f32 %v4698, 1.0
      %v4789 = vadd.f32 %v4700, 1.0
      %v4790 = vadd.f32 %v4702, 1.0
      %v4791 = vadd.f32 %v4704, 1.0
      %v4792 = vadd.f32 %v4706, 1.0
      %v4793 = vadd.f32 %v4708, 1.0
      %v4794 = vadd.f32 %v4710, 1.0
      %v4795 = vadd.f32 %v4712, 1.0
      %v4796 = vadd.f32 %v4714, 1.0
      %v4797 = vadd.f32 %v4716, 1.0
      %v4798 = vadd.f32 %v4718, 1.0
      %v4799 = vadd.f32 %v4720, 1.0
      %v4800 = vadd.f32 %v4722, 1.0
      %v4801 = vadd.f32 %v4724, 1.0
      %v4802 = vadd.f32 %v4726, 1.0
      %v4803 = vadd.f32 %v4728, 1.0
      %v4804 = vadd.f32 %v4730, 1.0
      %v4805 = vadd.f32 %v4732, 1.0
      %v4806 = vadd.f32 %v4734, 1.0
      %v4807 = vadd.f32 %v4736, 1.0
      %v4808 = vadd.f32 %v4738, 1.0
      %v4809 = vadd.f32 %v4740, 1.0
      %v4810 = vadd.f32 %v4742, 1.0
      %v4811 = vadd.f32 %v4744, 1.0
      %v4812 = vadd.f32 %v4746, 1.0
      %v4813 = vadd.f32 %v4748, 1.0
      %v4814 = vadd.f32 %v4750, 1.0
      %v4815 = vrcp.pop %v4751
      %v4816 = vmul.f32 1.0, %v4815
      %v4817 = vrcp.pop %v4752
      %v4818 = vmul.f32 1.0, %v4817
      %v4819 = vrcp.pop %v4753
      %v4820 = vmul.f32 1.0, %v4819
      %v4821 = vrcp.pop %v4754
      %v4822 = vmul.f32 1.0, %v4821
      %v4823 = vrcp.pop %v4755
      %v4824 = vmul.f32 1.0, %v4823
      %v4825 = vrcp.pop %v4756
      %v4826 = vmul.f32 1.0, %v4825
      %v4827 = vrcp.pop %v4757
      %v4828 = vmul.f32 1.0, %v4827
      %v4829 = vrcp.pop %v4758
      %v4830 = vmul.f32 1.0, %v4829
      %v4831 = vrcp.pop %v4759
      %v4832 = vmul.f32 1.0, %v4831
      %v4833 = vrcp.pop %v4760
      %v4834 = vmul.f32 1.0, %v4833
      %v4835 = vrcp.pop %v4761
      %v4836 = vmul.f32 1.0, %v4835
      %v4837 = vrcp.pop %v4762
      %v4838 = vmul.f32 1.0, %v4837
      %v4839 = vrcp.pop %v4763
      %v4840 = vmul.f32 1.0, %v4839
      %v4841 = vrcp.pop %v4764
      %v4842 = vmul.f32 1.0, %v4841
      %v4843 = vrcp.pop %v4765
      %v4844 = vmul.f32 1.0, %v4843
      %v4845 = vrcp.pop %v4766
      %v4846 = vmul.f32 1.0, %v4845
      %v4847 = vrcp.pop %v4767
      %v4848 = vmul.f32 1.0, %v4847
      %v4849 = vrcp.pop %v4768
      %v4850 = vmul.f32 1.0, %v4849
      %v4851 = vrcp.pop %v4769
      %v4852 = vmul.f32 1.0, %v4851
      %v4853 = vrcp.pop %v4770
      %v4854 = vmul.f32 1.0, %v4853
      %v4855 = vrcp.pop %v4771
      %v4856 = vmul.f32 1.0, %v4855
      %v4857 = vrcp.pop %v4772
      %v4858 = vmul.f32 1.0, %v4857
      %v4859 = vrcp.pop %v4773
      %v4860 = vmul.f32 1.0, %v4859
      %v4861 = vrcp.pop %v4774
      %v4862 = vmul.f32 1.0, %v4861
      %v4863 = vrcp.pop %v4775
      %v4864 = vmul.f32 1.0, %v4863
      %v4865 = vrcp.pop %v4776
      %v4866 = vmul.f32 1.0, %v4865
      %v4867 = vrcp.pop %v4777
      %v4868 = vmul.f32 1.0, %v4867
      %v4869 = vrcp.pop %v4778
      %v4870 = vmul.f32 1.0, %v4869
      %v4871 = vrcp.pop %v4779
      %v4872 = vmul.f32 1.0, %v4871
      %v4873 = vrcp.pop %v4780
      %v4874 = vmul.f32 1.0, %v4873
      %v4875 = vrcp.pop %v4781
      %v4876 = vmul.f32 1.0, %v4875
      %v4877 = vrcp.pop %v4782
      %v4878 = vmul.f32 1.0, %v4877
      %v4879 = vrcp.pop %v4783
      %v4880 = vmul.f32 1.0, %v4879
      %v4881 = vrcp.pop %v4784
      %v4882 = vmul.f32 1.0, %v4881
      %v4883 = vrcp.pop %v4785
      %v4884 = vmul.f32 1.0, %v4883
      %v4885 = vrcp.pop %v4786
      %v4886 = vmul.f32 1.0, %v4885
      %v4887 = vrcp.pop %v4787
      %v4888 = vmul.f32 1.0, %v4887
      %v4889 = vrcp.pop %v4788
      %v4890 = vmul.f32 1.0, %v4889
      %v4891 = vrcp.pop %v4789
      %v4892 = vmul.f32 1.0, %v4891
      %v4893 = vrcp.pop %v4790
      %v4894 = vmul.f32 1.0, %v4893
      %v4895 = vrcp.pop %v4791
      %v4896 = vmul.f32 1.0, %v4895
      %v4897 = vrcp.pop %v4792
      %v4898 = vmul.f32 1.0, %v4897
      %v4899 = vrcp.pop %v4793
      %v4900 = vmul.f32 1.0, %v4899
      %v4901 = vrcp.pop %v4794
      %v4902 = vmul.f32 1.0, %v4901
      %v4903 = vrcp.pop %v4795
      %v4904 = vmul.f32 1.0, %v4903
      %v4905 = vrcp.pop %v4796
      %v4906 = vmul.f32 1.0, %v4905
      %v4907 = vrcp.pop %v4797
      %v4908 = vmul.f32 1.0, %v4907
      %v4909 = vrcp.pop %v4798
      %v4910 = vmul.f32 1.0, %v4909
      %v4911 = vrcp.pop %v4799
      %v4912 = vmul.f32 1.0, %v4911
      %v4913 = vrcp.pop %v4800
      %v4914 = vmul.f32 1.0, %v4913
      %v4915 = vrcp.pop %v4801
      %v4916 = vmul.f32 1.0, %v4915
      %v4917 = vrcp.pop %v4802
      %v4918 = vmul.f32 1.0, %v4917
      %v4919 = vrcp.pop %v4803
      %v4920 = vmul.f32 1.0, %v4919
      %v4921 = vrcp.pop %v4804
      %v4922 = vmul.f32 1.0, %v4921
      %v4923 = vrcp.pop %v4805
      %v4924 = vmul.f32 1.0, %v4923
      %v4925 = vrcp.pop %v4806
      %v4926 = vmul.f32 1.0, %v4925
      %v4927 = vrcp.pop %v4807
      %v4928 = vmul.f32 1.0, %v4927
      %v4929 = vrcp.pop %v4808
      %v4930 = vmul.f32 1.0, %v4929
      %v4931 = vrcp.pop %v4809
      %v4932 = vmul.f32 1.0, %v4931
      %v4933 = vrcp.pop %v4810
      %v4934 = vmul.f32 1.0, %v4933
      %v4935 = vrcp.pop %v4811
      %v4936 = vmul.f32 1.0, %v4935
      %v4937 = vrcp.pop %v4812
      %v4938 = vmul.f32 1.0, %v4937
      %v4939 = vrcp.pop %v4813
      %v4940 = vmul.f32 1.0, %v4939
      %v4941 = vrcp.pop %v4814
      %v4942 = vmul.f32 1.0, %v4941
      %v4943 = vmul.f32 %v4495, %v4816
      %v4944 = vmul.f32 %v4496, %v4818
      %v4945 = vmul.f32 %v4497, %v4820
      %v4946 = vmul.f32 %v4498, %v4822
      %v4947 = vmul.f32 %v4499, %v4824
      %v4948 = vmul.f32 %v4500, %v4826
      %v4949 = vmul.f32 %v4501, %v4828
      %v4950 = vmul.f32 %v4502, %v4830
      %v4951 = vmul.f32 %v4503, %v4832
      %v4952 = vmul.f32 %v4504, %v4834
      %v4953 = vmul.f32 %v4505, %v4836
      %v4954 = vmul.f32 %v4506, %v4838
      %v4955 = vmul.f32 %v4507, %v4840
      %v4956 = vmul.f32 %v4508, %v4842
      %v4957 = vmul.f32 %v4509, %v4844
      %v4958 = vmul.f32 %v4510, %v4846
      %v4959 = vmul.f32 %v4511, %v4848
      %v4960 = vmul.f32 %v4512, %v4850
      %v4961 = vmul.f32 %v4513, %v4852
      %v4962 = vmul.f32 %v4514, %v4854
      %v4963 = vmul.f32 %v4515, %v4856
      %v4964 = vmul.f32 %v4516, %v4858
      %v4965 = vmul.f32 %v4517, %v4860
      %v4966 = vmul.f32 %v4518, %v4862
      %v4967 = vmul.f32 %v4519, %v4864
      %v4968 = vmul.f32 %v4520, %v4866
      %v4969 = vmul.f32 %v4521, %v4868
      %v4970 = vmul.f32 %v4522, %v4870
      %v4971 = vmul.f32 %v4523, %v4872
      %v4972 = vmul.f32 %v4524, %v4874
      %v4973 = vmul.f32 %v4525, %v4876
      %v4974 = vmul.f32 %v4526, %v4878
      %v4975 = vmul.f32 %v4527, %v4880
      %v4976 = vmul.f32 %v4528, %v4882
      %v4977 = vmul.f32 %v4529, %v4884
      %v4978 = vmul.f32 %v4530, %v4886
      %v4979 = vmul.f32 %v4531, %v4888
      %v4980 = vmul.f32 %v4532, %v4890
      %v4981 = vmul.f32 %v4533, %v4892
      %v4982 = vmul.f32 %v4534, %v4894
      %v4983 = vmul.f32 %v4535, %v4896
      %v4984 = vmul.f32 %v4536, %v4898
      %v4985 = vmul.f32 %v4537, %v4900
      %v4986 = vmul.f32 %v4538, %v4902
      %v4987 = vmul.f32 %v4539, %v4904
      %v4988 = vmul.f32 %v4540, %v4906
      %v4989 = vmul.f32 %v4541, %v4908
      %v4990 = vmul.f32 %v4542, %v4910
      %v4991 = vmul.f32 %v4543, %v4912
      %v4992 = vmul.f32 %v4544, %v4914
      %v4993 = vmul.f32 %v4545, %v4916
      %v4994 = vmul.f32 %v4546, %v4918
      %v4995 = vmul.f32 %v4547, %v4920
      %v4996 = vmul.f32 %v4548, %v4922
      %v4997 = vmul.f32 %v4549, %v4924
      %v4998 = vmul.f32 %v4550, %v4926
      %v4999 = vmul.f32 %v4551, %v4928
      %v5000 = vmul.f32 %v4552, %v4930
      %v5001 = vmul.f32 %v4553, %v4932
      %v5002 = vmul.f32 %v4554, %v4934
      %v5003 = vmul.f32 %v4555, %v4936
      %v5004 = vmul.f32 %v4556, %v4938
      %v5005 = vmul.f32 %v4557, %v4940
      %v5006 = vmul.f32 %v4558, %v4942
      %v5007 = vpack.c.bf16 %v4945, %v4943
      %v5008 = vpack.c.bf16 %v4946, %v4944
      %v5009 = vpack.c.bf16 %v4949, %v4947
      %v5010 = vpack.c.bf16 %v4950, %v4948
      %v5011 = vpack.c.bf16 %v4953, %v4951
      %v5012 = vpack.c.bf16 %v4954, %v4952
      %v5013 = vpack.c.bf16 %v4957, %v4955
      %v5014 = vpack.c.bf16 %v4958, %v4956
      %v5015 = vpack.c.bf16 %v4961, %v4959
      %v5016 = vpack.c.bf16 %v4962, %v4960
      %v5017 = vpack.c.bf16 %v4965, %v4963
      %v5018 = vpack.c.bf16 %v4966, %v4964
      %v5019 = vpack.c.bf16 %v4969, %v4967
      %v5020 = vpack.c.bf16 %v4970, %v4968
      %v5021 = vpack.c.bf16 %v4973, %v4971
      %v5022 = vpack.c.bf16 %v4974, %v4972
      %v5023 = vpack.c.bf16 %v4977, %v4975
      %v5024 = vpack.c.bf16 %v4978, %v4976
      %v5025 = vpack.c.bf16 %v4981, %v4979
      %v5026 = vpack.c.bf16 %v4982, %v4980
      %v5027 = vpack.c.bf16 %v4985, %v4983
      %v5028 = vpack.c.bf16 %v4986, %v4984
      %v5029 = vpack.c.bf16 %v4989, %v4987
      %v5030 = vpack.c.bf16 %v4990, %v4988
      %v5031 = vpack.c.bf16 %v4993, %v4991
      %v5032 = vpack.c.bf16 %v4994, %v4992
      %v5033 = vpack.c.bf16 %v4997, %v4995
      %v5034 = vpack.c.bf16 %v4998, %v4996
      %v5035 = vpack.c.bf16 %v5001, %v4999
      %v5036 = vpack.c.bf16 %v5002, %v5000
      %v5037 = vpack.c.bf16 %v5005, %v5003
      %v5038 = vpack.c.bf16 %v5006, %v5004
      %s5039 = scalar_lea.vmem [#allocation3], 16
      %5040 = vst [vmem:[%s5039] sm:$0xff] %v5007
      %5041 = vst [vmem:[%s5039 + $0x8] sm:$0xff] %v5008
      %5042 = vst [vmem:[%s5039 + $0x10] sm:$0xff] %v5009
      %5043 = vst [vmem:[%s5039 + $0x18] sm:$0xff] %v5010
      %5044 = vst [vmem:[%s5039 + $0x20] sm:$0xff] %v5011
      %5045 = vst [vmem:[%s5039 + $0x28] sm:$0xff] %v5012
      %5046 = vst [vmem:[%s5039 + $0x30] sm:$0xff] %v5013
      %5047 = vst [vmem:[%s5039 + $0x38] sm:$0xff] %v5014
      %5048 = vst [vmem:[%s5039 + $0x40] sm:$0xff] %v5015
      %5049 = vst [vmem:[%s5039 + $0x48] sm:$0xff] %v5016
      %5050 = vst [vmem:[%s5039 + $0x50] sm:$0xff] %v5017
      %5051 = vst [vmem:[%s5039 + $0x58] sm:$0xff] %v5018
      %5052 = vst [vmem:[%s5039 + $0x60] sm:$0xff] %v5019
      %5053 = vst [vmem:[%s5039 + $0x68] sm:$0xff] %v5020
      %5054 = vst [vmem:[%s5039 + $0x70] sm:$0xff] %v5021
      %5055 = vst [vmem:[%s5039 + $0x78] sm:$0xff] %v5022
      %5056 = vst [vmem:[%s5039 + $0x80] sm:$0xff] %v5023
      %5057 = vst [vmem:[%s5039 + $0x88] sm:$0xff] %v5024
      %5058 = vst [vmem:[%s5039 + $0x90] sm:$0xff] %v5025
      %5059 = vst [vmem:[%s5039 + $0x98] sm:$0xff] %v5026
      %5060 = vst [vmem:[%s5039 + $0xa0] sm:$0xff] %v5027
      %5061 = vst [vmem:[%s5039 + $0xa8] sm:$0xff] %v5028
      %5062 = vst [vmem:[%s5039 + $0xb0] sm:$0xff] %v5029
      %5063 = vst [vmem:[%s5039 + $0xb8] sm:$0xff] %v5030
      %5064 = vst [vmem:[%s5039 + $0xc0] sm:$0xff] %v5031
      %5065 = vst [vmem:[%s5039 + $0xc8] sm:$0xff] %v5032
      %5066 = vst [vmem:[%s5039 + $0xd0] sm:$0xff] %v5033
      %5067 = vst [vmem:[%s5039 + $0xd8] sm:$0xff] %v5034
      %5068 = vst [vmem:[%s5039 + $0xe0] sm:$0xff] %v5035
      %5069 = vst [vmem:[%s5039 + $0xe8] sm:$0xff] %v5036
      %5070 = vst [vmem:[%s5039 + $0xf0] sm:$0xff] %v5037
      %5071 = vst [vmem:[%s5039 + $0xf8] sm:$0xff] %v5038
      %v5072 = vld [vmem:[#allocation3] sm:$0xff]
      %v5073 = vld [vmem:[#allocation3 + $0x8] sm:$0xff]
      %v5074 = vld [vmem:[#allocation3 + $0x10] sm:$0xff]
      %v5075 = vld [vmem:[#allocation3 + $0x18] sm:$0xff]
      %v5076 = vld [vmem:[#allocation3 + $0x20] sm:$0xff]
      %v5077 = vld [vmem:[#allocation3 + $0x28] sm:$0xff]
      %v5078 = vld [vmem:[#allocation3 + $0x30] sm:$0xff]
      %v5079 = vld [vmem:[#allocation3 + $0x38] sm:$0xff]
      %v5080 = vld [vmem:[#allocation3 + $0x40] sm:$0xff]
      %v5081 = vld [vmem:[#allocation3 + $0x48] sm:$0xff]
      %v5082 = vld [vmem:[#allocation3 + $0x50] sm:$0xff]
      %v5083 = vld [vmem:[#allocation3 + $0x58] sm:$0xff]
      %v5084 = vld [vmem:[#allocation3 + $0x60] sm:$0xff]
      %v5085 = vld [vmem:[#allocation3 + $0x68] sm:$0xff]
      %v5086 = vld [vmem:[#allocation3 + $0x70] sm:$0xff]
      %v5087 = vld [vmem:[#allocation3 + $0x78] sm:$0xff]
      %v5088 = vld [vmem:[#allocation3 + $0x80] sm:$0xff]
      %v5089 = vld [vmem:[#allocation3 + $0x88] sm:$0xff]
      %v5090 = vld [vmem:[#allocation3 + $0x90] sm:$0xff]
      %v5091 = vld [vmem:[#allocation3 + $0x98] sm:$0xff]
      %v5092 = vld [vmem:[#allocation3 + $0xa0] sm:$0xff]
      %v5093 = vld [vmem:[#allocation3 + $0xa8] sm:$0xff]
      %v5094 = vld [vmem:[#allocation3 + $0xb0] sm:$0xff]
      %v5095 = vld [vmem:[#allocation3 + $0xb8] sm:$0xff]
      %v5096 = vld [vmem:[#allocation3 + $0xc0] sm:$0xff]
      %v5097 = vld [vmem:[#allocation3 + $0xc8] sm:$0xff]
      %v5098 = vld [vmem:[#allocation3 + $0xd0] sm:$0xff]
      %v5099 = vld [vmem:[#allocation3 + $0xd8] sm:$0xff]
      %v5100 = vld [vmem:[#allocation3 + $0xe0] sm:$0xff]
      %v5101 = vld [vmem:[#allocation3 + $0xe8] sm:$0xff]
      %v5102 = vld [vmem:[#allocation3 + $0xf0] sm:$0xff]
      %v5103 = vld [vmem:[#allocation3 + $0xf8] sm:$0xff]
      %v5104 = vld [vmem:[%s5039] sm:$0xff]
      %v5105 = vld [vmem:[%s5039 + $0x8] sm:$0xff]
      %v5106 = vld [vmem:[%s5039 + $0x10] sm:$0xff]
      %v5107 = vld [vmem:[%s5039 + $0x18] sm:$0xff]
      %v5108 = vld [vmem:[%s5039 + $0x20] sm:$0xff]
      %v5109 = vld [vmem:[%s5039 + $0x28] sm:$0xff]
      %v5110 = vld [vmem:[%s5039 + $0x30] sm:$0xff]
      %v5111 = vld [vmem:[%s5039 + $0x38] sm:$0xff]
      %v5112 = vld [vmem:[%s5039 + $0x40] sm:$0xff]
      %v5113 = vld [vmem:[%s5039 + $0x48] sm:$0xff]
      %v5114 = vld [vmem:[%s5039 + $0x50] sm:$0xff]
      %v5115 = vld [vmem:[%s5039 + $0x58] sm:$0xff]
      %v5116 = vld [vmem:[%s5039 + $0x60] sm:$0xff]
      %v5117 = vld [vmem:[%s5039 + $0x68] sm:$0xff]
      %v5118 = vld [vmem:[%s5039 + $0x70] sm:$0xff]
      %v5119 = vld [vmem:[%s5039 + $0x78] sm:$0xff]
      %v5120 = vld [vmem:[%s5039 + $0x80] sm:$0xff]
      %v5121 = vld [vmem:[%s5039 + $0x88] sm:$0xff]
      %v5122 = vld [vmem:[%s5039 + $0x90] sm:$0xff]
      %v5123 = vld [vmem:[%s5039 + $0x98] sm:$0xff]
      %v5124 = vld [vmem:[%s5039 + $0xa0] sm:$0xff]
      %v5125 = vld [vmem:[%s5039 + $0xa8] sm:$0xff]
      %v5126 = vld [vmem:[%s5039 + $0xb0] sm:$0xff]
      %v5127 = vld [vmem:[%s5039 + $0xb8] sm:$0xff]
      %v5128 = vld [vmem:[%s5039 + $0xc0] sm:$0xff]
      %v5129 = vld [vmem:[%s5039 + $0xc8] sm:$0xff]
      %v5130 = vld [vmem:[%s5039 + $0xd0] sm:$0xff]
      %v5131 = vld [vmem:[%s5039 + $0xd8] sm:$0xff]
      %v5132 = vld [vmem:[%s5039 + $0xe0] sm:$0xff]
      %v5133 = vld [vmem:[%s5039 + $0xe8] sm:$0xff]
      %v5134 = vld [vmem:[%s5039 + $0xf0] sm:$0xff]
      %v5135 = vld [vmem:[%s5039 + $0xf8] sm:$0xff]
      %s5136 = scalar_lea.vmem [#allocation3], 32
      %v5137 = vld [vmem:[%s5136] sm:$0xff]
      %v5138 = vld [vmem:[%s5136 + $0x8] sm:$0xff]
      %v5139 = vld [vmem:[%s5136 + $0x10] sm:$0xff]
      %v5140 = vld [vmem:[%s5136 + $0x18] sm:$0xff]
      %v5141 = vld [vmem:[%s5136 + $0x20] sm:$0xff]
      %v5142 = vld [vmem:[%s5136 + $0x28] sm:$0xff]
      %v5143 = vld [vmem:[%s5136 + $0x30] sm:$0xff]
      %v5144 = vld [vmem:[%s5136 + $0x38] sm:$0xff]
      %v5145 = vld [vmem:[%s5136 + $0x40] sm:$0xff]
      %v5146 = vld [vmem:[%s5136 + $0x48] sm:$0xff]
      %v5147 = vld [vmem:[%s5136 + $0x50] sm:$0xff]
      %v5148 = vld [vmem:[%s5136 + $0x58] sm:$0xff]
      %v5149 = vld [vmem:[%s5136 + $0x60] sm:$0xff]
      %v5150 = vld [vmem:[%s5136 + $0x68] sm:$0xff]
      %v5151 = vld [vmem:[%s5136 + $0x70] sm:$0xff]
      %v5152 = vld [vmem:[%s5136 + $0x78] sm:$0xff]
      %v5153 = vld [vmem:[%s5136 + $0x80] sm:$0xff]
      %v5154 = vld [vmem:[%s5136 + $0x88] sm:$0xff]
      %v5155 = vld [vmem:[%s5136 + $0x90] sm:$0xff]
      %v5156 = vld [vmem:[%s5136 + $0x98] sm:$0xff]
      %v5157 = vld [vmem:[%s5136 + $0xa0] sm:$0xff]
      %v5158 = vld [vmem:[%s5136 + $0xa8] sm:$0xff]
      %v5159 = vld [vmem:[%s5136 + $0xb0] sm:$0xff]
      %v5160 = vld [vmem:[%s5136 + $0xb8] sm:$0xff]
      %v5161 = vld [vmem:[%s5136 + $0xc0] sm:$0xff]
      %v5162 = vld [vmem:[%s5136 + $0xc8] sm:$0xff]
      %v5163 = vld [vmem:[%s5136 + $0xd0] sm:$0xff]
      %v5164 = vld [vmem:[%s5136 + $0xd8] sm:$0xff]
      %v5165 = vld [vmem:[%s5136 + $0xe0] sm:$0xff]
      %v5166 = vld [vmem:[%s5136 + $0xe8] sm:$0xff]
      %v5167 = vld [vmem:[%s5136 + $0xf0] sm:$0xff]
      %v5168 = vld [vmem:[%s5136 + $0xf8] sm:$0xff]
      %v5169 = vld [vmem:[%s3] sm:$0xff]
      %v5170 = vld [vmem:[%s3 + $0x8] sm:$0xff]
      %v5171 = vld [vmem:[%s3 + $0x10] sm:$0xff]
      %v5172 = vld [vmem:[%s3 + $0x18] sm:$0xff]
      %v5173 = vld [vmem:[%s3 + $0x20] sm:$0xff]
      %v5174 = vld [vmem:[%s3 + $0x28] sm:$0xff]
      %v5175 = vld [vmem:[%s3 + $0x30] sm:$0xff]
      %v5176 = vld [vmem:[%s3 + $0x38] sm:$0xff]
      %v5177 = vld [vmem:[%s3 + $0x40] sm:$0xff]
      %v5178 = vld [vmem:[%s3 + $0x48] sm:$0xff]
      %v5179 = vld [vmem:[%s3 + $0x50] sm:$0xff]
      %v5180 = vld [vmem:[%s3 + $0x58] sm:$0xff]
      %v5181 = vld [vmem:[%s3 + $0x60] sm:$0xff]
      %v5182 = vld [vmem:[%s3 + $0x68] sm:$0xff]
      %v5183 = vld [vmem:[%s3 + $0x70] sm:$0xff]
      %v5184 = vld [vmem:[%s3 + $0x78] sm:$0xff]
      %v5185 = vld [vmem:[%s3 + $0x80] sm:$0xff]
      %v5186 = vld [vmem:[%s3 + $0x88] sm:$0xff]
      %v5187 = vld [vmem:[%s3 + $0x90] sm:$0xff]
      %v5188 = vld [vmem:[%s3 + $0x98] sm:$0xff]
      %v5189 = vld [vmem:[%s3 + $0xa0] sm:$0xff]
      %v5190 = vld [vmem:[%s3 + $0xa8] sm:$0xff]
      %v5191 = vld [vmem:[%s3 + $0xb0] sm:$0xff]
      %v5192 = vld [vmem:[%s3 + $0xb8] sm:$0xff]
      %v5193 = vld [vmem:[%s3 + $0xc0] sm:$0xff]
      %v5194 = vld [vmem:[%s3 + $0xc8] sm:$0xff]
      %v5195 = vld [vmem:[%s3 + $0xd0] sm:$0xff]
      %v5196 = vld [vmem:[%s3 + $0xd8] sm:$0xff]
      %v5197 = vld [vmem:[%s3 + $0xe0] sm:$0xff]
      %v5198 = vld [vmem:[%s3 + $0xe8] sm:$0xff]
      %v5199 = vld [vmem:[%s3 + $0xf0] sm:$0xff]
      %v5200 = vld [vmem:[%s3 + $0xf8] sm:$0xff]
      %s5201 = scalar_lea.vmem %s3, 768
      %v5202 = vld [vmem:[%s5201] sm:$0xff]
      %v5203 = vld [vmem:[%s5201 + $0x8] sm:$0xff]
      %v5204 = vld [vmem:[%s5201 + $0x10] sm:$0xff]
      %v5205 = vld [vmem:[%s5201 + $0x18] sm:$0xff]
      %v5206 = vld [vmem:[%s5201 + $0x20] sm:$0xff]
      %v5207 = vld [vmem:[%s5201 + $0x28] sm:$0xff]
      %v5208 = vld [vmem:[%s5201 + $0x30] sm:$0xff]
      %v5209 = vld [vmem:[%s5201 + $0x38] sm:$0xff]
      %v5210 = vld [vmem:[%s5201 + $0x40] sm:$0xff]
      %v5211 = vld [vmem:[%s5201 + $0x48] sm:$0xff]
      %v5212 = vld [vmem:[%s5201 + $0x50] sm:$0xff]
      %v5213 = vld [vmem:[%s5201 + $0x58] sm:$0xff]
      %v5214 = vld [vmem:[%s5201 + $0x60] sm:$0xff]
      %v5215 = vld [vmem:[%s5201 + $0x68] sm:$0xff]
      %v5216 = vld [vmem:[%s5201 + $0x70] sm:$0xff]
      %v5217 = vld [vmem:[%s5201 + $0x78] sm:$0xff]
      %v5218 = vld [vmem:[%s5201 + $0x80] sm:$0xff]
      %v5219 = vld [vmem:[%s5201 + $0x88] sm:$0xff]
      %v5220 = vld [vmem:[%s5201 + $0x90] sm:$0xff]
      %v5221 = vld [vmem:[%s5201 + $0x98] sm:$0xff]
      %v5222 = vld [vmem:[%s5201 + $0xa0] sm:$0xff]
      %v5223 = vld [vmem:[%s5201 + $0xa8] sm:$0xff]
      %v5224 = vld [vmem:[%s5201 + $0xb0] sm:$0xff]
      %v5225 = vld [vmem:[%s5201 + $0xb8] sm:$0xff]
      %v5226 = vld [vmem:[%s5201 + $0xc0] sm:$0xff]
      %v5227 = vld [vmem:[%s5201 + $0xc8] sm:$0xff]
      %v5228 = vld [vmem:[%s5201 + $0xd0] sm:$0xff]
      %v5229 = vld [vmem:[%s5201 + $0xd8] sm:$0xff]
      %v5230 = vld [vmem:[%s5201 + $0xe0] sm:$0xff]
      %v5231 = vld [vmem:[%s5201 + $0xe8] sm:$0xff]
      %v5232 = vld [vmem:[%s5201 + $0xf0] sm:$0xff]
      %v5233 = vld [vmem:[%s5201 + $0xf8] sm:$0xff]
      %v5266 = vunpack.c.l.b16 %v5202
      %v5267 = vunpack.c.h.b16 %v5202
      %v5268 = vunpack.c.l.b16 %v5203
      %v5269 = vunpack.c.h.b16 %v5203
      %v5270 = vunpack.c.l.b16 %v5204
      %v5271 = vunpack.c.h.b16 %v5204
      %v5272 = vunpack.c.l.b16 %v5205
      %v5273 = vunpack.c.h.b16 %v5205
      %v5274 = vunpack.c.l.b16 %v5206
      %v5275 = vunpack.c.h.b16 %v5206
      %v5276 = vunpack.c.l.b16 %v5207
      %v5277 = vunpack.c.h.b16 %v5207
      %v5278 = vunpack.c.l.b16 %v5208
      %v5279 = vunpack.c.h.b16 %v5208
      %v5280 = vunpack.c.l.b16 %v5209
      %v5281 = vunpack.c.h.b16 %v5209
      %v5282 = vunpack.c.l.b16 %v5210
      %v5283 = vunpack.c.h.b16 %v5210
      %v5284 = vunpack.c.l.b16 %v5211
      %v5285 = vunpack.c.h.b16 %v5211
      %v5286 = vunpack.c.l.b16 %v5212
      %v5287 = vunpack.c.h.b16 %v5212
      %v5288 = vunpack.c.l.b16 %v5213
      %v5289 = vunpack.c.h.b16 %v5213
      %v5290 = vunpack.c.l.b16 %v5214
      %v5291 = vunpack.c.h.b16 %v5214
      %v5292 = vunpack.c.l.b16 %v5215
      %v5293 = vunpack.c.h.b16 %v5215
      %v5294 = vunpack.c.l.b16 %v5216
      %v5295 = vunpack.c.h.b16 %v5216
      %v5296 = vunpack.c.l.b16 %v5217
      %v5297 = vunpack.c.h.b16 %v5217
      %v5298 = vunpack.c.l.b16 %v5218
      %v5299 = vunpack.c.h.b16 %v5218
      %v5300 = vunpack.c.l.b16 %v5219
      %v5301 = vunpack.c.h.b16 %v5219
      %v5302 = vunpack.c.l.b16 %v5220
      %v5303 = vunpack.c.h.b16 %v5220
      %v5304 = vunpack.c.l.b16 %v5221
      %v5305 = vunpack.c.h.b16 %v5221
      %v5306 = vunpack.c.l.b16 %v5222
      %v5307 = vunpack.c.h.b16 %v5222
      %v5308 = vunpack.c.l.b16 %v5223
      %v5309 = vunpack.c.h.b16 %v5223
      %v5310 = vunpack.c.l.b16 %v5224
      %v5311 = vunpack.c.h.b16 %v5224
      %v5312 = vunpack.c.l.b16 %v5225
      %v5313 = vunpack.c.h.b16 %v5225
      %v5314 = vunpack.c.l.b16 %v5226
      %v5315 = vunpack.c.h.b16 %v5226
      %v5316 = vunpack.c.l.b16 %v5227
      %v5317 = vunpack.c.h.b16 %v5227
      %v5318 = vunpack.c.l.b16 %v5228
      %v5319 = vunpack.c.h.b16 %v5228
      %v5320 = vunpack.c.l.b16 %v5229
      %v5321 = vunpack.c.h.b16 %v5229
      %v5322 = vunpack.c.l.b16 %v5230
      %v5323 = vunpack.c.h.b16 %v5230
      %v5324 = vunpack.c.l.b16 %v5231
      %v5325 = vunpack.c.h.b16 %v5231
      %v5326 = vunpack.c.l.b16 %v5232
      %v5327 = vunpack.c.h.b16 %v5232
      %v5328 = vunpack.c.l.b16 %v5233
      %v5329 = vunpack.c.h.b16 %v5233
      %v5330 = vpack.c.b16 %v5268, %v5266
      %v5331 = vpack.c.b16 %v5269, %v5267
      %v5332 = vpack.c.b16 %v5272, %v5270
      %v5333 = vpack.c.b16 %v5273, %v5271
      %v5334 = vpack.c.b16 %v5276, %v5274
      %v5335 = vpack.c.b16 %v5277, %v5275
      %v5336 = vpack.c.b16 %v5280, %v5278
      %v5337 = vpack.c.b16 %v5281, %v5279
      %v5338 = vpack.c.b16 %v5284, %v5282
      %v5339 = vpack.c.b16 %v5285, %v5283
      %v5340 = vpack.c.b16 %v5288, %v5286
      %v5341 = vpack.c.b16 %v5289, %v5287
      %v5342 = vpack.c.b16 %v5292, %v5290
      %v5343 = vpack.c.b16 %v5293, %v5291
      %v5344 = vpack.c.b16 %v5296, %v5294
      %v5345 = vpack.c.b16 %v5297, %v5295
      %v5346 = vpack.c.b16 %v5300, %v5298
      %v5347 = vpack.c.b16 %v5301, %v5299
      %v5348 = vpack.c.b16 %v5304, %v5302
      %v5349 = vpack.c.b16 %v5305, %v5303
      %v5350 = vpack.c.b16 %v5308, %v5306
      %v5351 = vpack.c.b16 %v5309, %v5307
      %v5352 = vpack.c.b16 %v5312, %v5310
      %v5353 = vpack.c.b16 %v5313, %v5311
      %v5354 = vpack.c.b16 %v5316, %v5314
      %v5355 = vpack.c.b16 %v5317, %v5315
      %v5356 = vpack.c.b16 %v5320, %v5318
      %v5357 = vpack.c.b16 %v5321, %v5319
      %v5358 = vpack.c.b16 %v5324, %v5322
      %v5359 = vpack.c.b16 %v5325, %v5323
      %v5360 = vpack.c.b16 %v5328, %v5326
      %v5361 = vpack.c.b16 %v5329, %v5327
      %5394 = vmatprep.subr.bf16.mxu0 %v5331
      %5395 = vmatpush1.bf16.msra.mxu0 %v5330
      %5396 = vmatprep.subr.bf16.mxu0 %v5333
      %5397 = vmatpush1.bf16.msra.mxu0 %v5332
      %5398 = vmatprep.subr.bf16.mxu0 %v5335
      %5399 = vmatpush1.bf16.msra.mxu0 %v5334
      %5400 = vmatprep.subr.bf16.mxu0 %v5337
      %5401 = vmatpush1.bf16.msra.mxu0 %v5336
      %5402 = vmatprep.subr.bf16.mxu0 %v5339
      %5403 = vmatpush1.bf16.msra.mxu0 %v5338
      %5404 = vmatprep.subr.bf16.mxu0 %v5341
      %5405 = vmatpush1.bf16.msra.mxu0 %v5340
      %5406 = vmatprep.subr.bf16.mxu0 %v5343
      %5407 = vmatpush1.bf16.msra.mxu0 %v5342
      %5408 = vmatprep.subr.bf16.mxu0 %v5345
      %5409 = vmatpush1.bf16.msra.mxu0 %v5344
      %5410 = vmatprep.subr.bf16.mxu0 %v5347
      %5411 = vmatpush1.bf16.msra.mxu0 %v5346
      %5412 = vmatprep.subr.bf16.mxu0 %v5349
      %5413 = vmatpush1.bf16.msra.mxu0 %v5348
      %5414 = vmatprep.subr.bf16.mxu0 %v5351
      %5415 = vmatpush1.bf16.msra.mxu0 %v5350
      %5416 = vmatprep.subr.bf16.mxu0 %v5353
      %5417 = vmatpush1.bf16.msra.mxu0 %v5352
      %5418 = vmatprep.subr.bf16.mxu0 %v5355
      %5419 = vmatpush1.bf16.msra.mxu0 %v5354
      %5420 = vmatprep.subr.bf16.mxu0 %v5357
      %5421 = vmatpush1.bf16.msra.mxu0 %v5356
      %5422 = vmatprep.subr.bf16.mxu0 %v5359
      %5423 = vmatpush1.bf16.msra.mxu0 %v5358
      %5424 = vmatprep.subr.bf16.mxu0 %v5361
      %5425 = vmatpush1.bf16.msra.mxu0 %v5360
      %5426 = vmatprep.mubr.bf16.mxu0 %v5105
      %5427 = vmatmul.mubr.bf16.gmra.mrb[0].mxu0 %v5104
      %v5428 = vpop.f32.mrb[0].mxu0
      %v5429 = vadd.f32 0.0, %v5428
      %v5430 = vpop.f32.mrb[0].mxu0
      %v5431 = vadd.f32 0.0, %v5430
      %v5432 = vpop.f32.mrb[0].mxu0
      %v5433 = vadd.f32 0.0, %v5432
      %v5434 = vpop.f32.mrb[0].mxu0
      %v5435 = vadd.f32 0.0, %v5434
      %5436 = vmatprep.mubr.bf16.mxu0 %v5107
      %5437 = vmatmul.mubr.bf16.gmra.mrb[0].mxu0 %v5106
      %v5438 = vpop.f32.mrb[0].mxu0
      %v5439 = vadd.f32 0.0, %v5438
      %v5440 = vpop.f32.mrb[0].mxu0
      %v5441 = vadd.f32 0.0, %v5440
      %v5442 = vpop.f32.mrb[0].mxu0
      %v5443 = vadd.f32 0.0, %v5442
      %v5444 = vpop.f32.mrb[0].mxu0
      %v5445 = vadd.f32 0.0, %v5444
      %5446 = vmatprep.mubr.bf16.mxu0 %v5109
      %5447 = vmatmul.mubr.bf16.gmra.mrb[0].mxu0 %v5108
      %v5448 = vpop.f32.mrb[0].mxu0
      %v5449 = vadd.f32 0.0, %v5448
      %v5450 = vpop.f32.mrb[0].mxu0
      %v5451 = vadd.f32 0.0, %v5450
      %v5452 = vpop.f32.mrb[0].mxu0
      %v5453 = vadd.f32 0.0, %v5452
      %v5454 = vpop.f32.mrb[0].mxu0
      %v5455 = vadd.f32 0.0, %v5454
      %5456 = vmatprep.mubr.bf16.mxu0 %v5111
      %5457 = vmatmul.mubr.bf16.gmra.mrb[0].mxu0 %v5110
      %v5458 = vpop.f32.mrb[0].mxu0
      %v5459 = vadd.f32 0.0, %v5458
      %v5460 = vpop.f32.mrb[0].mxu0
      %v5461 = vadd.f32 0.0, %v5460
      %v5462 = vpop.f32.mrb[0].mxu0
      %v5463 = vadd.f32 0.0, %v5462
      %v5464 = vpop.f32.mrb[0].mxu0
      %v5465 = vadd.f32 0.0, %v5464
      %5466 = vmatprep.mubr.bf16.mxu0 %v5113
      %5467 = vmatmul.mubr.bf16.gmra.mrb[0].mxu0 %v5112
      %v5468 = vpop.f32.mrb[0].mxu0
      %v5469 = vadd.f32 0.0, %v5468
      %v5470 = vpop.f32.mrb[0].mxu0
      %v5471 = vadd.f32 0.0, %v5470
      %v5472 = vpop.f32.mrb[0].mxu0
      %v5473 = vadd.f32 0.0, %v5472
      %v5474 = vpop.f32.mrb[0].mxu0
      %v5475 = vadd.f32 0.0, %v5474
      %5476 = vmatprep.mubr.bf16.mxu0 %v5115
      %5477 = vmatmul.mubr.bf16.gmra.mrb[0].mxu0 %v5114
      %v5478 = vpop.f32.mrb[0].mxu0
      %v5479 = vadd.f32 0.0, %v5478
      %v5480 = vpop.f32.mrb[0].mxu0
      %v5481 = vadd.f32 0.0, %v5480
      %v5482 = vpop.f32.mrb[0].mxu0
      %v5483 = vadd.f32 0.0, %v5482
      %v5484 = vpop.f32.mrb[0].mxu0
      %v5485 = vadd.f32 0.0, %v5484
      %5486 = vmatprep.mubr.bf16.mxu0 %v5117
      %5487 = vmatmul.mubr.bf16.gmra.mrb[0].mxu0 %v5116
      %v5488 = vpop.f32.mrb[0].mxu0
      %v5489 = vadd.f32 0.0, %v5488
      %v5490 = vpop.f32.mrb[0].mxu0
      %v5491 = vadd.f32 0.0, %v5490
      %v5492 = vpop.f32.mrb[0].mxu0
      %v5493 = vadd.f32 0.0, %v5492
      %v5494 = vpop.f32.mrb[0].mxu0
      %v5495 = vadd.f32 0.0, %v5494
      %5496 = vmatprep.mubr.bf16.mxu0 %v5119
      %5497 = vmatmul.mubr.bf16.gmra.mrb[0].mxu0 %v5118
      %v5498 = vpop.f32.mrb[0].mxu0
      %v5499 = vadd.f32 0.0, %v5498
      %v5500 = vpop.f32.mrb[0].mxu0
      %v5501 = vadd.f32 0.0, %v5500
      %v5502 = vpop.f32.mrb[0].mxu0
      %v5503 = vadd.f32 0.0, %v5502
      %v5504 = vpop.f32.mrb[0].mxu0
      %v5505 = vadd.f32 0.0, %v5504
      %5506 = vmatprep.mubr.bf16.mxu0 %v5121
      %5507 = vmatmul.mubr.bf16.gmra.mrb[0].mxu0 %v5120
      %v5508 = vpop.f32.mrb[0].mxu0
      %v5509 = vadd.f32 0.0, %v5508
      %v5510 = vpop.f32.mrb[0].mxu0
      %v5511 = vadd.f32 0.0, %v5510
      %v5512 = vpop.f32.mrb[0].mxu0
      %v5513 = vadd.f32 0.0, %v5512
      %v5514 = vpop.f32.mrb[0].mxu0
      %v5515 = vadd.f32 0.0, %v5514
      %5516 = vmatprep.mubr.bf16.mxu0 %v5123
      %5517 = vmatmul.mubr.bf16.gmra.mrb[0].mxu0 %v5122
      %v5518 = vpop.f32.mrb[0].mxu0
      %v5519 = vadd.f32 0.0, %v5518
      %v5520 = vpop.f32.mrb[0].mxu0
      %v5521 = vadd.f32 0.0, %v5520
      %v5522 = vpop.f32.mrb[0].mxu0
      %v5523 = vadd.f32 0.0, %v5522
      %v5524 = vpop.f32.mrb[0].mxu0
      %v5525 = vadd.f32 0.0, %v5524
      %5526 = vmatprep.mubr.bf16.mxu0 %v5125
      %5527 = vmatmul.mubr.bf16.gmra.mrb[0].mxu0 %v5124
      %v5528 = vpop.f32.mrb[0].mxu0
      %v5529 = vadd.f32 0.0, %v5528
      %v5530 = vpop.f32.mrb[0].mxu0
      %v5531 = vadd.f32 0.0, %v5530
      %v5532 = vpop.f32.mrb[0].mxu0
      %v5533 = vadd.f32 0.0, %v5532
      %v5534 = vpop.f32.mrb[0].mxu0
      %v5535 = vadd.f32 0.0, %v5534
      %5536 = vmatprep.mubr.bf16.mxu0 %v5127
      %5537 = vmatmul.mubr.bf16.gmra.mrb[0].mxu0 %v5126
      %v5538 = vpop.f32.mrb[0].mxu0
      %v5539 = vadd.f32 0.0, %v5538
      %v5540 = vpop.f32.mrb[0].mxu0
      %v5541 = vadd.f32 0.0, %v5540
      %v5542 = vpop.f32.mrb[0].mxu0
      %v5543 = vadd.f32 0.0, %v5542
      %v5544 = vpop.f32.mrb[0].mxu0
      %v5545 = vadd.f32 0.0, %v5544
      %5546 = vmatprep.mubr.bf16.mxu0 %v5129
      %5547 = vmatmul.mubr.bf16.gmra.mrb[0].mxu0 %v5128
      %v5548 = vpop.f32.mrb[0].mxu0
      %v5549 = vadd.f32 0.0, %v5548
      %v5550 = vpop.f32.mrb[0].mxu0
      %v5551 = vadd.f32 0.0, %v5550
      %v5552 = vpop.f32.mrb[0].mxu0
      %v5553 = vadd.f32 0.0, %v5552
      %v5554 = vpop.f32.mrb[0].mxu0
      %v5555 = vadd.f32 0.0, %v5554
      %5556 = vmatprep.mubr.bf16.mxu0 %v5131
      %5557 = vmatmul.mubr.bf16.gmra.mrb[0].mxu0 %v5130
      %v5558 = vpop.f32.mrb[0].mxu0
      %v5559 = vadd.f32 0.0, %v5558
      %v5560 = vpop.f32.mrb[0].mxu0
      %v5561 = vadd.f32 0.0, %v5560
      %v5562 = vpop.f32.mrb[0].mxu0
      %v5563 = vadd.f32 0.0, %v5562
      %v5564 = vpop.f32.mrb[0].mxu0
      %v5565 = vadd.f32 0.0, %v5564
      %5566 = vmatprep.mubr.bf16.mxu0 %v5133
      %5567 = vmatmul.mubr.bf16.gmra.mrb[0].mxu0 %v5132
      %v5568 = vpop.f32.mrb[0].mxu0
      %v5569 = vadd.f32 0.0, %v5568
      %v5570 = vpop.f32.mrb[0].mxu0
      %v5571 = vadd.f32 0.0, %v5570
      %v5572 = vpop.f32.mrb[0].mxu0
      %v5573 = vadd.f32 0.0, %v5572
      %v5574 = vpop.f32.mrb[0].mxu0
      %v5575 = vadd.f32 0.0, %v5574
      %5576 = vmatprep.mubr.bf16.mxu0 %v5135
      %5577 = vmatmul.mubr.bf16.gmra.mrb[0].mxu0 %v5134
      %v5578 = vpop.f32.mrb[0].mxu0
      %v5579 = vadd.f32 0.0, %v5578
      %v5580 = vpop.f32.mrb[0].mxu0
      %v5581 = vadd.f32 0.0, %v5580
      %v5582 = vpop.f32.mrb[0].mxu0
      %v5583 = vadd.f32 0.0, %v5582
      %v5584 = vpop.f32.mrb[0].mxu0
      %v5585 = vadd.f32 0.0, %v5584
      %5586 = vdwg.mxu0
      %v5619 = vunpack.c.l.b16 %v5169
      %v5620 = vunpack.c.h.b16 %v5169
      %v5621 = vunpack.c.l.b16 %v5170
      %v5622 = vunpack.c.h.b16 %v5170
      %v5623 = vunpack.c.l.b16 %v5171
      %v5624 = vunpack.c.h.b16 %v5171
      %v5625 = vunpack.c.l.b16 %v5172
      %v5626 = vunpack.c.h.b16 %v5172
      %v5627 = vunpack.c.l.b16 %v5173
      %v5628 = vunpack.c.h.b16 %v5173
      %v5629 = vunpack.c.l.b16 %v5174
      %v5630 = vunpack.c.h.b16 %v5174
      %v5631 = vunpack.c.l.b16 %v5175
      %v5632 = vunpack.c.h.b16 %v5175
      %v5633 = vunpack.c.l.b16 %v5176
      %v5634 = vunpack.c.h.b16 %v5176
      %v5635 = vunpack.c.l.b16 %v5177
      %v5636 = vunpack.c.h.b16 %v5177
      %v5637 = vunpack.c.l.b16 %v5178
      %v5638 = vunpack.c.h.b16 %v5178
      %v5639 = vunpack.c.l.b16 %v5179
      %v5640 = vunpack.c.h.b16 %v5179
      %v5641 = vunpack.c.l.b16 %v5180
      %v5642 = vunpack.c.h.b16 %v5180
      %v5643 = vunpack.c.l.b16 %v5181
      %v5644 = vunpack.c.h.b16 %v5181
      %v5645 = vunpack.c.l.b16 %v5182
      %v5646 = vunpack.c.h.b16 %v5182
      %v5647 = vunpack.c.l.b16 %v5183
      %v5648 = vunpack.c.h.b16 %v5183
      %v5649 = vunpack.c.l.b16 %v5184
      %v5650 = vunpack.c.h.b16 %v5184
      %v5651 = vunpack.c.l.b16 %v5185
      %v5652 = vunpack.c.h.b16 %v5185
      %v5653 = vunpack.c.l.b16 %v5186
      %v5654 = vunpack.c.h.b16 %v5186
      %v5655 = vunpack.c.l.b16 %v5187
      %v5656 = vunpack.c.h.b16 %v5187
      %v5657 = vunpack.c.l.b16 %v5188
      %v5658 = vunpack.c.h.b16 %v5188
      %v5659 = vunpack.c.l.b16 %v5189
      %v5660 = vunpack.c.h.b16 %v5189
      %v5661 = vunpack.c.l.b16 %v5190
      %v5662 = vunpack.c.h.b16 %v5190
      %v5663 = vunpack.c.l.b16 %v5191
      %v5664 = vunpack.c.h.b16 %v5191
      %v5665 = vunpack.c.l.b16 %v5192
      %v5666 = vunpack.c.h.b16 %v5192
      %v5667 = vunpack.c.l.b16 %v5193
      %v5668 = vunpack.c.h.b16 %v5193
      %v5669 = vunpack.c.l.b16 %v5194
      %v5670 = vunpack.c.h.b16 %v5194
      %v5671 = vunpack.c.l.b16 %v5195
      %v5672 = vunpack.c.h.b16 %v5195
      %v5673 = vunpack.c.l.b16 %v5196
      %v5674 = vunpack.c.h.b16 %v5196
      %v5675 = vunpack.c.l.b16 %v5197
      %v5676 = vunpack.c.h.b16 %v5197
      %v5677 = vunpack.c.l.b16 %v5198
      %v5678 = vunpack.c.h.b16 %v5198
      %v5679 = vunpack.c.l.b16 %v5199
      %v5680 = vunpack.c.h.b16 %v5199
      %v5681 = vunpack.c.l.b16 %v5200
      %v5682 = vunpack.c.h.b16 %v5200
      %v5683 = vpack.c.b16 %v5621, %v5619
      %v5684 = vpack.c.b16 %v5622, %v5620
      %v5685 = vpack.c.b16 %v5625, %v5623
      %v5686 = vpack.c.b16 %v5626, %v5624
      %v5687 = vpack.c.b16 %v5629, %v5627
      %v5688 = vpack.c.b16 %v5630, %v5628
      %v5689 = vpack.c.b16 %v5633, %v5631
      %v5690 = vpack.c.b16 %v5634, %v5632
      %v5691 = vpack.c.b16 %v5637, %v5635
      %v5692 = vpack.c.b16 %v5638, %v5636
      %v5693 = vpack.c.b16 %v5641, %v5639
      %v5694 = vpack.c.b16 %v5642, %v5640
      %v5695 = vpack.c.b16 %v5645, %v5643
      %v5696 = vpack.c.b16 %v5646, %v5644
      %v5697 = vpack.c.b16 %v5649, %v5647
      %v5698 = vpack.c.b16 %v5650, %v5648
      %v5699 = vpack.c.b16 %v5653, %v5651
      %v5700 = vpack.c.b16 %v5654, %v5652
      %v5701 = vpack.c.b16 %v5657, %v5655
      %v5702 = vpack.c.b16 %v5658, %v5656
      %v5703 = vpack.c.b16 %v5661, %v5659
      %v5704 = vpack.c.b16 %v5662, %v5660
      %v5705 = vpack.c.b16 %v5665, %v5663
      %v5706 = vpack.c.b16 %v5666, %v5664
      %v5707 = vpack.c.b16 %v5669, %v5667
      %v5708 = vpack.c.b16 %v5670, %v5668
      %v5709 = vpack.c.b16 %v5673, %v5671
      %v5710 = vpack.c.b16 %v5674, %v5672
      %v5711 = vpack.c.b16 %v5677, %v5675
      %v5712 = vpack.c.b16 %v5678, %v5676
      %v5713 = vpack.c.b16 %v5681, %v5679
      %v5714 = vpack.c.b16 %v5682, %v5680
      %5747 = vmatprep.subr.bf16.mxu0 %v5684
      %5748 = vmatpush1.bf16.msra.mxu0 %v5683
      %5749 = vmatprep.subr.bf16.mxu0 %v5686
      %5750 = vmatpush1.bf16.msra.mxu0 %v5685
      %5751 = vmatprep.subr.bf16.mxu0 %v5688
      %5752 = vmatpush1.bf16.msra.mxu0 %v5687
      %5753 = vmatprep.subr.bf16.mxu0 %v5690
      %5754 = vmatpush1.bf16.msra.mxu0 %v5689
      %5755 = vmatprep.subr.bf16.mxu0 %v5692
      %5756 = vmatpush1.bf16.msra.mxu0 %v5691
      %5757 = vmatprep.subr.bf16.mxu0 %v5694
      %5758 = vmatpush1.bf16.msra.mxu0 %v5693
      %5759 = vmatprep.subr.bf16.mxu0 %v5696
      %5760 = vmatpush1.bf16.msra.mxu0 %v5695
      %5761 = vmatprep.subr.bf16.mxu0 %v5698
      %5762 = vmatpush1.bf16.msra.mxu0 %v5697
      %5763 = vmatprep.subr.bf16.mxu0 %v5700
      %5764 = vmatpush1.bf16.msra.mxu0 %v5699
      %5765 = vmatprep.subr.bf16.mxu0 %v5702
      %5766 = vmatpush1.bf16.msra.mxu0 %v5701
      %5767 = vmatprep.subr.bf16.mxu0 %v5704
      %5768 = vmatpush1.bf16.msra.mxu0 %v5703
      %5769 = vmatprep.subr.bf16.mxu0 %v5706
      %5770 = vmatpush1.bf16.msra.mxu0 %v5705
      %5771 = vmatprep.subr.bf16.mxu0 %v5708
      %5772 = vmatpush1.bf16.msra.mxu0 %v5707
      %5773 = vmatprep.subr.bf16.mxu0 %v5710
      %5774 = vmatpush1.bf16.msra.mxu0 %v5709
      %5775 = vmatprep.subr.bf16.mxu0 %v5712
      %5776 = vmatpush1.bf16.msra.mxu0 %v5711
      %5777 = vmatprep.subr.bf16.mxu0 %v5714
      %5778 = vmatpush1.bf16.msra.mxu0 %v5713
      %5779 = vmatprep.mubr.bf16.mxu0 %v5073
      %5780 = vmatmul.mubr.bf16.gmra.mrb[0].mxu0 %v5072
      %v5781 = vpop.f32.mrb[0].mxu0
      %v5782 = vadd.f32 %v5429, %v5781
      %v5783 = vpop.f32.mrb[0].mxu0
      %v5784 = vadd.f32 %v5431, %v5783
      %v5785 = vpop.f32.mrb[0].mxu0
      %v5786 = vadd.f32 %v5433, %v5785
      %v5787 = vpop.f32.mrb[0].mxu0
      %v5788 = vadd.f32 %v5435, %v5787
      %5789 = vmatprep.mubr.bf16.mxu0 %v5075
      %5790 = vmatmul.mubr.bf16.gmra.mrb[0].mxu0 %v5074
      %v5791 = vpop.f32.mrb[0].mxu0
      %v5792 = vadd.f32 %v5439, %v5791
      %v5793 = vpop.f32.mrb[0].mxu0
      %v5794 = vadd.f32 %v5441, %v5793
      %v5795 = vpop.f32.mrb[0].mxu0
      %v5796 = vadd.f32 %v5443, %v5795
      %v5797 = vpop.f32.mrb[0].mxu0
      %v5798 = vadd.f32 %v5445, %v5797
      %5799 = vmatprep.mubr.bf16.mxu0 %v5077
      %5800 = vmatmul.mubr.bf16.gmra.mrb[0].mxu0 %v5076
      %v5801 = vpop.f32.mrb[0].mxu0
      %v5802 = vadd.f32 %v5449, %v5801
      %v5803 = vpop.f32.mrb[0].mxu0
      %v5804 = vadd.f32 %v5451, %v5803
      %v5805 = vpop.f32.mrb[0].mxu0
      %v5806 = vadd.f32 %v5453, %v5805
      %v5807 = vpop.f32.mrb[0].mxu0
      %v5808 = vadd.f32 %v5455, %v5807
      %5809 = vmatprep.mubr.bf16.mxu0 %v5079
      %5810 = vmatmul.mubr.bf16.gmra.mrb[0].mxu0 %v5078
      %v5811 = vpop.f32.mrb[0].mxu0
      %v5812 = vadd.f32 %v5459, %v5811
      %v5813 = vpop.f32.mrb[0].mxu0
      %v5814 = vadd.f32 %v5461, %v5813
      %v5815 = vpop.f32.mrb[0].mxu0
      %v5816 = vadd.f32 %v5463, %v5815
      %v5817 = vpop.f32.mrb[0].mxu0
      %v5818 = vadd.f32 %v5465, %v5817
      %5819 = vmatprep.mubr.bf16.mxu0 %v5081
      %5820 = vmatmul.mubr.bf16.gmra.mrb[0].mxu0 %v5080
      %v5821 = vpop.f32.mrb[0].mxu0
      %v5822 = vadd.f32 %v5469, %v5821
      %v5823 = vpop.f32.mrb[0].mxu0
      %v5824 = vadd.f32 %v5471, %v5823
      %v5825 = vpop.f32.mrb[0].mxu0
      %v5826 = vadd.f32 %v5473, %v5825
      %v5827 = vpop.f32.mrb[0].mxu0
      %v5828 = vadd.f32 %v5475, %v5827
      %5829 = vmatprep.mubr.bf16.mxu0 %v5083
      %5830 = vmatmul.mubr.bf16.gmra.mrb[0].mxu0 %v5082
      %v5831 = vpop.f32.mrb[0].mxu0
      %v5832 = vadd.f32 %v5479, %v5831
      %v5833 = vpop.f32.mrb[0].mxu0
      %v5834 = vadd.f32 %v5481, %v5833
      %v5835 = vpop.f32.mrb[0].mxu0
      %v5836 = vadd.f32 %v5483, %v5835
      %v5837 = vpop.f32.mrb[0].mxu0
      %v5838 = vadd.f32 %v5485, %v5837
      %5839 = vmatprep.mubr.bf16.mxu0 %v5085
      %5840 = vmatmul.mubr.bf16.gmra.mrb[0].mxu0 %v5084
      %v5841 = vpop.f32.mrb[0].mxu0
      %v5842 = vadd.f32 %v5489, %v5841
      %v5843 = vpop.f32.mrb[0].mxu0
      %v5844 = vadd.f32 %v5491, %v5843
      %v5845 = vpop.f32.mrb[0].mxu0
      %v5846 = vadd.f32 %v5493, %v5845
      %v5847 = vpop.f32.mrb[0].mxu0
      %v5848 = vadd.f32 %v5495, %v5847
      %5849 = vmatprep.mubr.bf16.mxu0 %v5087
      %5850 = vmatmul.mubr.bf16.gmra.mrb[0].mxu0 %v5086
      %v5851 = vpop.f32.mrb[0].mxu0
      %v5852 = vadd.f32 %v5499, %v5851
      %v5853 = vpop.f32.mrb[0].mxu0
      %v5854 = vadd.f32 %v5501, %v5853
      %v5855 = vpop.f32.mrb[0].mxu0
      %v5856 = vadd.f32 %v5503, %v5855
      %v5857 = vpop.f32.mrb[0].mxu0
      %v5858 = vadd.f32 %v5505, %v5857
      %5859 = vmatprep.mubr.bf16.mxu0 %v5089
      %5860 = vmatmul.mubr.bf16.gmra.mrb[0].mxu0 %v5088
      %v5861 = vpop.f32.mrb[0].mxu0
      %v5862 = vadd.f32 %v5509, %v5861
      %v5863 = vpop.f32.mrb[0].mxu0
      %v5864 = vadd.f32 %v5511, %v5863
      %v5865 = vpop.f32.mrb[0].mxu0
      %v5866 = vadd.f32 %v5513, %v5865
      %v5867 = vpop.f32.mrb[0].mxu0
      %v5868 = vadd.f32 %v5515, %v5867
      %5869 = vmatprep.mubr.bf16.mxu0 %v5091
      %5870 = vmatmul.mubr.bf16.gmra.mrb[0].mxu0 %v5090
      %v5871 = vpop.f32.mrb[0].mxu0
      %v5872 = vadd.f32 %v5519, %v5871
      %v5873 = vpop.f32.mrb[0].mxu0
      %v5874 = vadd.f32 %v5521, %v5873
      %v5875 = vpop.f32.mrb[0].mxu0
      %v5876 = vadd.f32 %v5523, %v5875
      %v5877 = vpop.f32.mrb[0].mxu0
      %v5878 = vadd.f32 %v5525, %v5877
      %5879 = vmatprep.mubr.bf16.mxu0 %v5093
      %5880 = vmatmul.mubr.bf16.gmra.mrb[0].mxu0 %v5092
      %v5881 = vpop.f32.mrb[0].mxu0
      %v5882 = vadd.f32 %v5529, %v5881
      %v5883 = vpop.f32.mrb[0].mxu0
      %v5884 = vadd.f32 %v5531, %v5883
      %v5885 = vpop.f32.mrb[0].mxu0
      %v5886 = vadd.f32 %v5533, %v5885
      %v5887 = vpop.f32.mrb[0].mxu0
      %v5888 = vadd.f32 %v5535, %v5887
      %5889 = vmatprep.mubr.bf16.mxu0 %v5095
      %5890 = vmatmul.mubr.bf16.gmra.mrb[0].mxu0 %v5094
      %v5891 = vpop.f32.mrb[0].mxu0
      %v5892 = vadd.f32 %v5539, %v5891
      %v5893 = vpop.f32.mrb[0].mxu0
      %v5894 = vadd.f32 %v5541, %v5893
      %v5895 = vpop.f32.mrb[0].mxu0
      %v5896 = vadd.f32 %v5543, %v5895
      %v5897 = vpop.f32.mrb[0].mxu0
      %v5898 = vadd.f32 %v5545, %v5897
      %5899 = vmatprep.mubr.bf16.mxu0 %v5097
      %5900 = vmatmul.mubr.bf16.gmra.mrb[0].mxu0 %v5096
      %v5901 = vpop.f32.mrb[0].mxu0
      %v5902 = vadd.f32 %v5549, %v5901
      %v5903 = vpop.f32.mrb[0].mxu0
      %v5904 = vadd.f32 %v5551, %v5903
      %v5905 = vpop.f32.mrb[0].mxu0
      %v5906 = vadd.f32 %v5553, %v5905
      %v5907 = vpop.f32.mrb[0].mxu0
      %v5908 = vadd.f32 %v5555, %v5907
      %5909 = vmatprep.mubr.bf16.mxu0 %v5099
      %5910 = vmatmul.mubr.bf16.gmra.mrb[0].mxu0 %v5098
      %v5911 = vpop.f32.mrb[0].mxu0
      %v5912 = vadd.f32 %v5559, %v5911
      %v5913 = vpop.f32.mrb[0].mxu0
      %v5914 = vadd.f32 %v5561, %v5913
      %v5915 = vpop.f32.mrb[0].mxu0
      %v5916 = vadd.f32 %v5563, %v5915
      %v5917 = vpop.f32.mrb[0].mxu0
      %v5918 = vadd.f32 %v5565, %v5917
      %5919 = vmatprep.mubr.bf16.mxu0 %v5101
      %5920 = vmatmul.mubr.bf16.gmra.mrb[0].mxu0 %v5100
      %v5921 = vpop.f32.mrb[0].mxu0
      %v5922 = vadd.f32 %v5569, %v5921
      %v5923 = vpop.f32.mrb[0].mxu0
      %v5924 = vadd.f32 %v5571, %v5923
      %v5925 = vpop.f32.mrb[0].mxu0
      %v5926 = vadd.f32 %v5573, %v5925
      %v5927 = vpop.f32.mrb[0].mxu0
      %v5928 = vadd.f32 %v5575, %v5927
      %5929 = vmatprep.mubr.bf16.mxu0 %v5103
      %5930 = vmatmul.mubr.bf16.gmra.mrb[0].mxu0 %v5102
      %v5931 = vpop.f32.mrb[0].mxu0
      %v5932 = vadd.f32 %v5579, %v5931
      %v5933 = vpop.f32.mrb[0].mxu0
      %v5934 = vadd.f32 %v5581, %v5933
      %v5935 = vpop.f32.mrb[0].mxu0
      %v5936 = vadd.f32 %v5583, %v5935
      %v5937 = vpop.f32.mrb[0].mxu0
      %v5938 = vadd.f32 %v5585, %v5937
      %5939 = vdwg.mxu0
      %s5940 = scalar_lea.vmem %s3, 1536
      %v5941 = vld [vmem:[%s5940] sm:$0xff]
      %v5942 = vld [vmem:[%s5940 + $0x8] sm:$0xff]
      %v5943 = vld [vmem:[%s5940 + $0x10] sm:$0xff]
      %v5944 = vld [vmem:[%s5940 + $0x18] sm:$0xff]
      %v5945 = vld [vmem:[%s5940 + $0x20] sm:$0xff]
      %v5946 = vld [vmem:[%s5940 + $0x28] sm:$0xff]
      %v5947 = vld [vmem:[%s5940 + $0x30] sm:$0xff]
      %v5948 = vld [vmem:[%s5940 + $0x38] sm:$0xff]
      %v5949 = vld [vmem:[%s5940 + $0x40] sm:$0xff]
      %v5950 = vld [vmem:[%s5940 + $0x48] sm:$0xff]
      %v5951 = vld [vmem:[%s5940 + $0x50] sm:$0xff]
      %v5952 = vld [vmem:[%s5940 + $0x58] sm:$0xff]
      %v5953 = vld [vmem:[%s5940 + $0x60] sm:$0xff]
      %v5954 = vld [vmem:[%s5940 + $0x68] sm:$0xff]
      %v5955 = vld [vmem:[%s5940 + $0x70] sm:$0xff]
      %v5956 = vld [vmem:[%s5940 + $0x78] sm:$0xff]
      %v5957 = vld [vmem:[%s5940 + $0x80] sm:$0xff]
      %v5958 = vld [vmem:[%s5940 + $0x88] sm:$0xff]
      %v5959 = vld [vmem:[%s5940 + $0x90] sm:$0xff]
      %v5960 = vld [vmem:[%s5940 + $0x98] sm:$0xff]
      %v5961 = vld [vmem:[%s5940 + $0xa0] sm:$0xff]
      %v5962 = vld [vmem:[%s5940 + $0xa8] sm:$0xff]
      %v5963 = vld [vmem:[%s5940 + $0xb0] sm:$0xff]
      %v5964 = vld [vmem:[%s5940 + $0xb8] sm:$0xff]
      %v5965 = vld [vmem:[%s5940 + $0xc0] sm:$0xff]
      %v5966 = vld [vmem:[%s5940 + $0xc8] sm:$0xff]
      %v5967 = vld [vmem:[%s5940 + $0xd0] sm:$0xff]
      %v5968 = vld [vmem:[%s5940 + $0xd8] sm:$0xff]
      %v5969 = vld [vmem:[%s5940 + $0xe0] sm:$0xff]
      %v5970 = vld [vmem:[%s5940 + $0xe8] sm:$0xff]
      %v5971 = vld [vmem:[%s5940 + $0xf0] sm:$0xff]
      %v5972 = vld [vmem:[%s5940 + $0xf8] sm:$0xff]
      %v6005 = vunpack.c.l.b16 %v5941
      %v6006 = vunpack.c.h.b16 %v5941
      %v6007 = vunpack.c.l.b16 %v5942
      %v6008 = vunpack.c.h.b16 %v5942
      %v6009 = vunpack.c.l.b16 %v5943
      %v6010 = vunpack.c.h.b16 %v5943
      %v6011 = vunpack.c.l.b16 %v5944
      %v6012 = vunpack.c.h.b16 %v5944
      %v6013 = vunpack.c.l.b16 %v5945
      %v6014 = vunpack.c.h.b16 %v5945
      %v6015 = vunpack.c.l.b16 %v5946
      %v6016 = vunpack.c.h.b16 %v5946
      %v6017 = vunpack.c.l.b16 %v5947
      %v6018 = vunpack.c.h.b16 %v5947
      %v6019 = vunpack.c.l.b16 %v5948
      %v6020 = vunpack.c.h.b16 %v5948
      %v6021 = vunpack.c.l.b16 %v5949
      %v6022 = vunpack.c.h.b16 %v5949
      %v6023 = vunpack.c.l.b16 %v5950
      %v6024 = vunpack.c.h.b16 %v5950
      %v6025 = vunpack.c.l.b16 %v5951
      %v6026 = vunpack.c.h.b16 %v5951
      %v6027 = vunpack.c.l.b16 %v5952
      %v6028 = vunpack.c.h.b16 %v5952
      %v6029 = vunpack.c.l.b16 %v5953
      %v6030 = vunpack.c.h.b16 %v5953
      %v6031 = vunpack.c.l.b16 %v5954
      %v6032 = vunpack.c.h.b16 %v5954
      %v6033 = vunpack.c.l.b16 %v5955
      %v6034 = vunpack.c.h.b16 %v5955
      %v6035 = vunpack.c.l.b16 %v5956
      %v6036 = vunpack.c.h.b16 %v5956
      %v6037 = vunpack.c.l.b16 %v5957
      %v6038 = vunpack.c.h.b16 %v5957
      %v6039 = vunpack.c.l.b16 %v5958
      %v6040 = vunpack.c.h.b16 %v5958
      %v6041 = vunpack.c.l.b16 %v5959
      %v6042 = vunpack.c.h.b16 %v5959
      %v6043 = vunpack.c.l.b16 %v5960
      %v6044 = vunpack.c.h.b16 %v5960
      %v6045 = vunpack.c.l.b16 %v5961
      %v6046 = vunpack.c.h.b16 %v5961
      %v6047 = vunpack.c.l.b16 %v5962
      %v6048 = vunpack.c.h.b16 %v5962
      %v6049 = vunpack.c.l.b16 %v5963
      %v6050 = vunpack.c.h.b16 %v5963
      %v6051 = vunpack.c.l.b16 %v5964
      %v6052 = vunpack.c.h.b16 %v5964
      %v6053 = vunpack.c.l.b16 %v5965
      %v6054 = vunpack.c.h.b16 %v5965
      %v6055 = vunpack.c.l.b16 %v5966
      %v6056 = vunpack.c.h.b16 %v5966
      %v6057 = vunpack.c.l.b16 %v5967
      %v6058 = vunpack.c.h.b16 %v5967
      %v6059 = vunpack.c.l.b16 %v5968
      %v6060 = vunpack.c.h.b16 %v5968
      %v6061 = vunpack.c.l.b16 %v5969
      %v6062 = vunpack.c.h.b16 %v5969
      %v6063 = vunpack.c.l.b16 %v5970
      %v6064 = vunpack.c.h.b16 %v5970
      %v6065 = vunpack.c.l.b16 %v5971
      %v6066 = vunpack.c.h.b16 %v5971
      %v6067 = vunpack.c.l.b16 %v5972
      %v6068 = vunpack.c.h.b16 %v5972
      %v6069 = vpack.c.b16 %v6007, %v6005
      %v6070 = vpack.c.b16 %v6008, %v6006
      %v6071 = vpack.c.b16 %v6011, %v6009
      %v6072 = vpack.c.b16 %v6012, %v6010
      %v6073 = vpack.c.b16 %v6015, %v6013
      %v6074 = vpack.c.b16 %v6016, %v6014
      %v6075 = vpack.c.b16 %v6019, %v6017
      %v6076 = vpack.c.b16 %v6020, %v6018
      %v6077 = vpack.c.b16 %v6023, %v6021
      %v6078 = vpack.c.b16 %v6024, %v6022
      %v6079 = vpack.c.b16 %v6027, %v6025
      %v6080 = vpack.c.b16 %v6028, %v6026
      %v6081 = vpack.c.b16 %v6031, %v6029
      %v6082 = vpack.c.b16 %v6032, %v6030
      %v6083 = vpack.c.b16 %v6035, %v6033
      %v6084 = vpack.c.b16 %v6036, %v6034
      %v6085 = vpack.c.b16 %v6039, %v6037
      %v6086 = vpack.c.b16 %v6040, %v6038
      %v6087 = vpack.c.b16 %v6043, %v6041
      %v6088 = vpack.c.b16 %v6044, %v6042
      %v6089 = vpack.c.b16 %v6047, %v6045
      %v6090 = vpack.c.b16 %v6048, %v6046
      %v6091 = vpack.c.b16 %v6051, %v6049
      %v6092 = vpack.c.b16 %v6052, %v6050
      %v6093 = vpack.c.b16 %v6055, %v6053
      %v6094 = vpack.c.b16 %v6056, %v6054
      %v6095 = vpack.c.b16 %v6059, %v6057
      %v6096 = vpack.c.b16 %v6060, %v6058
      %v6097 = vpack.c.b16 %v6063, %v6061
      %v6098 = vpack.c.b16 %v6064, %v6062
      %v6099 = vpack.c.b16 %v6067, %v6065
      %v6100 = vpack.c.b16 %v6068, %v6066
      %6133 = vmatprep.subr.bf16.mxu0 %v6070
      %6134 = vmatpush1.bf16.msra.mxu0 %v6069
      %6135 = vmatprep.subr.bf16.mxu0 %v6072
      %6136 = vmatpush1.bf16.msra.mxu0 %v6071
      %6137 = vmatprep.subr.bf16.mxu0 %v6074
      %6138 = vmatpush1.bf16.msra.mxu0 %v6073
      %6139 = vmatprep.subr.bf16.mxu0 %v6076
      %6140 = vmatpush1.bf16.msra.mxu0 %v6075
      %6141 = vmatprep.subr.bf16.mxu0 %v6078
      %6142 = vmatpush1.bf16.msra.mxu0 %v6077
      %6143 = vmatprep.subr.bf16.mxu0 %v6080
      %6144 = vmatpush1.bf16.msra.mxu0 %v6079
      %6145 = vmatprep.subr.bf16.mxu0 %v6082
      %6146 = vmatpush1.bf16.msra.mxu0 %v6081
      %6147 = vmatprep.subr.bf16.mxu0 %v6084
      %6148 = vmatpush1.bf16.msra.mxu0 %v6083
      %6149 = vmatprep.subr.bf16.mxu0 %v6086
      %6150 = vmatpush1.bf16.msra.mxu0 %v6085
      %6151 = vmatprep.subr.bf16.mxu0 %v6088
      %6152 = vmatpush1.bf16.msra.mxu0 %v6087
      %6153 = vmatprep.subr.bf16.mxu0 %v6090
      %6154 = vmatpush1.bf16.msra.mxu0 %v6089
      %6155 = vmatprep.subr.bf16.mxu0 %v6092
      %6156 = vmatpush1.bf16.msra.mxu0 %v6091
      %6157 = vmatprep.subr.bf16.mxu0 %v6094
      %6158 = vmatpush1.bf16.msra.mxu0 %v6093
      %6159 = vmatprep.subr.bf16.mxu0 %v6096
      %6160 = vmatpush1.bf16.msra.mxu0 %v6095
      %6161 = vmatprep.subr.bf16.mxu0 %v6098
      %6162 = vmatpush1.bf16.msra.mxu0 %v6097
      %6163 = vmatprep.subr.bf16.mxu0 %v6100
      %6164 = vmatpush1.bf16.msra.mxu0 %v6099
      %6165 = vmatprep.mubr.bf16.mxu0 %v5138
      %6166 = vmatmul.mubr.bf16.gmra.mrb[0].mxu0 %v5137
      %v6167 = vpop.f32.mrb[0].mxu0
      %v6168 = vadd.f32 0.0, %v6167
      %v6169 = vpop.f32.mrb[0].mxu0
      %v6170 = vadd.f32 0.0, %v6169
      %v6171 = vpop.f32.mrb[0].mxu0
      %v6172 = vadd.f32 0.0, %v6171
      %v6173 = vpop.f32.mrb[0].mxu0
      %v6174 = vadd.f32 0.0, %v6173
      %6175 = vmatprep.mubr.bf16.mxu0 %v5140
      %6176 = vmatmul.mubr.bf16.gmra.mrb[0].mxu0 %v5139
      %v6177 = vpop.f32.mrb[0].mxu0
      %v6178 = vadd.f32 0.0, %v6177
      %v6179 = vpop.f32.mrb[0].mxu0
      %v6180 = vadd.f32 0.0, %v6179
      %v6181 = vpop.f32.mrb[0].mxu0
      %v6182 = vadd.f32 0.0, %v6181
      %v6183 = vpop.f32.mrb[0].mxu0
      %v6184 = vadd.f32 0.0, %v6183
      %6185 = vmatprep.mubr.bf16.mxu0 %v5142
      %6186 = vmatmul.mubr.bf16.gmra.mrb[0].mxu0 %v5141
      %v6187 = vpop.f32.mrb[0].mxu0
      %v6188 = vadd.f32 0.0, %v6187
      %v6189 = vpop.f32.mrb[0].mxu0
      %v6190 = vadd.f32 0.0, %v6189
      %v6191 = vpop.f32.mrb[0].mxu0
      %v6192 = vadd.f32 0.0, %v6191
      %v6193 = vpop.f32.mrb[0].mxu0
      %v6194 = vadd.f32 0.0, %v6193
      %6195 = vmatprep.mubr.bf16.mxu0 %v5144
      %6196 = vmatmul.mubr.bf16.gmra.mrb[0].mxu0 %v5143
      %v6197 = vpop.f32.mrb[0].mxu0
      %v6198 = vadd.f32 0.0, %v6197
      %v6199 = vpop.f32.mrb[0].mxu0
      %v6200 = vadd.f32 0.0, %v6199
      %v6201 = vpop.f32.mrb[0].mxu0
      %v6202 = vadd.f32 0.0, %v6201
      %v6203 = vpop.f32.mrb[0].mxu0
      %v6204 = vadd.f32 0.0, %v6203
      %6205 = vmatprep.mubr.bf16.mxu0 %v5146
      %6206 = vmatmul.mubr.bf16.gmra.mrb[0].mxu0 %v5145
      %v6207 = vpop.f32.mrb[0].mxu0
      %v6208 = vadd.f32 0.0, %v6207
      %v6209 = vpop.f32.mrb[0].mxu0
      %v6210 = vadd.f32 0.0, %v6209
      %v6211 = vpop.f32.mrb[0].mxu0
      %v6212 = vadd.f32 0.0, %v6211
      %v6213 = vpop.f32.mrb[0].mxu0
      %v6214 = vadd.f32 0.0, %v6213
      %6215 = vmatprep.mubr.bf16.mxu0 %v5148
      %6216 = vmatmul.mubr.bf16.gmra.mrb[0].mxu0 %v5147
      %v6217 = vpop.f32.mrb[0].mxu0
      %v6218 = vadd.f32 0.0, %v6217
      %v6219 = vpop.f32.mrb[0].mxu0
      %v6220 = vadd.f32 0.0, %v6219
      %v6221 = vpop.f32.mrb[0].mxu0
      %v6222 = vadd.f32 0.0, %v6221
      %v6223 = vpop.f32.mrb[0].mxu0
      %v6224 = vadd.f32 0.0, %v6223
      %6225 = vmatprep.mubr.bf16.mxu0 %v5150
      %6226 = vmatmul.mubr.bf16.gmra.mrb[0].mxu0 %v5149
      %v6227 = vpop.f32.mrb[0].mxu0
      %v6228 = vadd.f32 0.0, %v6227
      %v6229 = vpop.f32.mrb[0].mxu0
      %v6230 = vadd.f32 0.0, %v6229
      %v6231 = vpop.f32.mrb[0].mxu0
      %v6232 = vadd.f32 0.0, %v6231
      %v6233 = vpop.f32.mrb[0].mxu0
      %v6234 = vadd.f32 0.0, %v6233
      %6235 = vmatprep.mubr.bf16.mxu0 %v5152
      %6236 = vmatmul.mubr.bf16.gmra.mrb[0].mxu0 %v5151
      %v6237 = vpop.f32.mrb[0].mxu0
      %v6238 = vadd.f32 0.0, %v6237
      %v6239 = vpop.f32.mrb[0].mxu0
      %v6240 = vadd.f32 0.0, %v6239
      %v6241 = vpop.f32.mrb[0].mxu0
      %v6242 = vadd.f32 0.0, %v6241
      %v6243 = vpop.f32.mrb[0].mxu0
      %v6244 = vadd.f32 0.0, %v6243
      %6245 = vmatprep.mubr.bf16.mxu0 %v5154
      %6246 = vmatmul.mubr.bf16.gmra.mrb[0].mxu0 %v5153
      %v6247 = vpop.f32.mrb[0].mxu0
      %v6248 = vadd.f32 0.0, %v6247
      %v6249 = vpop.f32.mrb[0].mxu0
      %v6250 = vadd.f32 0.0, %v6249
      %v6251 = vpop.f32.mrb[0].mxu0
      %v6252 = vadd.f32 0.0, %v6251
      %v6253 = vpop.f32.mrb[0].mxu0
      %v6254 = vadd.f32 0.0, %v6253
      %6255 = vmatprep.mubr.bf16.mxu0 %v5156
      %6256 = vmatmul.mubr.bf16.gmra.mrb[0].mxu0 %v5155
      %v6257 = vpop.f32.mrb[0].mxu0
      %v6258 = vadd.f32 0.0, %v6257
      %v6259 = vpop.f32.mrb[0].mxu0
      %v6260 = vadd.f32 0.0, %v6259
      %v6261 = vpop.f32.mrb[0].mxu0
      %v6262 = vadd.f32 0.0, %v6261
      %v6263 = vpop.f32.mrb[0].mxu0
      %v6264 = vadd.f32 0.0, %v6263
      %6265 = vmatprep.mubr.bf16.mxu0 %v5158
      %6266 = vmatmul.mubr.bf16.gmra.mrb[0].mxu0 %v5157
      %v6267 = vpop.f32.mrb[0].mxu0
      %v6268 = vadd.f32 0.0, %v6267
      %v6269 = vpop.f32.mrb[0].mxu0
      %v6270 = vadd.f32 0.0, %v6269
      %v6271 = vpop.f32.mrb[0].mxu0
      %v6272 = vadd.f32 0.0, %v6271
      %v6273 = vpop.f32.mrb[0].mxu0
      %v6274 = vadd.f32 0.0, %v6273
      %6275 = vmatprep.mubr.bf16.mxu0 %v5160
      %6276 = vmatmul.mubr.bf16.gmra.mrb[0].mxu0 %v5159
      %v6277 = vpop.f32.mrb[0].mxu0
      %v6278 = vadd.f32 0.0, %v6277
      %v6279 = vpop.f32.mrb[0].mxu0
      %v6280 = vadd.f32 0.0, %v6279
      %v6281 = vpop.f32.mrb[0].mxu0
      %v6282 = vadd.f32 0.0, %v6281
      %v6283 = vpop.f32.mrb[0].mxu0
      %v6284 = vadd.f32 0.0, %v6283
      %6285 = vmatprep.mubr.bf16.mxu0 %v5162
      %6286 = vmatmul.mubr.bf16.gmra.mrb[0].mxu0 %v5161
      %v6287 = vpop.f32.mrb[0].mxu0
      %v6288 = vadd.f32 0.0, %v6287
      %v6289 = vpop.f32.mrb[0].mxu0
      %v6290 = vadd.f32 0.0, %v6289
      %v6291 = vpop.f32.mrb[0].mxu0
      %v6292 = vadd.f32 0.0, %v6291
      %v6293 = vpop.f32.mrb[0].mxu0
      %v6294 = vadd.f32 0.0, %v6293
      %6295 = vmatprep.mubr.bf16.mxu0 %v5164
      %6296 = vmatmul.mubr.bf16.gmra.mrb[0].mxu0 %v5163
      %v6297 = vpop.f32.mrb[0].mxu0
      %v6298 = vadd.f32 0.0, %v6297
      %v6299 = vpop.f32.mrb[0].mxu0
      %v6300 = vadd.f32 0.0, %v6299
      %v6301 = vpop.f32.mrb[0].mxu0
      %v6302 = vadd.f32 0.0, %v6301
      %v6303 = vpop.f32.mrb[0].mxu0
      %v6304 = vadd.f32 0.0, %v6303
      %6305 = vmatprep.mubr.bf16.mxu0 %v5166
      %6306 = vmatmul.mubr.bf16.gmra.mrb[0].mxu0 %v5165
      %v6307 = vpop.f32.mrb[0].mxu0
      %v6308 = vadd.f32 0.0, %v6307
      %v6309 = vpop.f32.mrb[0].mxu0
      %v6310 = vadd.f32 0.0, %v6309
      %v6311 = vpop.f32.mrb[0].mxu0
      %v6312 = vadd.f32 0.0, %v6311
      %v6313 = vpop.f32.mrb[0].mxu0
      %v6314 = vadd.f32 0.0, %v6313
      %6315 = vmatprep.mubr.bf16.mxu0 %v5168
      %6316 = vmatmul.mubr.bf16.gmra.mrb[0].mxu0 %v5167
      %v6317 = vpop.f32.mrb[0].mxu0
      %v6318 = vadd.f32 0.0, %v6317
      %v6319 = vpop.f32.mrb[0].mxu0
      %v6320 = vadd.f32 0.0, %v6319
      %v6321 = vpop.f32.mrb[0].mxu0
      %v6322 = vadd.f32 0.0, %v6321
      %v6323 = vpop.f32.mrb[0].mxu0
      %v6324 = vadd.f32 0.0, %v6323
      %6325 = vdwg.mxu0
      %v6326 = vadd.f32 %v5782, %v6168
      %v6327 = vadd.f32 %v5784, %v6170
      %v6328 = vadd.f32 %v5786, %v6172
      %v6329 = vadd.f32 %v5788, %v6174
      %v6330 = vadd.f32 %v5792, %v6178
      %v6331 = vadd.f32 %v5794, %v6180
      %v6332 = vadd.f32 %v5796, %v6182
      %v6333 = vadd.f32 %v5798, %v6184
      %v6334 = vadd.f32 %v5802, %v6188
      %v6335 = vadd.f32 %v5804, %v6190
      %v6336 = vadd.f32 %v5806, %v6192
      %v6337 = vadd.f32 %v5808, %v6194
      %v6338 = vadd.f32 %v5812, %v6198
      %v6339 = vadd.f32 %v5814, %v6200
      %v6340 = vadd.f32 %v5816, %v6202
      %v6341 = vadd.f32 %v5818, %v6204
      %v6342 = vadd.f32 %v5822, %v6208
      %v6343 = vadd.f32 %v5824, %v6210
      %v6344 = vadd.f32 %v5826, %v6212
      %v6345 = vadd.f32 %v5828, %v6214
      %v6346 = vadd.f32 %v5832, %v6218
      %v6347 = vadd.f32 %v5834, %v6220
      %v6348 = vadd.f32 %v5836, %v6222
      %v6349 = vadd.f32 %v5838, %v6224
      %v6350 = vadd.f32 %v5842, %v6228
      %v6351 = vadd.f32 %v5844, %v6230
      %v6352 = vadd.f32 %v5846, %v6232
      %v6353 = vadd.f32 %v5848, %v6234
      %v6354 = vadd.f32 %v5852, %v6238
      %v6355 = vadd.f32 %v5854, %v6240
      %v6356 = vadd.f32 %v5856, %v6242
      %v6357 = vadd.f32 %v5858, %v6244
      %v6358 = vadd.f32 %v5862, %v6248
      %v6359 = vadd.f32 %v5864, %v6250
      %v6360 = vadd.f32 %v5866, %v6252
      %v6361 = vadd.f32 %v5868, %v6254
      %v6362 = vadd.f32 %v5872, %v6258
      %v6363 = vadd.f32 %v5874, %v6260
      %v6364 = vadd.f32 %v5876, %v6262
      %v6365 = vadd.f32 %v5878, %v6264
      %v6366 = vadd.f32 %v5882, %v6268
      %v6367 = vadd.f32 %v5884, %v6270
      %v6368 = vadd.f32 %v5886, %v6272
      %v6369 = vadd.f32 %v5888, %v6274
      %v6370 = vadd.f32 %v5892, %v6278
      %v6371 = vadd.f32 %v5894, %v6280
      %v6372 = vadd.f32 %v5896, %v6282
      %v6373 = vadd.f32 %v5898, %v6284
      %v6374 = vadd.f32 %v5902, %v6288
      %v6375 = vadd.f32 %v5904, %v6290
      %v6376 = vadd.f32 %v5906, %v6292
      %v6377 = vadd.f32 %v5908, %v6294
      %v6378 = vadd.f32 %v5912, %v6298
      %v6379 = vadd.f32 %v5914, %v6300
      %v6380 = vadd.f32 %v5916, %v6302
      %v6381 = vadd.f32 %v5918, %v6304
      %v6382 = vadd.f32 %v5922, %v6308
      %v6383 = vadd.f32 %v5924, %v6310
      %v6384 = vadd.f32 %v5926, %v6312
      %v6385 = vadd.f32 %v5928, %v6314
      %v6386 = vadd.f32 %v5932, %v6318
      %v6387 = vadd.f32 %v5934, %v6320
      %v6388 = vadd.f32 %v5936, %v6322
      %v6389 = vadd.f32 %v5938, %v6324
      %6390 = vst [vmem:[#allocation4 + $0x10] sm:$0xff] %v6326
      %6391 = vst [vmem:[#allocation4 + $0x18] sm:$0xff] %v6327
      %6392 = vst [vmem:[#allocation4 + $0x20] sm:$0xff] %v6328
      %6393 = vst [vmem:[#allocation4 + $0x28] sm:$0xff] %v6329
      %6394 = vst [vmem:[#allocation4 + $0x50] sm:$0xff] %v6330
      %6395 = vst [vmem:[#allocation4 + $0x58] sm:$0xff] %v6331
      %6396 = vst [vmem:[#allocation4 + $0x60] sm:$0xff] %v6332
      %6397 = vst [vmem:[#allocation4 + $0x68] sm:$0xff] %v6333
      %6398 = vst [vmem:[#allocation4 + $0x90] sm:$0xff] %v6334
      %6399 = vst [vmem:[#allocation4 + $0x98] sm:$0xff] %v6335
      %6400 = vst [vmem:[#allocation4 + $0xa0] sm:$0xff] %v6336
      %6401 = vst [vmem:[#allocation4 + $0xa8] sm:$0xff] %v6337
      %6402 = vst [vmem:[#allocation4 + $0xd0] sm:$0xff] %v6338
      %6403 = vst [vmem:[#allocation4 + $0xd8] sm:$0xff] %v6339
      %6404 = vst [vmem:[#allocation4 + $0xe0] sm:$0xff] %v6340
      %6405 = vst [vmem:[#allocation4 + $0xe8] sm:$0xff] %v6341
      %6406 = vst [vmem:[#allocation4 + $0x110] sm:$0xff] %v6342
      %6407 = vst [vmem:[#allocation4 + $0x118] sm:$0xff] %v6343
      %6408 = vst [vmem:[#allocation4 + $0x120] sm:$0xff] %v6344
      %6409 = vst [vmem:[#allocation4 + $0x128] sm:$0xff] %v6345
      %6410 = vst [vmem:[#allocation4 + $0x150] sm:$0xff] %v6346
      %6411 = vst [vmem:[#allocation4 + $0x158] sm:$0xff] %v6347
      %6412 = vst [vmem:[#allocation4 + $0x160] sm:$0xff] %v6348
      %6413 = vst [vmem:[#allocation4 + $0x168] sm:$0xff] %v6349
      %6414 = vst [vmem:[#allocation4 + $0x190] sm:$0xff] %v6350
      %6415 = vst [vmem:[#allocation4 + $0x198] sm:$0xff] %v6351
      %6416 = vst [vmem:[#allocation4 + $0x1a0] sm:$0xff] %v6352
      %6417 = vst [vmem:[#allocation4 + $0x1a8] sm:$0xff] %v6353
      %6418 = vst [vmem:[#allocation4 + $0x1d0] sm:$0xff] %v6354
      %6419 = vst [vmem:[#allocation4 + $0x1d8] sm:$0xff] %v6355
      %6420 = vst [vmem:[#allocation4 + $0x1e0] sm:$0xff] %v6356
      %6421 = vst [vmem:[#allocation4 + $0x1e8] sm:$0xff] %v6357
      %6422 = vst [vmem:[#allocation4 + $0x210] sm:$0xff] %v6358
      %6423 = vst [vmem:[#allocation4 + $0x218] sm:$0xff] %v6359
      %6424 = vst [vmem:[#allocation4 + $0x220] sm:$0xff] %v6360
      %6425 = vst [vmem:[#allocation4 + $0x228] sm:$0xff] %v6361
      %6426 = vst [vmem:[#allocation4 + $0x250] sm:$0xff] %v6362
      %6427 = vst [vmem:[#allocation4 + $0x258] sm:$0xff] %v6363
      %6428 = vst [vmem:[#allocation4 + $0x260] sm:$0xff] %v6364
      %6429 = vst [vmem:[#allocation4 + $0x268] sm:$0xff] %v6365
      %6430 = vst [vmem:[#allocation4 + $0x290] sm:$0xff] %v6366
      %6431 = vst [vmem:[#allocation4 + $0x298] sm:$0xff] %v6367
      %6432 = vst [vmem:[#allocation4 + $0x2a0] sm:$0xff] %v6368
      %6433 = vst [vmem:[#allocation4 + $0x2a8] sm:$0xff] %v6369
      %6434 = vst [vmem:[#allocation4 + $0x2d0] sm:$0xff] %v6370
      %6435 = vst [vmem:[#allocation4 + $0x2d8] sm:$0xff] %v6371
      %6436 = vst [vmem:[#allocation4 + $0x2e0] sm:$0xff] %v6372
      %6437 = vst [vmem:[#allocation4 + $0x2e8] sm:$0xff] %v6373
      %6438 = vst [vmem:[#allocation4 + $0x310] sm:$0xff] %v6374
      %6439 = vst [vmem:[#allocation4 + $0x318] sm:$0xff] %v6375
      %6440 = vst [vmem:[#allocation4 + $0x320] sm:$0xff] %v6376
      %6441 = vst [vmem:[#allocation4 + $0x328] sm:$0xff] %v6377
      %6442 = vst [vmem:[#allocation4 + $0x350] sm:$0xff] %v6378
      %6443 = vst [vmem:[#allocation4 + $0x358] sm:$0xff] %v6379
      %6444 = vst [vmem:[#allocation4 + $0x360] sm:$0xff] %v6380
      %6445 = vst [vmem:[#allocation4 + $0x368] sm:$0xff] %v6381
      %6446 = vst [vmem:[#allocation4 + $0x390] sm:$0xff] %v6382
      %6447 = vst [vmem:[#allocation4 + $0x398] sm:$0xff] %v6383
      %6448 = vst [vmem:[#allocation4 + $0x3a0] sm:$0xff] %v6384
      %6449 = vst [vmem:[#allocation4 + $0x3a8] sm:$0xff] %v6385
      %6450 = vst [vmem:[#allocation4 + $0x3d0] sm:$0xff] %v6386
      %6451 = vst [vmem:[#allocation4 + $0x3d8] sm:$0xff] %v6387
      %6452 = vst [vmem:[#allocation4 + $0x3e0] sm:$0xff] %v6388
      %6453 = vst [vmem:[#allocation4 + $0x3e8] sm:$0xff] %v6389
      %v6454 = vld [vmem:[#allocation4] sm:$0x80]
      %v6455 = vld [vmem:[#allocation4 + $0x8] sm:$0x80]
      %v6456 = vld [vmem:[#allocation4 + $0x10] sm:$0xff]
      %v6457 = vld [vmem:[#allocation4 + $0x18] sm:$0xff]
      %v6458 = vld [vmem:[#allocation4 + $0x20] sm:$0x7f]
      %v6459 = vld [vmem:[#allocation4 + $0x28] sm:$0x7f]
      %v6460 = vld [vmem:[#allocation4 + $0x40] sm:$0x80]
      %v6461 = vld [vmem:[#allocation4 + $0x48] sm:$0x80]
      %v6462 = vld [vmem:[#allocation4 + $0x50] sm:$0xff]
      %v6463 = vld [vmem:[#allocation4 + $0x58] sm:$0xff]
      %v6464 = vld [vmem:[#allocation4 + $0x60] sm:$0x7f]
      %v6465 = vld [vmem:[#allocation4 + $0x68] sm:$0x7f]
      %v6466 = vld [vmem:[#allocation4 + $0x80] sm:$0x80]
      %v6467 = vld [vmem:[#allocation4 + $0x88] sm:$0x80]
      %v6468 = vld [vmem:[#allocation4 + $0x90] sm:$0xff]
      %v6469 = vld [vmem:[#allocation4 + $0x98] sm:$0xff]
      %v6470 = vld [vmem:[#allocation4 + $0xa0] sm:$0x7f]
      %v6471 = vld [vmem:[#allocation4 + $0xa8] sm:$0x7f]
      %v6472 = vld [vmem:[#allocation4 + $0xc0] sm:$0x80]
      %v6473 = vld [vmem:[#allocation4 + $0xc8] sm:$0x80]
      %v6474 = vld [vmem:[#allocation4 + $0xd0] sm:$0xff]
      %v6475 = vld [vmem:[#allocation4 + $0xd8] sm:$0xff]
      %v6476 = vld [vmem:[#allocation4 + $0xe0] sm:$0x7f]
      %v6477 = vld [vmem:[#allocation4 + $0xe8] sm:$0x7f]
      %v6478 = vld [vmem:[#allocation4 + $0x100] sm:$0x80]
      %v6479 = vld [vmem:[#allocation4 + $0x108] sm:$0x80]
      %v6480 = vld [vmem:[#allocation4 + $0x110] sm:$0xff]
      %v6481 = vld [vmem:[#allocation4 + $0x118] sm:$0xff]
      %v6482 = vld [vmem:[#allocation4 + $0x120] sm:$0x7f]
      %v6483 = vld [vmem:[#allocation4 + $0x128] sm:$0x7f]
      %v6484 = vld [vmem:[#allocation4 + $0x140] sm:$0x80]
      %v6485 = vld [vmem:[#allocation4 + $0x148] sm:$0x80]
      %v6486 = vld [vmem:[#allocation4 + $0x150] sm:$0xff]
      %v6487 = vld [vmem:[#allocation4 + $0x158] sm:$0xff]
      %v6488 = vld [vmem:[#allocation4 + $0x160] sm:$0x7f]
      %v6489 = vld [vmem:[#allocation4 + $0x168] sm:$0x7f]
      %v6490 = vld [vmem:[#allocation4 + $0x180] sm:$0x80]
      %v6491 = vld [vmem:[#allocation4 + $0x188] sm:$0x80]
      %v6492 = vld [vmem:[#allocation4 + $0x190] sm:$0xff]
      %v6493 = vld [vmem:[#allocation4 + $0x198] sm:$0xff]
      %v6494 = vld [vmem:[#allocation4 + $0x1a0] sm:$0x7f]
      %v6495 = vld [vmem:[#allocation4 + $0x1a8] sm:$0x7f]
      %v6496 = vld [vmem:[#allocation4 + $0x1c0] sm:$0x80]
      %v6497 = vld [vmem:[#allocation4 + $0x1c8] sm:$0x80]
      %v6498 = vld [vmem:[#allocation4 + $0x1d0] sm:$0xff]
      %v6499 = vld [vmem:[#allocation4 + $0x1d8] sm:$0xff]
      %v6500 = vld [vmem:[#allocation4 + $0x1e0] sm:$0x7f]
      %v6501 = vld [vmem:[#allocation4 + $0x1e8] sm:$0x7f]
      %v6502 = vld [vmem:[#allocation4 + $0x200] sm:$0x80]
      %v6503 = vld [vmem:[#allocation4 + $0x208] sm:$0x80]
      %v6504 = vld [vmem:[#allocation4 + $0x210] sm:$0xff]
      %v6505 = vld [vmem:[#allocation4 + $0x218] sm:$0xff]
      %v6506 = vld [vmem:[#allocation4 + $0x220] sm:$0x7f]
      %v6507 = vld [vmem:[#allocation4 + $0x228] sm:$0x7f]
      %v6508 = vld [vmem:[#allocation4 + $0x240] sm:$0x80]
      %v6509 = vld [vmem:[#allocation4 + $0x248] sm:$0x80]
      %v6510 = vld [vmem:[#allocation4 + $0x250] sm:$0xff]
      %v6511 = vld [vmem:[#allocation4 + $0x258] sm:$0xff]
      %v6512 = vld [vmem:[#allocation4 + $0x260] sm:$0x7f]
      %v6513 = vld [vmem:[#allocation4 + $0x268] sm:$0x7f]
      %v6514 = vld [vmem:[#allocation4 + $0x280] sm:$0x80]
      %v6515 = vld [vmem:[#allocation4 + $0x288] sm:$0x80]
      %v6516 = vld [vmem:[#allocation4 + $0x290] sm:$0xff]
      %v6517 = vld [vmem:[#allocation4 + $0x298] sm:$0xff]
      %v6518 = vld [vmem:[#allocation4 + $0x2a0] sm:$0x7f]
      %v6519 = vld [vmem:[#allocation4 + $0x2a8] sm:$0x7f]
      %v6520 = vld [vmem:[#allocation4 + $0x2c0] sm:$0x80]
      %v6521 = vld [vmem:[#allocation4 + $0x2c8] sm:$0x80]
      %v6522 = vld [vmem:[#allocation4 + $0x2d0] sm:$0xff]
      %v6523 = vld [vmem:[#allocation4 + $0x2d8] sm:$0xff]
      %v6524 = vld [vmem:[#allocation4 + $0x2e0] sm:$0x7f]
      %v6525 = vld [vmem:[#allocation4 + $0x2e8] sm:$0x7f]
      %v6526 = vld [vmem:[#allocation4 + $0x300] sm:$0x80]
      %v6527 = vld [vmem:[#allocation4 + $0x308] sm:$0x80]
      %v6528 = vld [vmem:[#allocation4 + $0x310] sm:$0xff]
      %v6529 = vld [vmem:[#allocation4 + $0x318] sm:$0xff]
      %v6530 = vld [vmem:[#allocation4 + $0x320] sm:$0x7f]
      %v6531 = vld [vmem:[#allocation4 + $0x328] sm:$0x7f]
      %v6532 = vld [vmem:[#allocation4 + $0x340] sm:$0x80]
      %v6533 = vld [vmem:[#allocation4 + $0x348] sm:$0x80]
      %v6534 = vld [vmem:[#allocation4 + $0x350] sm:$0xff]
      %v6535 = vld [vmem:[#allocation4 + $0x358] sm:$0xff]
      %v6536 = vld [vmem:[#allocation4 + $0x360] sm:$0x7f]
      %v6537 = vld [vmem:[#allocation4 + $0x368] sm:$0x7f]
      %v6538 = vld [vmem:[#allocation4 + $0x380] sm:$0x80]
      %v6539 = vld [vmem:[#allocation4 + $0x388] sm:$0x80]
      %v6540 = vld [vmem:[#allocation4 + $0x390] sm:$0xff]
      %v6541 = vld [vmem:[#allocation4 + $0x398] sm:$0xff]
      %v6542 = vld [vmem:[#allocation4 + $0x3a0] sm:$0x7f]
      %v6543 = vld [vmem:[#allocation4 + $0x3a8] sm:$0x7f]
      %v6544 = vld [vmem:[#allocation4 + $0x3c0] sm:$0x80]
      %v6545 = vld [vmem:[#allocation4 + $0x3c8] sm:$0x80]
      %v6546 = vld [vmem:[#allocation4 + $0x3d0] sm:$0xff]
      %v6547 = vld [vmem:[#allocation4 + $0x3d8] sm:$0xff]
      %v6548 = vld [vmem:[#allocation4 + $0x3e0] sm:$0x7f]
      %v6549 = vld [vmem:[#allocation4 + $0x3e8] sm:$0x7f]
      %v6646 = vrot.slane %v6454, 7
      %v6647 = vrot.slane %v6456, 7
      %v6648 = vsel %vm1717, %v6646, %v6647
      %v6649 = vrot.slane %v6455, 7
      %v6650 = vrot.slane %v6457, 7
      %v6651 = vsel %vm1717, %v6649, %v6650
      %v6652 = vrot.slane %v6458, 7
      %v6653 = vsel %vm1717, %v6647, %v6652
      %v6654 = vrot.slane %v6459, 7
      %v6655 = vsel %vm1717, %v6650, %v6654
      %v6656 = vrot.slane %v6460, 7
      %v6657 = vrot.slane %v6462, 7
      %v6658 = vsel %vm1717, %v6656, %v6657
      %v6659 = vrot.slane %v6461, 7
      %v6660 = vrot.slane %v6463, 7
      %v6661 = vsel %vm1717, %v6659, %v6660
      %v6662 = vrot.slane %v6464, 7
      %v6663 = vsel %vm1717, %v6657, %v6662
      %v6664 = vrot.slane %v6465, 7
      %v6665 = vsel %vm1717, %v6660, %v6664
      %v6666 = vrot.slane %v6466, 7
      %v6667 = vrot.slane %v6468, 7
      %v6668 = vsel %vm1717, %v6666, %v6667
      %v6669 = vrot.slane %v6467, 7
      %v6670 = vrot.slane %v6469, 7
      %v6671 = vsel %vm1717, %v6669, %v6670
      %v6672 = vrot.slane %v6470, 7
      %v6673 = vsel %vm1717, %v6667, %v6672
      %v6674 = vrot.slane %v6471, 7
      %v6675 = vsel %vm1717, %v6670, %v6674
      %v6676 = vrot.slane %v6472, 7
      %v6677 = vrot.slane %v6474, 7
      %v6678 = vsel %vm1717, %v6676, %v6677
      %v6679 = vrot.slane %v6473, 7
      %v6680 = vrot.slane %v6475, 7
      %v6681 = vsel %vm1717, %v6679, %v6680
      %v6682 = vrot.slane %v6476, 7
      %v6683 = vsel %vm1717, %v6677, %v6682
      %v6684 = vrot.slane %v6477, 7
      %v6685 = vsel %vm1717, %v6680, %v6684
      %v6686 = vrot.slane %v6478, 7
      %v6687 = vrot.slane %v6480, 7
      %v6688 = vsel %vm1717, %v6686, %v6687
      %v6689 = vrot.slane %v6479, 7
      %v6690 = vrot.slane %v6481, 7
      %v6691 = vsel %vm1717, %v6689, %v6690
      %v6692 = vrot.slane %v6482, 7
      %v6693 = vsel %vm1717, %v6687, %v6692
      %v6694 = vrot.slane %v6483, 7
      %v6695 = vsel %vm1717, %v6690, %v6694
      %v6696 = vrot.slane %v6484, 7
      %v6697 = vrot.slane %v6486, 7
      %v6698 = vsel %vm1717, %v6696, %v6697
      %v6699 = vrot.slane %v6485, 7
      %v6700 = vrot.slane %v6487, 7
      %v6701 = vsel %vm1717, %v6699, %v6700
      %v6702 = vrot.slane %v6488, 7
      %v6703 = vsel %vm1717, %v6697, %v6702
      %v6704 = vrot.slane %v6489, 7
      %v6705 = vsel %vm1717, %v6700, %v6704
      %v6706 = vrot.slane %v6490, 7
      %v6707 = vrot.slane %v6492, 7
      %v6708 = vsel %vm1717, %v6706, %v6707
      %v6709 = vrot.slane %v6491, 7
      %v6710 = vrot.slane %v6493, 7
      %v6711 = vsel %vm1717, %v6709, %v6710
      %v6712 = vrot.slane %v6494, 7
      %v6713 = vsel %vm1717, %v6707, %v6712
      %v6714 = vrot.slane %v6495, 7
      %v6715 = vsel %vm1717, %v6710, %v6714
      %v6716 = vrot.slane %v6496, 7
      %v6717 = vrot.slane %v6498, 7
      %v6718 = vsel %vm1717, %v6716, %v6717
      %v6719 = vrot.slane %v6497, 7
      %v6720 = vrot.slane %v6499, 7
      %v6721 = vsel %vm1717, %v6719, %v6720
      %v6722 = vrot.slane %v6500, 7
      %v6723 = vsel %vm1717, %v6717, %v6722
      %v6724 = vrot.slane %v6501, 7
      %v6725 = vsel %vm1717, %v6720, %v6724
      %v6726 = vrot.slane %v6502, 7
      %v6727 = vrot.slane %v6504, 7
      %v6728 = vsel %vm1717, %v6726, %v6727
      %v6729 = vrot.slane %v6503, 7
      %v6730 = vrot.slane %v6505, 7
      %v6731 = vsel %vm1717, %v6729, %v6730
      %v6732 = vrot.slane %v6506, 7
      %v6733 = vsel %vm1717, %v6727, %v6732
      %v6734 = vrot.slane %v6507, 7
      %v6735 = vsel %vm1717, %v6730, %v6734
      %v6736 = vrot.slane %v6508, 7
      %v6737 = vrot.slane %v6510, 7
      %v6738 = vsel %vm1717, %v6736, %v6737
      %v6739 = vrot.slane %v6509, 7
      %v6740 = vrot.slane %v6511, 7
      %v6741 = vsel %vm1717, %v6739, %v6740
      %v6742 = vrot.slane %v6512, 7
      %v6743 = vsel %vm1717, %v6737, %v6742
      %v6744 = vrot.slane %v6513, 7
      %v6745 = vsel %vm1717, %v6740, %v6744
      %v6746 = vrot.slane %v6514, 7
      %v6747 = vrot.slane %v6516, 7
      %v6748 = vsel %vm1717, %v6746, %v6747
      %v6749 = vrot.slane %v6515, 7
      %v6750 = vrot.slane %v6517, 7
      %v6751 = vsel %vm1717, %v6749, %v6750
      %v6752 = vrot.slane %v6518, 7
      %v6753 = vsel %vm1717, %v6747, %v6752
      %v6754 = vrot.slane %v6519, 7
      %v6755 = vsel %vm1717, %v6750, %v6754
      %v6756 = vrot.slane %v6520, 7
      %v6757 = vrot.slane %v6522, 7
      %v6758 = vsel %vm1717, %v6756, %v6757
      %v6759 = vrot.slane %v6521, 7
      %v6760 = vrot.slane %v6523, 7
      %v6761 = vsel %vm1717, %v6759, %v6760
      %v6762 = vrot.slane %v6524, 7
      %v6763 = vsel %vm1717, %v6757, %v6762
      %v6764 = vrot.slane %v6525, 7
      %v6765 = vsel %vm1717, %v6760, %v6764
      %v6766 = vrot.slane %v6526, 7
      %v6767 = vrot.slane %v6528, 7
      %v6768 = vsel %vm1717, %v6766, %v6767
      %v6769 = vrot.slane %v6527, 7
      %v6770 = vrot.slane %v6529, 7
      %v6771 = vsel %vm1717, %v6769, %v6770
      %v6772 = vrot.slane %v6530, 7
      %v6773 = vsel %vm1717, %v6767, %v6772
      %v6774 = vrot.slane %v6531, 7
      %v6775 = vsel %vm1717, %v6770, %v6774
      %v6776 = vrot.slane %v6532, 7
      %v6777 = vrot.slane %v6534, 7
      %v6778 = vsel %vm1717, %v6776, %v6777
      %v6779 = vrot.slane %v6533, 7
      %v6780 = vrot.slane %v6535, 7
      %v6781 = vsel %vm1717, %v6779, %v6780
      %v6782 = vrot.slane %v6536, 7
      %v6783 = vsel %vm1717, %v6777, %v6782
      %v6784 = vrot.slane %v6537, 7
      %v6785 = vsel %vm1717, %v6780, %v6784
      %v6786 = vrot.slane %v6538, 7
      %v6787 = vrot.slane %v6540, 7
      %v6788 = vsel %vm1717, %v6786, %v6787
      %v6789 = vrot.slane %v6539, 7
      %v6790 = vrot.slane %v6541, 7
      %v6791 = vsel %vm1717, %v6789, %v6790
      %v6792 = vrot.slane %v6542, 7
      %v6793 = vsel %vm1717, %v6787, %v6792
      %v6794 = vrot.slane %v6543, 7
      %v6795 = vsel %vm1717, %v6790, %v6794
      %v6796 = vrot.slane %v6544, 7
      %v6797 = vrot.slane %v6546, 7
      %v6798 = vsel %vm1717, %v6796, %v6797
      %v6799 = vrot.slane %v6545, 7
      %v6800 = vrot.slane %v6547, 7
      %v6801 = vsel %vm1717, %v6799, %v6800
      %v6802 = vrot.slane %v6548, 7
      %v6803 = vsel %vm1717, %v6797, %v6802
      %v6804 = vrot.slane %v6549, 7
      %v6805 = vsel %vm1717, %v6800, %v6804
      %v6870 = vadd.f32 %v6648, 0.0
      %v6871 = vadd.f32 %v6651, 0.0
      %v6872 = vadd.f32 %v6653, 0.0
      %v6873 = vadd.f32 %v6655, 0.0
      %v6874 = vadd.f32 %v6658, 0.0
      %v6875 = vadd.f32 %v6661, 0.0
      %v6876 = vadd.f32 %v6663, 0.0
      %v6877 = vadd.f32 %v6665, 0.0
      %v6878 = vadd.f32 %v6668, 0.0
      %v6879 = vadd.f32 %v6671, 0.0
      %v6880 = vadd.f32 %v6673, 0.0
      %v6881 = vadd.f32 %v6675, 0.0
      %v6882 = vadd.f32 %v6678, 0.0
      %v6883 = vadd.f32 %v6681, 0.0
      %v6884 = vadd.f32 %v6683, 0.0
      %v6885 = vadd.f32 %v6685, 0.0
      %v6886 = vadd.f32 %v6688, 0.0
      %v6887 = vadd.f32 %v6691, 0.0
      %v6888 = vadd.f32 %v6693, 0.0
      %v6889 = vadd.f32 %v6695, 0.0
      %v6890 = vadd.f32 %v6698, 0.0
      %v6891 = vadd.f32 %v6701, 0.0
      %v6892 = vadd.f32 %v6703, 0.0
      %v6893 = vadd.f32 %v6705, 0.0
      %v6894 = vadd.f32 %v6708, 0.0
      %v6895 = vadd.f32 %v6711, 0.0
      %v6896 = vadd.f32 %v6713, 0.0
      %v6897 = vadd.f32 %v6715, 0.0
      %v6898 = vadd.f32 %v6718, 0.0
      %v6899 = vadd.f32 %v6721, 0.0
      %v6900 = vadd.f32 %v6723, 0.0
      %v6901 = vadd.f32 %v6725, 0.0
      %v6902 = vadd.f32 %v6728, 0.0
      %v6903 = vadd.f32 %v6731, 0.0
      %v6904 = vadd.f32 %v6733, 0.0
      %v6905 = vadd.f32 %v6735, 0.0
      %v6906 = vadd.f32 %v6738, 0.0
      %v6907 = vadd.f32 %v6741, 0.0
      %v6908 = vadd.f32 %v6743, 0.0
      %v6909 = vadd.f32 %v6745, 0.0
      %v6910 = vadd.f32 %v6748, 0.0
      %v6911 = vadd.f32 %v6751, 0.0
      %v6912 = vadd.f32 %v6753, 0.0
      %v6913 = vadd.f32 %v6755, 0.0
      %v6914 = vadd.f32 %v6758, 0.0
      %v6915 = vadd.f32 %v6761, 0.0
      %v6916 = vadd.f32 %v6763, 0.0
      %v6917 = vadd.f32 %v6765, 0.0
      %v6918 = vadd.f32 %v6768, 0.0
      %v6919 = vadd.f32 %v6771, 0.0
      %v6920 = vadd.f32 %v6773, 0.0
      %v6921 = vadd.f32 %v6775, 0.0
      %v6922 = vadd.f32 %v6778, 0.0
      %v6923 = vadd.f32 %v6781, 0.0
      %v6924 = vadd.f32 %v6783, 0.0
      %v6925 = vadd.f32 %v6785, 0.0
      %v6926 = vadd.f32 %v6788, 0.0
      %v6927 = vadd.f32 %v6791, 0.0
      %v6928 = vadd.f32 %v6793, 0.0
      %v6929 = vadd.f32 %v6795, 0.0
      %v6930 = vadd.f32 %v6798, 0.0
      %v6931 = vadd.f32 %v6801, 0.0
      %v6932 = vadd.f32 %v6803, 0.0
      %v6933 = vadd.f32 %v6805, 0.0
      %s6934 = scalar_lea.vmem %s3, 256
      %v6935 = vld [vmem:[%s6934] sm:$0xff]
      %v6936 = vld [vmem:[%s6934 + $0x8] sm:$0xff]
      %v6937 = vld [vmem:[%s6934 + $0x10] sm:$0xff]
      %v6938 = vld [vmem:[%s6934 + $0x18] sm:$0xff]
      %v6939 = vld [vmem:[%s6934 + $0x20] sm:$0xff]
      %v6940 = vld [vmem:[%s6934 + $0x28] sm:$0xff]
      %v6941 = vld [vmem:[%s6934 + $0x30] sm:$0xff]
      %v6942 = vld [vmem:[%s6934 + $0x38] sm:$0xff]
      %v6943 = vld [vmem:[%s6934 + $0x40] sm:$0xff]
      %v6944 = vld [vmem:[%s6934 + $0x48] sm:$0xff]
      %v6945 = vld [vmem:[%s6934 + $0x50] sm:$0xff]
      %v6946 = vld [vmem:[%s6934 + $0x58] sm:$0xff]
      %v6947 = vld [vmem:[%s6934 + $0x60] sm:$0xff]
      %v6948 = vld [vmem:[%s6934 + $0x68] sm:$0xff]
      %v6949 = vld [vmem:[%s6934 + $0x70] sm:$0xff]
      %v6950 = vld [vmem:[%s6934 + $0x78] sm:$0xff]
      %v6951 = vld [vmem:[%s6934 + $0x80] sm:$0xff]
      %v6952 = vld [vmem:[%s6934 + $0x88] sm:$0xff]
      %v6953 = vld [vmem:[%s6934 + $0x90] sm:$0xff]
      %v6954 = vld [vmem:[%s6934 + $0x98] sm:$0xff]
      %v6955 = vld [vmem:[%s6934 + $0xa0] sm:$0xff]
      %v6956 = vld [vmem:[%s6934 + $0xa8] sm:$0xff]
      %v6957 = vld [vmem:[%s6934 + $0xb0] sm:$0xff]
      %v6958 = vld [vmem:[%s6934 + $0xb8] sm:$0xff]
      %v6959 = vld [vmem:[%s6934 + $0xc0] sm:$0xff]
      %v6960 = vld [vmem:[%s6934 + $0xc8] sm:$0xff]
      %v6961 = vld [vmem:[%s6934 + $0xd0] sm:$0xff]
      %v6962 = vld [vmem:[%s6934 + $0xd8] sm:$0xff]
      %v6963 = vld [vmem:[%s6934 + $0xe0] sm:$0xff]
      %v6964 = vld [vmem:[%s6934 + $0xe8] sm:$0xff]
      %v6965 = vld [vmem:[%s6934 + $0xf0] sm:$0xff]
      %v6966 = vld [vmem:[%s6934 + $0xf8] sm:$0xff]
      %s6967 = scalar_lea.vmem %s3, 1024
      %v6968 = vld [vmem:[%s6967] sm:$0xff]
      %v6969 = vld [vmem:[%s6967 + $0x8] sm:$0xff]
      %v6970 = vld [vmem:[%s6967 + $0x10] sm:$0xff]
      %v6971 = vld [vmem:[%s6967 + $0x18] sm:$0xff]
      %v6972 = vld [vmem:[%s6967 + $0x20] sm:$0xff]
      %v6973 = vld [vmem:[%s6967 + $0x28] sm:$0xff]
      %v6974 = vld [vmem:[%s6967 + $0x30] sm:$0xff]
      %v6975 = vld [vmem:[%s6967 + $0x38] sm:$0xff]
      %v6976 = vld [vmem:[%s6967 + $0x40] sm:$0xff]
      %v6977 = vld [vmem:[%s6967 + $0x48] sm:$0xff]
      %v6978 = vld [vmem:[%s6967 + $0x50] sm:$0xff]
      %v6979 = vld [vmem:[%s6967 + $0x58] sm:$0xff]
      %v6980 = vld [vmem:[%s6967 + $0x60] sm:$0xff]
      %v6981 = vld [vmem:[%s6967 + $0x68] sm:$0xff]
      %v6982 = vld [vmem:[%s6967 + $0x70] sm:$0xff]
      %v6983 = vld [vmem:[%s6967 + $0x78] sm:$0xff]
      %v6984 = vld [vmem:[%s6967 + $0x80] sm:$0xff]
      %v6985 = vld [vmem:[%s6967 + $0x88] sm:$0xff]
      %v6986 = vld [vmem:[%s6967 + $0x90] sm:$0xff]
      %v6987 = vld [vmem:[%s6967 + $0x98] sm:$0xff]
      %v6988 = vld [vmem:[%s6967 + $0xa0] sm:$0xff]
      %v6989 = vld [vmem:[%s6967 + $0xa8] sm:$0xff]
      %v6990 = vld [vmem:[%s6967 + $0xb0] sm:$0xff]
      %v6991 = vld [vmem:[%s6967 + $0xb8] sm:$0xff]
      %v6992 = vld [vmem:[%s6967 + $0xc0] sm:$0xff]
      %v6993 = vld [vmem:[%s6967 + $0xc8] sm:$0xff]
      %v6994 = vld [vmem:[%s6967 + $0xd0] sm:$0xff]
      %v6995 = vld [vmem:[%s6967 + $0xd8] sm:$0xff]
      %v6996 = vld [vmem:[%s6967 + $0xe0] sm:$0xff]
      %v6997 = vld [vmem:[%s6967 + $0xe8] sm:$0xff]
      %v6998 = vld [vmem:[%s6967 + $0xf0] sm:$0xff]
      %v6999 = vld [vmem:[%s6967 + $0xf8] sm:$0xff]
      %v7032 = vunpack.c.l.b16 %v6968
      %v7033 = vunpack.c.h.b16 %v6968
      %v7034 = vunpack.c.l.b16 %v6969
      %v7035 = vunpack.c.h.b16 %v6969
      %v7036 = vunpack.c.l.b16 %v6970
      %v7037 = vunpack.c.h.b16 %v6970
      %v7038 = vunpack.c.l.b16 %v6971
      %v7039 = vunpack.c.h.b16 %v6971
      %v7040 = vunpack.c.l.b16 %v6972
      %v7041 = vunpack.c.h.b16 %v6972
      %v7042 = vunpack.c.l.b16 %v6973
      %v7043 = vunpack.c.h.b16 %v6973
      %v7044 = vunpack.c.l.b16 %v6974
      %v7045 = vunpack.c.h.b16 %v6974
      %v7046 = vunpack.c.l.b16 %v6975
      %v7047 = vunpack.c.h.b16 %v6975
      %v7048 = vunpack.c.l.b16 %v6976
      %v7049 = vunpack.c.h.b16 %v6976
      %v7050 = vunpack.c.l.b16 %v6977
      %v7051 = vunpack.c.h.b16 %v6977
      %v7052 = vunpack.c.l.b16 %v6978
      %v7053 = vunpack.c.h.b16 %v6978
      %v7054 = vunpack.c.l.b16 %v6979
      %v7055 = vunpack.c.h.b16 %v6979
      %v7056 = vunpack.c.l.b16 %v6980
      %v7057 = vunpack.c.h.b16 %v6980
      %v7058 = vunpack.c.l.b16 %v6981
      %v7059 = vunpack.c.h.b16 %v6981
      %v7060 = vunpack.c.l.b16 %v6982
      %v7061 = vunpack.c.h.b16 %v6982
      %v7062 = vunpack.c.l.b16 %v6983
      %v7063 = vunpack.c.h.b16 %v6983
      %v7064 = vunpack.c.l.b16 %v6984
      %v7065 = vunpack.c.h.b16 %v6984
      %v7066 = vunpack.c.l.b16 %v6985
      %v7067 = vunpack.c.h.b16 %v6985
      %v7068 = vunpack.c.l.b16 %v6986
      %v7069 = vunpack.c.h.b16 %v6986
      %v7070 = vunpack.c.l.b16 %v6987
      %v7071 = vunpack.c.h.b16 %v6987
      %v7072 = vunpack.c.l.b16 %v6988
      %v7073 = vunpack.c.h.b16 %v6988
      %v7074 = vunpack.c.l.b16 %v6989
      %v7075 = vunpack.c.h.b16 %v6989
      %v7076 = vunpack.c.l.b16 %v6990
      %v7077 = vunpack.c.h.b16 %v6990
      %v7078 = vunpack.c.l.b16 %v6991
      %v7079 = vunpack.c.h.b16 %v6991
      %v7080 = vunpack.c.l.b16 %v6992
      %v7081 = vunpack.c.h.b16 %v6992
      %v7082 = vunpack.c.l.b16 %v6993
      %v7083 = vunpack.c.h.b16 %v6993
      %v7084 = vunpack.c.l.b16 %v6994
      %v7085 = vunpack.c.h.b16 %v6994
      %v7086 = vunpack.c.l.b16 %v6995
      %v7087 = vunpack.c.h.b16 %v6995
      %v7088 = vunpack.c.l.b16 %v6996
      %v7089 = vunpack.c.h.b16 %v6996
      %v7090 = vunpack.c.l.b16 %v6997
      %v7091 = vunpack.c.h.b16 %v6997
      %v7092 = vunpack.c.l.b16 %v6998
      %v7093 = vunpack.c.h.b16 %v6998
      %v7094 = vunpack.c.l.b16 %v6999
      %v7095 = vunpack.c.h.b16 %v6999
      %v7096 = vpack.c.b16 %v7034, %v7032
      %v7097 = vpack.c.b16 %v7035, %v7033
      %v7098 = vpack.c.b16 %v7038, %v7036
      %v7099 = vpack.c.b16 %v7039, %v7037
      %v7100 = vpack.c.b16 %v7042, %v7040
      %v7101 = vpack.c.b16 %v7043, %v7041
      %v7102 = vpack.c.b16 %v7046, %v7044
      %v7103 = vpack.c.b16 %v7047, %v7045
      %v7104 = vpack.c.b16 %v7050, %v7048
      %v7105 = vpack.c.b16 %v7051, %v7049
      %v7106 = vpack.c.b16 %v7054, %v7052
      %v7107 = vpack.c.b16 %v7055, %v7053
      %v7108 = vpack.c.b16 %v7058, %v7056
      %v7109 = vpack.c.b16 %v7059, %v7057
      %v7110 = vpack.c.b16 %v7062, %v7060
      %v7111 = vpack.c.b16 %v7063, %v7061
      %v7112 = vpack.c.b16 %v7066, %v7064
      %v7113 = vpack.c.b16 %v7067, %v7065
      %v7114 = vpack.c.b16 %v7070, %v7068
      %v7115 = vpack.c.b16 %v7071, %v7069
      %v7116 = vpack.c.b16 %v7074, %v7072
      %v7117 = vpack.c.b16 %v7075, %v7073
      %v7118 = vpack.c.b16 %v7078, %v7076
      %v7119 = vpack.c.b16 %v7079, %v7077
      %v7120 = vpack.c.b16 %v7082, %v7080
      %v7121 = vpack.c.b16 %v7083, %v7081
      %v7122 = vpack.c.b16 %v7086, %v7084
      %v7123 = vpack.c.b16 %v7087, %v7085
      %v7124 = vpack.c.b16 %v7090, %v7088
      %v7125 = vpack.c.b16 %v7091, %v7089
      %v7126 = vpack.c.b16 %v7094, %v7092
      %v7127 = vpack.c.b16 %v7095, %v7093
      %7160 = vmatprep.subr.bf16.mxu0 %v7097
      %7161 = vmatpush1.bf16.msra.mxu0 %v7096
      %7162 = vmatprep.subr.bf16.mxu0 %v7099
      %7163 = vmatpush1.bf16.msra.mxu0 %v7098
      %7164 = vmatprep.subr.bf16.mxu0 %v7101
      %7165 = vmatpush1.bf16.msra.mxu0 %v7100
      %7166 = vmatprep.subr.bf16.mxu0 %v7103
      %7167 = vmatpush1.bf16.msra.mxu0 %v7102
      %7168 = vmatprep.subr.bf16.mxu0 %v7105
      %7169 = vmatpush1.bf16.msra.mxu0 %v7104
      %7170 = vmatprep.subr.bf16.mxu0 %v7107
      %7171 = vmatpush1.bf16.msra.mxu0 %v7106
      %7172 = vmatprep.subr.bf16.mxu0 %v7109
      %7173 = vmatpush1.bf16.msra.mxu0 %v7108
      %7174 = vmatprep.subr.bf16.mxu0 %v7111
      %7175 = vmatpush1.bf16.msra.mxu0 %v7110
      %7176 = vmatprep.subr.bf16.mxu0 %v7113
      %7177 = vmatpush1.bf16.msra.mxu0 %v7112
      %7178 = vmatprep.subr.bf16.mxu0 %v7115
      %7179 = vmatpush1.bf16.msra.mxu0 %v7114
      %7180 = vmatprep.subr.bf16.mxu0 %v7117
      %7181 = vmatpush1.bf16.msra.mxu0 %v7116
      %7182 = vmatprep.subr.bf16.mxu0 %v7119
      %7183 = vmatpush1.bf16.msra.mxu0 %v7118
      %7184 = vmatprep.subr.bf16.mxu0 %v7121
      %7185 = vmatpush1.bf16.msra.mxu0 %v7120
      %7186 = vmatprep.subr.bf16.mxu0 %v7123
      %7187 = vmatpush1.bf16.msra.mxu0 %v7122
      %7188 = vmatprep.subr.bf16.mxu0 %v7125
      %7189 = vmatpush1.bf16.msra.mxu0 %v7124
      %7190 = vmatprep.subr.bf16.mxu0 %v7127
      %7191 = vmatpush1.bf16.msra.mxu0 %v7126
      %7192 = vmatprep.mubr.bf16.mxu0 %v5105
      %7193 = vmatmul.mubr.bf16.gmra.mrb[0].mxu0 %v5104
      %v7194 = vpop.f32.mrb[0].mxu0
      %v7195 = vadd.f32 0.0, %v7194
      %v7196 = vpop.f32.mrb[0].mxu0
      %v7197 = vadd.f32 0.0, %v7196
      %v7198 = vpop.f32.mrb[0].mxu0
      %v7199 = vadd.f32 0.0, %v7198
      %v7200 = vpop.f32.mrb[0].mxu0
      %v7201 = vadd.f32 0.0, %v7200
      %7202 = vmatprep.mubr.bf16.mxu0 %v5107
      %7203 = vmatmul.mubr.bf16.gmra.mrb[0].mxu0 %v5106
      %v7204 = vpop.f32.mrb[0].mxu0
      %v7205 = vadd.f32 0.0, %v7204
      %v7206 = vpop.f32.mrb[0].mxu0
      %v7207 = vadd.f32 0.0, %v7206
      %v7208 = vpop.f32.mrb[0].mxu0
      %v7209 = vadd.f32 0.0, %v7208
      %v7210 = vpop.f32.mrb[0].mxu0
      %v7211 = vadd.f32 0.0, %v7210
      %7212 = vmatprep.mubr.bf16.mxu0 %v5109
      %7213 = vmatmul.mubr.bf16.gmra.mrb[0].mxu0 %v5108
      %v7214 = vpop.f32.mrb[0].mxu0
      %v7215 = vadd.f32 0.0, %v7214
      %v7216 = vpop.f32.mrb[0].mxu0
      %v7217 = vadd.f32 0.0, %v7216
      %v7218 = vpop.f32.mrb[0].mxu0
      %v7219 = vadd.f32 0.0, %v7218
      %v7220 = vpop.f32.mrb[0].mxu0
      %v7221 = vadd.f32 0.0, %v7220
      %7222 = vmatprep.mubr.bf16.mxu0 %v5111
      %7223 = vmatmul.mubr.bf16.gmra.mrb[0].mxu0 %v5110
      %v7224 = vpop.f32.mrb[0].mxu0
      %v7225 = vadd.f32 0.0, %v7224
      %v7226 = vpop.f32.mrb[0].mxu0
      %v7227 = vadd.f32 0.0, %v7226
      %v7228 = vpop.f32.mrb[0].mxu0
      %v7229 = vadd.f32 0.0, %v7228
      %v7230 = vpop.f32.mrb[0].mxu0
      %v7231 = vadd.f32 0.0, %v7230
      %7232 = vmatprep.mubr.bf16.mxu0 %v5113
      %7233 = vmatmul.mubr.bf16.gmra.mrb[0].mxu0 %v5112
      %v7234 = vpop.f32.mrb[0].mxu0
      %v7235 = vadd.f32 0.0, %v7234
      %v7236 = vpop.f32.mrb[0].mxu0
      %v7237 = vadd.f32 0.0, %v7236
      %v7238 = vpop.f32.mrb[0].mxu0
      %v7239 = vadd.f32 0.0, %v7238
      %v7240 = vpop.f32.mrb[0].mxu0
      %v7241 = vadd.f32 0.0, %v7240
      %7242 = vmatprep.mubr.bf16.mxu0 %v5115
      %7243 = vmatmul.mubr.bf16.gmra.mrb[0].mxu0 %v5114
      %v7244 = vpop.f32.mrb[0].mxu0
      %v7245 = vadd.f32 0.0, %v7244
      %v7246 = vpop.f32.mrb[0].mxu0
      %v7247 = vadd.f32 0.0, %v7246
      %v7248 = vpop.f32.mrb[0].mxu0
      %v7249 = vadd.f32 0.0, %v7248
      %v7250 = vpop.f32.mrb[0].mxu0
      %v7251 = vadd.f32 0.0, %v7250
      %7252 = vmatprep.mubr.bf16.mxu0 %v5117
      %7253 = vmatmul.mubr.bf16.gmra.mrb[0].mxu0 %v5116
      %v7254 = vpop.f32.mrb[0].mxu0
      %v7255 = vadd.f32 0.0, %v7254
      %v7256 = vpop.f32.mrb[0].mxu0
      %v7257 = vadd.f32 0.0, %v7256
      %v7258 = vpop.f32.mrb[0].mxu0
      %v7259 = vadd.f32 0.0, %v7258
      %v7260 = vpop.f32.mrb[0].mxu0
      %v7261 = vadd.f32 0.0, %v7260
      %7262 = vmatprep.mubr.bf16.mxu0 %v5119
      %7263 = vmatmul.mubr.bf16.gmra.mrb[0].mxu0 %v5118
      %v7264 = vpop.f32.mrb[0].mxu0
      %v7265 = vadd.f32 0.0, %v7264
      %v7266 = vpop.f32.mrb[0].mxu0
      %v7267 = vadd.f32 0.0, %v7266
      %v7268 = vpop.f32.mrb[0].mxu0
      %v7269 = vadd.f32 0.0, %v7268
      %v7270 = vpop.f32.mrb[0].mxu0
      %v7271 = vadd.f32 0.0, %v7270
      %7272 = vmatprep.mubr.bf16.mxu0 %v5121
      %7273 = vmatmul.mubr.bf16.gmra.mrb[0].mxu0 %v5120
      %v7274 = vpop.f32.mrb[0].mxu0
      %v7275 = vadd.f32 0.0, %v7274
      %v7276 = vpop.f32.mrb[0].mxu0
      %v7277 = vadd.f32 0.0, %v7276
      %v7278 = vpop.f32.mrb[0].mxu0
      %v7279 = vadd.f32 0.0, %v7278
      %v7280 = vpop.f32.mrb[0].mxu0
      %v7281 = vadd.f32 0.0, %v7280
      %7282 = vmatprep.mubr.bf16.mxu0 %v5123
      %7283 = vmatmul.mubr.bf16.gmra.mrb[0].mxu0 %v5122
      %v7284 = vpop.f32.mrb[0].mxu0
      %v7285 = vadd.f32 0.0, %v7284
      %v7286 = vpop.f32.mrb[0].mxu0
      %v7287 = vadd.f32 0.0, %v7286
      %v7288 = vpop.f32.mrb[0].mxu0
      %v7289 = vadd.f32 0.0, %v7288
      %v7290 = vpop.f32.mrb[0].mxu0
      %v7291 = vadd.f32 0.0, %v7290
      %7292 = vmatprep.mubr.bf16.mxu0 %v5125
      %7293 = vmatmul.mubr.bf16.gmra.mrb[0].mxu0 %v5124
      %v7294 = vpop.f32.mrb[0].mxu0
      %v7295 = vadd.f32 0.0, %v7294
      %v7296 = vpop.f32.mrb[0].mxu0
      %v7297 = vadd.f32 0.0, %v7296
      %v7298 = vpop.f32.mrb[0].mxu0
      %v7299 = vadd.f32 0.0, %v7298
      %v7300 = vpop.f32.mrb[0].mxu0
      %v7301 = vadd.f32 0.0, %v7300
      %7302 = vmatprep.mubr.bf16.mxu0 %v5127
      %7303 = vmatmul.mubr.bf16.gmra.mrb[0].mxu0 %v5126
      %v7304 = vpop.f32.mrb[0].mxu0
      %v7305 = vadd.f32 0.0, %v7304
      %v7306 = vpop.f32.mrb[0].mxu0
      %v7307 = vadd.f32 0.0, %v7306
      %v7308 = vpop.f32.mrb[0].mxu0
      %v7309 = vadd.f32 0.0, %v7308
      %v7310 = vpop.f32.mrb[0].mxu0
      %v7311 = vadd.f32 0.0, %v7310
      %7312 = vmatprep.mubr.bf16.mxu0 %v5129
      %7313 = vmatmul.mubr.bf16.gmra.mrb[0].mxu0 %v5128
      %v7314 = vpop.f32.mrb[0].mxu0
      %v7315 = vadd.f32 0.0, %v7314
      %v7316 = vpop.f32.mrb[0].mxu0
      %v7317 = vadd.f32 0.0, %v7316
      %v7318 = vpop.f32.mrb[0].mxu0
      %v7319 = vadd.f32 0.0, %v7318
      %v7320 = vpop.f32.mrb[0].mxu0
      %v7321 = vadd.f32 0.0, %v7320
      %7322 = vmatprep.mubr.bf16.mxu0 %v5131
      %7323 = vmatmul.mubr.bf16.gmra.mrb[0].mxu0 %v5130
      %v7324 = vpop.f32.mrb[0].mxu0
      %v7325 = vadd.f32 0.0, %v7324
      %v7326 = vpop.f32.mrb[0].mxu0
      %v7327 = vadd.f32 0.0, %v7326
      %v7328 = vpop.f32.mrb[0].mxu0
      %v7329 = vadd.f32 0.0, %v7328
      %v7330 = vpop.f32.mrb[0].mxu0
      %v7331 = vadd.f32 0.0, %v7330
      %7332 = vmatprep.mubr.bf16.mxu0 %v5133
      %7333 = vmatmul.mubr.bf16.gmra.mrb[0].mxu0 %v5132
      %v7334 = vpop.f32.mrb[0].mxu0
      %v7335 = vadd.f32 0.0, %v7334
      %v7336 = vpop.f32.mrb[0].mxu0
      %v7337 = vadd.f32 0.0, %v7336
      %v7338 = vpop.f32.mrb[0].mxu0
      %v7339 = vadd.f32 0.0, %v7338
      %v7340 = vpop.f32.mrb[0].mxu0
      %v7341 = vadd.f32 0.0, %v7340
      %7342 = vmatprep.mubr.bf16.mxu0 %v5135
      %7343 = vmatmul.mubr.bf16.gmra.mrb[0].mxu0 %v5134
      %v7344 = vpop.f32.mrb[0].mxu0
      %v7345 = vadd.f32 0.0, %v7344
      %v7346 = vpop.f32.mrb[0].mxu0
      %v7347 = vadd.f32 0.0, %v7346
      %v7348 = vpop.f32.mrb[0].mxu0
      %v7349 = vadd.f32 0.0, %v7348
      %v7350 = vpop.f32.mrb[0].mxu0
      %v7351 = vadd.f32 0.0, %v7350
      %7352 = vdwg.mxu0
      %v7385 = vunpack.c.l.b16 %v6935
      %v7386 = vunpack.c.h.b16 %v6935
      %v7387 = vunpack.c.l.b16 %v6936
      %v7388 = vunpack.c.h.b16 %v6936
      %v7389 = vunpack.c.l.b16 %v6937
      %v7390 = vunpack.c.h.b16 %v6937
      %v7391 = vunpack.c.l.b16 %v6938
      %v7392 = vunpack.c.h.b16 %v6938
      %v7393 = vunpack.c.l.b16 %v6939
      %v7394 = vunpack.c.h.b16 %v6939
      %v7395 = vunpack.c.l.b16 %v6940
      %v7396 = vunpack.c.h.b16 %v6940
      %v7397 = vunpack.c.l.b16 %v6941
      %v7398 = vunpack.c.h.b16 %v6941
      %v7399 = vunpack.c.l.b16 %v6942
      %v7400 = vunpack.c.h.b16 %v6942
      %v7401 = vunpack.c.l.b16 %v6943
      %v7402 = vunpack.c.h.b16 %v6943
      %v7403 = vunpack.c.l.b16 %v6944
      %v7404 = vunpack.c.h.b16 %v6944
      %v7405 = vunpack.c.l.b16 %v6945
      %v7406 = vunpack.c.h.b16 %v6945
      %v7407 = vunpack.c.l.b16 %v6946
      %v7408 = vunpack.c.h.b16 %v6946
      %v7409 = vunpack.c.l.b16 %v6947
      %v7410 = vunpack.c.h.b16 %v6947
      %v7411 = vunpack.c.l.b16 %v6948
      %v7412 = vunpack.c.h.b16 %v6948
      %v7413 = vunpack.c.l.b16 %v6949
      %v7414 = vunpack.c.h.b16 %v6949
      %v7415 = vunpack.c.l.b16 %v6950
      %v7416 = vunpack.c.h.b16 %v6950
      %v7417 = vunpack.c.l.b16 %v6951
      %v7418 = vunpack.c.h.b16 %v6951
      %v7419 = vunpack.c.l.b16 %v6952
      %v7420 = vunpack.c.h.b16 %v6952
      %v7421 = vunpack.c.l.b16 %v6953
      %v7422 = vunpack.c.h.b16 %v6953
      %v7423 = vunpack.c.l.b16 %v6954
      %v7424 = vunpack.c.h.b16 %v6954
      %v7425 = vunpack.c.l.b16 %v6955
      %v7426 = vunpack.c.h.b16 %v6955
      %v7427 = vunpack.c.l.b16 %v6956
      %v7428 = vunpack.c.h.b16 %v6956
      %v7429 = vunpack.c.l.b16 %v6957
      %v7430 = vunpack.c.h.b16 %v6957
      %v7431 = vunpack.c.l.b16 %v6958
      %v7432 = vunpack.c.h.b16 %v6958
      %v7433 = vunpack.c.l.b16 %v6959
      %v7434 = vunpack.c.h.b16 %v6959
      %v7435 = vunpack.c.l.b16 %v6960
      %v7436 = vunpack.c.h.b16 %v6960
      %v7437 = vunpack.c.l.b16 %v6961
      %v7438 = vunpack.c.h.b16 %v6961
      %v7439 = vunpack.c.l.b16 %v6962
      %v7440 = vunpack.c.h.b16 %v6962
      %v7441 = vunpack.c.l.b16 %v6963
      %v7442 = vunpack.c.h.b16 %v6963
      %v7443 = vunpack.c.l.b16 %v6964
      %v7444 = vunpack.c.h.b16 %v6964
      %v7445 = vunpack.c.l.b16 %v6965
      %v7446 = vunpack.c.h.b16 %v6965
      %v7447 = vunpack.c.l.b16 %v6966
      %v7448 = vunpack.c.h.b16 %v6966
      %v7449 = vpack.c.b16 %v7387, %v7385
      %v7450 = vpack.c.b16 %v7388, %v7386
      %v7451 = vpack.c.b16 %v7391, %v7389
      %v7452 = vpack.c.b16 %v7392, %v7390
      %v7453 = vpack.c.b16 %v7395, %v7393
      %v7454 = vpack.c.b16 %v7396, %v7394
      %v7455 = vpack.c.b16 %v7399, %v7397
      %v7456 = vpack.c.b16 %v7400, %v7398
      %v7457 = vpack.c.b16 %v7403, %v7401
      %v7458 = vpack.c.b16 %v7404, %v7402
      %v7459 = vpack.c.b16 %v7407, %v7405
      %v7460 = vpack.c.b16 %v7408, %v7406
      %v7461 = vpack.c.b16 %v7411, %v7409
      %v7462 = vpack.c.b16 %v7412, %v7410
      %v7463 = vpack.c.b16 %v7415, %v7413
      %v7464 = vpack.c.b16 %v7416, %v7414
      %v7465 = vpack.c.b16 %v7419, %v7417
      %v7466 = vpack.c.b16 %v7420, %v7418
      %v7467 = vpack.c.b16 %v7423, %v7421
      %v7468 = vpack.c.b16 %v7424, %v7422
      %v7469 = vpack.c.b16 %v7427, %v7425
      %v7470 = vpack.c.b16 %v7428, %v7426
      %v7471 = vpack.c.b16 %v7431, %v7429
      %v7472 = vpack.c.b16 %v7432, %v7430
      %v7473 = vpack.c.b16 %v7435, %v7433
      %v7474 = vpack.c.b16 %v7436, %v7434
      %v7475 = vpack.c.b16 %v7439, %v7437
      %v7476 = vpack.c.b16 %v7440, %v7438
      %v7477 = vpack.c.b16 %v7443, %v7441
      %v7478 = vpack.c.b16 %v7444, %v7442
      %v7479 = vpack.c.b16 %v7447, %v7445
      %v7480 = vpack.c.b16 %v7448, %v7446
      %7513 = vmatprep.subr.bf16.mxu0 %v7450
      %7514 = vmatpush1.bf16.msra.mxu0 %v7449
      %7515 = vmatprep.subr.bf16.mxu0 %v7452
      %7516 = vmatpush1.bf16.msra.mxu0 %v7451
      %7517 = vmatprep.subr.bf16.mxu0 %v7454
      %7518 = vmatpush1.bf16.msra.mxu0 %v7453
      %7519 = vmatprep.subr.bf16.mxu0 %v7456
      %7520 = vmatpush1.bf16.msra.mxu0 %v7455
      %7521 = vmatprep.subr.bf16.mxu0 %v7458
      %7522 = vmatpush1.bf16.msra.mxu0 %v7457
      %7523 = vmatprep.subr.bf16.mxu0 %v7460
      %7524 = vmatpush1.bf16.msra.mxu0 %v7459
      %7525 = vmatprep.subr.bf16.mxu0 %v7462
      %7526 = vmatpush1.bf16.msra.mxu0 %v7461
      %7527 = vmatprep.subr.bf16.mxu0 %v7464
      %7528 = vmatpush1.bf16.msra.mxu0 %v7463
      %7529 = vmatprep.subr.bf16.mxu0 %v7466
      %7530 = vmatpush1.bf16.msra.mxu0 %v7465
      %7531 = vmatprep.subr.bf16.mxu0 %v7468
      %7532 = vmatpush1.bf16.msra.mxu0 %v7467
      %7533 = vmatprep.subr.bf16.mxu0 %v7470
      %7534 = vmatpush1.bf16.msra.mxu0 %v7469
      %7535 = vmatprep.subr.bf16.mxu0 %v7472
      %7536 = vmatpush1.bf16.msra.mxu0 %v7471
      %7537 = vmatprep.subr.bf16.mxu0 %v7474
      %7538 = vmatpush1.bf16.msra.mxu0 %v7473
      %7539 = vmatprep.subr.bf16.mxu0 %v7476
      %7540 = vmatpush1.bf16.msra.mxu0 %v7475
      %7541 = vmatprep.subr.bf16.mxu0 %v7478
      %7542 = vmatpush1.bf16.msra.mxu0 %v7477
      %7543 = vmatprep.subr.bf16.mxu0 %v7480
      %7544 = vmatpush1.bf16.msra.mxu0 %v7479
      %7545 = vmatprep.mubr.bf16.mxu0 %v5073
      %7546 = vmatmul.mubr.bf16.gmra.mrb[0].mxu0 %v5072
      %v7547 = vpop.f32.mrb[0].mxu0
      %v7548 = vadd.f32 %v7195, %v7547
      %v7549 = vpop.f32.mrb[0].mxu0
      %v7550 = vadd.f32 %v7197, %v7549
      %v7551 = vpop.f32.mrb[0].mxu0
      %v7552 = vadd.f32 %v7199, %v7551
      %v7553 = vpop.f32.mrb[0].mxu0
      %v7554 = vadd.f32 %v7201, %v7553
      %7555 = vmatprep.mubr.bf16.mxu0 %v5075
      %7556 = vmatmul.mubr.bf16.gmra.mrb[0].mxu0 %v5074
      %v7557 = vpop.f32.mrb[0].mxu0
      %v7558 = vadd.f32 %v7205, %v7557
      %v7559 = vpop.f32.mrb[0].mxu0
      %v7560 = vadd.f32 %v7207, %v7559
      %v7561 = vpop.f32.mrb[0].mxu0
      %v7562 = vadd.f32 %v7209, %v7561
      %v7563 = vpop.f32.mrb[0].mxu0
      %v7564 = vadd.f32 %v7211, %v7563
      %7565 = vmatprep.mubr.bf16.mxu0 %v5077
      %7566 = vmatmul.mubr.bf16.gmra.mrb[0].mxu0 %v5076
      %v7567 = vpop.f32.mrb[0].mxu0
      %v7568 = vadd.f32 %v7215, %v7567
      %v7569 = vpop.f32.mrb[0].mxu0
      %v7570 = vadd.f32 %v7217, %v7569
      %v7571 = vpop.f32.mrb[0].mxu0
      %v7572 = vadd.f32 %v7219, %v7571
      %v7573 = vpop.f32.mrb[0].mxu0
      %v7574 = vadd.f32 %v7221, %v7573
      %7575 = vmatprep.mubr.bf16.mxu0 %v5079
      %7576 = vmatmul.mubr.bf16.gmra.mrb[0].mxu0 %v5078
      %v7577 = vpop.f32.mrb[0].mxu0
      %v7578 = vadd.f32 %v7225, %v7577
      %v7579 = vpop.f32.mrb[0].mxu0
      %v7580 = vadd.f32 %v7227, %v7579
      %v7581 = vpop.f32.mrb[0].mxu0
      %v7582 = vadd.f32 %v7229, %v7581
      %v7583 = vpop.f32.mrb[0].mxu0
      %v7584 = vadd.f32 %v7231, %v7583
      %7585 = vmatprep.mubr.bf16.mxu0 %v5081
      %7586 = vmatmul.mubr.bf16.gmra.mrb[0].mxu0 %v5080
      %v7587 = vpop.f32.mrb[0].mxu0
      %v7588 = vadd.f32 %v7235, %v7587
      %v7589 = vpop.f32.mrb[0].mxu0
      %v7590 = vadd.f32 %v7237, %v7589
      %v7591 = vpop.f32.mrb[0].mxu0
      %v7592 = vadd.f32 %v7239, %v7591
      %v7593 = vpop.f32.mrb[0].mxu0
      %v7594 = vadd.f32 %v7241, %v7593
      %7595 = vmatprep.mubr.bf16.mxu0 %v5083
      %7596 = vmatmul.mubr.bf16.gmra.mrb[0].mxu0 %v5082
      %v7597 = vpop.f32.mrb[0].mxu0
      %v7598 = vadd.f32 %v7245, %v7597
      %v7599 = vpop.f32.mrb[0].mxu0
      %v7600 = vadd.f32 %v7247, %v7599
      %v7601 = vpop.f32.mrb[0].mxu0
      %v7602 = vadd.f32 %v7249, %v7601
      %v7603 = vpop.f32.mrb[0].mxu0
      %v7604 = vadd.f32 %v7251, %v7603
      %7605 = vmatprep.mubr.bf16.mxu0 %v5085
      %7606 = vmatmul.mubr.bf16.gmra.mrb[0].mxu0 %v5084
      %v7607 = vpop.f32.mrb[0].mxu0
      %v7608 = vadd.f32 %v7255, %v7607
      %v7609 = vpop.f32.mrb[0].mxu0
      %v7610 = vadd.f32 %v7257, %v7609
      %v7611 = vpop.f32.mrb[0].mxu0
      %v7612 = vadd.f32 %v7259, %v7611
      %v7613 = vpop.f32.mrb[0].mxu0
      %v7614 = vadd.f32 %v7261, %v7613
      %7615 = vmatprep.mubr.bf16.mxu0 %v5087
      %7616 = vmatmul.mubr.bf16.gmra.mrb[0].mxu0 %v5086
      %v7617 = vpop.f32.mrb[0].mxu0
      %v7618 = vadd.f32 %v7265, %v7617
      %v7619 = vpop.f32.mrb[0].mxu0
      %v7620 = vadd.f32 %v7267, %v7619
      %v7621 = vpop.f32.mrb[0].mxu0
      %v7622 = vadd.f32 %v7269, %v7621
      %v7623 = vpop.f32.mrb[0].mxu0
      %v7624 = vadd.f32 %v7271, %v7623
      %7625 = vmatprep.mubr.bf16.mxu0 %v5089
      %7626 = vmatmul.mubr.bf16.gmra.mrb[0].mxu0 %v5088
      %v7627 = vpop.f32.mrb[0].mxu0
      %v7628 = vadd.f32 %v7275, %v7627
      %v7629 = vpop.f32.mrb[0].mxu0
      %v7630 = vadd.f32 %v7277, %v7629
      %v7631 = vpop.f32.mrb[0].mxu0
      %v7632 = vadd.f32 %v7279, %v7631
      %v7633 = vpop.f32.mrb[0].mxu0
      %v7634 = vadd.f32 %v7281, %v7633
      %7635 = vmatprep.mubr.bf16.mxu0 %v5091
      %7636 = vmatmul.mubr.bf16.gmra.mrb[0].mxu0 %v5090
      %v7637 = vpop.f32.mrb[0].mxu0
      %v7638 = vadd.f32 %v7285, %v7637
      %v7639 = vpop.f32.mrb[0].mxu0
      %v7640 = vadd.f32 %v7287, %v7639
      %v7641 = vpop.f32.mrb[0].mxu0
      %v7642 = vadd.f32 %v7289, %v7641
      %v7643 = vpop.f32.mrb[0].mxu0
      %v7644 = vadd.f32 %v7291, %v7643
      %7645 = vmatprep.mubr.bf16.mxu0 %v5093
      %7646 = vmatmul.mubr.bf16.gmra.mrb[0].mxu0 %v5092
      %v7647 = vpop.f32.mrb[0].mxu0
      %v7648 = vadd.f32 %v7295, %v7647
      %v7649 = vpop.f32.mrb[0].mxu0
      %v7650 = vadd.f32 %v7297, %v7649
      %v7651 = vpop.f32.mrb[0].mxu0
      %v7652 = vadd.f32 %v7299, %v7651
      %v7653 = vpop.f32.mrb[0].mxu0
      %v7654 = vadd.f32 %v7301, %v7653
      %7655 = vmatprep.mubr.bf16.mxu0 %v5095
      %7656 = vmatmul.mubr.bf16.gmra.mrb[0].mxu0 %v5094
      %v7657 = vpop.f32.mrb[0].mxu0
      %v7658 = vadd.f32 %v7305, %v7657
      %v7659 = vpop.f32.mrb[0].mxu0
      %v7660 = vadd.f32 %v7307, %v7659
      %v7661 = vpop.f32.mrb[0].mxu0
      %v7662 = vadd.f32 %v7309, %v7661
      %v7663 = vpop.f32.mrb[0].mxu0
      %v7664 = vadd.f32 %v7311, %v7663
      %7665 = vmatprep.mubr.bf16.mxu0 %v5097
      %7666 = vmatmul.mubr.bf16.gmra.mrb[0].mxu0 %v5096
      %v7667 = vpop.f32.mrb[0].mxu0
      %v7668 = vadd.f32 %v7315, %v7667
      %v7669 = vpop.f32.mrb[0].mxu0
      %v7670 = vadd.f32 %v7317, %v7669
      %v7671 = vpop.f32.mrb[0].mxu0
      %v7672 = vadd.f32 %v7319, %v7671
      %v7673 = vpop.f32.mrb[0].mxu0
      %v7674 = vadd.f32 %v7321, %v7673
      %7675 = vmatprep.mubr.bf16.mxu0 %v5099
      %7676 = vmatmul.mubr.bf16.gmra.mrb[0].mxu0 %v5098
      %v7677 = vpop.f32.mrb[0].mxu0
      %v7678 = vadd.f32 %v7325, %v7677
      %v7679 = vpop.f32.mrb[0].mxu0
      %v7680 = vadd.f32 %v7327, %v7679
      %v7681 = vpop.f32.mrb[0].mxu0
      %v7682 = vadd.f32 %v7329, %v7681
      %v7683 = vpop.f32.mrb[0].mxu0
      %v7684 = vadd.f32 %v7331, %v7683
      %7685 = vmatprep.mubr.bf16.mxu0 %v5101
      %7686 = vmatmul.mubr.bf16.gmra.mrb[0].mxu0 %v5100
      %v7687 = vpop.f32.mrb[0].mxu0
      %v7688 = vadd.f32 %v7335, %v7687
      %v7689 = vpop.f32.mrb[0].mxu0
      %v7690 = vadd.f32 %v7337, %v7689
      %v7691 = vpop.f32.mrb[0].mxu0
      %v7692 = vadd.f32 %v7339, %v7691
      %v7693 = vpop.f32.mrb[0].mxu0
      %v7694 = vadd.f32 %v7341, %v7693
      %7695 = vmatprep.mubr.bf16.mxu0 %v5103
      %7696 = vmatmul.mubr.bf16.gmra.mrb[0].mxu0 %v5102
      %v7697 = vpop.f32.mrb[0].mxu0
      %v7698 = vadd.f32 %v7345, %v7697
      %v7699 = vpop.f32.mrb[0].mxu0
      %v7700 = vadd.f32 %v7347, %v7699
      %v7701 = vpop.f32.mrb[0].mxu0
      %v7702 = vadd.f32 %v7349, %v7701
      %v7703 = vpop.f32.mrb[0].mxu0
      %v7704 = vadd.f32 %v7351, %v7703
      %7705 = vdwg.mxu0
      %s7706 = scalar_lea.vmem %s3, 1792
      %v7707 = vld [vmem:[%s7706] sm:$0xff]
      %v7708 = vld [vmem:[%s7706 + $0x8] sm:$0xff]
      %v7709 = vld [vmem:[%s7706 + $0x10] sm:$0xff]
      %v7710 = vld [vmem:[%s7706 + $0x18] sm:$0xff]
      %v7711 = vld [vmem:[%s7706 + $0x20] sm:$0xff]
      %v7712 = vld [vmem:[%s7706 + $0x28] sm:$0xff]
      %v7713 = vld [vmem:[%s7706 + $0x30] sm:$0xff]
      %v7714 = vld [vmem:[%s7706 + $0x38] sm:$0xff]
      %v7715 = vld [vmem:[%s7706 + $0x40] sm:$0xff]
      %v7716 = vld [vmem:[%s7706 + $0x48] sm:$0xff]
      %v7717 = vld [vmem:[%s7706 + $0x50] sm:$0xff]
      %v7718 = vld [vmem:[%s7706 + $0x58] sm:$0xff]
      %v7719 = vld [vmem:[%s7706 + $0x60] sm:$0xff]
      %v7720 = vld [vmem:[%s7706 + $0x68] sm:$0xff]
      %v7721 = vld [vmem:[%s7706 + $0x70] sm:$0xff]
      %v7722 = vld [vmem:[%s7706 + $0x78] sm:$0xff]
      %v7723 = vld [vmem:[%s7706 + $0x80] sm:$0xff]
      %v7724 = vld [vmem:[%s7706 + $0x88] sm:$0xff]
      %v7725 = vld [vmem:[%s7706 + $0x90] sm:$0xff]
      %v7726 = vld [vmem:[%s7706 + $0x98] sm:$0xff]
      %v7727 = vld [vmem:[%s7706 + $0xa0] sm:$0xff]
      %v7728 = vld [vmem:[%s7706 + $0xa8] sm:$0xff]
      %v7729 = vld [vmem:[%s7706 + $0xb0] sm:$0xff]
      %v7730 = vld [vmem:[%s7706 + $0xb8] sm:$0xff]
      %v7731 = vld [vmem:[%s7706 + $0xc0] sm:$0xff]
      %v7732 = vld [vmem:[%s7706 + $0xc8] sm:$0xff]
      %v7733 = vld [vmem:[%s7706 + $0xd0] sm:$0xff]
      %v7734 = vld [vmem:[%s7706 + $0xd8] sm:$0xff]
      %v7735 = vld [vmem:[%s7706 + $0xe0] sm:$0xff]
      %v7736 = vld [vmem:[%s7706 + $0xe8] sm:$0xff]
      %v7737 = vld [vmem:[%s7706 + $0xf0] sm:$0xff]
      %v7738 = vld [vmem:[%s7706 + $0xf8] sm:$0xff]
      %v7771 = vunpack.c.l.b16 %v7707
      %v7772 = vunpack.c.h.b16 %v7707
      %v7773 = vunpack.c.l.b16 %v7708
      %v7774 = vunpack.c.h.b16 %v7708
      %v7775 = vunpack.c.l.b16 %v7709
      %v7776 = vunpack.c.h.b16 %v7709
      %v7777 = vunpack.c.l.b16 %v7710
      %v7778 = vunpack.c.h.b16 %v7710
      %v7779 = vunpack.c.l.b16 %v7711
      %v7780 = vunpack.c.h.b16 %v7711
      %v7781 = vunpack.c.l.b16 %v7712
      %v7782 = vunpack.c.h.b16 %v7712
      %v7783 = vunpack.c.l.b16 %v7713
      %v7784 = vunpack.c.h.b16 %v7713
      %v7785 = vunpack.c.l.b16 %v7714
      %v7786 = vunpack.c.h.b16 %v7714
      %v7787 = vunpack.c.l.b16 %v7715
      %v7788 = vunpack.c.h.b16 %v7715
      %v7789 = vunpack.c.l.b16 %v7716
      %v7790 = vunpack.c.h.b16 %v7716
      %v7791 = vunpack.c.l.b16 %v7717
      %v7792 = vunpack.c.h.b16 %v7717
      %v7793 = vunpack.c.l.b16 %v7718
      %v7794 = vunpack.c.h.b16 %v7718
      %v7795 = vunpack.c.l.b16 %v7719
      %v7796 = vunpack.c.h.b16 %v7719
      %v7797 = vunpack.c.l.b16 %v7720
      %v7798 = vunpack.c.h.b16 %v7720
      %v7799 = vunpack.c.l.b16 %v7721
      %v7800 = vunpack.c.h.b16 %v7721
      %v7801 = vunpack.c.l.b16 %v7722
      %v7802 = vunpack.c.h.b16 %v7722
      %v7803 = vunpack.c.l.b16 %v7723
      %v7804 = vunpack.c.h.b16 %v7723
      %v7805 = vunpack.c.l.b16 %v7724
      %v7806 = vunpack.c.h.b16 %v7724
      %v7807 = vunpack.c.l.b16 %v7725
      %v7808 = vunpack.c.h.b16 %v7725
      %v7809 = vunpack.c.l.b16 %v7726
      %v7810 = vunpack.c.h.b16 %v7726
      %v7811 = vunpack.c.l.b16 %v7727
      %v7812 = vunpack.c.h.b16 %v7727
      %v7813 = vunpack.c.l.b16 %v7728
      %v7814 = vunpack.c.h.b16 %v7728
      %v7815 = vunpack.c.l.b16 %v7729
      %v7816 = vunpack.c.h.b16 %v7729
      %v7817 = vunpack.c.l.b16 %v7730
      %v7818 = vunpack.c.h.b16 %v7730
      %v7819 = vunpack.c.l.b16 %v7731
      %v7820 = vunpack.c.h.b16 %v7731
      %v7821 = vunpack.c.l.b16 %v7732
      %v7822 = vunpack.c.h.b16 %v7732
      %v7823 = vunpack.c.l.b16 %v7733
      %v7824 = vunpack.c.h.b16 %v7733
      %v7825 = vunpack.c.l.b16 %v7734
      %v7826 = vunpack.c.h.b16 %v7734
      %v7827 = vunpack.c.l.b16 %v7735
      %v7828 = vunpack.c.h.b16 %v7735
      %v7829 = vunpack.c.l.b16 %v7736
      %v7830 = vunpack.c.h.b16 %v7736
      %v7831 = vunpack.c.l.b16 %v7737
      %v7832 = vunpack.c.h.b16 %v7737
      %v7833 = vunpack.c.l.b16 %v7738
      %v7834 = vunpack.c.h.b16 %v7738
      %v7835 = vpack.c.b16 %v7773, %v7771
      %v7836 = vpack.c.b16 %v7774, %v7772
      %v7837 = vpack.c.b16 %v7777, %v7775
      %v7838 = vpack.c.b16 %v7778, %v7776
      %v7839 = vpack.c.b16 %v7781, %v7779
      %v7840 = vpack.c.b16 %v7782, %v7780
      %v7841 = vpack.c.b16 %v7785, %v7783
      %v7842 = vpack.c.b16 %v7786, %v7784
      %v7843 = vpack.c.b16 %v7789, %v7787
      %v7844 = vpack.c.b16 %v7790, %v7788
      %v7845 = vpack.c.b16 %v7793, %v7791
      %v7846 = vpack.c.b16 %v7794, %v7792
      %v7847 = vpack.c.b16 %v7797, %v7795
      %v7848 = vpack.c.b16 %v7798, %v7796
      %v7849 = vpack.c.b16 %v7801, %v7799
      %v7850 = vpack.c.b16 %v7802, %v7800
      %v7851 = vpack.c.b16 %v7805, %v7803
      %v7852 = vpack.c.b16 %v7806, %v7804
      %v7853 = vpack.c.b16 %v7809, %v7807
      %v7854 = vpack.c.b16 %v7810, %v7808
      %v7855 = vpack.c.b16 %v7813, %v7811
      %v7856 = vpack.c.b16 %v7814, %v7812
      %v7857 = vpack.c.b16 %v7817, %v7815
      %v7858 = vpack.c.b16 %v7818, %v7816
      %v7859 = vpack.c.b16 %v7821, %v7819
      %v7860 = vpack.c.b16 %v7822, %v7820
      %v7861 = vpack.c.b16 %v7825, %v7823
      %v7862 = vpack.c.b16 %v7826, %v7824
      %v7863 = vpack.c.b16 %v7829, %v7827
      %v7864 = vpack.c.b16 %v7830, %v7828
      %v7865 = vpack.c.b16 %v7833, %v7831
      %v7866 = vpack.c.b16 %v7834, %v7832
      %7899 = vmatprep.subr.bf16.mxu0 %v7836
      %7900 = vmatpush1.bf16.msra.mxu0 %v7835
      %7901 = vmatprep.subr.bf16.mxu0 %v7838
      %7902 = vmatpush1.bf16.msra.mxu0 %v7837
      %7903 = vmatprep.subr.bf16.mxu0 %v7840
      %7904 = vmatpush1.bf16.msra.mxu0 %v7839
      %7905 = vmatprep.subr.bf16.mxu0 %v7842
      %7906 = vmatpush1.bf16.msra.mxu0 %v7841
      %7907 = vmatprep.subr.bf16.mxu0 %v7844
      %7908 = vmatpush1.bf16.msra.mxu0 %v7843
      %7909 = vmatprep.subr.bf16.mxu0 %v7846
      %7910 = vmatpush1.bf16.msra.mxu0 %v7845
      %7911 = vmatprep.subr.bf16.mxu0 %v7848
      %7912 = vmatpush1.bf16.msra.mxu0 %v7847
      %7913 = vmatprep.subr.bf16.mxu0 %v7850
      %7914 = vmatpush1.bf16.msra.mxu0 %v7849
      %7915 = vmatprep.subr.bf16.mxu0 %v7852
      %7916 = vmatpush1.bf16.msra.mxu0 %v7851
      %7917 = vmatprep.subr.bf16.mxu0 %v7854
      %7918 = vmatpush1.bf16.msra.mxu0 %v7853
      %7919 = vmatprep.subr.bf16.mxu0 %v7856
      %7920 = vmatpush1.bf16.msra.mxu0 %v7855
      %7921 = vmatprep.subr.bf16.mxu0 %v7858
      %7922 = vmatpush1.bf16.msra.mxu0 %v7857
      %7923 = vmatprep.subr.bf16.mxu0 %v7860
      %7924 = vmatpush1.bf16.msra.mxu0 %v7859
      %7925 = vmatprep.subr.bf16.mxu0 %v7862
      %7926 = vmatpush1.bf16.msra.mxu0 %v7861
      %7927 = vmatprep.subr.bf16.mxu0 %v7864
      %7928 = vmatpush1.bf16.msra.mxu0 %v7863
      %7929 = vmatprep.subr.bf16.mxu0 %v7866
      %7930 = vmatpush1.bf16.msra.mxu0 %v7865
      %7931 = vmatprep.mubr.bf16.mxu0 %v5138
      %7932 = vmatmul.mubr.bf16.gmra.mrb[0].mxu0 %v5137
      %v7933 = vpop.f32.mrb[0].mxu0
      %v7934 = vadd.f32 0.0, %v7933
      %v7935 = vpop.f32.mrb[0].mxu0
      %v7936 = vadd.f32 0.0, %v7935
      %v7937 = vpop.f32.mrb[0].mxu0
      %v7938 = vadd.f32 0.0, %v7937
      %v7939 = vpop.f32.mrb[0].mxu0
      %v7940 = vadd.f32 0.0, %v7939
      %7941 = vmatprep.mubr.bf16.mxu0 %v5140
      %7942 = vmatmul.mubr.bf16.gmra.mrb[0].mxu0 %v5139
      %v7943 = vpop.f32.mrb[0].mxu0
      %v7944 = vadd.f32 0.0, %v7943
      %v7945 = vpop.f32.mrb[0].mxu0
      %v7946 = vadd.f32 0.0, %v7945
      %v7947 = vpop.f32.mrb[0].mxu0
      %v7948 = vadd.f32 0.0, %v7947
      %v7949 = vpop.f32.mrb[0].mxu0
      %v7950 = vadd.f32 0.0, %v7949
      %7951 = vmatprep.mubr.bf16.mxu0 %v5142
      %7952 = vmatmul.mubr.bf16.gmra.mrb[0].mxu0 %v5141
      %v7953 = vpop.f32.mrb[0].mxu0
      %v7954 = vadd.f32 0.0, %v7953
      %v7955 = vpop.f32.mrb[0].mxu0
      %v7956 = vadd.f32 0.0, %v7955
      %v7957 = vpop.f32.mrb[0].mxu0
      %v7958 = vadd.f32 0.0, %v7957
      %v7959 = vpop.f32.mrb[0].mxu0
      %v7960 = vadd.f32 0.0, %v7959
      %7961 = vmatprep.mubr.bf16.mxu0 %v5144
      %7962 = vmatmul.mubr.bf16.gmra.mrb[0].mxu0 %v5143
      %v7963 = vpop.f32.mrb[0].mxu0
      %v7964 = vadd.f32 0.0, %v7963
      %v7965 = vpop.f32.mrb[0].mxu0
      %v7966 = vadd.f32 0.0, %v7965
      %v7967 = vpop.f32.mrb[0].mxu0
      %v7968 = vadd.f32 0.0, %v7967
      %v7969 = vpop.f32.mrb[0].mxu0
      %v7970 = vadd.f32 0.0, %v7969
      %7971 = vmatprep.mubr.bf16.mxu0 %v5146
      %7972 = vmatmul.mubr.bf16.gmra.mrb[0].mxu0 %v5145
      %v7973 = vpop.f32.mrb[0].mxu0
      %v7974 = vadd.f32 0.0, %v7973
      %v7975 = vpop.f32.mrb[0].mxu0
      %v7976 = vadd.f32 0.0, %v7975
      %v7977 = vpop.f32.mrb[0].mxu0
      %v7978 = vadd.f32 0.0, %v7977
      %v7979 = vpop.f32.mrb[0].mxu0
      %v7980 = vadd.f32 0.0, %v7979
      %7981 = vmatprep.mubr.bf16.mxu0 %v5148
      %7982 = vmatmul.mubr.bf16.gmra.mrb[0].mxu0 %v5147
      %v7983 = vpop.f32.mrb[0].mxu0
      %v7984 = vadd.f32 0.0, %v7983
      %v7985 = vpop.f32.mrb[0].mxu0
      %v7986 = vadd.f32 0.0, %v7985
      %v7987 = vpop.f32.mrb[0].mxu0
      %v7988 = vadd.f32 0.0, %v7987
      %v7989 = vpop.f32.mrb[0].mxu0
      %v7990 = vadd.f32 0.0, %v7989
      %7991 = vmatprep.mubr.bf16.mxu0 %v5150
      %7992 = vmatmul.mubr.bf16.gmra.mrb[0].mxu0 %v5149
      %v7993 = vpop.f32.mrb[0].mxu0
      %v7994 = vadd.f32 0.0, %v7993
      %v7995 = vpop.f32.mrb[0].mxu0
      %v7996 = vadd.f32 0.0, %v7995
      %v7997 = vpop.f32.mrb[0].mxu0
      %v7998 = vadd.f32 0.0, %v7997
      %v7999 = vpop.f32.mrb[0].mxu0
      %v8000 = vadd.f32 0.0, %v7999
      %8001 = vmatprep.mubr.bf16.mxu0 %v5152
      %8002 = vmatmul.mubr.bf16.gmra.mrb[0].mxu0 %v5151
      %v8003 = vpop.f32.mrb[0].mxu0
      %v8004 = vadd.f32 0.0, %v8003
      %v8005 = vpop.f32.mrb[0].mxu0
      %v8006 = vadd.f32 0.0, %v8005
      %v8007 = vpop.f32.mrb[0].mxu0
      %v8008 = vadd.f32 0.0, %v8007
      %v8009 = vpop.f32.mrb[0].mxu0
      %v8010 = vadd.f32 0.0, %v8009
      %8011 = vmatprep.mubr.bf16.mxu0 %v5154
      %8012 = vmatmul.mubr.bf16.gmra.mrb[0].mxu0 %v5153
      %v8013 = vpop.f32.mrb[0].mxu0
      %v8014 = vadd.f32 0.0, %v8013
      %v8015 = vpop.f32.mrb[0].mxu0
      %v8016 = vadd.f32 0.0, %v8015
      %v8017 = vpop.f32.mrb[0].mxu0
      %v8018 = vadd.f32 0.0, %v8017
      %v8019 = vpop.f32.mrb[0].mxu0
      %v8020 = vadd.f32 0.0, %v8019
      %8021 = vmatprep.mubr.bf16.mxu0 %v5156
      %8022 = vmatmul.mubr.bf16.gmra.mrb[0].mxu0 %v5155
      %v8023 = vpop.f32.mrb[0].mxu0
      %v8024 = vadd.f32 0.0, %v8023
      %v8025 = vpop.f32.mrb[0].mxu0
      %v8026 = vadd.f32 0.0, %v8025
      %v8027 = vpop.f32.mrb[0].mxu0
      %v8028 = vadd.f32 0.0, %v8027
      %v8029 = vpop.f32.mrb[0].mxu0
      %v8030 = vadd.f32 0.0, %v8029
      %8031 = vmatprep.mubr.bf16.mxu0 %v5158
      %8032 = vmatmul.mubr.bf16.gmra.mrb[0].mxu0 %v5157
      %v8033 = vpop.f32.mrb[0].mxu0
      %v8034 = vadd.f32 0.0, %v8033
      %v8035 = vpop.f32.mrb[0].mxu0
      %v8036 = vadd.f32 0.0, %v8035
      %v8037 = vpop.f32.mrb[0].mxu0
      %v8038 = vadd.f32 0.0, %v8037
      %v8039 = vpop.f32.mrb[0].mxu0
      %v8040 = vadd.f32 0.0, %v8039
      %8041 = vmatprep.mubr.bf16.mxu0 %v5160
      %8042 = vmatmul.mubr.bf16.gmra.mrb[0].mxu0 %v5159
      %v8043 = vpop.f32.mrb[0].mxu0
      %v8044 = vadd.f32 0.0, %v8043
      %v8045 = vpop.f32.mrb[0].mxu0
      %v8046 = vadd.f32 0.0, %v8045
      %v8047 = vpop.f32.mrb[0].mxu0
      %v8048 = vadd.f32 0.0, %v8047
      %v8049 = vpop.f32.mrb[0].mxu0
      %v8050 = vadd.f32 0.0, %v8049
      %8051 = vmatprep.mubr.bf16.mxu0 %v5162
      %8052 = vmatmul.mubr.bf16.gmra.mrb[0].mxu0 %v5161
      %v8053 = vpop.f32.mrb[0].mxu0
      %v8054 = vadd.f32 0.0, %v8053
      %v8055 = vpop.f32.mrb[0].mxu0
      %v8056 = vadd.f32 0.0, %v8055
      %v8057 = vpop.f32.mrb[0].mxu0
      %v8058 = vadd.f32 0.0, %v8057
      %v8059 = vpop.f32.mrb[0].mxu0
      %v8060 = vadd.f32 0.0, %v8059
      %8061 = vmatprep.mubr.bf16.mxu0 %v5164
      %8062 = vmatmul.mubr.bf16.gmra.mrb[0].mxu0 %v5163
      %v8063 = vpop.f32.mrb[0].mxu0
      %v8064 = vadd.f32 0.0, %v8063
      %v8065 = vpop.f32.mrb[0].mxu0
      %v8066 = vadd.f32 0.0, %v8065
      %v8067 = vpop.f32.mrb[0].mxu0
      %v8068 = vadd.f32 0.0, %v8067
      %v8069 = vpop.f32.mrb[0].mxu0
      %v8070 = vadd.f32 0.0, %v8069
      %8071 = vmatprep.mubr.bf16.mxu0 %v5166
      %8072 = vmatmul.mubr.bf16.gmra.mrb[0].mxu0 %v5165
      %v8073 = vpop.f32.mrb[0].mxu0
      %v8074 = vadd.f32 0.0, %v8073
      %v8075 = vpop.f32.mrb[0].mxu0
      %v8076 = vadd.f32 0.0, %v8075
      %v8077 = vpop.f32.mrb[0].mxu0
      %v8078 = vadd.f32 0.0, %v8077
      %v8079 = vpop.f32.mrb[0].mxu0
      %v8080 = vadd.f32 0.0, %v8079
      %8081 = vmatprep.mubr.bf16.mxu0 %v5168
      %8082 = vmatmul.mubr.bf16.gmra.mrb[0].mxu0 %v5167
      %v8083 = vpop.f32.mrb[0].mxu0
      %v8084 = vadd.f32 0.0, %v8083
      %v8085 = vpop.f32.mrb[0].mxu0
      %v8086 = vadd.f32 0.0, %v8085
      %v8087 = vpop.f32.mrb[0].mxu0
      %v8088 = vadd.f32 0.0, %v8087
      %v8089 = vpop.f32.mrb[0].mxu0
      %v8090 = vadd.f32 0.0, %v8089
      %8091 = vdwg.mxu0
      %v8092 = vadd.f32 %v7548, %v7934
      %v8093 = vadd.f32 %v7550, %v7936
      %v8094 = vadd.f32 %v7552, %v7938
      %v8095 = vadd.f32 %v7554, %v7940
      %v8096 = vadd.f32 %v7558, %v7944
      %v8097 = vadd.f32 %v7560, %v7946
      %v8098 = vadd.f32 %v7562, %v7948
      %v8099 = vadd.f32 %v7564, %v7950
      %v8100 = vadd.f32 %v7568, %v7954
      %v8101 = vadd.f32 %v7570, %v7956
      %v8102 = vadd.f32 %v7572, %v7958
      %v8103 = vadd.f32 %v7574, %v7960
      %v8104 = vadd.f32 %v7578, %v7964
      %v8105 = vadd.f32 %v7580, %v7966
      %v8106 = vadd.f32 %v7582, %v7968
      %v8107 = vadd.f32 %v7584, %v7970
      %v8108 = vadd.f32 %v7588, %v7974
      %v8109 = vadd.f32 %v7590, %v7976
      %v8110 = vadd.f32 %v7592, %v7978
      %v8111 = vadd.f32 %v7594, %v7980
      %v8112 = vadd.f32 %v7598, %v7984
      %v8113 = vadd.f32 %v7600, %v7986
      %v8114 = vadd.f32 %v7602, %v7988
      %v8115 = vadd.f32 %v7604, %v7990
      %v8116 = vadd.f32 %v7608, %v7994
      %v8117 = vadd.f32 %v7610, %v7996
      %v8118 = vadd.f32 %v7612, %v7998
      %v8119 = vadd.f32 %v7614, %v8000
      %v8120 = vadd.f32 %v7618, %v8004
      %v8121 = vadd.f32 %v7620, %v8006
      %v8122 = vadd.f32 %v7622, %v8008
      %v8123 = vadd.f32 %v7624, %v8010
      %v8124 = vadd.f32 %v7628, %v8014
      %v8125 = vadd.f32 %v7630, %v8016
      %v8126 = vadd.f32 %v7632, %v8018
      %v8127 = vadd.f32 %v7634, %v8020
      %v8128 = vadd.f32 %v7638, %v8024
      %v8129 = vadd.f32 %v7640, %v8026
      %v8130 = vadd.f32 %v7642, %v8028
      %v8131 = vadd.f32 %v7644, %v8030
      %v8132 = vadd.f32 %v7648, %v8034
      %v8133 = vadd.f32 %v7650, %v8036
      %v8134 = vadd.f32 %v7652, %v8038
      %v8135 = vadd.f32 %v7654, %v8040
      %v8136 = vadd.f32 %v7658, %v8044
      %v8137 = vadd.f32 %v7660, %v8046
      %v8138 = vadd.f32 %v7662, %v8048
      %v8139 = vadd.f32 %v7664, %v8050
      %v8140 = vadd.f32 %v7668, %v8054
      %v8141 = vadd.f32 %v7670, %v8056
      %v8142 = vadd.f32 %v7672, %v8058
      %v8143 = vadd.f32 %v7674, %v8060
      %v8144 = vadd.f32 %v7678, %v8064
      %v8145 = vadd.f32 %v7680, %v8066
      %v8146 = vadd.f32 %v7682, %v8068
      %v8147 = vadd.f32 %v7684, %v8070
      %v8148 = vadd.f32 %v7688, %v8074
      %v8149 = vadd.f32 %v7690, %v8076
      %v8150 = vadd.f32 %v7692, %v8078
      %v8151 = vadd.f32 %v7694, %v8080
      %v8152 = vadd.f32 %v7698, %v8084
      %v8153 = vadd.f32 %v7700, %v8086
      %v8154 = vadd.f32 %v7702, %v8088
      %v8155 = vadd.f32 %v7704, %v8090
      %v8156 = vadd.f32 %v6870, %v8092
      %v8157 = vadd.f32 %v6871, %v8093
      %v8158 = vadd.f32 %v6872, %v8094
      %v8159 = vadd.f32 %v6873, %v8095
      %v8160 = vadd.f32 %v6874, %v8096
      %v8161 = vadd.f32 %v6875, %v8097
      %v8162 = vadd.f32 %v6876, %v8098
      %v8163 = vadd.f32 %v6877, %v8099
      %v8164 = vadd.f32 %v6878, %v8100
      %v8165 = vadd.f32 %v6879, %v8101
      %v8166 = vadd.f32 %v6880, %v8102
      %v8167 = vadd.f32 %v6881, %v8103
      %v8168 = vadd.f32 %v6882, %v8104
      %v8169 = vadd.f32 %v6883, %v8105
      %v8170 = vadd.f32 %v6884, %v8106
      %v8171 = vadd.f32 %v6885, %v8107
      %v8172 = vadd.f32 %v6886, %v8108
      %v8173 = vadd.f32 %v6887, %v8109
      %v8174 = vadd.f32 %v6888, %v8110
      %v8175 = vadd.f32 %v6889, %v8111
      %v8176 = vadd.f32 %v6890, %v8112
      %v8177 = vadd.f32 %v6891, %v8113
      %v8178 = vadd.f32 %v6892, %v8114
      %v8179 = vadd.f32 %v6893, %v8115
      %v8180 = vadd.f32 %v6894, %v8116
      %v8181 = vadd.f32 %v6895, %v8117
      %v8182 = vadd.f32 %v6896, %v8118
      %v8183 = vadd.f32 %v6897, %v8119
      %v8184 = vadd.f32 %v6898, %v8120
      %v8185 = vadd.f32 %v6899, %v8121
      %v8186 = vadd.f32 %v6900, %v8122
      %v8187 = vadd.f32 %v6901, %v8123
      %v8188 = vadd.f32 %v6902, %v8124
      %v8189 = vadd.f32 %v6903, %v8125
      %v8190 = vadd.f32 %v6904, %v8126
      %v8191 = vadd.f32 %v6905, %v8127
      %v8192 = vadd.f32 %v6906, %v8128
      %v8193 = vadd.f32 %v6907, %v8129
      %v8194 = vadd.f32 %v6908, %v8130
      %v8195 = vadd.f32 %v6909, %v8131
      %v8196 = vadd.f32 %v6910, %v8132
      %v8197 = vadd.f32 %v6911, %v8133
      %v8198 = vadd.f32 %v6912, %v8134
      %v8199 = vadd.f32 %v6913, %v8135
      %v8200 = vadd.f32 %v6914, %v8136
      %v8201 = vadd.f32 %v6915, %v8137
      %v8202 = vadd.f32 %v6916, %v8138
      %v8203 = vadd.f32 %v6917, %v8139
      %v8204 = vadd.f32 %v6918, %v8140
      %v8205 = vadd.f32 %v6919, %v8141
      %v8206 = vadd.f32 %v6920, %v8142
      %v8207 = vadd.f32 %v6921, %v8143
      %v8208 = vadd.f32 %v6922, %v8144
      %v8209 = vadd.f32 %v6923, %v8145
      %v8210 = vadd.f32 %v6924, %v8146
      %v8211 = vadd.f32 %v6925, %v8147
      %v8212 = vadd.f32 %v6926, %v8148
      %v8213 = vadd.f32 %v6927, %v8149
      %v8214 = vadd.f32 %v6928, %v8150
      %v8215 = vadd.f32 %v6929, %v8151
      %v8216 = vadd.f32 %v6930, %v8152
      %v8217 = vadd.f32 %v6931, %v8153
      %v8218 = vadd.f32 %v6932, %v8154
      %v8219 = vadd.f32 %v6933, %v8155
      %s8220 = scalar_lea.vmem %s3, 512
      %v8221 = vld [vmem:[%s8220] sm:$0xff]
      %v8222 = vld [vmem:[%s8220 + $0x8] sm:$0xff]
      %v8223 = vld [vmem:[%s8220 + $0x10] sm:$0xff]
      %v8224 = vld [vmem:[%s8220 + $0x18] sm:$0xff]
      %v8225 = vld [vmem:[%s8220 + $0x20] sm:$0xff]
      %v8226 = vld [vmem:[%s8220 + $0x28] sm:$0xff]
      %v8227 = vld [vmem:[%s8220 + $0x30] sm:$0xff]
      %v8228 = vld [vmem:[%s8220 + $0x38] sm:$0xff]
      %v8229 = vld [vmem:[%s8220 + $0x40] sm:$0xff]
      %v8230 = vld [vmem:[%s8220 + $0x48] sm:$0xff]
      %v8231 = vld [vmem:[%s8220 + $0x50] sm:$0xff]
      %v8232 = vld [vmem:[%s8220 + $0x58] sm:$0xff]
      %v8233 = vld [vmem:[%s8220 + $0x60] sm:$0xff]
      %v8234 = vld [vmem:[%s8220 + $0x68] sm:$0xff]
      %v8235 = vld [vmem:[%s8220 + $0x70] sm:$0xff]
      %v8236 = vld [vmem:[%s8220 + $0x78] sm:$0xff]
      %v8237 = vld [vmem:[%s8220 + $0x80] sm:$0xff]
      %v8238 = vld [vmem:[%s8220 + $0x88] sm:$0xff]
      %v8239 = vld [vmem:[%s8220 + $0x90] sm:$0xff]
      %v8240 = vld [vmem:[%s8220 + $0x98] sm:$0xff]
      %v8241 = vld [vmem:[%s8220 + $0xa0] sm:$0xff]
      %v8242 = vld [vmem:[%s8220 + $0xa8] sm:$0xff]
      %v8243 = vld [vmem:[%s8220 + $0xb0] sm:$0xff]
      %v8244 = vld [vmem:[%s8220 + $0xb8] sm:$0xff]
      %v8245 = vld [vmem:[%s8220 + $0xc0] sm:$0xff]
      %v8246 = vld [vmem:[%s8220 + $0xc8] sm:$0xff]
      %v8247 = vld [vmem:[%s8220 + $0xd0] sm:$0xff]
      %v8248 = vld [vmem:[%s8220 + $0xd8] sm:$0xff]
      %v8249 = vld [vmem:[%s8220 + $0xe0] sm:$0xff]
      %v8250 = vld [vmem:[%s8220 + $0xe8] sm:$0xff]
      %v8251 = vld [vmem:[%s8220 + $0xf0] sm:$0xff]
      %v8252 = vld [vmem:[%s8220 + $0xf8] sm:$0xff]
      %s8253 = scalar_lea.vmem %s3, 1280
      %v8254 = vld [vmem:[%s8253] sm:$0xff]
      %v8255 = vld [vmem:[%s8253 + $0x8] sm:$0xff]
      %v8256 = vld [vmem:[%s8253 + $0x10] sm:$0xff]
      %v8257 = vld [vmem:[%s8253 + $0x18] sm:$0xff]
      %v8258 = vld [vmem:[%s8253 + $0x20] sm:$0xff]
      %v8259 = vld [vmem:[%s8253 + $0x28] sm:$0xff]
      %v8260 = vld [vmem:[%s8253 + $0x30] sm:$0xff]
      %v8261 = vld [vmem:[%s8253 + $0x38] sm:$0xff]
      %v8262 = vld [vmem:[%s8253 + $0x40] sm:$0xff]
      %v8263 = vld [vmem:[%s8253 + $0x48] sm:$0xff]
      %v8264 = vld [vmem:[%s8253 + $0x50] sm:$0xff]
      %v8265 = vld [vmem:[%s8253 + $0x58] sm:$0xff]
      %v8266 = vld [vmem:[%s8253 + $0x60] sm:$0xff]
      %v8267 = vld [vmem:[%s8253 + $0x68] sm:$0xff]
      %v8268 = vld [vmem:[%s8253 + $0x70] sm:$0xff]
      %v8269 = vld [vmem:[%s8253 + $0x78] sm:$0xff]
      %v8270 = vld [vmem:[%s8253 + $0x80] sm:$0xff]
      %v8271 = vld [vmem:[%s8253 + $0x88] sm:$0xff]
      %v8272 = vld [vmem:[%s8253 + $0x90] sm:$0xff]
      %v8273 = vld [vmem:[%s8253 + $0x98] sm:$0xff]
      %v8274 = vld [vmem:[%s8253 + $0xa0] sm:$0xff]
      %v8275 = vld [vmem:[%s8253 + $0xa8] sm:$0xff]
      %v8276 = vld [vmem:[%s8253 + $0xb0] sm:$0xff]
      %v8277 = vld [vmem:[%s8253 + $0xb8] sm:$0xff]
      %v8278 = vld [vmem:[%s8253 + $0xc0] sm:$0xff]
      %v8279 = vld [vmem:[%s8253 + $0xc8] sm:$0xff]
      %v8280 = vld [vmem:[%s8253 + $0xd0] sm:$0xff]
      %v8281 = vld [vmem:[%s8253 + $0xd8] sm:$0xff]
      %v8282 = vld [vmem:[%s8253 + $0xe0] sm:$0xff]
      %v8283 = vld [vmem:[%s8253 + $0xe8] sm:$0xff]
      %v8284 = vld [vmem:[%s8253 + $0xf0] sm:$0xff]
      %v8285 = vld [vmem:[%s8253 + $0xf8] sm:$0xff]
      %v8318 = vunpack.c.l.b16 %v8254
      %v8319 = vunpack.c.h.b16 %v8254
      %v8320 = vunpack.c.l.b16 %v8255
      %v8321 = vunpack.c.h.b16 %v8255
      %v8322 = vunpack.c.l.b16 %v8256
      %v8323 = vunpack.c.h.b16 %v8256
      %v8324 = vunpack.c.l.b16 %v8257
      %v8325 = vunpack.c.h.b16 %v8257
      %v8326 = vunpack.c.l.b16 %v8258
      %v8327 = vunpack.c.h.b16 %v8258
      %v8328 = vunpack.c.l.b16 %v8259
      %v8329 = vunpack.c.h.b16 %v8259
      %v8330 = vunpack.c.l.b16 %v8260
      %v8331 = vunpack.c.h.b16 %v8260
      %v8332 = vunpack.c.l.b16 %v8261
      %v8333 = vunpack.c.h.b16 %v8261
      %v8334 = vunpack.c.l.b16 %v8262
      %v8335 = vunpack.c.h.b16 %v8262
      %v8336 = vunpack.c.l.b16 %v8263
      %v8337 = vunpack.c.h.b16 %v8263
      %v8338 = vunpack.c.l.b16 %v8264
      %v8339 = vunpack.c.h.b16 %v8264
      %v8340 = vunpack.c.l.b16 %v8265
      %v8341 = vunpack.c.h.b16 %v8265
      %v8342 = vunpack.c.l.b16 %v8266
      %v8343 = vunpack.c.h.b16 %v8266
      %v8344 = vunpack.c.l.b16 %v8267
      %v8345 = vunpack.c.h.b16 %v8267
      %v8346 = vunpack.c.l.b16 %v8268
      %v8347 = vunpack.c.h.b16 %v8268
      %v8348 = vunpack.c.l.b16 %v8269
      %v8349 = vunpack.c.h.b16 %v8269
      %v8350 = vunpack.c.l.b16 %v8270
      %v8351 = vunpack.c.h.b16 %v8270
      %v8352 = vunpack.c.l.b16 %v8271
      %v8353 = vunpack.c.h.b16 %v8271
      %v8354 = vunpack.c.l.b16 %v8272
      %v8355 = vunpack.c.h.b16 %v8272
      %v8356 = vunpack.c.l.b16 %v8273
      %v8357 = vunpack.c.h.b16 %v8273
      %v8358 = vunpack.c.l.b16 %v8274
      %v8359 = vunpack.c.h.b16 %v8274
      %v8360 = vunpack.c.l.b16 %v8275
      %v8361 = vunpack.c.h.b16 %v8275
      %v8362 = vunpack.c.l.b16 %v8276
      %v8363 = vunpack.c.h.b16 %v8276
      %v8364 = vunpack.c.l.b16 %v8277
      %v8365 = vunpack.c.h.b16 %v8277
      %v8366 = vunpack.c.l.b16 %v8278
      %v8367 = vunpack.c.h.b16 %v8278
      %v8368 = vunpack.c.l.b16 %v8279
      %v8369 = vunpack.c.h.b16 %v8279
      %v8370 = vunpack.c.l.b16 %v8280
      %v8371 = vunpack.c.h.b16 %v8280
      %v8372 = vunpack.c.l.b16 %v8281
      %v8373 = vunpack.c.h.b16 %v8281
      %v8374 = vunpack.c.l.b16 %v8282
      %v8375 = vunpack.c.h.b16 %v8282
      %v8376 = vunpack.c.l.b16 %v8283
      %v8377 = vunpack.c.h.b16 %v8283
      %v8378 = vunpack.c.l.b16 %v8284
      %v8379 = vunpack.c.h.b16 %v8284
      %v8380 = vunpack.c.l.b16 %v8285
      %v8381 = vunpack.c.h.b16 %v8285
      %v8382 = vpack.c.b16 %v8320, %v8318
      %v8383 = vpack.c.b16 %v8321, %v8319
      %v8384 = vpack.c.b16 %v8324, %v8322
      %v8385 = vpack.c.b16 %v8325, %v8323
      %v8386 = vpack.c.b16 %v8328, %v8326
      %v8387 = vpack.c.b16 %v8329, %v8327
      %v8388 = vpack.c.b16 %v8332, %v8330
      %v8389 = vpack.c.b16 %v8333, %v8331
      %v8390 = vpack.c.b16 %v8336, %v8334
      %v8391 = vpack.c.b16 %v8337, %v8335
      %v8392 = vpack.c.b16 %v8340, %v8338
      %v8393 = vpack.c.b16 %v8341, %v8339
      %v8394 = vpack.c.b16 %v8344, %v8342
      %v8395 = vpack.c.b16 %v8345, %v8343
      %v8396 = vpack.c.b16 %v8348, %v8346
      %v8397 = vpack.c.b16 %v8349, %v8347
      %v8398 = vpack.c.b16 %v8352, %v8350
      %v8399 = vpack.c.b16 %v8353, %v8351
      %v8400 = vpack.c.b16 %v8356, %v8354
      %v8401 = vpack.c.b16 %v8357, %v8355
      %v8402 = vpack.c.b16 %v8360, %v8358
      %v8403 = vpack.c.b16 %v8361, %v8359
      %v8404 = vpack.c.b16 %v8364, %v8362
      %v8405 = vpack.c.b16 %v8365, %v8363
      %v8406 = vpack.c.b16 %v8368, %v8366
      %v8407 = vpack.c.b16 %v8369, %v8367
      %v8408 = vpack.c.b16 %v8372, %v8370
      %v8409 = vpack.c.b16 %v8373, %v8371
      %v8410 = vpack.c.b16 %v8376, %v8374
      %v8411 = vpack.c.b16 %v8377, %v8375
      %v8412 = vpack.c.b16 %v8380, %v8378
      %v8413 = vpack.c.b16 %v8381, %v8379
      %8446 = vmatprep.subr.bf16.mxu0 %v8383
      %8447 = vmatpush1.bf16.msra.mxu0 %v8382
      %8448 = vmatprep.subr.bf16.mxu0 %v8385
      %8449 = vmatpush1.bf16.msra.mxu0 %v8384
      %8450 = vmatprep.subr.bf16.mxu0 %v8387
      %8451 = vmatpush1.bf16.msra.mxu0 %v8386
      %8452 = vmatprep.subr.bf16.mxu0 %v8389
      %8453 = vmatpush1.bf16.msra.mxu0 %v8388
      %8454 = vmatprep.subr.bf16.mxu0 %v8391
      %8455 = vmatpush1.bf16.msra.mxu0 %v8390
      %8456 = vmatprep.subr.bf16.mxu0 %v8393
      %8457 = vmatpush1.bf16.msra.mxu0 %v8392
      %8458 = vmatprep.subr.bf16.mxu0 %v8395
      %8459 = vmatpush1.bf16.msra.mxu0 %v8394
      %8460 = vmatprep.subr.bf16.mxu0 %v8397
      %8461 = vmatpush1.bf16.msra.mxu0 %v8396
      %8462 = vmatprep.subr.bf16.mxu0 %v8399
      %8463 = vmatpush1.bf16.msra.mxu0 %v8398
      %8464 = vmatprep.subr.bf16.mxu0 %v8401
      %8465 = vmatpush1.bf16.msra.mxu0 %v8400
      %8466 = vmatprep.subr.bf16.mxu0 %v8403
      %8467 = vmatpush1.bf16.msra.mxu0 %v8402
      %8468 = vmatprep.subr.bf16.mxu0 %v8405
      %8469 = vmatpush1.bf16.msra.mxu0 %v8404
      %8470 = vmatprep.subr.bf16.mxu0 %v8407
      %8471 = vmatpush1.bf16.msra.mxu0 %v8406
      %8472 = vmatprep.subr.bf16.mxu0 %v8409
      %8473 = vmatpush1.bf16.msra.mxu0 %v8408
      %8474 = vmatprep.subr.bf16.mxu0 %v8411
      %8475 = vmatpush1.bf16.msra.mxu0 %v8410
      %8476 = vmatprep.subr.bf16.mxu0 %v8413
      %8477 = vmatpush1.bf16.msra.mxu0 %v8412
      %8478 = vmatprep.mubr.bf16.mxu0 %v5105
      %8479 = vmatmul.mubr.bf16.gmra.mrb[0].mxu0 %v5104
      %v8480 = vpop.f32.mrb[0].mxu0
      %v8481 = vadd.f32 0.0, %v8480
      %v8482 = vpop.f32.mrb[0].mxu0
      %v8483 = vadd.f32 0.0, %v8482
      %v8484 = vpop.f32.mrb[0].mxu0
      %v8485 = vadd.f32 0.0, %v8484
      %v8486 = vpop.f32.mrb[0].mxu0
      %v8487 = vadd.f32 0.0, %v8486
      %8488 = vmatprep.mubr.bf16.mxu0 %v5107
      %8489 = vmatmul.mubr.bf16.gmra.mrb[0].mxu0 %v5106
      %v8490 = vpop.f32.mrb[0].mxu0
      %v8491 = vadd.f32 0.0, %v8490
      %v8492 = vpop.f32.mrb[0].mxu0
      %v8493 = vadd.f32 0.0, %v8492
      %v8494 = vpop.f32.mrb[0].mxu0
      %v8495 = vadd.f32 0.0, %v8494
      %v8496 = vpop.f32.mrb[0].mxu0
      %v8497 = vadd.f32 0.0, %v8496
      %8498 = vmatprep.mubr.bf16.mxu0 %v5109
      %8499 = vmatmul.mubr.bf16.gmra.mrb[0].mxu0 %v5108
      %v8500 = vpop.f32.mrb[0].mxu0
      %v8501 = vadd.f32 0.0, %v8500
      %v8502 = vpop.f32.mrb[0].mxu0
      %v8503 = vadd.f32 0.0, %v8502
      %v8504 = vpop.f32.mrb[0].mxu0
      %v8505 = vadd.f32 0.0, %v8504
      %v8506 = vpop.f32.mrb[0].mxu0
      %v8507 = vadd.f32 0.0, %v8506
      %8508 = vmatprep.mubr.bf16.mxu0 %v5111
      %8509 = vmatmul.mubr.bf16.gmra.mrb[0].mxu0 %v5110
      %v8510 = vpop.f32.mrb[0].mxu0
      %v8511 = vadd.f32 0.0, %v8510
      %v8512 = vpop.f32.mrb[0].mxu0
      %v8513 = vadd.f32 0.0, %v8512
      %v8514 = vpop.f32.mrb[0].mxu0
      %v8515 = vadd.f32 0.0, %v8514
      %v8516 = vpop.f32.mrb[0].mxu0
      %v8517 = vadd.f32 0.0, %v8516
      %8518 = vmatprep.mubr.bf16.mxu0 %v5113
      %8519 = vmatmul.mubr.bf16.gmra.mrb[0].mxu0 %v5112
      %v8520 = vpop.f32.mrb[0].mxu0
      %v8521 = vadd.f32 0.0, %v8520
      %v8522 = vpop.f32.mrb[0].mxu0
      %v8523 = vadd.f32 0.0, %v8522
      %v8524 = vpop.f32.mrb[0].mxu0
      %v8525 = vadd.f32 0.0, %v8524
      %v8526 = vpop.f32.mrb[0].mxu0
      %v8527 = vadd.f32 0.0, %v8526
      %8528 = vmatprep.mubr.bf16.mxu0 %v5115
      %8529 = vmatmul.mubr.bf16.gmra.mrb[0].mxu0 %v5114
      %v8530 = vpop.f32.mrb[0].mxu0
      %v8531 = vadd.f32 0.0, %v8530
      %v8532 = vpop.f32.mrb[0].mxu0
      %v8533 = vadd.f32 0.0, %v8532
      %v8534 = vpop.f32.mrb[0].mxu0
      %v8535 = vadd.f32 0.0, %v8534
      %v8536 = vpop.f32.mrb[0].mxu0
      %v8537 = vadd.f32 0.0, %v8536
      %8538 = vmatprep.mubr.bf16.mxu0 %v5117
      %8539 = vmatmul.mubr.bf16.gmra.mrb[0].mxu0 %v5116
      %v8540 = vpop.f32.mrb[0].mxu0
      %v8541 = vadd.f32 0.0, %v8540
      %v8542 = vpop.f32.mrb[0].mxu0
      %v8543 = vadd.f32 0.0, %v8542
      %v8544 = vpop.f32.mrb[0].mxu0
      %v8545 = vadd.f32 0.0, %v8544
      %v8546 = vpop.f32.mrb[0].mxu0
      %v8547 = vadd.f32 0.0, %v8546
      %8548 = vmatprep.mubr.bf16.mxu0 %v5119
      %8549 = vmatmul.mubr.bf16.gmra.mrb[0].mxu0 %v5118
      %v8550 = vpop.f32.mrb[0].mxu0
      %v8551 = vadd.f32 0.0, %v8550
      %v8552 = vpop.f32.mrb[0].mxu0
      %v8553 = vadd.f32 0.0, %v8552
      %v8554 = vpop.f32.mrb[0].mxu0
      %v8555 = vadd.f32 0.0, %v8554
      %v8556 = vpop.f32.mrb[0].mxu0
      %v8557 = vadd.f32 0.0, %v8556
      %8558 = vmatprep.mubr.bf16.mxu0 %v5121
      %8559 = vmatmul.mubr.bf16.gmra.mrb[0].mxu0 %v5120
      %v8560 = vpop.f32.mrb[0].mxu0
      %v8561 = vadd.f32 0.0, %v8560
      %v8562 = vpop.f32.mrb[0].mxu0
      %v8563 = vadd.f32 0.0, %v8562
      %v8564 = vpop.f32.mrb[0].mxu0
      %v8565 = vadd.f32 0.0, %v8564
      %v8566 = vpop.f32.mrb[0].mxu0
      %v8567 = vadd.f32 0.0, %v8566
      %8568 = vmatprep.mubr.bf16.mxu0 %v5123
      %8569 = vmatmul.mubr.bf16.gmra.mrb[0].mxu0 %v5122
      %v8570 = vpop.f32.mrb[0].mxu0
      %v8571 = vadd.f32 0.0, %v8570
      %v8572 = vpop.f32.mrb[0].mxu0
      %v8573 = vadd.f32 0.0, %v8572
      %v8574 = vpop.f32.mrb[0].mxu0
      %v8575 = vadd.f32 0.0, %v8574
      %v8576 = vpop.f32.mrb[0].mxu0
      %v8577 = vadd.f32 0.0, %v8576
      %8578 = vmatprep.mubr.bf16.mxu0 %v5125
      %8579 = vmatmul.mubr.bf16.gmra.mrb[0].mxu0 %v5124
      %v8580 = vpop.f32.mrb[0].mxu0
      %v8581 = vadd.f32 0.0, %v8580
      %v8582 = vpop.f32.mrb[0].mxu0
      %v8583 = vadd.f32 0.0, %v8582
      %v8584 = vpop.f32.mrb[0].mxu0
      %v8585 = vadd.f32 0.0, %v8584
      %v8586 = vpop.f32.mrb[0].mxu0
      %v8587 = vadd.f32 0.0, %v8586
      %8588 = vmatprep.mubr.bf16.mxu0 %v5127
      %8589 = vmatmul.mubr.bf16.gmra.mrb[0].mxu0 %v5126
      %v8590 = vpop.f32.mrb[0].mxu0
      %v8591 = vadd.f32 0.0, %v8590
      %v8592 = vpop.f32.mrb[0].mxu0
      %v8593 = vadd.f32 0.0, %v8592
      %v8594 = vpop.f32.mrb[0].mxu0
      %v8595 = vadd.f32 0.0, %v8594
      %v8596 = vpop.f32.mrb[0].mxu0
      %v8597 = vadd.f32 0.0, %v8596
      %8598 = vmatprep.mubr.bf16.mxu0 %v5129
      %8599 = vmatmul.mubr.bf16.gmra.mrb[0].mxu0 %v5128
      %v8600 = vpop.f32.mrb[0].mxu0
      %v8601 = vadd.f32 0.0, %v8600
      %v8602 = vpop.f32.mrb[0].mxu0
      %v8603 = vadd.f32 0.0, %v8602
      %v8604 = vpop.f32.mrb[0].mxu0
      %v8605 = vadd.f32 0.0, %v8604
      %v8606 = vpop.f32.mrb[0].mxu0
      %v8607 = vadd.f32 0.0, %v8606
      %8608 = vmatprep.mubr.bf16.mxu0 %v5131
      %8609 = vmatmul.mubr.bf16.gmra.mrb[0].mxu0 %v5130
      %v8610 = vpop.f32.mrb[0].mxu0
      %v8611 = vadd.f32 0.0, %v8610
      %v8612 = vpop.f32.mrb[0].mxu0
      %v8613 = vadd.f32 0.0, %v8612
      %v8614 = vpop.f32.mrb[0].mxu0
      %v8615 = vadd.f32 0.0, %v8614
      %v8616 = vpop.f32.mrb[0].mxu0
      %v8617 = vadd.f32 0.0, %v8616
      %8618 = vmatprep.mubr.bf16.mxu0 %v5133
      %8619 = vmatmul.mubr.bf16.gmra.mrb[0].mxu0 %v5132
      %v8620 = vpop.f32.mrb[0].mxu0
      %v8621 = vadd.f32 0.0, %v8620
      %v8622 = vpop.f32.mrb[0].mxu0
      %v8623 = vadd.f32 0.0, %v8622
      %v8624 = vpop.f32.mrb[0].mxu0
      %v8625 = vadd.f32 0.0, %v8624
      %v8626 = vpop.f32.mrb[0].mxu0
      %v8627 = vadd.f32 0.0, %v8626
      %8628 = vmatprep.mubr.bf16.mxu0 %v5135
      %8629 = vmatmul.mubr.bf16.gmra.mrb[0].mxu0 %v5134
      %v8630 = vpop.f32.mrb[0].mxu0
      %v8631 = vadd.f32 0.0, %v8630
      %v8632 = vpop.f32.mrb[0].mxu0
      %v8633 = vadd.f32 0.0, %v8632
      %v8634 = vpop.f32.mrb[0].mxu0
      %v8635 = vadd.f32 0.0, %v8634
      %v8636 = vpop.f32.mrb[0].mxu0
      %v8637 = vadd.f32 0.0, %v8636
      %8638 = vdwg.mxu0
      %v8671 = vunpack.c.l.b16 %v8221
      %v8672 = vunpack.c.h.b16 %v8221
      %v8673 = vunpack.c.l.b16 %v8222
      %v8674 = vunpack.c.h.b16 %v8222
      %v8675 = vunpack.c.l.b16 %v8223
      %v8676 = vunpack.c.h.b16 %v8223
      %v8677 = vunpack.c.l.b16 %v8224
      %v8678 = vunpack.c.h.b16 %v8224
      %v8679 = vunpack.c.l.b16 %v8225
      %v8680 = vunpack.c.h.b16 %v8225
      %v8681 = vunpack.c.l.b16 %v8226
      %v8682 = vunpack.c.h.b16 %v8226
      %v8683 = vunpack.c.l.b16 %v8227
      %v8684 = vunpack.c.h.b16 %v8227
      %v8685 = vunpack.c.l.b16 %v8228
      %v8686 = vunpack.c.h.b16 %v8228
      %v8687 = vunpack.c.l.b16 %v8229
      %v8688 = vunpack.c.h.b16 %v8229
      %v8689 = vunpack.c.l.b16 %v8230
      %v8690 = vunpack.c.h.b16 %v8230
      %v8691 = vunpack.c.l.b16 %v8231
      %v8692 = vunpack.c.h.b16 %v8231
      %v8693 = vunpack.c.l.b16 %v8232
      %v8694 = vunpack.c.h.b16 %v8232
      %v8695 = vunpack.c.l.b16 %v8233
      %v8696 = vunpack.c.h.b16 %v8233
      %v8697 = vunpack.c.l.b16 %v8234
      %v8698 = vunpack.c.h.b16 %v8234
      %v8699 = vunpack.c.l.b16 %v8235
      %v8700 = vunpack.c.h.b16 %v8235
      %v8701 = vunpack.c.l.b16 %v8236
      %v8702 = vunpack.c.h.b16 %v8236
      %v8703 = vunpack.c.l.b16 %v8237
      %v8704 = vunpack.c.h.b16 %v8237
      %v8705 = vunpack.c.l.b16 %v8238
      %v8706 = vunpack.c.h.b16 %v8238
      %v8707 = vunpack.c.l.b16 %v8239
      %v8708 = vunpack.c.h.b16 %v8239
      %v8709 = vunpack.c.l.b16 %v8240
      %v8710 = vunpack.c.h.b16 %v8240
      %v8711 = vunpack.c.l.b16 %v8241
      %v8712 = vunpack.c.h.b16 %v8241
      %v8713 = vunpack.c.l.b16 %v8242
      %v8714 = vunpack.c.h.b16 %v8242
      %v8715 = vunpack.c.l.b16 %v8243
      %v8716 = vunpack.c.h.b16 %v8243
      %v8717 = vunpack.c.l.b16 %v8244
      %v8718 = vunpack.c.h.b16 %v8244
      %v8719 = vunpack.c.l.b16 %v8245
      %v8720 = vunpack.c.h.b16 %v8245
      %v8721 = vunpack.c.l.b16 %v8246
      %v8722 = vunpack.c.h.b16 %v8246
      %v8723 = vunpack.c.l.b16 %v8247
      %v8724 = vunpack.c.h.b16 %v8247
      %v8725 = vunpack.c.l.b16 %v8248
      %v8726 = vunpack.c.h.b16 %v8248
      %v8727 = vunpack.c.l.b16 %v8249
      %v8728 = vunpack.c.h.b16 %v8249
      %v8729 = vunpack.c.l.b16 %v8250
      %v8730 = vunpack.c.h.b16 %v8250
      %v8731 = vunpack.c.l.b16 %v8251
      %v8732 = vunpack.c.h.b16 %v8251
      %v8733 = vunpack.c.l.b16 %v8252
      %v8734 = vunpack.c.h.b16 %v8252
      %v8735 = vpack.c.b16 %v8673, %v8671
      %v8736 = vpack.c.b16 %v8674, %v8672
      %v8737 = vpack.c.b16 %v8677, %v8675
      %v8738 = vpack.c.b16 %v8678, %v8676
      %v8739 = vpack.c.b16 %v8681, %v8679
      %v8740 = vpack.c.b16 %v8682, %v8680
      %v8741 = vpack.c.b16 %v8685, %v8683
      %v8742 = vpack.c.b16 %v8686, %v8684
      %v8743 = vpack.c.b16 %v8689, %v8687
      %v8744 = vpack.c.b16 %v8690, %v8688
      %v8745 = vpack.c.b16 %v8693, %v8691
      %v8746 = vpack.c.b16 %v8694, %v8692
      %v8747 = vpack.c.b16 %v8697, %v8695
      %v8748 = vpack.c.b16 %v8698, %v8696
      %v8749 = vpack.c.b16 %v8701, %v8699
      %v8750 = vpack.c.b16 %v8702, %v8700
      %v8751 = vpack.c.b16 %v8705, %v8703
      %v8752 = vpack.c.b16 %v8706, %v8704
      %v8753 = vpack.c.b16 %v8709, %v8707
      %v8754 = vpack.c.b16 %v8710, %v8708
      %v8755 = vpack.c.b16 %v8713, %v8711
      %v8756 = vpack.c.b16 %v8714, %v8712
      %v8757 = vpack.c.b16 %v8717, %v8715
      %v8758 = vpack.c.b16 %v8718, %v8716
      %v8759 = vpack.c.b16 %v8721, %v8719
      %v8760 = vpack.c.b16 %v8722, %v8720
      %v8761 = vpack.c.b16 %v8725, %v8723
      %v8762 = vpack.c.b16 %v8726, %v8724
      %v8763 = vpack.c.b16 %v8729, %v8727
      %v8764 = vpack.c.b16 %v8730, %v8728
      %v8765 = vpack.c.b16 %v8733, %v8731
      %v8766 = vpack.c.b16 %v8734, %v8732
      %8799 = vmatprep.subr.bf16.mxu0 %v8736
      %8800 = vmatpush1.bf16.msra.mxu0 %v8735
      %8801 = vmatprep.subr.bf16.mxu0 %v8738
      %8802 = vmatpush1.bf16.msra.mxu0 %v8737
      %8803 = vmatprep.subr.bf16.mxu0 %v8740
      %8804 = vmatpush1.bf16.msra.mxu0 %v8739
      %8805 = vmatprep.subr.bf16.mxu0 %v8742
      %8806 = vmatpush1.bf16.msra.mxu0 %v8741
      %8807 = vmatprep.subr.bf16.mxu0 %v8744
      %8808 = vmatpush1.bf16.msra.mxu0 %v8743
      %8809 = vmatprep.subr.bf16.mxu0 %v8746
      %8810 = vmatpush1.bf16.msra.mxu0 %v8745
      %8811 = vmatprep.subr.bf16.mxu0 %v8748
      %8812 = vmatpush1.bf16.msra.mxu0 %v8747
      %8813 = vmatprep.subr.bf16.mxu0 %v8750
      %8814 = vmatpush1.bf16.msra.mxu0 %v8749
      %8815 = vmatprep.subr.bf16.mxu0 %v8752
      %8816 = vmatpush1.bf16.msra.mxu0 %v8751
      %8817 = vmatprep.subr.bf16.mxu0 %v8754
      %8818 = vmatpush1.bf16.msra.mxu0 %v8753
      %8819 = vmatprep.subr.bf16.mxu0 %v8756
      %8820 = vmatpush1.bf16.msra.mxu0 %v8755
      %8821 = vmatprep.subr.bf16.mxu0 %v8758
      %8822 = vmatpush1.bf16.msra.mxu0 %v8757
      %8823 = vmatprep.subr.bf16.mxu0 %v8760
      %8824 = vmatpush1.bf16.msra.mxu0 %v8759
      %8825 = vmatprep.subr.bf16.mxu0 %v8762
      %8826 = vmatpush1.bf16.msra.mxu0 %v8761
      %8827 = vmatprep.subr.bf16.mxu0 %v8764
      %8828 = vmatpush1.bf16.msra.mxu0 %v8763
      %8829 = vmatprep.subr.bf16.mxu0 %v8766
      %8830 = vmatpush1.bf16.msra.mxu0 %v8765
      %8831 = vmatprep.mubr.bf16.mxu0 %v5073
      %8832 = vmatmul.mubr.bf16.gmra.mrb[0].mxu0 %v5072
      %v8833 = vpop.f32.mrb[0].mxu0
      %v8834 = vadd.f32 %v8481, %v8833
      %v8835 = vpop.f32.mrb[0].mxu0
      %v8836 = vadd.f32 %v8483, %v8835
      %v8837 = vpop.f32.mrb[0].mxu0
      %v8838 = vadd.f32 %v8485, %v8837
      %v8839 = vpop.f32.mrb[0].mxu0
      %v8840 = vadd.f32 %v8487, %v8839
      %8841 = vmatprep.mubr.bf16.mxu0 %v5075
      %8842 = vmatmul.mubr.bf16.gmra.mrb[0].mxu0 %v5074
      %v8843 = vpop.f32.mrb[0].mxu0
      %v8844 = vadd.f32 %v8491, %v8843
      %v8845 = vpop.f32.mrb[0].mxu0
      %v8846 = vadd.f32 %v8493, %v8845
      %v8847 = vpop.f32.mrb[0].mxu0
      %v8848 = vadd.f32 %v8495, %v8847
      %v8849 = vpop.f32.mrb[0].mxu0
      %v8850 = vadd.f32 %v8497, %v8849
      %8851 = vmatprep.mubr.bf16.mxu0 %v5077
      %8852 = vmatmul.mubr.bf16.gmra.mrb[0].mxu0 %v5076
      %v8853 = vpop.f32.mrb[0].mxu0
      %v8854 = vadd.f32 %v8501, %v8853
      %v8855 = vpop.f32.mrb[0].mxu0
      %v8856 = vadd.f32 %v8503, %v8855
      %v8857 = vpop.f32.mrb[0].mxu0
      %v8858 = vadd.f32 %v8505, %v8857
      %v8859 = vpop.f32.mrb[0].mxu0
      %v8860 = vadd.f32 %v8507, %v8859
      %8861 = vmatprep.mubr.bf16.mxu0 %v5079
      %8862 = vmatmul.mubr.bf16.gmra.mrb[0].mxu0 %v5078
      %v8863 = vpop.f32.mrb[0].mxu0
      %v8864 = vadd.f32 %v8511, %v8863
      %v8865 = vpop.f32.mrb[0].mxu0
      %v8866 = vadd.f32 %v8513, %v8865
      %v8867 = vpop.f32.mrb[0].mxu0
      %v8868 = vadd.f32 %v8515, %v8867
      %v8869 = vpop.f32.mrb[0].mxu0
      %v8870 = vadd.f32 %v8517, %v8869
      %8871 = vmatprep.mubr.bf16.mxu0 %v5081
      %8872 = vmatmul.mubr.bf16.gmra.mrb[0].mxu0 %v5080
      %v8873 = vpop.f32.mrb[0].mxu0
      %v8874 = vadd.f32 %v8521, %v8873
      %v8875 = vpop.f32.mrb[0].mxu0
      %v8876 = vadd.f32 %v8523, %v8875
      %v8877 = vpop.f32.mrb[0].mxu0
      %v8878 = vadd.f32 %v8525, %v8877
      %v8879 = vpop.f32.mrb[0].mxu0
      %v8880 = vadd.f32 %v8527, %v8879
      %8881 = vmatprep.mubr.bf16.mxu0 %v5083
      %8882 = vmatmul.mubr.bf16.gmra.mrb[0].mxu0 %v5082
      %v8883 = vpop.f32.mrb[0].mxu0
      %v8884 = vadd.f32 %v8531, %v8883
      %v8885 = vpop.f32.mrb[0].mxu0
      %v8886 = vadd.f32 %v8533, %v8885
      %v8887 = vpop.f32.mrb[0].mxu0
      %v8888 = vadd.f32 %v8535, %v8887
      %v8889 = vpop.f32.mrb[0].mxu0
      %v8890 = vadd.f32 %v8537, %v8889
      %8891 = vmatprep.mubr.bf16.mxu0 %v5085
      %8892 = vmatmul.mubr.bf16.gmra.mrb[0].mxu0 %v5084
      %v8893 = vpop.f32.mrb[0].mxu0
      %v8894 = vadd.f32 %v8541, %v8893
      %v8895 = vpop.f32.mrb[0].mxu0
      %v8896 = vadd.f32 %v8543, %v8895
      %v8897 = vpop.f32.mrb[0].mxu0
      %v8898 = vadd.f32 %v8545, %v8897
      %v8899 = vpop.f32.mrb[0].mxu0
      %v8900 = vadd.f32 %v8547, %v8899
      %8901 = vmatprep.mubr.bf16.mxu0 %v5087
      %8902 = vmatmul.mubr.bf16.gmra.mrb[0].mxu0 %v5086
      %v8903 = vpop.f32.mrb[0].mxu0
      %v8904 = vadd.f32 %v8551, %v8903
      %v8905 = vpop.f32.mrb[0].mxu0
      %v8906 = vadd.f32 %v8553, %v8905
      %v8907 = vpop.f32.mrb[0].mxu0
      %v8908 = vadd.f32 %v8555, %v8907
      %v8909 = vpop.f32.mrb[0].mxu0
      %v8910 = vadd.f32 %v8557, %v8909
      %8911 = vmatprep.mubr.bf16.mxu0 %v5089
      %8912 = vmatmul.mubr.bf16.gmra.mrb[0].mxu0 %v5088
      %v8913 = vpop.f32.mrb[0].mxu0
      %v8914 = vadd.f32 %v8561, %v8913
      %v8915 = vpop.f32.mrb[0].mxu0
      %v8916 = vadd.f32 %v8563, %v8915
      %v8917 = vpop.f32.mrb[0].mxu0
      %v8918 = vadd.f32 %v8565, %v8917
      %v8919 = vpop.f32.mrb[0].mxu0
      %v8920 = vadd.f32 %v8567, %v8919
      %8921 = vmatprep.mubr.bf16.mxu0 %v5091
      %8922 = vmatmul.mubr.bf16.gmra.mrb[0].mxu0 %v5090
      %v8923 = vpop.f32.mrb[0].mxu0
      %v8924 = vadd.f32 %v8571, %v8923
      %v8925 = vpop.f32.mrb[0].mxu0
      %v8926 = vadd.f32 %v8573, %v8925
      %v8927 = vpop.f32.mrb[0].mxu0
      %v8928 = vadd.f32 %v8575, %v8927
      %v8929 = vpop.f32.mrb[0].mxu0
      %v8930 = vadd.f32 %v8577, %v8929
      %8931 = vmatprep.mubr.bf16.mxu0 %v5093
      %8932 = vmatmul.mubr.bf16.gmra.mrb[0].mxu0 %v5092
      %v8933 = vpop.f32.mrb[0].mxu0
      %v8934 = vadd.f32 %v8581, %v8933
      %v8935 = vpop.f32.mrb[0].mxu0
      %v8936 = vadd.f32 %v8583, %v8935
      %v8937 = vpop.f32.mrb[0].mxu0
      %v8938 = vadd.f32 %v8585, %v8937
      %v8939 = vpop.f32.mrb[0].mxu0
      %v8940 = vadd.f32 %v8587, %v8939
      %8941 = vmatprep.mubr.bf16.mxu0 %v5095
      %8942 = vmatmul.mubr.bf16.gmra.mrb[0].mxu0 %v5094
      %v8943 = vpop.f32.mrb[0].mxu0
      %v8944 = vadd.f32 %v8591, %v8943
      %v8945 = vpop.f32.mrb[0].mxu0
      %v8946 = vadd.f32 %v8593, %v8945
      %v8947 = vpop.f32.mrb[0].mxu0
      %v8948 = vadd.f32 %v8595, %v8947
      %v8949 = vpop.f32.mrb[0].mxu0
      %v8950 = vadd.f32 %v8597, %v8949
      %8951 = vmatprep.mubr.bf16.mxu0 %v5097
      %8952 = vmatmul.mubr.bf16.gmra.mrb[0].mxu0 %v5096
      %v8953 = vpop.f32.mrb[0].mxu0
      %v8954 = vadd.f32 %v8601, %v8953
      %v8955 = vpop.f32.mrb[0].mxu0
      %v8956 = vadd.f32 %v8603, %v8955
      %v8957 = vpop.f32.mrb[0].mxu0
      %v8958 = vadd.f32 %v8605, %v8957
      %v8959 = vpop.f32.mrb[0].mxu0
      %v8960 = vadd.f32 %v8607, %v8959
      %8961 = vmatprep.mubr.bf16.mxu0 %v5099
      %8962 = vmatmul.mubr.bf16.gmra.mrb[0].mxu0 %v5098
      %v8963 = vpop.f32.mrb[0].mxu0
      %v8964 = vadd.f32 %v8611, %v8963
      %v8965 = vpop.f32.mrb[0].mxu0
      %v8966 = vadd.f32 %v8613, %v8965
      %v8967 = vpop.f32.mrb[0].mxu0
      %v8968 = vadd.f32 %v8615, %v8967
      %v8969 = vpop.f32.mrb[0].mxu0
      %v8970 = vadd.f32 %v8617, %v8969
      %8971 = vmatprep.mubr.bf16.mxu0 %v5101
      %8972 = vmatmul.mubr.bf16.gmra.mrb[0].mxu0 %v5100
      %v8973 = vpop.f32.mrb[0].mxu0
      %v8974 = vadd.f32 %v8621, %v8973
      %v8975 = vpop.f32.mrb[0].mxu0
      %v8976 = vadd.f32 %v8623, %v8975
      %v8977 = vpop.f32.mrb[0].mxu0
      %v8978 = vadd.f32 %v8625, %v8977
      %v8979 = vpop.f32.mrb[0].mxu0
      %v8980 = vadd.f32 %v8627, %v8979
      %8981 = vmatprep.mubr.bf16.mxu0 %v5103
      %8982 = vmatmul.mubr.bf16.gmra.mrb[0].mxu0 %v5102
      %v8983 = vpop.f32.mrb[0].mxu0
      %v8984 = vadd.f32 %v8631, %v8983
      %v8985 = vpop.f32.mrb[0].mxu0
      %v8986 = vadd.f32 %v8633, %v8985
      %v8987 = vpop.f32.mrb[0].mxu0
      %v8988 = vadd.f32 %v8635, %v8987
      %v8989 = vpop.f32.mrb[0].mxu0
      %v8990 = vadd.f32 %v8637, %v8989
      %8991 = vdwg.mxu0
      %s8992 = scalar_lea.vmem %s3, 2048
      %v8993 = vld [vmem:[%s8992] sm:$0xff]
      %v8994 = vld [vmem:[%s8992 + $0x8] sm:$0xff]
      %v8995 = vld [vmem:[%s8992 + $0x10] sm:$0xff]
      %v8996 = vld [vmem:[%s8992 + $0x18] sm:$0xff]
      %v8997 = vld [vmem:[%s8992 + $0x20] sm:$0xff]
      %v8998 = vld [vmem:[%s8992 + $0x28] sm:$0xff]
      %v8999 = vld [vmem:[%s8992 + $0x30] sm:$0xff]
      %v9000 = vld [vmem:[%s8992 + $0x38] sm:$0xff]
      %v9001 = vld [vmem:[%s8992 + $0x40] sm:$0xff]
      %v9002 = vld [vmem:[%s8992 + $0x48] sm:$0xff]
      %v9003 = vld [vmem:[%s8992 + $0x50] sm:$0xff]
      %v9004 = vld [vmem:[%s8992 + $0x58] sm:$0xff]
      %v9005 = vld [vmem:[%s8992 + $0x60] sm:$0xff]
      %v9006 = vld [vmem:[%s8992 + $0x68] sm:$0xff]
      %v9007 = vld [vmem:[%s8992 + $0x70] sm:$0xff]
      %v9008 = vld [vmem:[%s8992 + $0x78] sm:$0xff]
      %v9009 = vld [vmem:[%s8992 + $0x80] sm:$0xff]
      %v9010 = vld [vmem:[%s8992 + $0x88] sm:$0xff]
      %v9011 = vld [vmem:[%s8992 + $0x90] sm:$0xff]
      %v9012 = vld [vmem:[%s8992 + $0x98] sm:$0xff]
      %v9013 = vld [vmem:[%s8992 + $0xa0] sm:$0xff]
      %v9014 = vld [vmem:[%s8992 + $0xa8] sm:$0xff]
      %v9015 = vld [vmem:[%s8992 + $0xb0] sm:$0xff]
      %v9016 = vld [vmem:[%s8992 + $0xb8] sm:$0xff]
      %v9017 = vld [vmem:[%s8992 + $0xc0] sm:$0xff]
      %v9018 = vld [vmem:[%s8992 + $0xc8] sm:$0xff]
      %v9019 = vld [vmem:[%s8992 + $0xd0] sm:$0xff]
      %v9020 = vld [vmem:[%s8992 + $0xd8] sm:$0xff]
      %v9021 = vld [vmem:[%s8992 + $0xe0] sm:$0xff]
      %v9022 = vld [vmem:[%s8992 + $0xe8] sm:$0xff]
      %v9023 = vld [vmem:[%s8992 + $0xf0] sm:$0xff]
      %v9024 = vld [vmem:[%s8992 + $0xf8] sm:$0xff]
      %v9057 = vunpack.c.l.b16 %v8993
      %v9058 = vunpack.c.h.b16 %v8993
      %v9059 = vunpack.c.l.b16 %v8994
      %v9060 = vunpack.c.h.b16 %v8994
      %v9061 = vunpack.c.l.b16 %v8995
      %v9062 = vunpack.c.h.b16 %v8995
      %v9063 = vunpack.c.l.b16 %v8996
      %v9064 = vunpack.c.h.b16 %v8996
      %v9065 = vunpack.c.l.b16 %v8997
      %v9066 = vunpack.c.h.b16 %v8997
      %v9067 = vunpack.c.l.b16 %v8998
      %v9068 = vunpack.c.h.b16 %v8998
      %v9069 = vunpack.c.l.b16 %v8999
      %v9070 = vunpack.c.h.b16 %v8999
      %v9071 = vunpack.c.l.b16 %v9000
      %v9072 = vunpack.c.h.b16 %v9000
      %v9073 = vunpack.c.l.b16 %v9001
      %v9074 = vunpack.c.h.b16 %v9001
      %v9075 = vunpack.c.l.b16 %v9002
      %v9076 = vunpack.c.h.b16 %v9002
      %v9077 = vunpack.c.l.b16 %v9003
      %v9078 = vunpack.c.h.b16 %v9003
      %v9079 = vunpack.c.l.b16 %v9004
      %v9080 = vunpack.c.h.b16 %v9004
      %v9081 = vunpack.c.l.b16 %v9005
      %v9082 = vunpack.c.h.b16 %v9005
      %v9083 = vunpack.c.l.b16 %v9006
      %v9084 = vunpack.c.h.b16 %v9006
      %v9085 = vunpack.c.l.b16 %v9007
      %v9086 = vunpack.c.h.b16 %v9007
      %v9087 = vunpack.c.l.b16 %v9008
      %v9088 = vunpack.c.h.b16 %v9008
      %v9089 = vunpack.c.l.b16 %v9009
      %v9090 = vunpack.c.h.b16 %v9009
      %v9091 = vunpack.c.l.b16 %v9010
      %v9092 = vunpack.c.h.b16 %v9010
      %v9093 = vunpack.c.l.b16 %v9011
      %v9094 = vunpack.c.h.b16 %v9011
      %v9095 = vunpack.c.l.b16 %v9012
      %v9096 = vunpack.c.h.b16 %v9012
      %v9097 = vunpack.c.l.b16 %v9013
      %v9098 = vunpack.c.h.b16 %v9013
      %v9099 = vunpack.c.l.b16 %v9014
      %v9100 = vunpack.c.h.b16 %v9014
      %v9101 = vunpack.c.l.b16 %v9015
      %v9102 = vunpack.c.h.b16 %v9015
      %v9103 = vunpack.c.l.b16 %v9016
      %v9104 = vunpack.c.h.b16 %v9016
      %v9105 = vunpack.c.l.b16 %v9017
      %v9106 = vunpack.c.h.b16 %v9017
      %v9107 = vunpack.c.l.b16 %v9018
      %v9108 = vunpack.c.h.b16 %v9018
      %v9109 = vunpack.c.l.b16 %v9019
      %v9110 = vunpack.c.h.b16 %v9019
      %v9111 = vunpack.c.l.b16 %v9020
      %v9112 = vunpack.c.h.b16 %v9020
      %v9113 = vunpack.c.l.b16 %v9021
      %v9114 = vunpack.c.h.b16 %v9021
      %v9115 = vunpack.c.l.b16 %v9022
      %v9116 = vunpack.c.h.b16 %v9022
      %v9117 = vunpack.c.l.b16 %v9023
      %v9118 = vunpack.c.h.b16 %v9023
      %v9119 = vunpack.c.l.b16 %v9024
      %v9120 = vunpack.c.h.b16 %v9024
      %v9121 = vpack.c.b16 %v9059, %v9057
      %v9122 = vpack.c.b16 %v9060, %v9058
      %v9123 = vpack.c.b16 %v9063, %v9061
      %v9124 = vpack.c.b16 %v9064, %v9062
      %v9125 = vpack.c.b16 %v9067, %v9065
      %v9126 = vpack.c.b16 %v9068, %v9066
      %v9127 = vpack.c.b16 %v9071, %v9069
      %v9128 = vpack.c.b16 %v9072, %v9070
      %v9129 = vpack.c.b16 %v9075, %v9073
      %v9130 = vpack.c.b16 %v9076, %v9074
      %v9131 = vpack.c.b16 %v9079, %v9077
      %v9132 = vpack.c.b16 %v9080, %v9078
      %v9133 = vpack.c.b16 %v9083, %v9081
      %v9134 = vpack.c.b16 %v9084, %v9082
      %v9135 = vpack.c.b16 %v9087, %v9085
      %v9136 = vpack.c.b16 %v9088, %v9086
      %v9137 = vpack.c.b16 %v9091, %v9089
      %v9138 = vpack.c.b16 %v9092, %v9090
      %v9139 = vpack.c.b16 %v9095, %v9093
      %v9140 = vpack.c.b16 %v9096, %v9094
      %v9141 = vpack.c.b16 %v9099, %v9097
      %v9142 = vpack.c.b16 %v9100, %v9098
      %v9143 = vpack.c.b16 %v9103, %v9101
      %v9144 = vpack.c.b16 %v9104, %v9102
      %v9145 = vpack.c.b16 %v9107, %v9105
      %v9146 = vpack.c.b16 %v9108, %v9106
      %v9147 = vpack.c.b16 %v9111, %v9109
      %v9148 = vpack.c.b16 %v9112, %v9110
      %v9149 = vpack.c.b16 %v9115, %v9113
      %v9150 = vpack.c.b16 %v9116, %v9114
      %v9151 = vpack.c.b16 %v9119, %v9117
      %v9152 = vpack.c.b16 %v9120, %v9118
      %9185 = vmatprep.subr.bf16.mxu0 %v9122
      %9186 = vmatpush1.bf16.msra.mxu0 %v9121
      %9187 = vmatprep.subr.bf16.mxu0 %v9124
      %9188 = vmatpush1.bf16.msra.mxu0 %v9123
      %9189 = vmatprep.subr.bf16.mxu0 %v9126
      %9190 = vmatpush1.bf16.msra.mxu0 %v9125
      %9191 = vmatprep.subr.bf16.mxu0 %v9128
      %9192 = vmatpush1.bf16.msra.mxu0 %v9127
      %9193 = vmatprep.subr.bf16.mxu0 %v9130
      %9194 = vmatpush1.bf16.msra.mxu0 %v9129
      %9195 = vmatprep.subr.bf16.mxu0 %v9132
      %9196 = vmatpush1.bf16.msra.mxu0 %v9131
      %9197 = vmatprep.subr.bf16.mxu0 %v9134
      %9198 = vmatpush1.bf16.msra.mxu0 %v9133
      %9199 = vmatprep.subr.bf16.mxu0 %v9136
      %9200 = vmatpush1.bf16.msra.mxu0 %v9135
      %9201 = vmatprep.subr.bf16.mxu0 %v9138
      %9202 = vmatpush1.bf16.msra.mxu0 %v9137
      %9203 = vmatprep.subr.bf16.mxu0 %v9140
      %9204 = vmatpush1.bf16.msra.mxu0 %v9139
      %9205 = vmatprep.subr.bf16.mxu0 %v9142
      %9206 = vmatpush1.bf16.msra.mxu0 %v9141
      %9207 = vmatprep.subr.bf16.mxu0 %v9144
      %9208 = vmatpush1.bf16.msra.mxu0 %v9143
      %9209 = vmatprep.subr.bf16.mxu0 %v9146
      %9210 = vmatpush1.bf16.msra.mxu0 %v9145
      %9211 = vmatprep.subr.bf16.mxu0 %v9148
      %9212 = vmatpush1.bf16.msra.mxu0 %v9147
      %9213 = vmatprep.subr.bf16.mxu0 %v9150
      %9214 = vmatpush1.bf16.msra.mxu0 %v9149
      %9215 = vmatprep.subr.bf16.mxu0 %v9152
      %9216 = vmatpush1.bf16.msra.mxu0 %v9151
      %9217 = vmatprep.mubr.bf16.mxu0 %v5138
      %9218 = vmatmul.mubr.bf16.gmra.mrb[0].mxu0 %v5137
      %v9219 = vpop.f32.mrb[0].mxu0
      %v9220 = vadd.f32 0.0, %v9219
      %v9221 = vpop.f32.mrb[0].mxu0
      %v9222 = vadd.f32 0.0, %v9221
      %v9223 = vpop.f32.mrb[0].mxu0
      %v9224 = vadd.f32 0.0, %v9223
      %v9225 = vpop.f32.mrb[0].mxu0
      %v9226 = vadd.f32 0.0, %v9225
      %9227 = vmatprep.mubr.bf16.mxu0 %v5140
      %9228 = vmatmul.mubr.bf16.gmra.mrb[0].mxu0 %v5139
      %v9229 = vpop.f32.mrb[0].mxu0
      %v9230 = vadd.f32 0.0, %v9229
      %v9231 = vpop.f32.mrb[0].mxu0
      %v9232 = vadd.f32 0.0, %v9231
      %v9233 = vpop.f32.mrb[0].mxu0
      %v9234 = vadd.f32 0.0, %v9233
      %v9235 = vpop.f32.mrb[0].mxu0
      %v9236 = vadd.f32 0.0, %v9235
      %9237 = vmatprep.mubr.bf16.mxu0 %v5142
      %9238 = vmatmul.mubr.bf16.gmra.mrb[0].mxu0 %v5141
      %v9239 = vpop.f32.mrb[0].mxu0
      %v9240 = vadd.f32 0.0, %v9239
      %v9241 = vpop.f32.mrb[0].mxu0
      %v9242 = vadd.f32 0.0, %v9241
      %v9243 = vpop.f32.mrb[0].mxu0
      %v9244 = vadd.f32 0.0, %v9243
      %v9245 = vpop.f32.mrb[0].mxu0
      %v9246 = vadd.f32 0.0, %v9245
      %9247 = vmatprep.mubr.bf16.mxu0 %v5144
      %9248 = vmatmul.mubr.bf16.gmra.mrb[0].mxu0 %v5143
      %v9249 = vpop.f32.mrb[0].mxu0
      %v9250 = vadd.f32 0.0, %v9249
      %v9251 = vpop.f32.mrb[0].mxu0
      %v9252 = vadd.f32 0.0, %v9251
      %v9253 = vpop.f32.mrb[0].mxu0
      %v9254 = vadd.f32 0.0, %v9253
      %v9255 = vpop.f32.mrb[0].mxu0
      %v9256 = vadd.f32 0.0, %v9255
      %9257 = vmatprep.mubr.bf16.mxu0 %v5146
      %9258 = vmatmul.mubr.bf16.gmra.mrb[0].mxu0 %v5145
      %v9259 = vpop.f32.mrb[0].mxu0
      %v9260 = vadd.f32 0.0, %v9259
      %v9261 = vpop.f32.mrb[0].mxu0
      %v9262 = vadd.f32 0.0, %v9261
      %v9263 = vpop.f32.mrb[0].mxu0
      %v9264 = vadd.f32 0.0, %v9263
      %v9265 = vpop.f32.mrb[0].mxu0
      %v9266 = vadd.f32 0.0, %v9265
      %9267 = vmatprep.mubr.bf16.mxu0 %v5148
      %9268 = vmatmul.mubr.bf16.gmra.mrb[0].mxu0 %v5147
      %v9269 = vpop.f32.mrb[0].mxu0
      %v9270 = vadd.f32 0.0, %v9269
      %v9271 = vpop.f32.mrb[0].mxu0
      %v9272 = vadd.f32 0.0, %v9271
      %v9273 = vpop.f32.mrb[0].mxu0
      %v9274 = vadd.f32 0.0, %v9273
      %v9275 = vpop.f32.mrb[0].mxu0
      %v9276 = vadd.f32 0.0, %v9275
      %9277 = vmatprep.mubr.bf16.mxu0 %v5150
      %9278 = vmatmul.mubr.bf16.gmra.mrb[0].mxu0 %v5149
      %v9279 = vpop.f32.mrb[0].mxu0
      %v9280 = vadd.f32 0.0, %v9279
      %v9281 = vpop.f32.mrb[0].mxu0
      %v9282 = vadd.f32 0.0, %v9281
      %v9283 = vpop.f32.mrb[0].mxu0
      %v9284 = vadd.f32 0.0, %v9283
      %v9285 = vpop.f32.mrb[0].mxu0
      %v9286 = vadd.f32 0.0, %v9285
      %9287 = vmatprep.mubr.bf16.mxu0 %v5152
      %9288 = vmatmul.mubr.bf16.gmra.mrb[0].mxu0 %v5151
      %v9289 = vpop.f32.mrb[0].mxu0
      %v9290 = vadd.f32 0.0, %v9289
      %v9291 = vpop.f32.mrb[0].mxu0
      %v9292 = vadd.f32 0.0, %v9291
      %v9293 = vpop.f32.mrb[0].mxu0
      %v9294 = vadd.f32 0.0, %v9293
      %v9295 = vpop.f32.mrb[0].mxu0
      %v9296 = vadd.f32 0.0, %v9295
      %9297 = vmatprep.mubr.bf16.mxu0 %v5154
      %9298 = vmatmul.mubr.bf16.gmra.mrb[0].mxu0 %v5153
      %v9299 = vpop.f32.mrb[0].mxu0
      %v9300 = vadd.f32 0.0, %v9299
      %v9301 = vpop.f32.mrb[0].mxu0
      %v9302 = vadd.f32 0.0, %v9301
      %v9303 = vpop.f32.mrb[0].mxu0
      %v9304 = vadd.f32 0.0, %v9303
      %v9305 = vpop.f32.mrb[0].mxu0
      %v9306 = vadd.f32 0.0, %v9305
      %9307 = vmatprep.mubr.bf16.mxu0 %v5156
      %9308 = vmatmul.mubr.bf16.gmra.mrb[0].mxu0 %v5155
      %v9309 = vpop.f32.mrb[0].mxu0
      %v9310 = vadd.f32 0.0, %v9309
      %v9311 = vpop.f32.mrb[0].mxu0
      %v9312 = vadd.f32 0.0, %v9311
      %v9313 = vpop.f32.mrb[0].mxu0
      %v9314 = vadd.f32 0.0, %v9313
      %v9315 = vpop.f32.mrb[0].mxu0
      %v9316 = vadd.f32 0.0, %v9315
      %9317 = vmatprep.mubr.bf16.mxu0 %v5158
      %9318 = vmatmul.mubr.bf16.gmra.mrb[0].mxu0 %v5157
      %v9319 = vpop.f32.mrb[0].mxu0
      %v9320 = vadd.f32 0.0, %v9319
      %v9321 = vpop.f32.mrb[0].mxu0
      %v9322 = vadd.f32 0.0, %v9321
      %v9323 = vpop.f32.mrb[0].mxu0
      %v9324 = vadd.f32 0.0, %v9323
      %v9325 = vpop.f32.mrb[0].mxu0
      %v9326 = vadd.f32 0.0, %v9325
      %9327 = vmatprep.mubr.bf16.mxu0 %v5160
      %9328 = vmatmul.mubr.bf16.gmra.mrb[0].mxu0 %v5159
      %v9329 = vpop.f32.mrb[0].mxu0
      %v9330 = vadd.f32 0.0, %v9329
      %v9331 = vpop.f32.mrb[0].mxu0
      %v9332 = vadd.f32 0.0, %v9331
      %v9333 = vpop.f32.mrb[0].mxu0
      %v9334 = vadd.f32 0.0, %v9333
      %v9335 = vpop.f32.mrb[0].mxu0
      %v9336 = vadd.f32 0.0, %v9335
      %9337 = vmatprep.mubr.bf16.mxu0 %v5162
      %9338 = vmatmul.mubr.bf16.gmra.mrb[0].mxu0 %v5161
      %v9339 = vpop.f32.mrb[0].mxu0
      %v9340 = vadd.f32 0.0, %v9339
      %v9341 = vpop.f32.mrb[0].mxu0
      %v9342 = vadd.f32 0.0, %v9341
      %v9343 = vpop.f32.mrb[0].mxu0
      %v9344 = vadd.f32 0.0, %v9343
      %v9345 = vpop.f32.mrb[0].mxu0
      %v9346 = vadd.f32 0.0, %v9345
      %9347 = vmatprep.mubr.bf16.mxu0 %v5164
      %9348 = vmatmul.mubr.bf16.gmra.mrb[0].mxu0 %v5163
      %v9349 = vpop.f32.mrb[0].mxu0
      %v9350 = vadd.f32 0.0, %v9349
      %v9351 = vpop.f32.mrb[0].mxu0
      %v9352 = vadd.f32 0.0, %v9351
      %v9353 = vpop.f32.mrb[0].mxu0
      %v9354 = vadd.f32 0.0, %v9353
      %v9355 = vpop.f32.mrb[0].mxu0
      %v9356 = vadd.f32 0.0, %v9355
      %9357 = vmatprep.mubr.bf16.mxu0 %v5166
      %9358 = vmatmul.mubr.bf16.gmra.mrb[0].mxu0 %v5165
      %v9359 = vpop.f32.mrb[0].mxu0
      %v9360 = vadd.f32 0.0, %v9359
      %v9361 = vpop.f32.mrb[0].mxu0
      %v9362 = vadd.f32 0.0, %v9361
      %v9363 = vpop.f32.mrb[0].mxu0
      %v9364 = vadd.f32 0.0, %v9363
      %v9365 = vpop.f32.mrb[0].mxu0
      %v9366 = vadd.f32 0.0, %v9365
      %9367 = vmatprep.mubr.bf16.mxu0 %v5168
      %9368 = vmatmul.mubr.bf16.gmra.mrb[0].mxu0 %v5167
      %v9369 = vpop.f32.mrb[0].mxu0
      %v9370 = vadd.f32 0.0, %v9369
      %v9371 = vpop.f32.mrb[0].mxu0
      %v9372 = vadd.f32 0.0, %v9371
      %v9373 = vpop.f32.mrb[0].mxu0
      %v9374 = vadd.f32 0.0, %v9373
      %v9375 = vpop.f32.mrb[0].mxu0
      %v9376 = vadd.f32 0.0, %v9375
      %9377 = vdwg.mxu0
      %v9378 = vadd.f32 %v8834, %v9220
      %v9379 = vadd.f32 %v8836, %v9222
      %v9380 = vadd.f32 %v8838, %v9224
      %v9381 = vadd.f32 %v8840, %v9226
      %v9382 = vadd.f32 %v8844, %v9230
      %v9383 = vadd.f32 %v8846, %v9232
      %v9384 = vadd.f32 %v8848, %v9234
      %v9385 = vadd.f32 %v8850, %v9236
      %v9386 = vadd.f32 %v8854, %v9240
      %v9387 = vadd.f32 %v8856, %v9242
      %v9388 = vadd.f32 %v8858, %v9244
      %v9389 = vadd.f32 %v8860, %v9246
      %v9390 = vadd.f32 %v8864, %v9250
      %v9391 = vadd.f32 %v8866, %v9252
      %v9392 = vadd.f32 %v8868, %v9254
      %v9393 = vadd.f32 %v8870, %v9256
      %v9394 = vadd.f32 %v8874, %v9260
      %v9395 = vadd.f32 %v8876, %v9262
      %v9396 = vadd.f32 %v8878, %v9264
      %v9397 = vadd.f32 %v8880, %v9266
      %v9398 = vadd.f32 %v8884, %v9270
      %v9399 = vadd.f32 %v8886, %v9272
      %v9400 = vadd.f32 %v8888, %v9274
      %v9401 = vadd.f32 %v8890, %v9276
      %v9402 = vadd.f32 %v8894, %v9280
      %v9403 = vadd.f32 %v8896, %v9282
      %v9404 = vadd.f32 %v8898, %v9284
      %v9405 = vadd.f32 %v8900, %v9286
      %v9406 = vadd.f32 %v8904, %v9290
      %v9407 = vadd.f32 %v8906, %v9292
      %v9408 = vadd.f32 %v8908, %v9294
      %v9409 = vadd.f32 %v8910, %v9296
      %v9410 = vadd.f32 %v8914, %v9300
      %v9411 = vadd.f32 %v8916, %v9302
      %v9412 = vadd.f32 %v8918, %v9304
      %v9413 = vadd.f32 %v8920, %v9306
      %v9414 = vadd.f32 %v8924, %v9310
      %v9415 = vadd.f32 %v8926, %v9312
      %v9416 = vadd.f32 %v8928, %v9314
      %v9417 = vadd.f32 %v8930, %v9316
      %v9418 = vadd.f32 %v8934, %v9320
      %v9419 = vadd.f32 %v8936, %v9322
      %v9420 = vadd.f32 %v8938, %v9324
      %v9421 = vadd.f32 %v8940, %v9326
      %v9422 = vadd.f32 %v8944, %v9330
      %v9423 = vadd.f32 %v8946, %v9332
      %v9424 = vadd.f32 %v8948, %v9334
      %v9425 = vadd.f32 %v8950, %v9336
      %v9426 = vadd.f32 %v8954, %v9340
      %v9427 = vadd.f32 %v8956, %v9342
      %v9428 = vadd.f32 %v8958, %v9344
      %v9429 = vadd.f32 %v8960, %v9346
      %v9430 = vadd.f32 %v8964, %v9350
      %v9431 = vadd.f32 %v8966, %v9352
      %v9432 = vadd.f32 %v8968, %v9354
      %v9433 = vadd.f32 %v8970, %v9356
      %v9434 = vadd.f32 %v8974, %v9360
      %v9435 = vadd.f32 %v8976, %v9362
      %v9436 = vadd.f32 %v8978, %v9364
      %v9437 = vadd.f32 %v8980, %v9366
      %v9438 = vadd.f32 %v8984, %v9370
      %v9439 = vadd.f32 %v8986, %v9372
      %v9440 = vadd.f32 %v8988, %v9374
      %v9441 = vadd.f32 %v8990, %v9376
      %9442 = vst [vmem:[#allocation4 + $0x10] sm:$0xff] %v9378
      %9443 = vst [vmem:[#allocation4 + $0x18] sm:$0xff] %v9379
      %9444 = vst [vmem:[#allocation4 + $0x20] sm:$0xff] %v9380
      %9445 = vst [vmem:[#allocation4 + $0x28] sm:$0xff] %v9381
      %9446 = vst [vmem:[#allocation4 + $0x50] sm:$0xff] %v9382
      %9447 = vst [vmem:[#allocation4 + $0x58] sm:$0xff] %v9383
      %9448 = vst [vmem:[#allocation4 + $0x60] sm:$0xff] %v9384
      %9449 = vst [vmem:[#allocation4 + $0x68] sm:$0xff] %v9385
      %9450 = vst [vmem:[#allocation4 + $0x90] sm:$0xff] %v9386
      %9451 = vst [vmem:[#allocation4 + $0x98] sm:$0xff] %v9387
      %9452 = vst [vmem:[#allocation4 + $0xa0] sm:$0xff] %v9388
      %9453 = vst [vmem:[#allocation4 + $0xa8] sm:$0xff] %v9389
      %9454 = vst [vmem:[#allocation4 + $0xd0] sm:$0xff] %v9390
      %9455 = vst [vmem:[#allocation4 + $0xd8] sm:$0xff] %v9391
      %9456 = vst [vmem:[#allocation4 + $0xe0] sm:$0xff] %v9392
      %9457 = vst [vmem:[#allocation4 + $0xe8] sm:$0xff] %v9393
      %9458 = vst [vmem:[#allocation4 + $0x110] sm:$0xff] %v9394
      %9459 = vst [vmem:[#allocation4 + $0x118] sm:$0xff] %v9395
      %9460 = vst [vmem:[#allocation4 + $0x120] sm:$0xff] %v9396
      %9461 = vst [vmem:[#allocation4 + $0x128] sm:$0xff] %v9397
      %9462 = vst [vmem:[#allocation4 + $0x150] sm:$0xff] %v9398
      %9463 = vst [vmem:[#allocation4 + $0x158] sm:$0xff] %v9399
      %9464 = vst [vmem:[#allocation4 + $0x160] sm:$0xff] %v9400
      %9465 = vst [vmem:[#allocation4 + $0x168] sm:$0xff] %v9401
      %9466 = vst [vmem:[#allocation4 + $0x190] sm:$0xff] %v9402
      %9467 = vst [vmem:[#allocation4 + $0x198] sm:$0xff] %v9403
      %9468 = vst [vmem:[#allocation4 + $0x1a0] sm:$0xff] %v9404
      %9469 = vst [vmem:[#allocation4 + $0x1a8] sm:$0xff] %v9405
      %9470 = vst [vmem:[#allocation4 + $0x1d0] sm:$0xff] %v9406
      %9471 = vst [vmem:[#allocation4 + $0x1d8] sm:$0xff] %v9407
      %9472 = vst [vmem:[#allocation4 + $0x1e0] sm:$0xff] %v9408
      %9473 = vst [vmem:[#allocation4 + $0x1e8] sm:$0xff] %v9409
      %9474 = vst [vmem:[#allocation4 + $0x210] sm:$0xff] %v9410
      %9475 = vst [vmem:[#allocation4 + $0x218] sm:$0xff] %v9411
      %9476 = vst [vmem:[#allocation4 + $0x220] sm:$0xff] %v9412
      %9477 = vst [vmem:[#allocation4 + $0x228] sm:$0xff] %v9413
      %9478 = vst [vmem:[#allocation4 + $0x250] sm:$0xff] %v9414
      %9479 = vst [vmem:[#allocation4 + $0x258] sm:$0xff] %v9415
      %9480 = vst [vmem:[#allocation4 + $0x260] sm:$0xff] %v9416
      %9481 = vst [vmem:[#allocation4 + $0x268] sm:$0xff] %v9417
      %9482 = vst [vmem:[#allocation4 + $0x290] sm:$0xff] %v9418
      %9483 = vst [vmem:[#allocation4 + $0x298] sm:$0xff] %v9419
      %9484 = vst [vmem:[#allocation4 + $0x2a0] sm:$0xff] %v9420
      %9485 = vst [vmem:[#allocation4 + $0x2a8] sm:$0xff] %v9421
      %9486 = vst [vmem:[#allocation4 + $0x2d0] sm:$0xff] %v9422
      %9487 = vst [vmem:[#allocation4 + $0x2d8] sm:$0xff] %v9423
      %9488 = vst [vmem:[#allocation4 + $0x2e0] sm:$0xff] %v9424
      %9489 = vst [vmem:[#allocation4 + $0x2e8] sm:$0xff] %v9425
      %9490 = vst [vmem:[#allocation4 + $0x310] sm:$0xff] %v9426
      %9491 = vst [vmem:[#allocation4 + $0x318] sm:$0xff] %v9427
      %9492 = vst [vmem:[#allocation4 + $0x320] sm:$0xff] %v9428
      %9493 = vst [vmem:[#allocation4 + $0x328] sm:$0xff] %v9429
      %9494 = vst [vmem:[#allocation4 + $0x350] sm:$0xff] %v9430
      %9495 = vst [vmem:[#allocation4 + $0x358] sm:$0xff] %v9431
      %9496 = vst [vmem:[#allocation4 + $0x360] sm:$0xff] %v9432
      %9497 = vst [vmem:[#allocation4 + $0x368] sm:$0xff] %v9433
      %9498 = vst [vmem:[#allocation4 + $0x390] sm:$0xff] %v9434
      %9499 = vst [vmem:[#allocation4 + $0x398] sm:$0xff] %v9435
      %9500 = vst [vmem:[#allocation4 + $0x3a0] sm:$0xff] %v9436
      %9501 = vst [vmem:[#allocation4 + $0x3a8] sm:$0xff] %v9437
      %9502 = vst [vmem:[#allocation4 + $0x3d0] sm:$0xff] %v9438
      %9503 = vst [vmem:[#allocation4 + $0x3d8] sm:$0xff] %v9439
      %9504 = vst [vmem:[#allocation4 + $0x3e0] sm:$0xff] %v9440
      %9505 = vst [vmem:[#allocation4 + $0x3e8] sm:$0xff] %v9441
      %v9506 = vld [vmem:[#allocation4 + $0x10] sm:$0xfe]
      %v9507 = vld [vmem:[#allocation4 + $0x18] sm:$0xfe]
      %v9508 = vld [vmem:[#allocation4 + $0x20] sm:$0xff]
      %v9509 = vld [vmem:[#allocation4 + $0x28] sm:$0xff]
      %v9510 = vld [vmem:[#allocation4 + $0x30] sm:$0x1]
      %v9511 = vld [vmem:[#allocation4 + $0x38] sm:$0x1]
      %v9512 = vld [vmem:[#allocation4 + $0x50] sm:$0xfe]
      %v9513 = vld [vmem:[#allocation4 + $0x58] sm:$0xfe]
      %v9514 = vld [vmem:[#allocation4 + $0x60] sm:$0xff]
      %v9515 = vld [vmem:[#allocation4 + $0x68] sm:$0xff]
      %v9516 = vld [vmem:[#allocation4 + $0x70] sm:$0x1]
      %v9517 = vld [vmem:[#allocation4 + $0x78] sm:$0x1]
      %v9518 = vld [vmem:[#allocation4 + $0x90] sm:$0xfe]
      %v9519 = vld [vmem:[#allocation4 + $0x98] sm:$0xfe]
      %v9520 = vld [vmem:[#allocation4 + $0xa0] sm:$0xff]
      %v9521 = vld [vmem:[#allocation4 + $0xa8] sm:$0xff]
      %v9522 = vld [vmem:[#allocation4 + $0xb0] sm:$0x1]
      %v9523 = vld [vmem:[#allocation4 + $0xb8] sm:$0x1]
      %v9524 = vld [vmem:[#allocation4 + $0xd0] sm:$0xfe]
      %v9525 = vld [vmem:[#allocation4 + $0xd8] sm:$0xfe]
      %v9526 = vld [vmem:[#allocation4 + $0xe0] sm:$0xff]
      %v9527 = vld [vmem:[#allocation4 + $0xe8] sm:$0xff]
      %v9528 = vld [vmem:[#allocation4 + $0xf0] sm:$0x1]
      %v9529 = vld [vmem:[#allocation4 + $0xf8] sm:$0x1]
      %v9530 = vld [vmem:[#allocation4 + $0x110] sm:$0xfe]
      %v9531 = vld [vmem:[#allocation4 + $0x118] sm:$0xfe]
      %v9532 = vld [vmem:[#allocation4 + $0x120] sm:$0xff]
      %v9533 = vld [vmem:[#allocation4 + $0x128] sm:$0xff]
      %v9534 = vld [vmem:[#allocation4 + $0x130] sm:$0x1]
      %v9535 = vld [vmem:[#allocation4 + $0x138] sm:$0x1]
      %v9536 = vld [vmem:[#allocation4 + $0x150] sm:$0xfe]
      %v9537 = vld [vmem:[#allocation4 + $0x158] sm:$0xfe]
      %v9538 = vld [vmem:[#allocation4 + $0x160] sm:$0xff]
      %v9539 = vld [vmem:[#allocation4 + $0x168] sm:$0xff]
      %v9540 = vld [vmem:[#allocation4 + $0x170] sm:$0x1]
      %v9541 = vld [vmem:[#allocation4 + $0x178] sm:$0x1]
      %v9542 = vld [vmem:[#allocation4 + $0x190] sm:$0xfe]
      %v9543 = vld [vmem:[#allocation4 + $0x198] sm:$0xfe]
      %v9544 = vld [vmem:[#allocation4 + $0x1a0] sm:$0xff]
      %v9545 = vld [vmem:[#allocation4 + $0x1a8] sm:$0xff]
      %v9546 = vld [vmem:[#allocation4 + $0x1b0] sm:$0x1]
      %v9547 = vld [vmem:[#allocation4 + $0x1b8] sm:$0x1]
      %v9548 = vld [vmem:[#allocation4 + $0x1d0] sm:$0xfe]
      %v9549 = vld [vmem:[#allocation4 + $0x1d8] sm:$0xfe]
      %v9550 = vld [vmem:[#allocation4 + $0x1e0] sm:$0xff]
      %v9551 = vld [vmem:[#allocation4 + $0x1e8] sm:$0xff]
      %v9552 = vld [vmem:[#allocation4 + $0x1f0] sm:$0x1]
      %v9553 = vld [vmem:[#allocation4 + $0x1f8] sm:$0x1]
      %v9554 = vld [vmem:[#allocation4 + $0x210] sm:$0xfe]
      %v9555 = vld [vmem:[#allocation4 + $0x218] sm:$0xfe]
      %v9556 = vld [vmem:[#allocation4 + $0x220] sm:$0xff]
      %v9557 = vld [vmem:[#allocation4 + $0x228] sm:$0xff]
      %v9558 = vld [vmem:[#allocation4 + $0x230] sm:$0x1]
      %v9559 = vld [vmem:[#allocation4 + $0x238] sm:$0x1]
      %v9560 = vld [vmem:[#allocation4 + $0x250] sm:$0xfe]
      %v9561 = vld [vmem:[#allocation4 + $0x258] sm:$0xfe]
      %v9562 = vld [vmem:[#allocation4 + $0x260] sm:$0xff]
      %v9563 = vld [vmem:[#allocation4 + $0x268] sm:$0xff]
      %v9564 = vld [vmem:[#allocation4 + $0x270] sm:$0x1]
      %v9565 = vld [vmem:[#allocation4 + $0x278] sm:$0x1]
      %v9566 = vld [vmem:[#allocation4 + $0x290] sm:$0xfe]
      %v9567 = vld [vmem:[#allocation4 + $0x298] sm:$0xfe]
      %v9568 = vld [vmem:[#allocation4 + $0x2a0] sm:$0xff]
      %v9569 = vld [vmem:[#allocation4 + $0x2a8] sm:$0xff]
      %v9570 = vld [vmem:[#allocation4 + $0x2b0] sm:$0x1]
      %v9571 = vld [vmem:[#allocation4 + $0x2b8] sm:$0x1]
      %v9572 = vld [vmem:[#allocation4 + $0x2d0] sm:$0xfe]
      %v9573 = vld [vmem:[#allocation4 + $0x2d8] sm:$0xfe]
      %v9574 = vld [vmem:[#allocation4 + $0x2e0] sm:$0xff]
      %v9575 = vld [vmem:[#allocation4 + $0x2e8] sm:$0xff]
      %v9576 = vld [vmem:[#allocation4 + $0x2f0] sm:$0x1]
      %v9577 = vld [vmem:[#allocation4 + $0x2f8] sm:$0x1]
      %v9578 = vld [vmem:[#allocation4 + $0x310] sm:$0xfe]
      %v9579 = vld [vmem:[#allocation4 + $0x318] sm:$0xfe]
      %v9580 = vld [vmem:[#allocation4 + $0x320] sm:$0xff]
      %v9581 = vld [vmem:[#allocation4 + $0x328] sm:$0xff]
      %v9582 = vld [vmem:[#allocation4 + $0x330] sm:$0x1]
      %v9583 = vld [vmem:[#allocation4 + $0x338] sm:$0x1]
      %v9584 = vld [vmem:[#allocation4 + $0x350] sm:$0xfe]
      %v9585 = vld [vmem:[#allocation4 + $0x358] sm:$0xfe]
      %v9586 = vld [vmem:[#allocation4 + $0x360] sm:$0xff]
      %v9587 = vld [vmem:[#allocation4 + $0x368] sm:$0xff]
      %v9588 = vld [vmem:[#allocation4 + $0x370] sm:$0x1]
      %v9589 = vld [vmem:[#allocation4 + $0x378] sm:$0x1]
      %v9590 = vld [vmem:[#allocation4 + $0x390] sm:$0xfe]
      %v9591 = vld [vmem:[#allocation4 + $0x398] sm:$0xfe]
      %v9592 = vld [vmem:[#allocation4 + $0x3a0] sm:$0xff]
      %v9593 = vld [vmem:[#allocation4 + $0x3a8] sm:$0xff]
      %v9594 = vld [vmem:[#allocation4 + $0x3b0] sm:$0x1]
      %v9595 = vld [vmem:[#allocation4 + $0x3b8] sm:$0x1]
      %v9596 = vld [vmem:[#allocation4 + $0x3d0] sm:$0xfe]
      %v9597 = vld [vmem:[#allocation4 + $0x3d8] sm:$0xfe]
      %v9598 = vld [vmem:[#allocation4 + $0x3e0] sm:$0xff]
      %v9599 = vld [vmem:[#allocation4 + $0x3e8] sm:$0xff]
      %v9600 = vld [vmem:[#allocation4 + $0x3f0] sm:$0x1]
      %v9601 = vld [vmem:[#allocation4 + $0x3f8] sm:$0x1]
      %v9698 = vrot.slane %v9506, 1
      %v9699 = vrot.slane %v9508, 1
      %v9700 = vsel %vm4194, %v9698, %v9699
      %v9701 = vrot.slane %v9507, 1
      %v9702 = vrot.slane %v9509, 1
      %v9703 = vsel %vm4194, %v9701, %v9702
      %v9704 = vrot.slane %v9510, 1
      %v9705 = vsel %vm4194, %v9699, %v9704
      %v9706 = vrot.slane %v9511, 1
      %v9707 = vsel %vm4194, %v9702, %v9706
      %v9708 = vrot.slane %v9512, 1
      %v9709 = vrot.slane %v9514, 1
      %v9710 = vsel %vm4194, %v9708, %v9709
      %v9711 = vrot.slane %v9513, 1
      %v9712 = vrot.slane %v9515, 1
      %v9713 = vsel %vm4194, %v9711, %v9712
      %v9714 = vrot.slane %v9516, 1
      %v9715 = vsel %vm4194, %v9709, %v9714
      %v9716 = vrot.slane %v9517, 1
      %v9717 = vsel %vm4194, %v9712, %v9716
      %v9718 = vrot.slane %v9518, 1
      %v9719 = vrot.slane %v9520, 1
      %v9720 = vsel %vm4194, %v9718, %v9719
      %v9721 = vrot.slane %v9519, 1
      %v9722 = vrot.slane %v9521, 1
      %v9723 = vsel %vm4194, %v9721, %v9722
      %v9724 = vrot.slane %v9522, 1
      %v9725 = vsel %vm4194, %v9719, %v9724
      %v9726 = vrot.slane %v9523, 1
      %v9727 = vsel %vm4194, %v9722, %v9726
      %v9728 = vrot.slane %v9524, 1
      %v9729 = vrot.slane %v9526, 1
      %v9730 = vsel %vm4194, %v9728, %v9729
      %v9731 = vrot.slane %v9525, 1
      %v9732 = vrot.slane %v9527, 1
      %v9733 = vsel %vm4194, %v9731, %v9732
      %v9734 = vrot.slane %v9528, 1
      %v9735 = vsel %vm4194, %v9729, %v9734
      %v9736 = vrot.slane %v9529, 1
      %v9737 = vsel %vm4194, %v9732, %v9736
      %v9738 = vrot.slane %v9530, 1
      %v9739 = vrot.slane %v9532, 1
      %v9740 = vsel %vm4194, %v9738, %v9739
      %v9741 = vrot.slane %v9531, 1
      %v9742 = vrot.slane %v9533, 1
      %v9743 = vsel %vm4194, %v9741, %v9742
      %v9744 = vrot.slane %v9534, 1
      %v9745 = vsel %vm4194, %v9739, %v9744
      %v9746 = vrot.slane %v9535, 1
      %v9747 = vsel %vm4194, %v9742, %v9746
      %v9748 = vrot.slane %v9536, 1
      %v9749 = vrot.slane %v9538, 1
      %v9750 = vsel %vm4194, %v9748, %v9749
      %v9751 = vrot.slane %v9537, 1
      %v9752 = vrot.slane %v9539, 1
      %v9753 = vsel %vm4194, %v9751, %v9752
      %v9754 = vrot.slane %v9540, 1
      %v9755 = vsel %vm4194, %v9749, %v9754
      %v9756 = vrot.slane %v9541, 1
      %v9757 = vsel %vm4194, %v9752, %v9756
      %v9758 = vrot.slane %v9542, 1
      %v9759 = vrot.slane %v9544, 1
      %v9760 = vsel %vm4194, %v9758, %v9759
      %v9761 = vrot.slane %v9543, 1
      %v9762 = vrot.slane %v9545, 1
      %v9763 = vsel %vm4194, %v9761, %v9762
      %v9764 = vrot.slane %v9546, 1
      %v9765 = vsel %vm4194, %v9759, %v9764
      %v9766 = vrot.slane %v9547, 1
      %v9767 = vsel %vm4194, %v9762, %v9766
      %v9768 = vrot.slane %v9548, 1
      %v9769 = vrot.slane %v9550, 1
      %v9770 = vsel %vm4194, %v9768, %v9769
      %v9771 = vrot.slane %v9549, 1
      %v9772 = vrot.slane %v9551, 1
      %v9773 = vsel %vm4194, %v9771, %v9772
      %v9774 = vrot.slane %v9552, 1
      %v9775 = vsel %vm4194, %v9769, %v9774
      %v9776 = vrot.slane %v9553, 1
      %v9777 = vsel %vm4194, %v9772, %v9776
      %v9778 = vrot.slane %v9554, 1
      %v9779 = vrot.slane %v9556, 1
      %v9780 = vsel %vm4194, %v9778, %v9779
      %v9781 = vrot.slane %v9555, 1
      %v9782 = vrot.slane %v9557, 1
      %v9783 = vsel %vm4194, %v9781, %v9782
      %v9784 = vrot.slane %v9558, 1
      %v9785 = vsel %vm4194, %v9779, %v9784
      %v9786 = vrot.slane %v9559, 1
      %v9787 = vsel %vm4194, %v9782, %v9786
      %v9788 = vrot.slane %v9560, 1
      %v9789 = vrot.slane %v9562, 1
      %v9790 = vsel %vm4194, %v9788, %v9789
      %v9791 = vrot.slane %v9561, 1
      %v9792 = vrot.slane %v9563, 1
      %v9793 = vsel %vm4194, %v9791, %v9792
      %v9794 = vrot.slane %v9564, 1
      %v9795 = vsel %vm4194, %v9789, %v9794
      %v9796 = vrot.slane %v9565, 1
      %v9797 = vsel %vm4194, %v9792, %v9796
      %v9798 = vrot.slane %v9566, 1
      %v9799 = vrot.slane %v9568, 1
      %v9800 = vsel %vm4194, %v9798, %v9799
      %v9801 = vrot.slane %v9567, 1
      %v9802 = vrot.slane %v9569, 1
      %v9803 = vsel %vm4194, %v9801, %v9802
      %v9804 = vrot.slane %v9570, 1
      %v9805 = vsel %vm4194, %v9799, %v9804
      %v9806 = vrot.slane %v9571, 1
      %v9807 = vsel %vm4194, %v9802, %v9806
      %v9808 = vrot.slane %v9572, 1
      %v9809 = vrot.slane %v9574, 1
      %v9810 = vsel %vm4194, %v9808, %v9809
      %v9811 = vrot.slane %v9573, 1
      %v9812 = vrot.slane %v9575, 1
      %v9813 = vsel %vm4194, %v9811, %v9812
      %v9814 = vrot.slane %v9576, 1
      %v9815 = vsel %vm4194, %v9809, %v9814
      %v9816 = vrot.slane %v9577, 1
      %v9817 = vsel %vm4194, %v9812, %v9816
      %v9818 = vrot.slane %v9578, 1
      %v9819 = vrot.slane %v9580, 1
      %v9820 = vsel %vm4194, %v9818, %v9819
      %v9821 = vrot.slane %v9579, 1
      %v9822 = vrot.slane %v9581, 1
      %v9823 = vsel %vm4194, %v9821, %v9822
      %v9824 = vrot.slane %v9582, 1
      %v9825 = vsel %vm4194, %v9819, %v9824
      %v9826 = vrot.slane %v9583, 1
      %v9827 = vsel %vm4194, %v9822, %v9826
      %v9828 = vrot.slane %v9584, 1
      %v9829 = vrot.slane %v9586, 1
      %v9830 = vsel %vm4194, %v9828, %v9829
      %v9831 = vrot.slane %v9585, 1
      %v9832 = vrot.slane %v9587, 1
      %v9833 = vsel %vm4194, %v9831, %v9832
      %v9834 = vrot.slane %v9588, 1
      %v9835 = vsel %vm4194, %v9829, %v9834
      %v9836 = vrot.slane %v9589, 1
      %v9837 = vsel %vm4194, %v9832, %v9836
      %v9838 = vrot.slane %v9590, 1
      %v9839 = vrot.slane %v9592, 1
      %v9840 = vsel %vm4194, %v9838, %v9839
      %v9841 = vrot.slane %v9591, 1
      %v9842 = vrot.slane %v9593, 1
      %v9843 = vsel %vm4194, %v9841, %v9842
      %v9844 = vrot.slane %v9594, 1
      %v9845 = vsel %vm4194, %v9839, %v9844
      %v9846 = vrot.slane %v9595, 1
      %v9847 = vsel %vm4194, %v9842, %v9846
      %v9848 = vrot.slane %v9596, 1
      %v9849 = vrot.slane %v9598, 1
      %v9850 = vsel %vm4194, %v9848, %v9849
      %v9851 = vrot.slane %v9597, 1
      %v9852 = vrot.slane %v9599, 1
      %v9853 = vsel %vm4194, %v9851, %v9852
      %v9854 = vrot.slane %v9600, 1
      %v9855 = vsel %vm4194, %v9849, %v9854
      %v9856 = vrot.slane %v9601, 1
      %v9857 = vsel %vm4194, %v9852, %v9856
      %v9922 = vadd.f32 %v8156, %v9700
      %v9923 = vadd.f32 %v8157, %v9703
      %v9924 = vadd.f32 %v8158, %v9705
      %v9925 = vadd.f32 %v8159, %v9707
      %v9926 = vadd.f32 %v8160, %v9710
      %v9927 = vadd.f32 %v8161, %v9713
      %v9928 = vadd.f32 %v8162, %v9715
      %v9929 = vadd.f32 %v8163, %v9717
      %v9930 = vadd.f32 %v8164, %v9720
      %v9931 = vadd.f32 %v8165, %v9723
      %v9932 = vadd.f32 %v8166, %v9725
      %v9933 = vadd.f32 %v8167, %v9727
      %v9934 = vadd.f32 %v8168, %v9730
      %v9935 = vadd.f32 %v8169, %v9733
      %v9936 = vadd.f32 %v8170, %v9735
      %v9937 = vadd.f32 %v8171, %v9737
      %v9938 = vadd.f32 %v8172, %v9740
      %v9939 = vadd.f32 %v8173, %v9743
      %v9940 = vadd.f32 %v8174, %v9745
      %v9941 = vadd.f32 %v8175, %v9747
      %v9942 = vadd.f32 %v8176, %v9750
      %v9943 = vadd.f32 %v8177, %v9753
      %v9944 = vadd.f32 %v8178, %v9755
      %v9945 = vadd.f32 %v8179, %v9757
      %v9946 = vadd.f32 %v8180, %v9760
      %v9947 = vadd.f32 %v8181, %v9763
      %v9948 = vadd.f32 %v8182, %v9765
      %v9949 = vadd.f32 %v8183, %v9767
      %v9950 = vadd.f32 %v8184, %v9770
      %v9951 = vadd.f32 %v8185, %v9773
      %v9952 = vadd.f32 %v8186, %v9775
      %v9953 = vadd.f32 %v8187, %v9777
      %v9954 = vadd.f32 %v8188, %v9780
      %v9955 = vadd.f32 %v8189, %v9783
      %v9956 = vadd.f32 %v8190, %v9785
      %v9957 = vadd.f32 %v8191, %v9787
      %v9958 = vadd.f32 %v8192, %v9790
      %v9959 = vadd.f32 %v8193, %v9793
      %v9960 = vadd.f32 %v8194, %v9795
      %v9961 = vadd.f32 %v8195, %v9797
      %v9962 = vadd.f32 %v8196, %v9800
      %v9963 = vadd.f32 %v8197, %v9803
      %v9964 = vadd.f32 %v8198, %v9805
      %v9965 = vadd.f32 %v8199, %v9807
      %v9966 = vadd.f32 %v8200, %v9810
      %v9967 = vadd.f32 %v8201, %v9813
      %v9968 = vadd.f32 %v8202, %v9815
      %v9969 = vadd.f32 %v8203, %v9817
      %v9970 = vadd.f32 %v8204, %v9820
      %v9971 = vadd.f32 %v8205, %v9823
      %v9972 = vadd.f32 %v8206, %v9825
      %v9973 = vadd.f32 %v8207, %v9827
      %v9974 = vadd.f32 %v8208, %v9830
      %v9975 = vadd.f32 %v8209, %v9833
      %v9976 = vadd.f32 %v8210, %v9835
      %v9977 = vadd.f32 %v8211, %v9837
      %v9978 = vadd.f32 %v8212, %v9840
      %v9979 = vadd.f32 %v8213, %v9843
      %v9980 = vadd.f32 %v8214, %v9845
      %v9981 = vadd.f32 %v8215, %v9847
      %v9982 = vadd.f32 %v8216, %v9850
      %v9983 = vadd.f32 %v8217, %v9853
      %v9984 = vadd.f32 %v8218, %v9855
      %v9985 = vadd.f32 %v8219, %v9857
      %v9986 = vld [vmem:[%s4] sm:$0x3]
      %v9988 = vlaneseq
      %v9989 = vshrl.u32 %v9988, 7
      %v9990 = vsub.s32 0, %v9989
      %v9991 = vrot.slane %v9986, %v9990
      %v9992 = vlaneseq
      %v9993 = vshrl.u32 %v9992, 7
      %v9994 = vsub.s32 1, %v9993
      %v9995 = vrot.slane %v9986, %v9994
      %v9998 = vadd.f32 %v9922, %v9991
      %v9999 = vadd.f32 %v9923, %v9995
      %v10000 = vadd.f32 %v9924, %v9991
      %v10001 = vadd.f32 %v9925, %v9995
      %v10002 = vadd.f32 %v9926, %v9991
      %v10003 = vadd.f32 %v9927, %v9995
      %v10004 = vadd.f32 %v9928, %v9991
      %v10005 = vadd.f32 %v9929, %v9995
      %v10006 = vadd.f32 %v9930, %v9991
      %v10007 = vadd.f32 %v9931, %v9995
      %v10008 = vadd.f32 %v9932, %v9991
      %v10009 = vadd.f32 %v9933, %v9995
      %v10010 = vadd.f32 %v9934, %v9991
      %v10011 = vadd.f32 %v9935, %v9995
      %v10012 = vadd.f32 %v9936, %v9991
      %v10013 = vadd.f32 %v9937, %v9995
      %v10014 = vadd.f32 %v9938, %v9991
      %v10015 = vadd.f32 %v9939, %v9995
      %v10016 = vadd.f32 %v9940, %v9991
      %v10017 = vadd.f32 %v9941, %v9995
      %v10018 = vadd.f32 %v9942, %v9991
      %v10019 = vadd.f32 %v9943, %v9995
      %v10020 = vadd.f32 %v9944, %v9991
      %v10021 = vadd.f32 %v9945, %v9995
      %v10022 = vadd.f32 %v9946, %v9991
      %v10023 = vadd.f32 %v9947, %v9995
      %v10024 = vadd.f32 %v9948, %v9991
      %v10025 = vadd.f32 %v9949, %v9995
      %v10026 = vadd.f32 %v9950, %v9991
      %v10027 = vadd.f32 %v9951, %v9995
      %v10028 = vadd.f32 %v9952, %v9991
      %v10029 = vadd.f32 %v9953, %v9995
      %v10030 = vadd.f32 %v9954, %v9991
      %v10031 = vadd.f32 %v9955, %v9995
      %v10032 = vadd.f32 %v9956, %v9991
      %v10033 = vadd.f32 %v9957, %v9995
      %v10034 = vadd.f32 %v9958, %v9991
      %v10035 = vadd.f32 %v9959, %v9995
      %v10036 = vadd.f32 %v9960, %v9991
      %v10037 = vadd.f32 %v9961, %v9995
      %v10038 = vadd.f32 %v9962, %v9991
      %v10039 = vadd.f32 %v9963, %v9995
      %v10040 = vadd.f32 %v9964, %v9991
      %v10041 = vadd.f32 %v9965, %v9995
      %v10042 = vadd.f32 %v9966, %v9991
      %v10043 = vadd.f32 %v9967, %v9995
      %v10044 = vadd.f32 %v9968, %v9991
      %v10045 = vadd.f32 %v9969, %v9995
      %v10046 = vadd.f32 %v9970, %v9991
      %v10047 = vadd.f32 %v9971, %v9995
      %v10048 = vadd.f32 %v9972, %v9991
      %v10049 = vadd.f32 %v9973, %v9995
      %v10050 = vadd.f32 %v9974, %v9991
      %v10051 = vadd.f32 %v9975, %v9995
      %v10052 = vadd.f32 %v9976, %v9991
      %v10053 = vadd.f32 %v9977, %v9995
      %v10054 = vadd.f32 %v9978, %v9991
      %v10055 = vadd.f32 %v9979, %v9995
      %v10056 = vadd.f32 %v9980, %v9991
      %v10057 = vadd.f32 %v9981, %v9995
      %v10058 = vadd.f32 %v9982, %v9991
      %v10059 = vadd.f32 %v9983, %v9995
      %v10060 = vadd.f32 %v9984, %v9991
      %v10061 = vadd.f32 %v9985, %v9995
      %v10062 = vxor.u32 %v9998, 2147483648
      %v10063 = vxor.u32 %v9999, 2147483648
      %v10064 = vxor.u32 %v10000, 2147483648
      %v10065 = vxor.u32 %v10001, 2147483648
      %v10066 = vxor.u32 %v10002, 2147483648
      %v10067 = vxor.u32 %v10003, 2147483648
      %v10068 = vxor.u32 %v10004, 2147483648
      %v10069 = vxor.u32 %v10005, 2147483648
      %v10070 = vxor.u32 %v10006, 2147483648
      %v10071 = vxor.u32 %v10007, 2147483648
      %v10072 = vxor.u32 %v10008, 2147483648
      %v10073 = vxor.u32 %v10009, 2147483648
      %v10074 = vxor.u32 %v10010, 2147483648
      %v10075 = vxor.u32 %v10011, 2147483648
      %v10076 = vxor.u32 %v10012, 2147483648
      %v10077 = vxor.u32 %v10013, 2147483648
      %v10078 = vxor.u32 %v10014, 2147483648
      %v10079 = vxor.u32 %v10015, 2147483648
      %v10080 = vxor.u32 %v10016, 2147483648
      %v10081 = vxor.u32 %v10017, 2147483648
      %v10082 = vxor.u32 %v10018, 2147483648
      %v10083 = vxor.u32 %v10019, 2147483648
      %v10084 = vxor.u32 %v10020, 2147483648
      %v10085 = vxor.u32 %v10021, 2147483648
      %v10086 = vxor.u32 %v10022, 2147483648
      %v10087 = vxor.u32 %v10023, 2147483648
      %v10088 = vxor.u32 %v10024, 2147483648
      %v10089 = vxor.u32 %v10025, 2147483648
      %v10090 = vxor.u32 %v10026, 2147483648
      %v10091 = vxor.u32 %v10027, 2147483648
      %v10092 = vxor.u32 %v10028, 2147483648
      %v10093 = vxor.u32 %v10029, 2147483648
      %v10094 = vxor.u32 %v10030, 2147483648
      %v10095 = vxor.u32 %v10031, 2147483648
      %v10096 = vxor.u32 %v10032, 2147483648
      %v10097 = vxor.u32 %v10033, 2147483648
      %v10098 = vxor.u32 %v10034, 2147483648
      %v10099 = vxor.u32 %v10035, 2147483648
      %v10100 = vxor.u32 %v10036, 2147483648
      %v10101 = vxor.u32 %v10037, 2147483648
      %v10102 = vxor.u32 %v10038, 2147483648
      %v10103 = vxor.u32 %v10039, 2147483648
      %v10104 = vxor.u32 %v10040, 2147483648
      %v10105 = vxor.u32 %v10041, 2147483648
      %v10106 = vxor.u32 %v10042, 2147483648
      %v10107 = vxor.u32 %v10043, 2147483648
      %v10108 = vxor.u32 %v10044, 2147483648
      %v10109 = vxor.u32 %v10045, 2147483648
      %v10110 = vxor.u32 %v10046, 2147483648
      %v10111 = vxor.u32 %v10047, 2147483648
      %v10112 = vxor.u32 %v10048, 2147483648
      %v10113 = vxor.u32 %v10049, 2147483648
      %v10114 = vxor.u32 %v10050, 2147483648
      %v10115 = vxor.u32 %v10051, 2147483648
      %v10116 = vxor.u32 %v10052, 2147483648
      %v10117 = vxor.u32 %v10053, 2147483648
      %v10118 = vxor.u32 %v10054, 2147483648
      %v10119 = vxor.u32 %v10055, 2147483648
      %v10120 = vxor.u32 %v10056, 2147483648
      %v10121 = vxor.u32 %v10057, 2147483648
      %v10122 = vxor.u32 %v10058, 2147483648
      %v10123 = vxor.u32 %v10059, 2147483648
      %v10124 = vxor.u32 %v10060, 2147483648
      %v10125 = vxor.u32 %v10061, 2147483648
      %v10126 = vmul.f32 %v10062, 1.442695
      %v10127 = vpow.pop %v10126
      %v10128 = vmul.f32 %v10063, 1.442695
      %v10129 = vpow.pop %v10128
      %v10130 = vmul.f32 %v10064, 1.442695
      %v10131 = vpow.pop %v10130
      %v10132 = vmul.f32 %v10065, 1.442695
      %v10133 = vpow.pop %v10132
      %v10134 = vmul.f32 %v10066, 1.442695
      %v10135 = vpow.pop %v10134
      %v10136 = vmul.f32 %v10067, 1.442695
      %v10137 = vpow.pop %v10136
      %v10138 = vmul.f32 %v10068, 1.442695
      %v10139 = vpow.pop %v10138
      %v10140 = vmul.f32 %v10069, 1.442695
      %v10141 = vpow.pop %v10140
      %v10142 = vmul.f32 %v10070, 1.442695
      %v10143 = vpow.pop %v10142
      %v10144 = vmul.f32 %v10071, 1.442695
      %v10145 = vpow.pop %v10144
      %v10146 = vmul.f32 %v10072, 1.442695
      %v10147 = vpow.pop %v10146
      %v10148 = vmul.f32 %v10073, 1.442695
      %v10149 = vpow.pop %v10148
      %v10150 = vmul.f32 %v10074, 1.442695
      %v10151 = vpow.pop %v10150
      %v10152 = vmul.f32 %v10075, 1.442695
      %v10153 = vpow.pop %v10152
      %v10154 = vmul.f32 %v10076, 1.442695
      %v10155 = vpow.pop %v10154
      %v10156 = vmul.f32 %v10077, 1.442695
      %v10157 = vpow.pop %v10156
      %v10158 = vmul.f32 %v10078, 1.442695
      %v10159 = vpow.pop %v10158
      %v10160 = vmul.f32 %v10079, 1.442695
      %v10161 = vpow.pop %v10160
      %v10162 = vmul.f32 %v10080, 1.442695
      %v10163 = vpow.pop %v10162
      %v10164 = vmul.f32 %v10081, 1.442695
      %v10165 = vpow.pop %v10164
      %v10166 = vmul.f32 %v10082, 1.442695
      %v10167 = vpow.pop %v10166
      %v10168 = vmul.f32 %v10083, 1.442695
      %v10169 = vpow.pop %v10168
      %v10170 = vmul.f32 %v10084, 1.442695
      %v10171 = vpow.pop %v10170
      %v10172 = vmul.f32 %v10085, 1.442695
      %v10173 = vpow.pop %v10172
      %v10174 = vmul.f32 %v10086, 1.442695
      %v10175 = vpow.pop %v10174
      %v10176 = vmul.f32 %v10087, 1.442695
      %v10177 = vpow.pop %v10176
      %v10178 = vmul.f32 %v10088, 1.442695
      %v10179 = vpow.pop %v10178
      %v10180 = vmul.f32 %v10089, 1.442695
      %v10181 = vpow.pop %v10180
      %v10182 = vmul.f32 %v10090, 1.442695
      %v10183 = vpow.pop %v10182
      %v10184 = vmul.f32 %v10091, 1.442695
      %v10185 = vpow.pop %v10184
      %v10186 = vmul.f32 %v10092, 1.442695
      %v10187 = vpow.pop %v10186
      %v10188 = vmul.f32 %v10093, 1.442695
      %v10189 = vpow.pop %v10188
      %v10190 = vmul.f32 %v10094, 1.442695
      %v10191 = vpow.pop %v10190
      %v10192 = vmul.f32 %v10095, 1.442695
      %v10193 = vpow.pop %v10192
      %v10194 = vmul.f32 %v10096, 1.442695
      %v10195 = vpow.pop %v10194
      %v10196 = vmul.f32 %v10097, 1.442695
      %v10197 = vpow.pop %v10196
      %v10198 = vmul.f32 %v10098, 1.442695
      %v10199 = vpow.pop %v10198
      %v10200 = vmul.f32 %v10099, 1.442695
      %v10201 = vpow.pop %v10200
      %v10202 = vmul.f32 %v10100, 1.442695
      %v10203 = vpow.pop %v10202
      %v10204 = vmul.f32 %v10101, 1.442695
      %v10205 = vpow.pop %v10204
      %v10206 = vmul.f32 %v10102, 1.442695
      %v10207 = vpow.pop %v10206
      %v10208 = vmul.f32 %v10103, 1.442695
      %v10209 = vpow.pop %v10208
      %v10210 = vmul.f32 %v10104, 1.442695
      %v10211 = vpow.pop %v10210
      %v10212 = vmul.f32 %v10105, 1.442695
      %v10213 = vpow.pop %v10212
      %v10214 = vmul.f32 %v10106, 1.442695
      %v10215 = vpow.pop %v10214
      %v10216 = vmul.f32 %v10107, 1.442695
      %v10217 = vpow.pop %v10216
      %v10218 = vmul.f32 %v10108, 1.442695
      %v10219 = vpow.pop %v10218
      %v10220 = vmul.f32 %v10109, 1.442695
      %v10221 = vpow.pop %v10220
      %v10222 = vmul.f32 %v10110, 1.442695
      %v10223 = vpow.pop %v10222
      %v10224 = vmul.f32 %v10111, 1.442695
      %v10225 = vpow.pop %v10224
      %v10226 = vmul.f32 %v10112, 1.442695
      %v10227 = vpow.pop %v10226
      %v10228 = vmul.f32 %v10113, 1.442695
      %v10229 = vpow.pop %v10228
      %v10230 = vmul.f32 %v10114, 1.442695
      %v10231 = vpow.pop %v10230
      %v10232 = vmul.f32 %v10115, 1.442695
      %v10233 = vpow.pop %v10232
      %v10234 = vmul.f32 %v10116, 1.442695
      %v10235 = vpow.pop %v10234
      %v10236 = vmul.f32 %v10117, 1.442695
      %v10237 = vpow.pop %v10236
      %v10238 = vmul.f32 %v10118, 1.442695
      %v10239 = vpow.pop %v10238
      %v10240 = vmul.f32 %v10119, 1.442695
      %v10241 = vpow.pop %v10240
      %v10242 = vmul.f32 %v10120, 1.442695
      %v10243 = vpow.pop %v10242
      %v10244 = vmul.f32 %v10121, 1.442695
      %v10245 = vpow.pop %v10244
      %v10246 = vmul.f32 %v10122, 1.442695
      %v10247 = vpow.pop %v10246
      %v10248 = vmul.f32 %v10123, 1.442695
      %v10249 = vpow.pop %v10248
      %v10250 = vmul.f32 %v10124, 1.442695
      %v10251 = vpow.pop %v10250
      %v10252 = vmul.f32 %v10125, 1.442695
      %v10253 = vpow.pop %v10252
      %v10254 = vadd.f32 %v10127, 1.0
      %v10255 = vadd.f32 %v10129, 1.0
      %v10256 = vadd.f32 %v10131, 1.0
      %v10257 = vadd.f32 %v10133, 1.0
      %v10258 = vadd.f32 %v10135, 1.0
      %v10259 = vadd.f32 %v10137, 1.0
      %v10260 = vadd.f32 %v10139, 1.0
      %v10261 = vadd.f32 %v10141, 1.0
      %v10262 = vadd.f32 %v10143, 1.0
      %v10263 = vadd.f32 %v10145, 1.0
      %v10264 = vadd.f32 %v10147, 1.0
      %v10265 = vadd.f32 %v10149, 1.0
      %v10266 = vadd.f32 %v10151, 1.0
      %v10267 = vadd.f32 %v10153, 1.0
      %v10268 = vadd.f32 %v10155, 1.0
      %v10269 = vadd.f32 %v10157, 1.0
      %v10270 = vadd.f32 %v10159, 1.0
      %v10271 = vadd.f32 %v10161, 1.0
      %v10272 = vadd.f32 %v10163, 1.0
      %v10273 = vadd.f32 %v10165, 1.0
      %v10274 = vadd.f32 %v10167, 1.0
      %v10275 = vadd.f32 %v10169, 1.0
      %v10276 = vadd.f32 %v10171, 1.0
      %v10277 = vadd.f32 %v10173, 1.0
      %v10278 = vadd.f32 %v10175, 1.0
      %v10279 = vadd.f32 %v10177, 1.0
      %v10280 = vadd.f32 %v10179, 1.0
      %v10281 = vadd.f32 %v10181, 1.0
      %v10282 = vadd.f32 %v10183, 1.0
      %v10283 = vadd.f32 %v10185, 1.0
      %v10284 = vadd.f32 %v10187, 1.0
      %v10285 = vadd.f32 %v10189, 1.0
      %v10286 = vadd.f32 %v10191, 1.0
      %v10287 = vadd.f32 %v10193, 1.0
      %v10288 = vadd.f32 %v10195, 1.0
      %v10289 = vadd.f32 %v10197, 1.0
      %v10290 = vadd.f32 %v10199, 1.0
      %v10291 = vadd.f32 %v10201, 1.0
      %v10292 = vadd.f32 %v10203, 1.0
      %v10293 = vadd.f32 %v10205, 1.0
      %v10294 = vadd.f32 %v10207, 1.0
      %v10295 = vadd.f32 %v10209, 1.0
      %v10296 = vadd.f32 %v10211, 1.0
      %v10297 = vadd.f32 %v10213, 1.0
      %v10298 = vadd.f32 %v10215, 1.0
      %v10299 = vadd.f32 %v10217, 1.0
      %v10300 = vadd.f32 %v10219, 1.0
      %v10301 = vadd.f32 %v10221, 1.0
      %v10302 = vadd.f32 %v10223, 1.0
      %v10303 = vadd.f32 %v10225, 1.0
      %v10304 = vadd.f32 %v10227, 1.0
      %v10305 = vadd.f32 %v10229, 1.0
      %v10306 = vadd.f32 %v10231, 1.0
      %v10307 = vadd.f32 %v10233, 1.0
      %v10308 = vadd.f32 %v10235, 1.0
      %v10309 = vadd.f32 %v10237, 1.0
      %v10310 = vadd.f32 %v10239, 1.0
      %v10311 = vadd.f32 %v10241, 1.0
      %v10312 = vadd.f32 %v10243, 1.0
      %v10313 = vadd.f32 %v10245, 1.0
      %v10314 = vadd.f32 %v10247, 1.0
      %v10315 = vadd.f32 %v10249, 1.0
      %v10316 = vadd.f32 %v10251, 1.0
      %v10317 = vadd.f32 %v10253, 1.0
      %v10318 = vrcp.pop %v10254
      %v10319 = vmul.f32 1.0, %v10318
      %v10320 = vrcp.pop %v10255
      %v10321 = vmul.f32 1.0, %v10320
      %v10322 = vrcp.pop %v10256
      %v10323 = vmul.f32 1.0, %v10322
      %v10324 = vrcp.pop %v10257
      %v10325 = vmul.f32 1.0, %v10324
      %v10326 = vrcp.pop %v10258
      %v10327 = vmul.f32 1.0, %v10326
      %v10328 = vrcp.pop %v10259
      %v10329 = vmul.f32 1.0, %v10328
      %v10330 = vrcp.pop %v10260
      %v10331 = vmul.f32 1.0, %v10330
      %v10332 = vrcp.pop %v10261
      %v10333 = vmul.f32 1.0, %v10332
      %v10334 = vrcp.pop %v10262
      %v10335 = vmul.f32 1.0, %v10334
      %v10336 = vrcp.pop %v10263
      %v10337 = vmul.f32 1.0, %v10336
      %v10338 = vrcp.pop %v10264
      %v10339 = vmul.f32 1.0, %v10338
      %v10340 = vrcp.pop %v10265
      %v10341 = vmul.f32 1.0, %v10340
      %v10342 = vrcp.pop %v10266
      %v10343 = vmul.f32 1.0, %v10342
      %v10344 = vrcp.pop %v10267
      %v10345 = vmul.f32 1.0, %v10344
      %v10346 = vrcp.pop %v10268
      %v10347 = vmul.f32 1.0, %v10346
      %v10348 = vrcp.pop %v10269
      %v10349 = vmul.f32 1.0, %v10348
      %v10350 = vrcp.pop %v10270
      %v10351 = vmul.f32 1.0, %v10350
      %v10352 = vrcp.pop %v10271
      %v10353 = vmul.f32 1.0, %v10352
      %v10354 = vrcp.pop %v10272
      %v10355 = vmul.f32 1.0, %v10354
      %v10356 = vrcp.pop %v10273
      %v10357 = vmul.f32 1.0, %v10356
      %v10358 = vrcp.pop %v10274
      %v10359 = vmul.f32 1.0, %v10358
      %v10360 = vrcp.pop %v10275
      %v10361 = vmul.f32 1.0, %v10360
      %v10362 = vrcp.pop %v10276
      %v10363 = vmul.f32 1.0, %v10362
      %v10364 = vrcp.pop %v10277
      %v10365 = vmul.f32 1.0, %v10364
      %v10366 = vrcp.pop %v10278
      %v10367 = vmul.f32 1.0, %v10366
      %v10368 = vrcp.pop %v10279
      %v10369 = vmul.f32 1.0, %v10368
      %v10370 = vrcp.pop %v10280
      %v10371 = vmul.f32 1.0, %v10370
      %v10372 = vrcp.pop %v10281
      %v10373 = vmul.f32 1.0, %v10372
      %v10374 = vrcp.pop %v10282
      %v10375 = vmul.f32 1.0, %v10374
      %v10376 = vrcp.pop %v10283
      %v10377 = vmul.f32 1.0, %v10376
      %v10378 = vrcp.pop %v10284
      %v10379 = vmul.f32 1.0, %v10378
      %v10380 = vrcp.pop %v10285
      %v10381 = vmul.f32 1.0, %v10380
      %v10382 = vrcp.pop %v10286
      %v10383 = vmul.f32 1.0, %v10382
      %v10384 = vrcp.pop %v10287
      %v10385 = vmul.f32 1.0, %v10384
      %v10386 = vrcp.pop %v10288
      %v10387 = vmul.f32 1.0, %v10386
      %v10388 = vrcp.pop %v10289
      %v10389 = vmul.f32 1.0, %v10388
      %v10390 = vrcp.pop %v10290
      %v10391 = vmul.f32 1.0, %v10390
      %v10392 = vrcp.pop %v10291
      %v10393 = vmul.f32 1.0, %v10392
      %v10394 = vrcp.pop %v10292
      %v10395 = vmul.f32 1.0, %v10394
      %v10396 = vrcp.pop %v10293
      %v10397 = vmul.f32 1.0, %v10396
      %v10398 = vrcp.pop %v10294
      %v10399 = vmul.f32 1.0, %v10398
      %v10400 = vrcp.pop %v10295
      %v10401 = vmul.f32 1.0, %v10400
      %v10402 = vrcp.pop %v10296
      %v10403 = vmul.f32 1.0, %v10402
      %v10404 = vrcp.pop %v10297
      %v10405 = vmul.f32 1.0, %v10404
      %v10406 = vrcp.pop %v10298
      %v10407 = vmul.f32 1.0, %v10406
      %v10408 = vrcp.pop %v10299
      %v10409 = vmul.f32 1.0, %v10408
      %v10410 = vrcp.pop %v10300
      %v10411 = vmul.f32 1.0, %v10410
      %v10412 = vrcp.pop %v10301
      %v10413 = vmul.f32 1.0, %v10412
      %v10414 = vrcp.pop %v10302
      %v10415 = vmul.f32 1.0, %v10414
      %v10416 = vrcp.pop %v10303
      %v10417 = vmul.f32 1.0, %v10416
      %v10418 = vrcp.pop %v10304
      %v10419 = vmul.f32 1.0, %v10418
      %v10420 = vrcp.pop %v10305
      %v10421 = vmul.f32 1.0, %v10420
      %v10422 = vrcp.pop %v10306
      %v10423 = vmul.f32 1.0, %v10422
      %v10424 = vrcp.pop %v10307
      %v10425 = vmul.f32 1.0, %v10424
      %v10426 = vrcp.pop %v10308
      %v10427 = vmul.f32 1.0, %v10426
      %v10428 = vrcp.pop %v10309
      %v10429 = vmul.f32 1.0, %v10428
      %v10430 = vrcp.pop %v10310
      %v10431 = vmul.f32 1.0, %v10430
      %v10432 = vrcp.pop %v10311
      %v10433 = vmul.f32 1.0, %v10432
      %v10434 = vrcp.pop %v10312
      %v10435 = vmul.f32 1.0, %v10434
      %v10436 = vrcp.pop %v10313
      %v10437 = vmul.f32 1.0, %v10436
      %v10438 = vrcp.pop %v10314
      %v10439 = vmul.f32 1.0, %v10438
      %v10440 = vrcp.pop %v10315
      %v10441 = vmul.f32 1.0, %v10440
      %v10442 = vrcp.pop %v10316
      %v10443 = vmul.f32 1.0, %v10442
      %v10444 = vrcp.pop %v10317
      %v10445 = vmul.f32 1.0, %v10444
      %v10446 = vmul.f32 %v9998, %v10319
      %v10447 = vmul.f32 %v9999, %v10321
      %v10448 = vmul.f32 %v10000, %v10323
      %v10449 = vmul.f32 %v10001, %v10325
      %v10450 = vmul.f32 %v10002, %v10327
      %v10451 = vmul.f32 %v10003, %v10329
      %v10452 = vmul.f32 %v10004, %v10331
      %v10453 = vmul.f32 %v10005, %v10333
      %v10454 = vmul.f32 %v10006, %v10335
      %v10455 = vmul.f32 %v10007, %v10337
      %v10456 = vmul.f32 %v10008, %v10339
      %v10457 = vmul.f32 %v10009, %v10341
      %v10458 = vmul.f32 %v10010, %v10343
      %v10459 = vmul.f32 %v10011, %v10345
      %v10460 = vmul.f32 %v10012, %v10347
      %v10461 = vmul.f32 %v10013, %v10349
      %v10462 = vmul.f32 %v10014, %v10351
      %v10463 = vmul.f32 %v10015, %v10353
      %v10464 = vmul.f32 %v10016, %v10355
      %v10465 = vmul.f32 %v10017, %v10357
      %v10466 = vmul.f32 %v10018, %v10359
      %v10467 = vmul.f32 %v10019, %v10361
      %v10468 = vmul.f32 %v10020, %v10363
      %v10469 = vmul.f32 %v10021, %v10365
      %v10470 = vmul.f32 %v10022, %v10367
      %v10471 = vmul.f32 %v10023, %v10369
      %v10472 = vmul.f32 %v10024, %v10371
      %v10473 = vmul.f32 %v10025, %v10373
      %v10474 = vmul.f32 %v10026, %v10375
      %v10475 = vmul.f32 %v10027, %v10377
      %v10476 = vmul.f32 %v10028, %v10379
      %v10477 = vmul.f32 %v10029, %v10381
      %v10478 = vmul.f32 %v10030, %v10383
      %v10479 = vmul.f32 %v10031, %v10385
      %v10480 = vmul.f32 %v10032, %v10387
      %v10481 = vmul.f32 %v10033, %v10389
      %v10482 = vmul.f32 %v10034, %v10391
      %v10483 = vmul.f32 %v10035, %v10393
      %v10484 = vmul.f32 %v10036, %v10395
      %v10485 = vmul.f32 %v10037, %v10397
      %v10486 = vmul.f32 %v10038, %v10399
      %v10487 = vmul.f32 %v10039, %v10401
      %v10488 = vmul.f32 %v10040, %v10403
      %v10489 = vmul.f32 %v10041, %v10405
      %v10490 = vmul.f32 %v10042, %v10407
      %v10491 = vmul.f32 %v10043, %v10409
      %v10492 = vmul.f32 %v10044, %v10411
      %v10493 = vmul.f32 %v10045, %v10413
      %v10494 = vmul.f32 %v10046, %v10415
      %v10495 = vmul.f32 %v10047, %v10417
      %v10496 = vmul.f32 %v10048, %v10419
      %v10497 = vmul.f32 %v10049, %v10421
      %v10498 = vmul.f32 %v10050, %v10423
      %v10499 = vmul.f32 %v10051, %v10425
      %v10500 = vmul.f32 %v10052, %v10427
      %v10501 = vmul.f32 %v10053, %v10429
      %v10502 = vmul.f32 %v10054, %v10431
      %v10503 = vmul.f32 %v10055, %v10433
      %v10504 = vmul.f32 %v10056, %v10435
      %v10505 = vmul.f32 %v10057, %v10437
      %v10506 = vmul.f32 %v10058, %v10439
      %v10507 = vmul.f32 %v10059, %v10441
      %v10508 = vmul.f32 %v10060, %v10443
      %v10509 = vmul.f32 %v10061, %v10445
      %10510 = vst [vmem:[%s224] sm:$0xff] %v10446
      %10511 = vst [vmem:[%s224 + $0x8] sm:$0xff] %v10447
      %10512 = vst [vmem:[%s224 + $0x10] sm:$0xff] %v10448
      %10513 = vst [vmem:[%s224 + $0x18] sm:$0xff] %v10449
      %10514 = vst [vmem:[%s224 + $0x20] sm:$0xff] %v10450
      %10515 = vst [vmem:[%s224 + $0x28] sm:$0xff] %v10451
      %10516 = vst [vmem:[%s224 + $0x30] sm:$0xff] %v10452
      %10517 = vst [vmem:[%s224 + $0x38] sm:$0xff] %v10453
      %10518 = vst [vmem:[%s224 + $0x40] sm:$0xff] %v10454
      %10519 = vst [vmem:[%s224 + $0x48] sm:$0xff] %v10455
      %10520 = vst [vmem:[%s224 + $0x50] sm:$0xff] %v10456
      %10521 = vst [vmem:[%s224 + $0x58] sm:$0xff] %v10457
      %10522 = vst [vmem:[%s224 + $0x60] sm:$0xff] %v10458
      %10523 = vst [vmem:[%s224 + $0x68] sm:$0xff] %v10459
      %10524 = vst [vmem:[%s224 + $0x70] sm:$0xff] %v10460
      %10525 = vst [vmem:[%s224 + $0x78] sm:$0xff] %v10461
      %10526 = vst [vmem:[%s224 + $0x80] sm:$0xff] %v10462
      %10527 = vst [vmem:[%s224 + $0x88] sm:$0xff] %v10463
      %10528 = vst [vmem:[%s224 + $0x90] sm:$0xff] %v10464
      %10529 = vst [vmem:[%s224 + $0x98] sm:$0xff] %v10465
      %10530 = vst [vmem:[%s224 + $0xa0] sm:$0xff] %v10466
      %10531 = vst [vmem:[%s224 + $0xa8] sm:$0xff] %v10467
      %10532 = vst [vmem:[%s224 + $0xb0] sm:$0xff] %v10468
      %10533 = vst [vmem:[%s224 + $0xb8] sm:$0xff] %v10469
      %10534 = vst [vmem:[%s224 + $0xc0] sm:$0xff] %v10470
      %10535 = vst [vmem:[%s224 + $0xc8] sm:$0xff] %v10471
      %10536 = vst [vmem:[%s224 + $0xd0] sm:$0xff] %v10472
      %10537 = vst [vmem:[%s224 + $0xd8] sm:$0xff] %v10473
      %10538 = vst [vmem:[%s224 + $0xe0] sm:$0xff] %v10474
      %10539 = vst [vmem:[%s224 + $0xe8] sm:$0xff] %v10475
      %10540 = vst [vmem:[%s224 + $0xf0] sm:$0xff] %v10476
      %10541 = vst [vmem:[%s224 + $0xf8] sm:$0xff] %v10477
      %10542 = vst [vmem:[%s224 + $0x100] sm:$0xff] %v10478
      %10543 = vst [vmem:[%s224 + $0x108] sm:$0xff] %v10479
      %10544 = vst [vmem:[%s224 + $0x110] sm:$0xff] %v10480
      %10545 = vst [vmem:[%s224 + $0x118] sm:$0xff] %v10481
      %10546 = vst [vmem:[%s224 + $0x120] sm:$0xff] %v10482
      %10547 = vst [vmem:[%s224 + $0x128] sm:$0xff] %v10483
      %10548 = vst [vmem:[%s224 + $0x130] sm:$0xff] %v10484
      %10549 = vst [vmem:[%s224 + $0x138] sm:$0xff] %v10485
      %10550 = vst [vmem:[%s224 + $0x140] sm:$0xff] %v10486
      %10551 = vst [vmem:[%s224 + $0x148] sm:$0xff] %v10487
      %10552 = vst [vmem:[%s224 + $0x150] sm:$0xff] %v10488
      %10553 = vst [vmem:[%s224 + $0x158] sm:$0xff] %v10489
      %10554 = vst [vmem:[%s224 + $0x160] sm:$0xff] %v10490
      %10555 = vst [vmem:[%s224 + $0x168] sm:$0xff] %v10491
      %10556 = vst [vmem:[%s224 + $0x170] sm:$0xff] %v10492
      %10557 = vst [vmem:[%s224 + $0x178] sm:$0xff] %v10493
      %10558 = vst [vmem:[%s224 + $0x180] sm:$0xff] %v10494
      %10559 = vst [vmem:[%s224 + $0x188] sm:$0xff] %v10495
      %10560 = vst [vmem:[%s224 + $0x190] sm:$0xff] %v10496
      %10561 = vst [vmem:[%s224 + $0x198] sm:$0xff] %v10497
      %10562 = vst [vmem:[%s224 + $0x1a0] sm:$0xff] %v10498
      %10563 = vst [vmem:[%s224 + $0x1a8] sm:$0xff] %v10499
      %10564 = vst [vmem:[%s224 + $0x1b0] sm:$0xff] %v10500
      %10565 = vst [vmem:[%s224 + $0x1b8] sm:$0xff] %v10501
      %10566 = vst [vmem:[%s224 + $0x1c0] sm:$0xff] %v10502
      %10567 = vst [vmem:[%s224 + $0x1c8] sm:$0xff] %v10503
      %10568 = vst [vmem:[%s224 + $0x1d0] sm:$0xff] %v10504
      %10569 = vst [vmem:[%s224 + $0x1d8] sm:$0xff] %v10505
      %10570 = vst [vmem:[%s224 + $0x1e0] sm:$0xff] %v10506
      %10571 = vst [vmem:[%s224 + $0x1e8] sm:$0xff] %v10507
      %10572 = vst [vmem:[%s224 + $0x1f0] sm:$0xff] %v10508
      %10573 = vst [vmem:[%s224 + $0x1f8] sm:$0xff] %v10509
      %p10574 = scmp.lt.s32.totalorder %s16, 1
      %s10575 = scalar_select %p10574, %s16, 1
      %s10576 = smul.addr %s10575, 64
      %s10577 = smul.addr %s10576, 8
      %s10578 = scalar_lea.vmem %s5, %s10577
      // Predicated region
      $region41: #{decouple_forward.1} parent=39 // pred_check
        %p10579 = pneg %p144
      $region42: #{decouple_forward.1} parent=39 // pred_check_branch
        %10581 = sbr.rel (%p10579) target = $region44
      $region43: #{decouple_forward.1} parent=39 // pred_region
        _
      $region44: #{decouple_forward.1} parent=39 // pred_fallthru
        _
    $region40: #{decouple_forward.1} parent=5 // pred_fallthru
      _
    %p10582 = scmp.le.s32.totalorder 2, %s11
    // Predicated region
    $region45: #{decouple_forward.1} parent=5 // pred_check
      %p10583 = pneg %p10582
    $region46: #{decouple_forward.1} parent=5 // pred_check_branch
      %10585 = sbr.rel (%p10583) target = $region48
    $region47: #{decouple_forward.1} parent=5 // pred_region
      %s10586 = ssub.s32 %s11, 2
      // Predicated region
      $region49: #{decouple_forward.1} parent=47 // pred_check
        %p10587 = pneg %p150
      $region50: #{decouple_forward.1} parent=47 // pred_check_branch
        %10589 = sbr.rel (%p10587) target = $region52
      $region51: #{decouple_forward.1} parent=47 // pred_region
        %p10590 = scmp.lt.s32.totalorder %s17, 1
        %s10591 = scalar_select %p10590, %s17, 1
        %s10592 = smul.addr %s10591, 64
        %s10593 = smul.addr %s10592, 8
        %s10594 = scalar_lea.vmem %s5, %s10593
      $region52: #{decouple_forward.1} parent=47 // pred_fallthru
        _
    $region48: #{decouple_forward.1} parent=5 // pred_fallthru
      _
  $region6: #{decouple_forward.1} parent=0 // loop_footer
    %s15 = sadd.s32 1, %s11
  $region7: #{decouple_forward.1} parent=0 // loop_footer_branch
    %10 = sbr.rel target = $region3
  $region8: #{decouple_forward.1} parent=0 // loop_exit
    _

</llo_original>
